<compile_context>
chip_gen: v6e
topology: v6e:2x2x1
jax: 0.10.0
libtpu: 0.0.40
codegen_flags: <defaults>
</compile_context>

<pallas_src>
import functools

import jax
import jax.numpy as jnp
from jax.experimental import pallas as pl
from jax.experimental.pallas import tpu as pltpu

LOC_CH = 32    # localisation conv output channels (fixed by the module: 32*4*4 -> fc_loc)
POOL = 4       # adaptive_max_pool2d output size (4, 4)
FC_HID = 256   # fc_loc hidden width


def _roll_rows(x, shift_up, n_rows):
    """rolled[p, :] = x[(p + shift_up) % n_rows, :] (static shift, sublane rotate)."""
    k = shift_up % n_rows
    if k == 0:
        return x
    # pltpu.roll has jnp.roll semantics (result[i] = x[i - shift]); roll "up" by k == shift n-k.
    return pltpu.roll(x, n_rows - k, 0)


def _window_max(x, n, stride, n_rows):
    """t[p, :] = max_{0<=i<n} x[p + i*stride, :]  (log-depth doubling tree of rolls)."""
    if n == 1:
        return x
    t = x
    cov = 1
    while cov * 2 <= n:
        t = jnp.maximum(t, _roll_rows(t, cov * stride, n_rows))
        cov *= 2
    if cov < n:
        t = jnp.maximum(t, _roll_rows(t, (n - cov) * stride, n_rows))
    return t


# ------------------------------------------------------------------------------------------
# Fused kernel: loc conv + ReLU + adaptive 4x4 max pool + fc_loc + affine_grid + grid_sample
# Runs once per batch element (grid=(B,), "parallel").
# ------------------------------------------------------------------------------------------
def st_kernel(x_ref, wc_ref, w1_ref, b1_ref, w2_ref, b2_ref, src_ref, o_ref,
              *, h_in, w_in, c_in, hi, wi):
    hw = h_in * w_in
    p_tot = hi * wi
    wh, ww = h_in // POOL, w_in // POOL

    # ---- localisation: 3x3 same-padding conv via 9 in-kernel shifted taps (im2col-free) ----
    x_pc = x_ref[0]                                                       # (H*W, Cin)
    pix = jax.lax.broadcasted_iota(jnp.int32, (hw, 1), 0).astype(jnp.float32)
    hp = jnp.floor((pix + 0.5) * (1.0 / w_in))                            # pixel row
    wp = pix - w_in * hp                                                  # pixel col

    conv = jnp.zeros((hw, LOC_CH), jnp.float32)
    for idx in range(9):
        kh, kw = idx // 3, idx % 3
        dh, dw = kh - 1, kw - 1
        tap = _roll_rows(x_pc, dh * w_in + dw, hw)                        # x[(h+dh), (w+dw)]
        valid = ((hp + dh >= 0.0) & (hp + dh <= h_in - 1.0)
                 & (wp + dw >= 0.0) & (wp + dw <= w_in - 1.0))
        tap = tap * valid.astype(jnp.float32)                             # zero padding taps
        conv = conv + jnp.dot(tap, wc_ref[idx * c_in:(idx + 1) * c_in, :],
                              preferred_element_type=jnp.float32)
    conv = jnp.maximum(conv, 0.0)          # relu(maxpool(relu(z))) == maxpool(relu(z))

    # ---- adaptive 4x4 max pool: log-depth sliding max over pool-window rows/cols ----------
    m = _window_max(conv, ww, 1, hw)       # max over the window's columns
    m = _window_max(m, wh, w_in, hw)       # max over the window's rows
    # pooled value of cell (ph, pw) now lives in row ph*wh*W + pw*ww (channels on lanes)

    # ---- fc_loc: Linear(32*4*4, 256) -> ReLU -> Linear(256, 6) ----------------------------
    acc = jnp.zeros((1, FC_HID), jnp.float32)
    for q in range(POOL * POOL):           # w1 rows are pre-permuted to (q, c) order
        ph, pw = q // POOL, q % POOL
        row = ph * wh * w_in + pw * ww
        acc = acc + jnp.dot(m[row:row + 1, :], w1_ref[q * LOC_CH:(q + 1) * LOC_CH, :],
                            preferred_element_type=jnp.float32)
    hvec = jnp.maximum(acc + b1_ref[...], 0.0)
    theta = jnp.dot(hvec, w2_ref[...], preferred_element_type=jnp.float32) + b2_ref[...]

    # ---- affine_grid(theta, input_trans.size(), align_corners=True) -----------------------
    pf = jax.lax.broadcasted_iota(jnp.int32, (1, p_tot), 1).astype(jnp.float32)
    hof = jnp.floor((pf + 0.5) * (1.0 / wi))                              # output row
    wof = pf - wi * hof                                                   # output col
    xn = 2.0 * wof / (wi - 1.0) - 1.0
    yn = 2.0 * hof / (hi - 1.0) - 1.0
    gx = theta[:, 0:1] * xn + theta[:, 1:2] * yn + theta[:, 2:3]          # (1, P)
    gy = theta[:, 3:4] * xn + theta[:, 4:5] * yn + theta[:, 5:6]

    # ---- grid_sample(bilinear, padding_mode='zeros', align_corners=True), gather-free -----
    ix = (gx + 1.0) * 0.5 * (wi - 1.0)
    iy = (gy + 1.0) * 0.5 * (hi - 1.0)
    x0 = jnp.floor(ix)
    y0 = jnp.floor(iy)
    fx = ix - x0
    fy = iy - y0
    sf = jax.lax.broadcasted_iota(jnp.int32, (p_tot, p_tot), 0).astype(jnp.float32)
    hs = jnp.floor((sf + 0.5) * (1.0 / wi))                               # source pixel row
    ws = sf - wi * hs                                                     # source pixel col
    # One-hot bilinear weights; out-of-bounds taps never match a source index -> zeros pad.
    wy = jnp.where(hs == y0, 1.0 - fy, 0.0) + jnp.where(hs == y0 + 1.0, fy, 0.0)
    wx = jnp.where(ws == x0, 1.0 - fx, 0.0) + jnp.where(ws == x0 + 1.0, fx, 0.0)
    wbl = wy * wx                                                         # (Hi*Wi, Hi*Wi)
    # Lane-dense K=256 matmul does the whole bilinear gather; one (C, 256) block store.
    o_ref[0] = jnp.dot(src_ref[0], wbl,
                       preferred_element_type=jnp.float32).astype(o_ref.dtype)


# ------------------------------------------------------------------------------------------
# Wrapper (layout glue only) + parameter init matching the module's __init__ policy
# ------------------------------------------------------------------------------------------
def spatial_transformer_forward(params, x, input_trans=None):
    if input_trans is None:
        input_trans = x
    B, C, H, W = x.shape
    Bi, Ci, Hi, Wi = input_trans.shape
    assert B == Bi
    assert Hi > 1 and Wi > 1
    # TODO(synk): adaptive_max_pool2d is implemented for H, W divisible by 4 (equal,
    # non-overlapping windows), which holds for this configuration.
    assert H % POOL == 0 and W % POOL == 0
    hw = H * W
    p_tot = Hi * Wi

    # Cheap layout glue: pixel-major x for the in-kernel im2col, lane-dense source rows.
    x_pc = jnp.transpose(x, (0, 2, 3, 1)).reshape(B, hw, C)
    src = input_trans.reshape(Bi, Ci, p_tot)

    flops_per_b = (2 * hw * (9 * C) * LOC_CH                         # conv taps
                   + 2 * (LOC_CH * POOL * POOL) * FC_HID + 2 * FC_HID * 6
                   + 14 * p_tot * p_tot                              # one-hot weight build
                   + 2 * Ci * p_tot * p_tot)                         # sampling matmul
    bytes_per_b = 4 * (hw * C + 2 * Ci * p_tot)
    bytes_weights = 4 * (9 * C * LOC_CH + LOC_CH * POOL * POOL * FC_HID
                         + FC_HID + FC_HID * 6 + 6)

    out = pl.pallas_call(
        functools.partial(st_kernel, h_in=H, w_in=W, c_in=C, hi=Hi, wi=Wi),
        out_shape=jax.ShapeDtypeStruct((B, Ci, p_tot), jnp.float32),
        grid_spec=pltpu.PrefetchScalarGridSpec(
            num_scalar_prefetch=0,
            grid=(B,),
            in_specs=[
                pl.BlockSpec((1, hw, C), lambda b: (b, 0, 0)),            # x (per batch)
                pl.BlockSpec((9 * C, LOC_CH), lambda b: (0, 0)),          # conv weight
                pl.BlockSpec((LOC_CH * POOL * POOL, FC_HID), lambda b: (0, 0)),   # fc1 W
                pl.BlockSpec((1, FC_HID), lambda b: (0, 0)),              # fc1 b
                pl.BlockSpec((FC_HID, 6), lambda b: (0, 0)),              # fc2 W
                pl.BlockSpec((1, 6), lambda b: (0, 0)),                   # fc2 b
                pl.BlockSpec((1, Ci, p_tot), lambda b: (b, 0, 0)),        # sampling source
            ],
            out_specs=pl.BlockSpec((1, Ci, p_tot), lambda b: (b, 0, 0)),
        ),
        compiler_params=pltpu.CompilerParams(dimension_semantics=("parallel",)),
        cost_estimate=pl.CostEstimate(flops=B * flops_per_b, transcendentals=0,
                                      bytes_accessed=B * bytes_per_b + bytes_weights),
    )(x_pc, params["wc"], params["w1"], params["b1"], params["w2"], params["b2"], src)
    return out.reshape(Bi, Ci, Hi, Wi)


def init_params(key, fan_in):
    k1, k2 = jax.random.split(key)

    # loc[0]: Conv2d(fan_in, 32, 3, padding=1, bias=False), xavier_normal_ init.
    f_i, f_o = fan_in * 9, LOC_CH * 9
    w_conv = ((2.0 / (f_i + f_o)) ** 0.5) * jax.random.normal(
        k1, (LOC_CH, fan_in, 3, 3), jnp.float32)
    wc = jnp.transpose(w_conv, (2, 3, 1, 0)).reshape(9 * fan_in, LOC_CH)   # (kh,kw,cin) x cout

    # fc_loc[0]: Linear(32*4*4, 256), xavier_normal_ weight, zero bias.
    k_in = LOC_CH * POOL * POOL
    w1_t = ((2.0 / (k_in + FC_HID)) ** 0.5) * jax.random.normal(
        k2, (FC_HID, k_in), jnp.float32)
    # Torch flattens the pooled map as (c, ph, pw); the kernel consumes per-pool-position
    # (q, c) row slabs.  Permute the weight rows once here so no in-kernel relayout is needed.
    w1 = jnp.transpose(w1_t.reshape(FC_HID, LOC_CH, POOL * POOL),
                       (2, 1, 0)).reshape(k_in, FC_HID)
    b1 = jnp.zeros((1, FC_HID), jnp.float32)

    # fc_loc[2]: Linear(256, 6): zero weight, identity-affine bias (theta == identity at init).
    w2 = jnp.zeros((FC_HID, 6), jnp.float32)
    b2 = jnp.array([[1.0, 0.0, 0.0, 0.0, 1.0, 0.0]], jnp.float32)
    return dict(wc=wc, w1=w1, b1=b1, w2=w2, b2=b2)


if __name__ == "__main__":
    key = jax.random.PRNGKey(0)
    pkey, xkey, tkey = jax.random.split(key, 3)

    x = jax.random.uniform(xkey, (2, 4, 16, 16), dtype=jnp.float32)   # (B, fan_in, H, W)
    params = init_params(pkey, fan_in=4)

    fwd = jax.jit(spatial_transformer_forward)
    out = fwd(params, x)
    jax.block_until_ready(out)
    # At module init theta == identity, so grid_sample reproduces the input exactly.
    assert out.shape == x.shape
    assert jnp.allclose(out, x, atol=1e-4), "identity-transform check failed"

    # Second run with a non-zero fc_loc[2] weight so the conv/pool/fc and off-grid bilinear
    # sampling paths are exercised with a non-identity affine transform as well.
    params2 = dict(params)
    params2["w2"] = 0.01 * jax.random.normal(tkey, (FC_HID, 6), jnp.float32)
    out2 = fwd(params2, x)
    jax.block_until_ready(out2)
    assert bool(jnp.all(jnp.isfinite(out2)))

    print("KERNEL_OK")
</pallas_src>

<mosaic_0001>
module attributes {stable_mosaic.version = 11 : i64} {
  func.func @st_kernel(%arg0: i32, %arg1: memref<1x256x4xf32, #tpu.memory_space<vmem>>, %arg2: memref<36x32xf32, #tpu.memory_space<vmem>>, %arg3: memref<512x256xf32, #tpu.memory_space<vmem>>, %arg4: memref<1x256xf32, #tpu.memory_space<vmem>>, %arg5: memref<256x6xf32, #tpu.memory_space<vmem>>, %arg6: memref<1x6xf32, #tpu.memory_space<vmem>>, %arg7: memref<1x4x256xf32, #tpu.memory_space<vmem>>, %arg8: memref<1x4x256xf32, #tpu.memory_space<vmem>>) attributes {dimension_semantics = [#tpu.dimension_semantics<parallel>], iteration_bounds = array<i64: 2>, scalar_prefetch = 0 : i64, scratch_operands = 0 : i64, tpu.core_type = #tpu.core_type<tc>, window_params = [{transform_indices = @transform_0, window_bounds = array<i64: 1, 256, 4>}, {pipeline_mode = #tpu.pipeline_mode<synchronous>, transform_indices = @transform_1, window_bounds = array<i64: 36, 32>}, {pipeline_mode = #tpu.pipeline_mode<synchronous>, transform_indices = @transform_2, window_bounds = array<i64: 512, 256>}, {pipeline_mode = #tpu.pipeline_mode<synchronous>, transform_indices = @transform_3, window_bounds = array<i64: 1, 256>}, {pipeline_mode = #tpu.pipeline_mode<synchronous>, transform_indices = @transform_4, window_bounds = array<i64: 256, 6>}, {pipeline_mode = #tpu.pipeline_mode<synchronous>, transform_indices = @transform_5, window_bounds = array<i64: 1, 6>}, {transform_indices = @transform_6, window_bounds = array<i64: 1, 4, 256>}, {transform_indices = @transform_7, window_bounds = array<i64: 1, 4, 256>}]} {
    %c0 = arith.constant 0 : index
    %c0_0 = arith.constant 0 : index
    %c0_1 = arith.constant 0 : index
    %0 = vector.load %arg1[%c0, %c0_0, %c0_1] : memref<1x256x4xf32, #tpu.memory_space<vmem>>, vector<1x256x4xf32>
    %1 = vector.shape_cast %0 : vector<1x256x4xf32> to vector<256x4xf32>
    %2 = tpu.iota {dimensions = array<i32: 0>} : vector<256x1xi32>
    %3 = arith.sitofp %2 : vector<256x1xi32> to vector<256x1xf32>
    %cst = arith.constant 5.000000e-01 : f32
    %4 = vector.broadcast %cst : f32 to vector<256x1xf32>
    %5 = arith.addf %3, %4 : vector<256x1xf32>
    %cst_2 = arith.constant 6.250000e-02 : f32
    %6 = vector.broadcast %cst_2 : f32 to vector<256x1xf32>
    %7 = arith.mulf %5, %6 : vector<256x1xf32>
    %8 = math.floor %7 : vector<256x1xf32>
    %cst_3 = arith.constant 1.600000e+01 : f32
    %9 = vector.broadcast %cst_3 : f32 to vector<256x1xf32>
    %10 = arith.mulf %9, %8 : vector<256x1xf32>
    %11 = arith.subf %3, %10 : vector<256x1xf32>
    %cst_4 = arith.constant 0.000000e+00 : f32
    %12 = vector.broadcast %cst_4 : f32 to vector<256x32xf32>
    %c17_i32 = arith.constant 17 : i32
    %13 = tpu.dynamic_rotate %1 by %c17_i32 dim 0 : vector<256x4xf32>, i32 -> vector<256x4xf32>
    %cst_5 = arith.constant -1.000000e+00 : f32
    %14 = vector.broadcast %cst_5 : f32 to vector<256x1xf32>
    %15 = arith.addf %8, %14 : vector<256x1xf32>
    %cst_6 = arith.constant 0.000000e+00 : f32
    %16 = vector.broadcast %cst_6 : f32 to vector<256x1xf32>
    %17 = arith.cmpf oge, %15, %16 : vector<256x1xf32>
    %cst_7 = arith.constant -1.000000e+00 : f32
    %18 = vector.broadcast %cst_7 : f32 to vector<256x1xf32>
    %19 = arith.addf %8, %18 : vector<256x1xf32>
    %cst_8 = arith.constant 1.500000e+01 : f32
    %20 = vector.broadcast %cst_8 : f32 to vector<256x1xf32>
    %21 = arith.cmpf ole, %19, %20 : vector<256x1xf32>
    %22 = arith.andi %17, %21 : vector<256x1xi1>
    %cst_9 = arith.constant -1.000000e+00 : f32
    %23 = vector.broadcast %cst_9 : f32 to vector<256x1xf32>
    %24 = arith.addf %11, %23 : vector<256x1xf32>
    %cst_10 = arith.constant 0.000000e+00 : f32
    %25 = vector.broadcast %cst_10 : f32 to vector<256x1xf32>
    %26 = arith.cmpf oge, %24, %25 : vector<256x1xf32>
    %27 = arith.andi %22, %26 : vector<256x1xi1>
    %cst_11 = arith.constant -1.000000e+00 : f32
    %28 = vector.broadcast %cst_11 : f32 to vector<256x1xf32>
    %29 = arith.addf %11, %28 : vector<256x1xf32>
    %cst_12 = arith.constant 1.500000e+01 : f32
    %30 = vector.broadcast %cst_12 : f32 to vector<256x1xf32>
    %31 = arith.cmpf ole, %29, %30 : vector<256x1xf32>
    %32 = arith.andi %27, %31 : vector<256x1xi1>
    %33 = arith.extui %32 : vector<256x1xi1> to vector<256x1xi32>
    %34 = arith.sitofp %33 : vector<256x1xi32> to vector<256x1xf32>
    %35 = vector.broadcast %34 : vector<256x1xf32> to vector<256x4xf32>
    %36 = arith.mulf %13, %35 : vector<256x4xf32>
    %c0_13 = arith.constant 0 : index
    %c0_14 = arith.constant 0 : index
    %37 = vector.load %arg2[%c0_13, %c0_14] : memref<36x32xf32, #tpu.memory_space<vmem>>, vector<4x32xf32>
    %cst_15 = arith.constant dense<0.000000e+00> : vector<256x32xf32>
    %38 = tpu.matmul %36, %37, %cst_15 {dimension_numbers = #tpu.dot_dimension_numbers<[1], [0], [0], [1], [0, 0, 1, 1], [], []>} : vector<256x4xf32>, vector<4x32xf32>, vector<256x32xf32> -> vector<256x32xf32>
    %39 = arith.addf %12, %38 : vector<256x32xf32>
    %c16_i32 = arith.constant 16 : i32
    %40 = tpu.dynamic_rotate %1 by %c16_i32 dim 0 : vector<256x4xf32>, i32 -> vector<256x4xf32>
    %cst_16 = arith.constant -1.000000e+00 : f32
    %41 = vector.broadcast %cst_16 : f32 to vector<256x1xf32>
    %42 = arith.addf %8, %41 : vector<256x1xf32>
    %cst_17 = arith.constant 0.000000e+00 : f32
    %43 = vector.broadcast %cst_17 : f32 to vector<256x1xf32>
    %44 = arith.cmpf oge, %42, %43 : vector<256x1xf32>
    %cst_18 = arith.constant -1.000000e+00 : f32
    %45 = vector.broadcast %cst_18 : f32 to vector<256x1xf32>
    %46 = arith.addf %8, %45 : vector<256x1xf32>
    %cst_19 = arith.constant 1.500000e+01 : f32
    %47 = vector.broadcast %cst_19 : f32 to vector<256x1xf32>
    %48 = arith.cmpf ole, %46, %47 : vector<256x1xf32>
    %49 = arith.andi %44, %48 : vector<256x1xi1>
    %cst_20 = arith.constant 0.000000e+00 : f32
    %50 = vector.broadcast %cst_20 : f32 to vector<256x1xf32>
    %51 = arith.addf %11, %50 : vector<256x1xf32>
    %cst_21 = arith.constant 0.000000e+00 : f32
    %52 = vector.broadcast %cst_21 : f32 to vector<256x1xf32>
    %53 = arith.cmpf oge, %51, %52 : vector<256x1xf32>
    %54 = arith.andi %49, %53 : vector<256x1xi1>
    %cst_22 = arith.constant 0.000000e+00 : f32
    %55 = vector.broadcast %cst_22 : f32 to vector<256x1xf32>
    %56 = arith.addf %11, %55 : vector<256x1xf32>
    %cst_23 = arith.constant 1.500000e+01 : f32
    %57 = vector.broadcast %cst_23 : f32 to vector<256x1xf32>
    %58 = arith.cmpf ole, %56, %57 : vector<256x1xf32>
    %59 = arith.andi %54, %58 : vector<256x1xi1>
    %60 = arith.extui %59 : vector<256x1xi1> to vector<256x1xi32>
    %61 = arith.sitofp %60 : vector<256x1xi32> to vector<256x1xf32>
    %62 = vector.broadcast %61 : vector<256x1xf32> to vector<256x4xf32>
    %63 = arith.mulf %40, %62 : vector<256x4xf32>
    %c4 = arith.constant 4 : index
    %c0_24 = arith.constant 0 : index
    %64 = vector.load %arg2[%c4, %c0_24] : memref<36x32xf32, #tpu.memory_space<vmem>>, vector<4x32xf32>
    %cst_25 = arith.constant dense<0.000000e+00> : vector<256x32xf32>
    %65 = tpu.matmul %63, %64, %cst_25 {dimension_numbers = #tpu.dot_dimension_numbers<[1], [0], [0], [1], [0, 0, 1, 1], [], []>} : vector<256x4xf32>, vector<4x32xf32>, vector<256x32xf32> -> vector<256x32xf32>
    %66 = arith.addf %39, %65 : vector<256x32xf32>
    %c15_i32 = arith.constant 15 : i32
    %67 = tpu.dynamic_rotate %1 by %c15_i32 dim 0 : vector<256x4xf32>, i32 -> vector<256x4xf32>
    %cst_26 = arith.constant -1.000000e+00 : f32
    %68 = vector.broadcast %cst_26 : f32 to vector<256x1xf32>
    %69 = arith.addf %8, %68 : vector<256x1xf32>
    %cst_27 = arith.constant 0.000000e+00 : f32
    %70 = vector.broadcast %cst_27 : f32 to vector<256x1xf32>
    %71 = arith.cmpf oge, %69, %70 : vector<256x1xf32>
    %cst_28 = arith.constant -1.000000e+00 : f32
    %72 = vector.broadcast %cst_28 : f32 to vector<256x1xf32>
    %73 = arith.addf %8, %72 : vector<256x1xf32>
    %cst_29 = arith.constant 1.500000e+01 : f32
    %74 = vector.broadcast %cst_29 : f32 to vector<256x1xf32>
    %75 = arith.cmpf ole, %73, %74 : vector<256x1xf32>
    %76 = arith.andi %71, %75 : vector<256x1xi1>
    %cst_30 = arith.constant 1.000000e+00 : f32
    %77 = vector.broadcast %cst_30 : f32 to vector<256x1xf32>
    %78 = arith.addf %11, %77 : vector<256x1xf32>
    %cst_31 = arith.constant 0.000000e+00 : f32
    %79 = vector.broadcast %cst_31 : f32 to vector<256x1xf32>
    %80 = arith.cmpf oge, %78, %79 : vector<256x1xf32>
    %81 = arith.andi %76, %80 : vector<256x1xi1>
    %cst_32 = arith.constant 1.000000e+00 : f32
    %82 = vector.broadcast %cst_32 : f32 to vector<256x1xf32>
    %83 = arith.addf %11, %82 : vector<256x1xf32>
    %cst_33 = arith.constant 1.500000e+01 : f32
    %84 = vector.broadcast %cst_33 : f32 to vector<256x1xf32>
    %85 = arith.cmpf ole, %83, %84 : vector<256x1xf32>
    %86 = arith.andi %81, %85 : vector<256x1xi1>
    %87 = arith.extui %86 : vector<256x1xi1> to vector<256x1xi32>
    %88 = arith.sitofp %87 : vector<256x1xi32> to vector<256x1xf32>
    %89 = vector.broadcast %88 : vector<256x1xf32> to vector<256x4xf32>
    %90 = arith.mulf %67, %89 : vector<256x4xf32>
    %c8 = arith.constant 8 : index
    %c0_34 = arith.constant 0 : index
    %91 = vector.load %arg2[%c8, %c0_34] : memref<36x32xf32, #tpu.memory_space<vmem>>, vector<4x32xf32>
    %cst_35 = arith.constant dense<0.000000e+00> : vector<256x32xf32>
    %92 = tpu.matmul %90, %91, %cst_35 {dimension_numbers = #tpu.dot_dimension_numbers<[1], [0], [0], [1], [0, 0, 1, 1], [], []>} : vector<256x4xf32>, vector<4x32xf32>, vector<256x32xf32> -> vector<256x32xf32>
    %93 = arith.addf %66, %92 : vector<256x32xf32>
    %c1_i32 = arith.constant 1 : i32
    %94 = tpu.dynamic_rotate %1 by %c1_i32 dim 0 : vector<256x4xf32>, i32 -> vector<256x4xf32>
    %cst_36 = arith.constant 0.000000e+00 : f32
    %95 = vector.broadcast %cst_36 : f32 to vector<256x1xf32>
    %96 = arith.addf %8, %95 : vector<256x1xf32>
    %cst_37 = arith.constant 0.000000e+00 : f32
    %97 = vector.broadcast %cst_37 : f32 to vector<256x1xf32>
    %98 = arith.cmpf oge, %96, %97 : vector<256x1xf32>
    %cst_38 = arith.constant 0.000000e+00 : f32
    %99 = vector.broadcast %cst_38 : f32 to vector<256x1xf32>
    %100 = arith.addf %8, %99 : vector<256x1xf32>
    %cst_39 = arith.constant 1.500000e+01 : f32
    %101 = vector.broadcast %cst_39 : f32 to vector<256x1xf32>
    %102 = arith.cmpf ole, %100, %101 : vector<256x1xf32>
    %103 = arith.andi %98, %102 : vector<256x1xi1>
    %cst_40 = arith.constant -1.000000e+00 : f32
    %104 = vector.broadcast %cst_40 : f32 to vector<256x1xf32>
    %105 = arith.addf %11, %104 : vector<256x1xf32>
    %cst_41 = arith.constant 0.000000e+00 : f32
    %106 = vector.broadcast %cst_41 : f32 to vector<256x1xf32>
    %107 = arith.cmpf oge, %105, %106 : vector<256x1xf32>
    %108 = arith.andi %103, %107 : vector<256x1xi1>
    %cst_42 = arith.constant -1.000000e+00 : f32
    %109 = vector.broadcast %cst_42 : f32 to vector<256x1xf32>
    %110 = arith.addf %11, %109 : vector<256x1xf32>
    %cst_43 = arith.constant 1.500000e+01 : f32
    %111 = vector.broadcast %cst_43 : f32 to vector<256x1xf32>
    %112 = arith.cmpf ole, %110, %111 : vector<256x1xf32>
    %113 = arith.andi %108, %112 : vector<256x1xi1>
    %114 = arith.extui %113 : vector<256x1xi1> to vector<256x1xi32>
    %115 = arith.sitofp %114 : vector<256x1xi32> to vector<256x1xf32>
    %116 = vector.broadcast %115 : vector<256x1xf32> to vector<256x4xf32>
    %117 = arith.mulf %94, %116 : vector<256x4xf32>
    %c12 = arith.constant 12 : index
    %c0_44 = arith.constant 0 : index
    %118 = vector.load %arg2[%c12, %c0_44] : memref<36x32xf32, #tpu.memory_space<vmem>>, vector<4x32xf32>
    %cst_45 = arith.constant dense<0.000000e+00> : vector<256x32xf32>
    %119 = tpu.matmul %117, %118, %cst_45 {dimension_numbers = #tpu.dot_dimension_numbers<[1], [0], [0], [1], [0, 0, 1, 1], [], []>} : vector<256x4xf32>, vector<4x32xf32>, vector<256x32xf32> -> vector<256x32xf32>
    %120 = arith.addf %93, %119 : vector<256x32xf32>
    %cst_46 = arith.constant 0.000000e+00 : f32
    %121 = vector.broadcast %cst_46 : f32 to vector<256x1xf32>
    %122 = arith.addf %8, %121 : vector<256x1xf32>
    %cst_47 = arith.constant 0.000000e+00 : f32
    %123 = vector.broadcast %cst_47 : f32 to vector<256x1xf32>
    %124 = arith.cmpf oge, %122, %123 : vector<256x1xf32>
    %cst_48 = arith.constant 0.000000e+00 : f32
    %125 = vector.broadcast %cst_48 : f32 to vector<256x1xf32>
    %126 = arith.addf %8, %125 : vector<256x1xf32>
    %cst_49 = arith.constant 1.500000e+01 : f32
    %127 = vector.broadcast %cst_49 : f32 to vector<256x1xf32>
    %128 = arith.cmpf ole, %126, %127 : vector<256x1xf32>
    %129 = arith.andi %124, %128 : vector<256x1xi1>
    %cst_50 = arith.constant 0.000000e+00 : f32
    %130 = vector.broadcast %cst_50 : f32 to vector<256x1xf32>
    %131 = arith.addf %11, %130 : vector<256x1xf32>
    %cst_51 = arith.constant 0.000000e+00 : f32
    %132 = vector.broadcast %cst_51 : f32 to vector<256x1xf32>
    %133 = arith.cmpf oge, %131, %132 : vector<256x1xf32>
    %134 = arith.andi %129, %133 : vector<256x1xi1>
    %cst_52 = arith.constant 0.000000e+00 : f32
    %135 = vector.broadcast %cst_52 : f32 to vector<256x1xf32>
    %136 = arith.addf %11, %135 : vector<256x1xf32>
    %cst_53 = arith.constant 1.500000e+01 : f32
    %137 = vector.broadcast %cst_53 : f32 to vector<256x1xf32>
    %138 = arith.cmpf ole, %136, %137 : vector<256x1xf32>
    %139 = arith.andi %134, %138 : vector<256x1xi1>
    %140 = arith.extui %139 : vector<256x1xi1> to vector<256x1xi32>
    %141 = arith.sitofp %140 : vector<256x1xi32> to vector<256x1xf32>
    %142 = vector.broadcast %141 : vector<256x1xf32> to vector<256x4xf32>
    %143 = arith.mulf %1, %142 : vector<256x4xf32>
    %c16 = arith.constant 16 : index
    %c0_54 = arith.constant 0 : index
    %144 = vector.load %arg2[%c16, %c0_54] : memref<36x32xf32, #tpu.memory_space<vmem>>, vector<4x32xf32>
    %cst_55 = arith.constant dense<0.000000e+00> : vector<256x32xf32>
    %145 = tpu.matmul %143, %144, %cst_55 {dimension_numbers = #tpu.dot_dimension_numbers<[1], [0], [0], [1], [0, 0, 1, 1], [], []>} : vector<256x4xf32>, vector<4x32xf32>, vector<256x32xf32> -> vector<256x32xf32>
    %146 = arith.addf %120, %145 : vector<256x32xf32>
    %c255_i32 = arith.constant 255 : i32
    %147 = tpu.dynamic_rotate %1 by %c255_i32 dim 0 : vector<256x4xf32>, i32 -> vector<256x4xf32>
    %cst_56 = arith.constant 0.000000e+00 : f32
    %148 = vector.broadcast %cst_56 : f32 to vector<256x1xf32>
    %149 = arith.addf %8, %148 : vector<256x1xf32>
    %cst_57 = arith.constant 0.000000e+00 : f32
    %150 = vector.broadcast %cst_57 : f32 to vector<256x1xf32>
    %151 = arith.cmpf oge, %149, %150 : vector<256x1xf32>
    %cst_58 = arith.constant 0.000000e+00 : f32
    %152 = vector.broadcast %cst_58 : f32 to vector<256x1xf32>
    %153 = arith.addf %8, %152 : vector<256x1xf32>
    %cst_59 = arith.constant 1.500000e+01 : f32
    %154 = vector.broadcast %cst_59 : f32 to vector<256x1xf32>
    %155 = arith.cmpf ole, %153, %154 : vector<256x1xf32>
    %156 = arith.andi %151, %155 : vector<256x1xi1>
    %cst_60 = arith.constant 1.000000e+00 : f32
    %157 = vector.broadcast %cst_60 : f32 to vector<256x1xf32>
    %158 = arith.addf %11, %157 : vector<256x1xf32>
    %cst_61 = arith.constant 0.000000e+00 : f32
    %159 = vector.broadcast %cst_61 : f32 to vector<256x1xf32>
    %160 = arith.cmpf oge, %158, %159 : vector<256x1xf32>
    %161 = arith.andi %156, %160 : vector<256x1xi1>
    %cst_62 = arith.constant 1.000000e+00 : f32
    %162 = vector.broadcast %cst_62 : f32 to vector<256x1xf32>
    %163 = arith.addf %11, %162 : vector<256x1xf32>
    %cst_63 = arith.constant 1.500000e+01 : f32
    %164 = vector.broadcast %cst_63 : f32 to vector<256x1xf32>
    %165 = arith.cmpf ole, %163, %164 : vector<256x1xf32>
    %166 = arith.andi %161, %165 : vector<256x1xi1>
    %167 = arith.extui %166 : vector<256x1xi1> to vector<256x1xi32>
    %168 = arith.sitofp %167 : vector<256x1xi32> to vector<256x1xf32>
    %169 = vector.broadcast %168 : vector<256x1xf32> to vector<256x4xf32>
    %170 = arith.mulf %147, %169 : vector<256x4xf32>
    %c20 = arith.constant 20 : index
    %c0_64 = arith.constant 0 : index
    %171 = vector.load %arg2[%c20, %c0_64] : memref<36x32xf32, #tpu.memory_space<vmem>>, vector<4x32xf32>
    %cst_65 = arith.constant dense<0.000000e+00> : vector<256x32xf32>
    %172 = tpu.matmul %170, %171, %cst_65 {dimension_numbers = #tpu.dot_dimension_numbers<[1], [0], [0], [1], [0, 0, 1, 1], [], []>} : vector<256x4xf32>, vector<4x32xf32>, vector<256x32xf32> -> vector<256x32xf32>
    %173 = arith.addf %146, %172 : vector<256x32xf32>
    %c241_i32 = arith.constant 241 : i32
    %174 = tpu.dynamic_rotate %1 by %c241_i32 dim 0 : vector<256x4xf32>, i32 -> vector<256x4xf32>
    %cst_66 = arith.constant 1.000000e+00 : f32
    %175 = vector.broadcast %cst_66 : f32 to vector<256x1xf32>
    %176 = arith.addf %8, %175 : vector<256x1xf32>
    %cst_67 = arith.constant 0.000000e+00 : f32
    %177 = vector.broadcast %cst_67 : f32 to vector<256x1xf32>
    %178 = arith.cmpf oge, %176, %177 : vector<256x1xf32>
    %cst_68 = arith.constant 1.000000e+00 : f32
    %179 = vector.broadcast %cst_68 : f32 to vector<256x1xf32>
    %180 = arith.addf %8, %179 : vector<256x1xf32>
    %cst_69 = arith.constant 1.500000e+01 : f32
    %181 = vector.broadcast %cst_69 : f32 to vector<256x1xf32>
    %182 = arith.cmpf ole, %180, %181 : vector<256x1xf32>
    %183 = arith.andi %178, %182 : vector<256x1xi1>
    %cst_70 = arith.constant -1.000000e+00 : f32
    %184 = vector.broadcast %cst_70 : f32 to vector<256x1xf32>
    %185 = arith.addf %11, %184 : vector<256x1xf32>
    %cst_71 = arith.constant 0.000000e+00 : f32
    %186 = vector.broadcast %cst_71 : f32 to vector<256x1xf32>
    %187 = arith.cmpf oge, %185, %186 : vector<256x1xf32>
    %188 = arith.andi %183, %187 : vector<256x1xi1>
    %cst_72 = arith.constant -1.000000e+00 : f32
    %189 = vector.broadcast %cst_72 : f32 to vector<256x1xf32>
    %190 = arith.addf %11, %189 : vector<256x1xf32>
    %cst_73 = arith.constant 1.500000e+01 : f32
    %191 = vector.broadcast %cst_73 : f32 to vector<256x1xf32>
    %192 = arith.cmpf ole, %190, %191 : vector<256x1xf32>
    %193 = arith.andi %188, %192 : vector<256x1xi1>
    %194 = arith.extui %193 : vector<256x1xi1> to vector<256x1xi32>
    %195 = arith.sitofp %194 : vector<256x1xi32> to vector<256x1xf32>
    %196 = vector.broadcast %195 : vector<256x1xf32> to vector<256x4xf32>
    %197 = arith.mulf %174, %196 : vector<256x4xf32>
    %c24 = arith.constant 24 : index
    %c0_74 = arith.constant 0 : index
    %198 = vector.load %arg2[%c24, %c0_74] : memref<36x32xf32, #tpu.memory_space<vmem>>, vector<4x32xf32>
    %cst_75 = arith.constant dense<0.000000e+00> : vector<256x32xf32>
    %199 = tpu.matmul %197, %198, %cst_75 {dimension_numbers = #tpu.dot_dimension_numbers<[1], [0], [0], [1], [0, 0, 1, 1], [], []>} : vector<256x4xf32>, vector<4x32xf32>, vector<256x32xf32> -> vector<256x32xf32>
    %200 = arith.addf %173, %199 : vector<256x32xf32>
    %c240_i32 = arith.constant 240 : i32
    %201 = tpu.dynamic_rotate %1 by %c240_i32 dim 0 : vector<256x4xf32>, i32 -> vector<256x4xf32>
    %cst_76 = arith.constant 1.000000e+00 : f32
    %202 = vector.broadcast %cst_76 : f32 to vector<256x1xf32>
    %203 = arith.addf %8, %202 : vector<256x1xf32>
    %cst_77 = arith.constant 0.000000e+00 : f32
    %204 = vector.broadcast %cst_77 : f32 to vector<256x1xf32>
    %205 = arith.cmpf oge, %203, %204 : vector<256x1xf32>
    %cst_78 = arith.constant 1.000000e+00 : f32
    %206 = vector.broadcast %cst_78 : f32 to vector<256x1xf32>
    %207 = arith.addf %8, %206 : vector<256x1xf32>
    %cst_79 = arith.constant 1.500000e+01 : f32
    %208 = vector.broadcast %cst_79 : f32 to vector<256x1xf32>
    %209 = arith.cmpf ole, %207, %208 : vector<256x1xf32>
    %210 = arith.andi %205, %209 : vector<256x1xi1>
    %cst_80 = arith.constant 0.000000e+00 : f32
    %211 = vector.broadcast %cst_80 : f32 to vector<256x1xf32>
    %212 = arith.addf %11, %211 : vector<256x1xf32>
    %cst_81 = arith.constant 0.000000e+00 : f32
    %213 = vector.broadcast %cst_81 : f32 to vector<256x1xf32>
    %214 = arith.cmpf oge, %212, %213 : vector<256x1xf32>
    %215 = arith.andi %210, %214 : vector<256x1xi1>
    %cst_82 = arith.constant 0.000000e+00 : f32
    %216 = vector.broadcast %cst_82 : f32 to vector<256x1xf32>
    %217 = arith.addf %11, %216 : vector<256x1xf32>
    %cst_83 = arith.constant 1.500000e+01 : f32
    %218 = vector.broadcast %cst_83 : f32 to vector<256x1xf32>
    %219 = arith.cmpf ole, %217, %218 : vector<256x1xf32>
    %220 = arith.andi %215, %219 : vector<256x1xi1>
    %221 = arith.extui %220 : vector<256x1xi1> to vector<256x1xi32>
    %222 = arith.sitofp %221 : vector<256x1xi32> to vector<256x1xf32>
    %223 = vector.broadcast %222 : vector<256x1xf32> to vector<256x4xf32>
    %224 = arith.mulf %201, %223 : vector<256x4xf32>
    %c28 = arith.constant 28 : index
    %c0_84 = arith.constant 0 : index
    %225 = vector.load %arg2[%c28, %c0_84] : memref<36x32xf32, #tpu.memory_space<vmem>>, vector<4x32xf32>
    %cst_85 = arith.constant dense<0.000000e+00> : vector<256x32xf32>
    %226 = tpu.matmul %224, %225, %cst_85 {dimension_numbers = #tpu.dot_dimension_numbers<[1], [0], [0], [1], [0, 0, 1, 1], [], []>} : vector<256x4xf32>, vector<4x32xf32>, vector<256x32xf32> -> vector<256x32xf32>
    %227 = arith.addf %200, %226 : vector<256x32xf32>
    %c239_i32 = arith.constant 239 : i32
    %228 = tpu.dynamic_rotate %1 by %c239_i32 dim 0 : vector<256x4xf32>, i32 -> vector<256x4xf32>
    %cst_86 = arith.constant 1.000000e+00 : f32
    %229 = vector.broadcast %cst_86 : f32 to vector<256x1xf32>
    %230 = arith.addf %8, %229 : vector<256x1xf32>
    %cst_87 = arith.constant 0.000000e+00 : f32
    %231 = vector.broadcast %cst_87 : f32 to vector<256x1xf32>
    %232 = arith.cmpf oge, %230, %231 : vector<256x1xf32>
    %cst_88 = arith.constant 1.000000e+00 : f32
    %233 = vector.broadcast %cst_88 : f32 to vector<256x1xf32>
    %234 = arith.addf %8, %233 : vector<256x1xf32>
    %cst_89 = arith.constant 1.500000e+01 : f32
    %235 = vector.broadcast %cst_89 : f32 to vector<256x1xf32>
    %236 = arith.cmpf ole, %234, %235 : vector<256x1xf32>
    %237 = arith.andi %232, %236 : vector<256x1xi1>
    %cst_90 = arith.constant 1.000000e+00 : f32
    %238 = vector.broadcast %cst_90 : f32 to vector<256x1xf32>
    %239 = arith.addf %11, %238 : vector<256x1xf32>
    %cst_91 = arith.constant 0.000000e+00 : f32
    %240 = vector.broadcast %cst_91 : f32 to vector<256x1xf32>
    %241 = arith.cmpf oge, %239, %240 : vector<256x1xf32>
    %242 = arith.andi %237, %241 : vector<256x1xi1>
    %cst_92 = arith.constant 1.000000e+00 : f32
    %243 = vector.broadcast %cst_92 : f32 to vector<256x1xf32>
    %244 = arith.addf %11, %243 : vector<256x1xf32>
    %cst_93 = arith.constant 1.500000e+01 : f32
    %245 = vector.broadcast %cst_93 : f32 to vector<256x1xf32>
    %246 = arith.cmpf ole, %244, %245 : vector<256x1xf32>
    %247 = arith.andi %242, %246 : vector<256x1xi1>
    %248 = arith.extui %247 : vector<256x1xi1> to vector<256x1xi32>
    %249 = arith.sitofp %248 : vector<256x1xi32> to vector<256x1xf32>
    %250 = vector.broadcast %249 : vector<256x1xf32> to vector<256x4xf32>
    %251 = arith.mulf %228, %250 : vector<256x4xf32>
    %c32 = arith.constant 32 : index
    %c0_94 = arith.constant 0 : index
    %252 = vector.load %arg2[%c32, %c0_94] : memref<36x32xf32, #tpu.memory_space<vmem>>, vector<4x32xf32>
    %cst_95 = arith.constant dense<0.000000e+00> : vector<256x32xf32>
    %253 = tpu.matmul %251, %252, %cst_95 {dimension_numbers = #tpu.dot_dimension_numbers<[1], [0], [0], [1], [0, 0, 1, 1], [], []>} : vector<256x4xf32>, vector<4x32xf32>, vector<256x32xf32> -> vector<256x32xf32>
    %254 = arith.addf %227, %253 : vector<256x32xf32>
    %cst_96 = arith.constant 0.000000e+00 : f32
    %255 = vector.broadcast %cst_96 : f32 to vector<256x32xf32>
    %256 = arith.maximumf %254, %255 : vector<256x32xf32>
    %c255_i32_97 = arith.constant 255 : i32
    %257 = tpu.dynamic_rotate %256 by %c255_i32_97 dim 0 : vector<256x32xf32>, i32 -> vector<256x32xf32>
    %258 = arith.maximumf %256, %257 : vector<256x32xf32>
    %c254_i32 = arith.constant 254 : i32
    %259 = tpu.dynamic_rotate %258 by %c254_i32 dim 0 : vector<256x32xf32>, i32 -> vector<256x32xf32>
    %260 = arith.maximumf %258, %259 : vector<256x32xf32>
    %c240_i32_98 = arith.constant 240 : i32
    %261 = tpu.dynamic_rotate %260 by %c240_i32_98 dim 0 : vector<256x32xf32>, i32 -> vector<256x32xf32>
    %262 = arith.maximumf %260, %261 : vector<256x32xf32>
    %c224_i32 = arith.constant 224 : i32
    %263 = tpu.dynamic_rotate %262 by %c224_i32 dim 0 : vector<256x32xf32>, i32 -> vector<256x32xf32>
    %264 = arith.maximumf %262, %263 : vector<256x32xf32>
    %cst_99 = arith.constant 0.000000e+00 : f32
    %265 = vector.broadcast %cst_99 : f32 to vector<1x256xf32>
    %266 = vector.extract_strided_slice %264 {offsets = [0, 0], sizes = [1, 32], strides = [1, 1]} : vector<256x32xf32> to vector<1x32xf32>
    %c0_100 = arith.constant 0 : index
    %c0_101 = arith.constant 0 : index
    %267 = vector.load %arg3[%c0_100, %c0_101] : memref<512x256xf32, #tpu.memory_space<vmem>>, vector<32x256xf32>
    %cst_102 = arith.constant dense<0.000000e+00> : vector<1x256xf32>
    %268 = tpu.matmul %266, %267, %cst_102 {dimension_numbers = #tpu.dot_dimension_numbers<[1], [0], [0], [1], [0, 0, 1, 1], [], []>} : vector<1x32xf32>, vector<32x256xf32>, vector<1x256xf32> -> vector<1x256xf32>
    %269 = arith.addf %265, %268 : vector<1x256xf32>
    %270 = vector.extract_strided_slice %264 {offsets = [4, 0], sizes = [1, 32], strides = [1, 1]} : vector<256x32xf32> to vector<1x32xf32>
    %c32_103 = arith.constant 32 : index
    %c0_104 = arith.constant 0 : index
    %271 = vector.load %arg3[%c32_103, %c0_104] : memref<512x256xf32, #tpu.memory_space<vmem>>, vector<32x256xf32>
    %cst_105 = arith.constant dense<0.000000e+00> : vector<1x256xf32>
    %272 = tpu.matmul %270, %271, %cst_105 {dimension_numbers = #tpu.dot_dimension_numbers<[1], [0], [0], [1], [0, 0, 1, 1], [], []>} : vector<1x32xf32>, vector<32x256xf32>, vector<1x256xf32> -> vector<1x256xf32>
    %273 = arith.addf %269, %272 : vector<1x256xf32>
    %274 = vector.extract_strided_slice %264 {offsets = [8, 0], sizes = [1, 32], strides = [1, 1]} : vector<256x32xf32> to vector<1x32xf32>
    %c64 = arith.constant 64 : index
    %c0_106 = arith.constant 0 : index
    %275 = vector.load %arg3[%c64, %c0_106] : memref<512x256xf32, #tpu.memory_space<vmem>>, vector<32x256xf32>
    %cst_107 = arith.constant dense<0.000000e+00> : vector<1x256xf32>
    %276 = tpu.matmul %274, %275, %cst_107 {dimension_numbers = #tpu.dot_dimension_numbers<[1], [0], [0], [1], [0, 0, 1, 1], [], []>} : vector<1x32xf32>, vector<32x256xf32>, vector<1x256xf32> -> vector<1x256xf32>
    %277 = arith.addf %273, %276 : vector<1x256xf32>
    %278 = vector.extract_strided_slice %264 {offsets = [12, 0], sizes = [1, 32], strides = [1, 1]} : vector<256x32xf32> to vector<1x32xf32>
    %c96 = arith.constant 96 : index
    %c0_108 = arith.constant 0 : index
    %279 = vector.load %arg3[%c96, %c0_108] : memref<512x256xf32, #tpu.memory_space<vmem>>, vector<32x256xf32>
    %cst_109 = arith.constant dense<0.000000e+00> : vector<1x256xf32>
    %280 = tpu.matmul %278, %279, %cst_109 {dimension_numbers = #tpu.dot_dimension_numbers<[1], [0], [0], [1], [0, 0, 1, 1], [], []>} : vector<1x32xf32>, vector<32x256xf32>, vector<1x256xf32> -> vector<1x256xf32>
    %281 = arith.addf %277, %280 : vector<1x256xf32>
    %282 = vector.extract_strided_slice %264 {offsets = [64, 0], sizes = [1, 32], strides = [1, 1]} : vector<256x32xf32> to vector<1x32xf32>
    %c128 = arith.constant 128 : index
    %c0_110 = arith.constant 0 : index
    %283 = vector.load %arg3[%c128, %c0_110] : memref<512x256xf32, #tpu.memory_space<vmem>>, vector<32x256xf32>
    %cst_111 = arith.constant dense<0.000000e+00> : vector<1x256xf32>
    %284 = tpu.matmul %282, %283, %cst_111 {dimension_numbers = #tpu.dot_dimension_numbers<[1], [0], [0], [1], [0, 0, 1, 1], [], []>} : vector<1x32xf32>, vector<32x256xf32>, vector<1x256xf32> -> vector<1x256xf32>
    %285 = arith.addf %281, %284 : vector<1x256xf32>
    %286 = vector.extract_strided_slice %264 {offsets = [68, 0], sizes = [1, 32], strides = [1, 1]} : vector<256x32xf32> to vector<1x32xf32>
    %c160 = arith.constant 160 : index
    %c0_112 = arith.constant 0 : index
    %287 = vector.load %arg3[%c160, %c0_112] : memref<512x256xf32, #tpu.memory_space<vmem>>, vector<32x256xf32>
    %cst_113 = arith.constant dense<0.000000e+00> : vector<1x256xf32>
    %288 = tpu.matmul %286, %287, %cst_113 {dimension_numbers = #tpu.dot_dimension_numbers<[1], [0], [0], [1], [0, 0, 1, 1], [], []>} : vector<1x32xf32>, vector<32x256xf32>, vector<1x256xf32> -> vector<1x256xf32>
    %289 = arith.addf %285, %288 : vector<1x256xf32>
    %290 = vector.extract_strided_slice %264 {offsets = [72, 0], sizes = [1, 32], strides = [1, 1]} : vector<256x32xf32> to vector<1x32xf32>
    %c192 = arith.constant 192 : index
    %c0_114 = arith.constant 0 : index
    %291 = vector.load %arg3[%c192, %c0_114] : memref<512x256xf32, #tpu.memory_space<vmem>>, vector<32x256xf32>
    %cst_115 = arith.constant dense<0.000000e+00> : vector<1x256xf32>
    %292 = tpu.matmul %290, %291, %cst_115 {dimension_numbers = #tpu.dot_dimension_numbers<[1], [0], [0], [1], [0, 0, 1, 1], [], []>} : vector<1x32xf32>, vector<32x256xf32>, vector<1x256xf32> -> vector<1x256xf32>
    %293 = arith.addf %289, %292 : vector<1x256xf32>
    %294 = vector.extract_strided_slice %264 {offsets = [76, 0], sizes = [1, 32], strides = [1, 1]} : vector<256x32xf32> to vector<1x32xf32>
    %c224 = arith.constant 224 : index
    %c0_116 = arith.constant 0 : index
    %295 = vector.load %arg3[%c224, %c0_116] : memref<512x256xf32, #tpu.memory_space<vmem>>, vector<32x256xf32>
    %cst_117 = arith.constant dense<0.000000e+00> : vector<1x256xf32>
    %296 = tpu.matmul %294, %295, %cst_117 {dimension_numbers = #tpu.dot_dimension_numbers<[1], [0], [0], [1], [0, 0, 1, 1], [], []>} : vector<1x32xf32>, vector<32x256xf32>, vector<1x256xf32> -> vector<1x256xf32>
    %297 = arith.addf %293, %296 : vector<1x256xf32>
    %298 = vector.extract_strided_slice %264 {offsets = [128, 0], sizes = [1, 32], strides = [1, 1]} : vector<256x32xf32> to vector<1x32xf32>
    %c256 = arith.constant 256 : index
    %c0_118 = arith.constant 0 : index
    %299 = vector.load %arg3[%c256, %c0_118] : memref<512x256xf32, #tpu.memory_space<vmem>>, vector<32x256xf32>
    %cst_119 = arith.constant dense<0.000000e+00> : vector<1x256xf32>
    %300 = tpu.matmul %298, %299, %cst_119 {dimension_numbers = #tpu.dot_dimension_numbers<[1], [0], [0], [1], [0, 0, 1, 1], [], []>} : vector<1x32xf32>, vector<32x256xf32>, vector<1x256xf32> -> vector<1x256xf32>
    %301 = arith.addf %297, %300 : vector<1x256xf32>
    %302 = vector.extract_strided_slice %264 {offsets = [132, 0], sizes = [1, 32], strides = [1, 1]} : vector<256x32xf32> to vector<1x32xf32>
    %c288 = arith.constant 288 : index
    %c0_120 = arith.constant 0 : index
    %303 = vector.load %arg3[%c288, %c0_120] : memref<512x256xf32, #tpu.memory_space<vmem>>, vector<32x256xf32>
    %cst_121 = arith.constant dense<0.000000e+00> : vector<1x256xf32>
    %304 = tpu.matmul %302, %303, %cst_121 {dimension_numbers = #tpu.dot_dimension_numbers<[1], [0], [0], [1], [0, 0, 1, 1], [], []>} : vector<1x32xf32>, vector<32x256xf32>, vector<1x256xf32> -> vector<1x256xf32>
    %305 = arith.addf %301, %304 : vector<1x256xf32>
    %306 = vector.extract_strided_slice %264 {offsets = [136, 0], sizes = [1, 32], strides = [1, 1]} : vector<256x32xf32> to vector<1x32xf32>
    %c320 = arith.constant 320 : index
    %c0_122 = arith.constant 0 : index
    %307 = vector.load %arg3[%c320, %c0_122] : memref<512x256xf32, #tpu.memory_space<vmem>>, vector<32x256xf32>
    %cst_123 = arith.constant dense<0.000000e+00> : vector<1x256xf32>
    %308 = tpu.matmul %306, %307, %cst_123 {dimension_numbers = #tpu.dot_dimension_numbers<[1], [0], [0], [1], [0, 0, 1, 1], [], []>} : vector<1x32xf32>, vector<32x256xf32>, vector<1x256xf32> -> vector<1x256xf32>
    %309 = arith.addf %305, %308 : vector<1x256xf32>
    %310 = vector.extract_strided_slice %264 {offsets = [140, 0], sizes = [1, 32], strides = [1, 1]} : vector<256x32xf32> to vector<1x32xf32>
    %c352 = arith.constant 352 : index
    %c0_124 = arith.constant 0 : index
    %311 = vector.load %arg3[%c352, %c0_124] : memref<512x256xf32, #tpu.memory_space<vmem>>, vector<32x256xf32>
    %cst_125 = arith.constant dense<0.000000e+00> : vector<1x256xf32>
    %312 = tpu.matmul %310, %311, %cst_125 {dimension_numbers = #tpu.dot_dimension_numbers<[1], [0], [0], [1], [0, 0, 1, 1], [], []>} : vector<1x32xf32>, vector<32x256xf32>, vector<1x256xf32> -> vector<1x256xf32>
    %313 = arith.addf %309, %312 : vector<1x256xf32>
    %314 = vector.extract_strided_slice %264 {offsets = [192, 0], sizes = [1, 32], strides = [1, 1]} : vector<256x32xf32> to vector<1x32xf32>
    %c384 = arith.constant 384 : index
    %c0_126 = arith.constant 0 : index
    %315 = vector.load %arg3[%c384, %c0_126] : memref<512x256xf32, #tpu.memory_space<vmem>>, vector<32x256xf32>
    %cst_127 = arith.constant dense<0.000000e+00> : vector<1x256xf32>
    %316 = tpu.matmul %314, %315, %cst_127 {dimension_numbers = #tpu.dot_dimension_numbers<[1], [0], [0], [1], [0, 0, 1, 1], [], []>} : vector<1x32xf32>, vector<32x256xf32>, vector<1x256xf32> -> vector<1x256xf32>
    %317 = arith.addf %313, %316 : vector<1x256xf32>
    %318 = vector.extract_strided_slice %264 {offsets = [196, 0], sizes = [1, 32], strides = [1, 1]} : vector<256x32xf32> to vector<1x32xf32>
    %c416 = arith.constant 416 : index
    %c0_128 = arith.constant 0 : index
    %319 = vector.load %arg3[%c416, %c0_128] : memref<512x256xf32, #tpu.memory_space<vmem>>, vector<32x256xf32>
    %cst_129 = arith.constant dense<0.000000e+00> : vector<1x256xf32>
    %320 = tpu.matmul %318, %319, %cst_129 {dimension_numbers = #tpu.dot_dimension_numbers<[1], [0], [0], [1], [0, 0, 1, 1], [], []>} : vector<1x32xf32>, vector<32x256xf32>, vector<1x256xf32> -> vector<1x256xf32>
    %321 = arith.addf %317, %320 : vector<1x256xf32>
    %322 = vector.extract_strided_slice %264 {offsets = [200, 0], sizes = [1, 32], strides = [1, 1]} : vector<256x32xf32> to vector<1x32xf32>
    %c448 = arith.constant 448 : index
    %c0_130 = arith.constant 0 : index
    %323 = vector.load %arg3[%c448, %c0_130] : memref<512x256xf32, #tpu.memory_space<vmem>>, vector<32x256xf32>
    %cst_131 = arith.constant dense<0.000000e+00> : vector<1x256xf32>
    %324 = tpu.matmul %322, %323, %cst_131 {dimension_numbers = #tpu.dot_dimension_numbers<[1], [0], [0], [1], [0, 0, 1, 1], [], []>} : vector<1x32xf32>, vector<32x256xf32>, vector<1x256xf32> -> vector<1x256xf32>
    %325 = arith.addf %321, %324 : vector<1x256xf32>
    %326 = vector.extract_strided_slice %264 {offsets = [204, 0], sizes = [1, 32], strides = [1, 1]} : vector<256x32xf32> to vector<1x32xf32>
    %c480 = arith.constant 480 : index
    %c0_132 = arith.constant 0 : index
    %327 = vector.load %arg3[%c480, %c0_132] : memref<512x256xf32, #tpu.memory_space<vmem>>, vector<32x256xf32>
    %cst_133 = arith.constant dense<0.000000e+00> : vector<1x256xf32>
    %328 = tpu.matmul %326, %327, %cst_133 {dimension_numbers = #tpu.dot_dimension_numbers<[1], [0], [0], [1], [0, 0, 1, 1], [], []>} : vector<1x32xf32>, vector<32x256xf32>, vector<1x256xf32> -> vector<1x256xf32>
    %329 = arith.addf %325, %328 : vector<1x256xf32>
    %c0_134 = arith.constant 0 : index
    %c0_135 = arith.constant 0 : index
    %330 = vector.load %arg4[%c0_134, %c0_135] : memref<1x256xf32, #tpu.memory_space<vmem>>, vector<1x256xf32>
    %331 = arith.addf %329, %330 : vector<1x256xf32>
    %cst_136 = arith.constant 0.000000e+00 : f32
    %332 = vector.broadcast %cst_136 : f32 to vector<1x256xf32>
    %333 = arith.maximumf %331, %332 : vector<1x256xf32>
    %c0_137 = arith.constant 0 : index
    %c0_138 = arith.constant 0 : index
    %334 = vector.load %arg5[%c0_137, %c0_138] : memref<256x6xf32, #tpu.memory_space<vmem>>, vector<256x6xf32>
    %cst_139 = arith.constant dense<0.000000e+00> : vector<1x6xf32>
    %335 = tpu.matmul %333, %334, %cst_139 {dimension_numbers = #tpu.dot_dimension_numbers<[1], [0], [0], [1], [0, 0, 1, 1], [], []>} : vector<1x256xf32>, vector<256x6xf32>, vector<1x6xf32> -> vector<1x6xf32>
    %c0_140 = arith.constant 0 : index
    %c0_141 = arith.constant 0 : index
    %336 = vector.load %arg6[%c0_140, %c0_141] : memref<1x6xf32, #tpu.memory_space<vmem>>, vector<1x6xf32>
    %337 = arith.addf %335, %336 : vector<1x6xf32>
    %338 = tpu.iota {dimensions = array<i32: 1>} : vector<1x256xi32>
    %339 = arith.sitofp %338 : vector<1x256xi32> to vector<1x256xf32>
    %cst_142 = arith.constant 5.000000e-01 : f32
    %340 = vector.broadcast %cst_142 : f32 to vector<1x256xf32>
    %341 = arith.addf %339, %340 : vector<1x256xf32>
    %cst_143 = arith.constant 6.250000e-02 : f32
    %342 = vector.broadcast %cst_143 : f32 to vector<1x256xf32>
    %343 = arith.mulf %341, %342 : vector<1x256xf32>
    %344 = math.floor %343 : vector<1x256xf32>
    %cst_144 = arith.constant 1.600000e+01 : f32
    %345 = vector.broadcast %cst_144 : f32 to vector<1x256xf32>
    %346 = arith.mulf %345, %344 : vector<1x256xf32>
    %347 = arith.subf %339, %346 : vector<1x256xf32>
    %cst_145 = arith.constant 2.000000e+00 : f32
    %348 = vector.broadcast %cst_145 : f32 to vector<1x256xf32>
    %349 = arith.mulf %348, %347 : vector<1x256xf32>
    %cst_146 = arith.constant 1.500000e+01 : f32
    %350 = vector.broadcast %cst_146 : f32 to vector<1x256xf32>
    %351 = arith.divf %349, %350 : vector<1x256xf32>
    %cst_147 = arith.constant 1.000000e+00 : f32
    %352 = vector.broadcast %cst_147 : f32 to vector<1x256xf32>
    %353 = arith.subf %351, %352 : vector<1x256xf32>
    %cst_148 = arith.constant 2.000000e+00 : f32
    %354 = vector.broadcast %cst_148 : f32 to vector<1x256xf32>
    %355 = arith.mulf %354, %344 : vector<1x256xf32>
    %cst_149 = arith.constant 1.500000e+01 : f32
    %356 = vector.broadcast %cst_149 : f32 to vector<1x256xf32>
    %357 = arith.divf %355, %356 : vector<1x256xf32>
    %cst_150 = arith.constant 1.000000e+00 : f32
    %358 = vector.broadcast %cst_150 : f32 to vector<1x256xf32>
    %359 = arith.subf %357, %358 : vector<1x256xf32>
    %360 = vector.extract_strided_slice %337 {offsets = [0, 0], sizes = [1, 1], strides = [1, 1]} : vector<1x6xf32> to vector<1x1xf32>
    %361 = vector.broadcast %360 : vector<1x1xf32> to vector<1x256xf32>
    %362 = arith.mulf %361, %353 : vector<1x256xf32>
    %363 = vector.extract_strided_slice %337 {offsets = [0, 1], sizes = [1, 1], strides = [1, 1]} : vector<1x6xf32> to vector<1x1xf32>
    %364 = vector.broadcast %363 : vector<1x1xf32> to vector<1x256xf32>
    %365 = arith.mulf %364, %359 : vector<1x256xf32>
    %366 = arith.addf %362, %365 : vector<1x256xf32>
    %367 = vector.extract_strided_slice %337 {offsets = [0, 2], sizes = [1, 1], strides = [1, 1]} : vector<1x6xf32> to vector<1x1xf32>
    %368 = vector.broadcast %367 : vector<1x1xf32> to vector<1x256xf32>
    %369 = arith.addf %366, %368 : vector<1x256xf32>
    %370 = vector.extract_strided_slice %337 {offsets = [0, 3], sizes = [1, 1], strides = [1, 1]} : vector<1x6xf32> to vector<1x1xf32>
    %371 = vector.broadcast %370 : vector<1x1xf32> to vector<1x256xf32>
    %372 = arith.mulf %371, %353 : vector<1x256xf32>
    %373 = vector.extract_strided_slice %337 {offsets = [0, 4], sizes = [1, 1], strides = [1, 1]} : vector<1x6xf32> to vector<1x1xf32>
    %374 = vector.broadcast %373 : vector<1x1xf32> to vector<1x256xf32>
    %375 = arith.mulf %374, %359 : vector<1x256xf32>
    %376 = arith.addf %372, %375 : vector<1x256xf32>
    %377 = vector.extract_strided_slice %337 {offsets = [0, 5], sizes = [1, 1], strides = [1, 1]} : vector<1x6xf32> to vector<1x1xf32>
    %378 = vector.broadcast %377 : vector<1x1xf32> to vector<1x256xf32>
    %379 = arith.addf %376, %378 : vector<1x256xf32>
    %cst_151 = arith.constant 1.000000e+00 : f32
    %380 = vector.broadcast %cst_151 : f32 to vector<1x256xf32>
    %381 = arith.addf %369, %380 : vector<1x256xf32>
    %cst_152 = arith.constant 5.000000e-01 : f32
    %382 = vector.broadcast %cst_152 : f32 to vector<1x256xf32>
    %383 = arith.mulf %381, %382 : vector<1x256xf32>
    %cst_153 = arith.constant 1.500000e+01 : f32
    %384 = vector.broadcast %cst_153 : f32 to vector<1x256xf32>
    %385 = arith.mulf %383, %384 : vector<1x256xf32>
    %cst_154 = arith.constant 1.000000e+00 : f32
    %386 = vector.broadcast %cst_154 : f32 to vector<1x256xf32>
    %387 = arith.addf %379, %386 : vector<1x256xf32>
    %cst_155 = arith.constant 5.000000e-01 : f32
    %388 = vector.broadcast %cst_155 : f32 to vector<1x256xf32>
    %389 = arith.mulf %387, %388 : vector<1x256xf32>
    %cst_156 = arith.constant 1.500000e+01 : f32
    %390 = vector.broadcast %cst_156 : f32 to vector<1x256xf32>
    %391 = arith.mulf %389, %390 : vector<1x256xf32>
    %392 = math.floor %385 : vector<1x256xf32>
    %393 = math.floor %391 : vector<1x256xf32>
    %394 = arith.subf %385, %392 : vector<1x256xf32>
    %395 = arith.subf %391, %393 : vector<1x256xf32>
    %396 = tpu.iota {dimensions = array<i32: 0>} : vector<256x256xi32>
    %397 = arith.sitofp %396 : vector<256x256xi32> to vector<256x256xf32>
    %cst_157 = arith.constant 5.000000e-01 : f32
    %398 = vector.broadcast %cst_157 : f32 to vector<256x256xf32>
    %399 = arith.addf %397, %398 : vector<256x256xf32>
    %cst_158 = arith.constant 6.250000e-02 : f32
    %400 = vector.broadcast %cst_158 : f32 to vector<256x256xf32>
    %401 = arith.mulf %399, %400 : vector<256x256xf32>
    %402 = math.floor %401 : vector<256x256xf32>
    %cst_159 = arith.constant 1.600000e+01 : f32
    %403 = vector.broadcast %cst_159 : f32 to vector<256x256xf32>
    %404 = arith.mulf %403, %402 : vector<256x256xf32>
    %405 = arith.subf %397, %404 : vector<256x256xf32>
    %406 = vector.broadcast %393 : vector<1x256xf32> to vector<256x256xf32>
    %407 = arith.cmpf oeq, %402, %406 : vector<256x256xf32>
    %cst_160 = arith.constant 1.000000e+00 : f32
    %408 = vector.broadcast %cst_160 : f32 to vector<1x256xf32>
    %409 = arith.subf %408, %395 : vector<1x256xf32>
    %cst_161 = arith.constant 0.000000e+00 : f32
    %410 = vector.shape_cast %409 : vector<1x256xf32> to vector<1x256xf32>
    %411 = vector.broadcast %410 : vector<1x256xf32> to vector<256x256xf32>
    %412 = vector.broadcast %cst_161 : f32 to vector<256x256xf32>
    %413 = arith.select %407, %411, %412 : vector<256x256xi1>, vector<256x256xf32>
    %cst_162 = arith.constant 1.000000e+00 : f32
    %414 = vector.broadcast %cst_162 : f32 to vector<1x256xf32>
    %415 = arith.addf %393, %414 : vector<1x256xf32>
    %416 = vector.broadcast %415 : vector<1x256xf32> to vector<256x256xf32>
    %417 = arith.cmpf oeq, %402, %416 : vector<256x256xf32>
    %cst_163 = arith.constant 0.000000e+00 : f32
    %418 = vector.shape_cast %395 : vector<1x256xf32> to vector<1x256xf32>
    %419 = vector.broadcast %418 : vector<1x256xf32> to vector<256x256xf32>
    %420 = vector.broadcast %cst_163 : f32 to vector<256x256xf32>
    %421 = arith.select %417, %419, %420 : vector<256x256xi1>, vector<256x256xf32>
    %422 = arith.addf %413, %421 : vector<256x256xf32>
    %423 = vector.broadcast %392 : vector<1x256xf32> to vector<256x256xf32>
    %424 = arith.cmpf oeq, %405, %423 : vector<256x256xf32>
    %cst_164 = arith.constant 1.000000e+00 : f32
    %425 = vector.broadcast %cst_164 : f32 to vector<1x256xf32>
    %426 = arith.subf %425, %394 : vector<1x256xf32>
    %cst_165 = arith.constant 0.000000e+00 : f32
    %427 = vector.shape_cast %426 : vector<1x256xf32> to vector<1x256xf32>
    %428 = vector.broadcast %427 : vector<1x256xf32> to vector<256x256xf32>
    %429 = vector.broadcast %cst_165 : f32 to vector<256x256xf32>
    %430 = arith.select %424, %428, %429 : vector<256x256xi1>, vector<256x256xf32>
    %cst_166 = arith.constant 1.000000e+00 : f32
    %431 = vector.broadcast %cst_166 : f32 to vector<1x256xf32>
    %432 = arith.addf %392, %431 : vector<1x256xf32>
    %433 = vector.broadcast %432 : vector<1x256xf32> to vector<256x256xf32>
    %434 = arith.cmpf oeq, %405, %433 : vector<256x256xf32>
    %cst_167 = arith.constant 0.000000e+00 : f32
    %435 = vector.shape_cast %394 : vector<1x256xf32> to vector<1x256xf32>
    %436 = vector.broadcast %435 : vector<1x256xf32> to vector<256x256xf32>
    %437 = vector.broadcast %cst_167 : f32 to vector<256x256xf32>
    %438 = arith.select %434, %436, %437 : vector<256x256xi1>, vector<256x256xf32>
    %439 = arith.addf %430, %438 : vector<256x256xf32>
    %440 = arith.mulf %422, %439 : vector<256x256xf32>
    %c0_168 = arith.constant 0 : index
    %c0_169 = arith.constant 0 : index
    %c0_170 = arith.constant 0 : index
    %441 = vector.load %arg7[%c0_168, %c0_169, %c0_170] : memref<1x4x256xf32, #tpu.memory_space<vmem>>, vector<1x4x256xf32>
    %442 = vector.shape_cast %441 : vector<1x4x256xf32> to vector<4x256xf32>
    %cst_171 = arith.constant dense<0.000000e+00> : vector<4x256xf32>
    %443 = tpu.matmul %442, %440, %cst_171 {dimension_numbers = #tpu.dot_dimension_numbers<[1], [0], [0], [1], [0, 0, 1, 1], [], []>} : vector<4x256xf32>, vector<256x256xf32>, vector<4x256xf32> -> vector<4x256xf32>
    %c0_172 = arith.constant 0 : index
    %c0_173 = arith.constant 0 : index
    %c0_174 = arith.constant 0 : index
    %444 = vector.load %arg8[%c0_172, %c0_173, %c0_174] : memref<1x4x256xf32, #tpu.memory_space<vmem>>, vector<1x4x256xf32>
    %445 = vector.shape_cast %444 : vector<1x4x256xf32> to vector<4x256xf32>
    %446 = vector.shape_cast %443 : vector<4x256xf32> to vector<1x4x256xf32>
    tpu.vector_store %arg8[%c0_172, %c0_173, %c0_174], %446 {strides = array<i32>} : memref<1x4x256xf32, #tpu.memory_space<vmem>>, vector<1x4x256xf32>,
    return
  }
  func.func @transform_0(%arg0: i32) -> (i32, i32, i32) {
    %c0_i32 = arith.constant 0 : i32
    %c0_i32_0 = arith.constant 0 : i32
    %c0_i32_1 = arith.constant 0 : i32
    return %arg0, %c0_i32, %c0_i32_0 : i32, i32, i32
  }
  func.func @transform_1(%arg0: i32) -> (i32, i32) {
    %c0_i32 = arith.constant 0 : i32
    %c0_i32_0 = arith.constant 0 : i32
    %c0_i32_1 = arith.constant 0 : i32
    return %c0_i32, %c0_i32_0 : i32, i32
  }
  func.func @transform_2(%arg0: i32) -> (i32, i32) {
    %c0_i32 = arith.constant 0 : i32
    %c0_i32_0 = arith.constant 0 : i32
    %c0_i32_1 = arith.constant 0 : i32
    return %c0_i32, %c0_i32_0 : i32, i32
  }
  func.func @transform_3(%arg0: i32) -> (i32, i32) {
    %c0_i32 = arith.constant 0 : i32
    %c0_i32_0 = arith.constant 0 : i32
    %c0_i32_1 = arith.constant 0 : i32
    return %c0_i32, %c0_i32_0 : i32, i32
  }
  func.func @transform_4(%arg0: i32) -> (i32, i32) {
    %c0_i32 = arith.constant 0 : i32
    %c0_i32_0 = arith.constant 0 : i32
    %c0_i32_1 = arith.constant 0 : i32
    return %c0_i32, %c0_i32_0 : i32, i32
  }
  func.func @transform_5(%arg0: i32) -> (i32, i32) {
    %c0_i32 = arith.constant 0 : i32
    %c0_i32_0 = arith.constant 0 : i32
    %c0_i32_1 = arith.constant 0 : i32
    return %c0_i32, %c0_i32_0 : i32, i32
  }
  func.func @transform_6(%arg0: i32) -> (i32, i32, i32) {
    %c0_i32 = arith.constant 0 : i32
    %c0_i32_0 = arith.constant 0 : i32
    %c0_i32_1 = arith.constant 0 : i32
    return %arg0, %c0_i32, %c0_i32_0 : i32, i32, i32
  }
  func.func @transform_7(%arg0: i32) -> (i32, i32, i32) {
    %c0_i32 = arith.constant 0 : i32
    %c0_i32_0 = arith.constant 0 : i32
    %c0_i32_1 = arith.constant 0 : i32
    return %arg0, %c0_i32, %c0_i32_0 : i32, i32, i32
  }
}

</mosaic_0001>

<llo_original>
// kernel: spatial_transformer_forward.1
$region0: #{spatial_transformer_forward.1}
  #allocation0 [shape = 'u32[]', space=smem, size = 0x4, offset = 0x4, fixed_abs, tag = 'smem constant byte address 0x4 - core index']
  #allocation1 [shape = 'u32[144,128]{1,0:T(1,128)}', space=vmem, size = 0x12000, scoped, tag = 'internal scratch']
  %s0 = inlined_call_operand.vmem [shape: f32[2,256,4], index: 0, kind: input, shape index: {}]
  %s1 = inlined_call_operand.vmem [shape: f32[36,32], index: 1, kind: input, shape index: {}]
  %s2 = inlined_call_operand.vmem [shape: f32[512,256], index: 2, kind: input, shape index: {}]
  %s3 = inlined_call_operand.vmem [shape: f32[1,256], index: 3, kind: input, shape index: {}]
  %s4 = inlined_call_operand.vmem [shape: f32[256,6], index: 4, kind: input, shape index: {}]
  %s5 = inlined_call_operand.vmem [shape: f32[1,6], index: 5, kind: input, shape index: {}]
  %s6 = inlined_call_operand.vmem [shape: f32[2,4,256], index: 6, kind: input, shape index: {}]
  %s7 = inlined_call_operand.vmem [shape: f32[2,4,256], index: 7, kind: output, shape index: {}]
  %s8 = sld [smem:[#allocation0]]
  $region61: #{spatial_transformer_forward.1} parent=0
    _
  %s10 = ssub.s32 1, %s8
  %s11 = scalar_select 0, %s10, %s8
  loop: start=0, step=1, limit=4
  $region2: #{spatial_transformer_forward.1} parent=0 // loop_pre_header
    _
  $region3: #{spatial_transformer_forward.1} parent=0 // loop_header
    %s13 = sphi 0, %s17
    %p14 = scmp.ge.s32.totalorder %s13, 4
    %s23 = sphi 0, %s25
    %s26 = sphi 0, %s23
    %s27 = sphi 0, %s26
    %s43 = sphi 0, %s27
    %s47 = sphi 0, %s47
    %s49 = sphi 0, %s47
    %s50 = sphi 0, %s49
    %s64 = sphi 0, %s50
    %s68 = sphi 0, %s68
    %s70 = sphi 0, %s68
    %s71 = sphi 0, %s70
    %s85 = sphi 0, %s71
    %s89 = sphi 0, %s89
    %s91 = sphi 0, %s89
    %s92 = sphi 0, %s91
    %s106 = sphi 0, %s92
    %s110 = sphi 0, %s110
    %s112 = sphi 0, %s110
    %s113 = sphi 0, %s112
    %s127 = sphi 0, %s113
    %s131 = sphi 0, %s131
    %s133 = sphi 0, %s131
    %s134 = sphi 0, %s133
    %s148 = sphi 0, %s134
    %s154 = sphi 0, %s156
    %s157 = sphi 0, %s154
    %s158 = sphi 0, %s157
    %s174 = sphi 0, %s158
    %s180 = sphi 0, %s182
    %s183 = sphi 0, %s180
    %s184 = sphi 0, %s183
    %s200 = sphi 0, %s184
  $region4: #{spatial_transformer_forward.1} parent=0 // loop_header_branch
    %16 = sbr.rel (%p14) target = $region8
  $region5: #{spatial_transformer_forward.1} parent=0 // loop_body
    %s18 = ssub.s32 %s13, 1
    %s19 = ssub.s32 %s13, 2
    %s20 = sadd.s32 %s13, 1
    %s21 = ssub.s32 %s13, %s20
    %p22 = scmp.eq.s32.totalorder %s21, 0
    %s24 = sadd.s32 %s23, 1
    %s25 = scalar_select %p22, %s23, %s24
    %p28 = pneg %p22
    %p29 = scmp.eq.s32.totalorder %s13, 1
    %p30 = por %p28, %p29
    %p31 = scmp.ne.s32.totalorder %s23, %s26
    %p32 = scmp.eq.s32.totalorder %s13, 0
    %p33 = por %p31, %p32
    %p34 = scmp.ne.s32.totalorder %s23, %s26
    %p35 = scmp.eq.s32.totalorder %s18, 1
    %p36 = por %p34, %p35
    %p37 = scmp.ne.s32.totalorder %s26, %s27
    %p38 = scmp.eq.s32.totalorder %s18, 0
    %p39 = por %p37, %p38
    %p40 = scmp.ne.s32.totalorder %s26, %s27
    %p41 = scmp.eq.s32.totalorder %s19, 1
    %p42 = por %p40, %p41
    %p44 = scmp.ne.s32.totalorder %s27, %s43
    %p45 = scmp.eq.s32.totalorder %s19, 0
    %p46 = por %p44, %p45
    %s48 = sadd.s32 %s47, 1
    %p51 = scmp.eq.s32.totalorder %s13, 1
    %p52 = scmp.ne.s32.totalorder %s47, %s49
    %p53 = scmp.eq.s32.totalorder %s13, 0
    %p54 = por %p52, %p53
    %p55 = scmp.ne.s32.totalorder %s47, %s49
    %p56 = scmp.eq.s32.totalorder %s18, 1
    %p57 = por %p55, %p56
    %p58 = scmp.ne.s32.totalorder %s49, %s50
    %p59 = scmp.eq.s32.totalorder %s18, 0
    %p60 = por %p58, %p59
    %p61 = scmp.ne.s32.totalorder %s49, %s50
    %p62 = scmp.eq.s32.totalorder %s19, 1
    %p63 = por %p61, %p62
    %p65 = scmp.ne.s32.totalorder %s50, %s64
    %p66 = scmp.eq.s32.totalorder %s19, 0
    %p67 = por %p65, %p66
    %s69 = sadd.s32 %s68, 1
    %p72 = scmp.eq.s32.totalorder %s13, 1
    %p73 = scmp.ne.s32.totalorder %s68, %s70
    %p74 = scmp.eq.s32.totalorder %s13, 0
    %p75 = por %p73, %p74
    %p76 = scmp.ne.s32.totalorder %s68, %s70
    %p77 = scmp.eq.s32.totalorder %s18, 1
    %p78 = por %p76, %p77
    %p79 = scmp.ne.s32.totalorder %s70, %s71
    %p80 = scmp.eq.s32.totalorder %s18, 0
    %p81 = por %p79, %p80
    %p82 = scmp.ne.s32.totalorder %s70, %s71
    %p83 = scmp.eq.s32.totalorder %s19, 1
    %p84 = por %p82, %p83
    %p86 = scmp.ne.s32.totalorder %s71, %s85
    %p87 = scmp.eq.s32.totalorder %s19, 0
    %p88 = por %p86, %p87
    %s90 = sadd.s32 %s89, 1
    %p93 = scmp.eq.s32.totalorder %s13, 1
    %p94 = scmp.ne.s32.totalorder %s89, %s91
    %p95 = scmp.eq.s32.totalorder %s13, 0
    %p96 = por %p94, %p95
    %p97 = scmp.ne.s32.totalorder %s89, %s91
    %p98 = scmp.eq.s32.totalorder %s18, 1
    %p99 = por %p97, %p98
    %p100 = scmp.ne.s32.totalorder %s91, %s92
    %p101 = scmp.eq.s32.totalorder %s18, 0
    %p102 = por %p100, %p101
    %p103 = scmp.ne.s32.totalorder %s91, %s92
    %p104 = scmp.eq.s32.totalorder %s19, 1
    %p105 = por %p103, %p104
    %p107 = scmp.ne.s32.totalorder %s92, %s106
    %p108 = scmp.eq.s32.totalorder %s19, 0
    %p109 = por %p107, %p108
    %s111 = sadd.s32 %s110, 1
    %p114 = scmp.eq.s32.totalorder %s13, 1
    %p115 = scmp.ne.s32.totalorder %s110, %s112
    %p116 = scmp.eq.s32.totalorder %s13, 0
    %p117 = por %p115, %p116
    %p118 = scmp.ne.s32.totalorder %s110, %s112
    %p119 = scmp.eq.s32.totalorder %s18, 1
    %p120 = por %p118, %p119
    %p121 = scmp.ne.s32.totalorder %s112, %s113
    %p122 = scmp.eq.s32.totalorder %s18, 0
    %p123 = por %p121, %p122
    %p124 = scmp.ne.s32.totalorder %s112, %s113
    %p125 = scmp.eq.s32.totalorder %s19, 1
    %p126 = por %p124, %p125
    %p128 = scmp.ne.s32.totalorder %s113, %s127
    %p129 = scmp.eq.s32.totalorder %s19, 0
    %p130 = por %p128, %p129
    %s132 = sadd.s32 %s131, 1
    %p135 = scmp.eq.s32.totalorder %s13, 1
    %p136 = scmp.ne.s32.totalorder %s131, %s133
    %p137 = scmp.eq.s32.totalorder %s13, 0
    %p138 = por %p136, %p137
    %p139 = scmp.ne.s32.totalorder %s131, %s133
    %p140 = scmp.eq.s32.totalorder %s18, 1
    %p141 = por %p139, %p140
    %p142 = scmp.ne.s32.totalorder %s133, %s134
    %p143 = scmp.eq.s32.totalorder %s18, 0
    %p144 = por %p142, %p143
    %p145 = scmp.ne.s32.totalorder %s133, %s134
    %p146 = scmp.eq.s32.totalorder %s19, 1
    %p147 = por %p145, %p146
    %p149 = scmp.ne.s32.totalorder %s134, %s148
    %p150 = scmp.eq.s32.totalorder %s19, 0
    %p151 = por %p149, %p150
    %s152 = ssub.s32 %s13, %s20
    %p153 = scmp.eq.s32.totalorder %s152, 0
    %s155 = sadd.s32 %s154, 1
    %s156 = scalar_select %p153, %s154, %s155
    %p159 = pneg %p153
    %p160 = scmp.eq.s32.totalorder %s13, 1
    %p161 = por %p159, %p160
    %p162 = scmp.ne.s32.totalorder %s154, %s157
    %p163 = scmp.eq.s32.totalorder %s13, 0
    %p164 = por %p162, %p163
    %p165 = scmp.ne.s32.totalorder %s154, %s157
    %p166 = scmp.eq.s32.totalorder %s18, 1
    %p167 = por %p165, %p166
    %p168 = scmp.ne.s32.totalorder %s157, %s158
    %p169 = scmp.eq.s32.totalorder %s18, 0
    %p170 = por %p168, %p169
    %p171 = scmp.ne.s32.totalorder %s157, %s158
    %p172 = scmp.eq.s32.totalorder %s19, 1
    %p173 = por %p171, %p172
    %p175 = scmp.ne.s32.totalorder %s158, %s174
    %p176 = scmp.eq.s32.totalorder %s19, 0
    %p177 = por %p175, %p176
    %s178 = ssub.s32 %s13, %s20
    %p179 = scmp.eq.s32.totalorder %s178, 0
    %s181 = sadd.s32 %s180, 1
    %s182 = scalar_select %p179, %s180, %s181
    %p185 = pneg %p179
    %p186 = scmp.eq.s32.totalorder %s13, 1
    %p187 = por %p185, %p186
    %p188 = scmp.ne.s32.totalorder %s180, %s183
    %p189 = scmp.eq.s32.totalorder %s13, 0
    %p190 = por %p188, %p189
    %p191 = scmp.ne.s32.totalorder %s180, %s183
    %p192 = scmp.eq.s32.totalorder %s18, 1
    %p193 = por %p191, %p192
    %p194 = scmp.ne.s32.totalorder %s183, %s184
    %p195 = scmp.eq.s32.totalorder %s18, 0
    %p196 = por %p194, %p195
    %p197 = scmp.ne.s32.totalorder %s183, %s184
    %p198 = scmp.eq.s32.totalorder %s19, 1
    %p199 = por %p197, %p198
    %p201 = scmp.ne.s32.totalorder %s184, %s200
    %p202 = scmp.eq.s32.totalorder %s19, 0
    %p203 = por %p201, %p202
    %p204 = scmp.le.s32.totalorder 1, %s13
    %p205 = scmp.lt.s32.totalorder %s13, 3
    %p206 = pnand %p204, %p205
    %p207 = pneg %p206
    // Predicated region
    $region9: #{spatial_transformer_forward.1} parent=5 // pred_check
      _
    $region10: #{spatial_transformer_forward.1} parent=5 // pred_check_branch
      %209 = sbr.rel (%p206) target = $region12
    $region11: #{spatial_transformer_forward.1} parent=5 // pred_region
      %s210 = ssub.s32 %s13, 1
      // Predicated region
      $region13: #{spatial_transformer_forward.1} parent=11 // pred_check
        %p211 = pneg %p60
      $region14: #{spatial_transformer_forward.1} parent=11 // pred_check_branch
        %213 = sbr.rel (%p211) target = $region16
      $region15: #{spatial_transformer_forward.1} parent=11 // pred_region
        _
      $region16: #{spatial_transformer_forward.1} parent=11 // pred_fallthru
        _
      // Predicated region
      $region17: #{spatial_transformer_forward.1} parent=11 // pred_check
        %p214 = pneg %p81
      $region18: #{spatial_transformer_forward.1} parent=11 // pred_check_branch
        %216 = sbr.rel (%p214) target = $region20
      $region19: #{spatial_transformer_forward.1} parent=11 // pred_region
        _
      $region20: #{spatial_transformer_forward.1} parent=11 // pred_fallthru
        _
      // Predicated region
      $region21: #{spatial_transformer_forward.1} parent=11 // pred_check
        %p217 = pneg %p102
      $region22: #{spatial_transformer_forward.1} parent=11 // pred_check_branch
        %219 = sbr.rel (%p217) target = $region24
      $region23: #{spatial_transformer_forward.1} parent=11 // pred_region
        _
      $region24: #{spatial_transformer_forward.1} parent=11 // pred_fallthru
        _
      // Predicated region
      $region25: #{spatial_transformer_forward.1} parent=11 // pred_check
        %p220 = pneg %p123
      $region26: #{spatial_transformer_forward.1} parent=11 // pred_check_branch
        %222 = sbr.rel (%p220) target = $region28
      $region27: #{spatial_transformer_forward.1} parent=11 // pred_region
        _
      $region28: #{spatial_transformer_forward.1} parent=11 // pred_fallthru
        _
      // Predicated region
      $region29: #{spatial_transformer_forward.1} parent=11 // pred_check
        %p223 = pneg %p144
      $region30: #{spatial_transformer_forward.1} parent=11 // pred_check_branch
        %225 = sbr.rel (%p223) target = $region32
      $region31: #{spatial_transformer_forward.1} parent=11 // pred_region
        _
      $region32: #{spatial_transformer_forward.1} parent=11 // pred_fallthru
        _
    $region12: #{spatial_transformer_forward.1} parent=5 // pred_fallthru
      _
    %p226 = scmp.lt.s32.totalorder %s13, 2
    // Predicated region
    $region33: #{spatial_transformer_forward.1} parent=5 // pred_check
      %p227 = pneg %p226
    $region34: #{spatial_transformer_forward.1} parent=5 // pred_check_branch
      %229 = sbr.rel (%p227) target = $region36
    $region35: #{spatial_transformer_forward.1} parent=5 // pred_region
      // Predicated region
      $region37: #{spatial_transformer_forward.1} parent=35 // pred_check
        %p230 = pneg %p33
      $region38: #{spatial_transformer_forward.1} parent=35 // pred_check_branch
        %232 = sbr.rel (%p230) target = $region40
      $region39: #{spatial_transformer_forward.1} parent=35 // pred_region
        %p233 = scmp.lt.s32.totalorder %s13, 1
        %s234 = scalar_select %p233, %s13, 1
        %s235 = smul.addr %s234, 32
        %s236 = smul.addr %s235, 8
        %s237 = scalar_lea.vmem %s0, %s236
      $region40: #{spatial_transformer_forward.1} parent=35 // pred_fallthru
        _
      // Predicated region
      $region41: #{spatial_transformer_forward.1} parent=35 // pred_check
        %p238 = pneg %p164
      $region42: #{spatial_transformer_forward.1} parent=35 // pred_check_branch
        %240 = sbr.rel (%p238) target = $region44
      $region43: #{spatial_transformer_forward.1} parent=35 // pred_region
        %p241 = scmp.lt.s32.totalorder %s13, 1
        %s242 = scalar_select %p241, %s13, 1
        %s243 = smul.addr %s242, 2
        %s244 = smul.addr %s243, 4
        %s245 = scalar_lea.vmem %s6, %s244
      $region44: #{spatial_transformer_forward.1} parent=35 // pred_fallthru
        _
    $region36: #{spatial_transformer_forward.1} parent=5 // pred_fallthru
      _
    %p246 = scmp.le.s32.totalorder 1, %s13
    %p247 = scmp.lt.s32.totalorder %s13, 3
    %p248 = pnand %p246, %p247
    %p249 = pneg %p248
    // Predicated region
    $region45: #{spatial_transformer_forward.1} parent=5 // pred_check
      _
    $region46: #{spatial_transformer_forward.1} parent=5 // pred_check_branch
      %251 = sbr.rel (%p248) target = $region48
    $region47: #{spatial_transformer_forward.1} parent=5 // pred_region
      %s252 = ssub.s32 %s13, 1
      %p253 = scmp.lt.s32.totalorder %s18, 1
      %s254 = scalar_select %p253, %s18, 1
      %s255 = smul.addr %s254, 32
      %s256 = smul.addr %s255, 8
      %s257 = scalar_lea.vmem %s0, %s256
      %p258 = pneg %p39
      %p259 = pneg %p36
      %p260 = pneg %p60
      %p261 = pneg %p57
      %p262 = pneg %p81
      %p263 = pneg %p78
      %p264 = pneg %p102
      %p265 = pneg %p99
      %p266 = pneg %p123
      %p267 = pneg %p120
      %p268 = pneg %p144
      %p269 = pneg %p141
      %p270 = scmp.lt.s32.totalorder %s18, 1
      %s271 = scalar_select %p270, %s18, 1
      %s272 = smul.addr %s271, 2
      %s273 = smul.addr %s272, 4
      %s274 = scalar_lea.vmem %s6, %s273
      %p275 = pneg %p170
      %p276 = pneg %p167
      %p277 = pneg %p196
      %p278 = pneg %p193
      %p279 = scmp.lt.s32.totalorder %s18, 1
      %s280 = scalar_select %p279, %s18, 1
      %s281 = smul.addr %s280, 2
      %s282 = smul.addr %s281, 4
      %s283 = scalar_lea.vmem %s7, %s282
      %p284 = scmp.lt.s32.totalorder %s18, 1
      %s285 = scalar_select %p284, %s18, 1
      %s286 = smul.addr %s285, 32
      %s287 = smul.addr %s286, 8
      %s288 = scalar_lea.vmem %s0, %s287
      %p289 = scmp.lt.s32.totalorder %s18, 1
      %s290 = scalar_select %p289, %s18, 1
      %s291 = smul.addr %s290, 2
      %s292 = smul.addr %s291, 4
      %s293 = scalar_lea.vmem %s6, %s292
      %p294 = scmp.lt.s32.totalorder %s18, 1
      %s295 = scalar_select %p294, %s18, 1
      %s296 = smul.addr %s295, 2
      %s297 = smul.addr %s296, 4
      %s298 = scalar_lea.vmem %s7, %s297
      %v299 = vld [vmem:[%s288] sm:$0xff]
      %v300 = vld [vmem:[%s288 + $0x8] sm:$0xff]
      %v301 = vld [vmem:[%s288 + $0x10] sm:$0xff]
      %v302 = vld [vmem:[%s288 + $0x18] sm:$0xff]
      %v303 = vld [vmem:[%s288 + $0x20] sm:$0xff]
      %v304 = vld [vmem:[%s288 + $0x28] sm:$0xff]
      %v305 = vld [vmem:[%s288 + $0x30] sm:$0xff]
      %v306 = vld [vmem:[%s288 + $0x38] sm:$0xff]
      %v307 = vld [vmem:[%s288 + $0x40] sm:$0xff]
      %v308 = vld [vmem:[%s288 + $0x48] sm:$0xff]
      %v309 = vld [vmem:[%s288 + $0x50] sm:$0xff]
      %v310 = vld [vmem:[%s288 + $0x58] sm:$0xff]
      %v311 = vld [vmem:[%s288 + $0x60] sm:$0xff]
      %v312 = vld [vmem:[%s288 + $0x68] sm:$0xff]
      %v313 = vld [vmem:[%s288 + $0x70] sm:$0xff]
      %v314 = vld [vmem:[%s288 + $0x78] sm:$0xff]
      %v315 = vld [vmem:[%s288 + $0x80] sm:$0xff]
      %v316 = vld [vmem:[%s288 + $0x88] sm:$0xff]
      %v317 = vld [vmem:[%s288 + $0x90] sm:$0xff]
      %v318 = vld [vmem:[%s288 + $0x98] sm:$0xff]
      %v319 = vld [vmem:[%s288 + $0xa0] sm:$0xff]
      %v320 = vld [vmem:[%s288 + $0xa8] sm:$0xff]
      %v321 = vld [vmem:[%s288 + $0xb0] sm:$0xff]
      %v322 = vld [vmem:[%s288 + $0xb8] sm:$0xff]
      %v323 = vld [vmem:[%s288 + $0xc0] sm:$0xff]
      %v324 = vld [vmem:[%s288 + $0xc8] sm:$0xff]
      %v325 = vld [vmem:[%s288 + $0xd0] sm:$0xff]
      %v326 = vld [vmem:[%s288 + $0xd8] sm:$0xff]
      %v327 = vld [vmem:[%s288 + $0xe0] sm:$0xff]
      %v328 = vld [vmem:[%s288 + $0xe8] sm:$0xff]
      %v329 = vld [vmem:[%s288 + $0xf0] sm:$0xff]
      %v330 = vld [vmem:[%s288 + $0xf8] sm:$0xff]
      %v331 = vlaneseq
      %v332 = vshrl.u32 %v331, 7
      %v333 = vadd.s32 %v332, 8
      %v334 = vadd.s32 %v332, 16
      %v335 = vadd.s32 %v332, 24
      %v336 = vadd.s32 %v332, 32
      %v337 = vadd.s32 %v332, 40
      %v338 = vadd.s32 %v332, 48
      %v339 = vadd.s32 %v332, 56
      %v340 = vadd.s32 %v332, 64
      %v341 = vadd.s32 %v332, 72
      %v342 = vadd.s32 %v332, 80
      %v343 = vadd.s32 %v332, 88
      %v344 = vadd.s32 %v332, 96
      %v345 = vadd.s32 %v332, 104
      %v346 = vadd.s32 %v332, 112
      %v347 = vadd.s32 %v332, 120
      %v348 = vadd.s32 %v332, 128
      %v349 = vadd.s32 %v332, 136
      %v350 = vadd.s32 %v332, 144
      %v351 = vadd.s32 %v332, 152
      %v352 = vadd.s32 %v332, 160
      %v353 = vadd.s32 %v332, 168
      %v354 = vadd.s32 %v332, 176
      %v355 = vadd.s32 %v332, 184
      %v356 = vadd.s32 %v332, 192
      %v357 = vadd.s32 %v332, 200
      %v358 = vadd.s32 %v332, 208
      %v359 = vadd.s32 %v332, 216
      %v360 = vadd.s32 %v332, 224
      %v361 = vadd.s32 %v332, 232
      %v362 = vadd.s32 %v332, 240
      %v363 = vadd.s32 %v332, 248
      %v364 = vcvt.s32.f32 %v332
      %v365 = vcvt.s32.f32 %v333
      %v366 = vcvt.s32.f32 %v334
      %v367 = vcvt.s32.f32 %v335
      %v368 = vcvt.s32.f32 %v336
      %v369 = vcvt.s32.f32 %v337
      %v370 = vcvt.s32.f32 %v338
      %v371 = vcvt.s32.f32 %v339
      %v372 = vcvt.s32.f32 %v340
      %v373 = vcvt.s32.f32 %v341
      %v374 = vcvt.s32.f32 %v342
      %v375 = vcvt.s32.f32 %v343
      %v376 = vcvt.s32.f32 %v344
      %v377 = vcvt.s32.f32 %v345
      %v378 = vcvt.s32.f32 %v346
      %v379 = vcvt.s32.f32 %v347
      %v380 = vcvt.s32.f32 %v348
      %v381 = vcvt.s32.f32 %v349
      %v382 = vcvt.s32.f32 %v350
      %v383 = vcvt.s32.f32 %v351
      %v384 = vcvt.s32.f32 %v352
      %v385 = vcvt.s32.f32 %v353
      %v386 = vcvt.s32.f32 %v354
      %v387 = vcvt.s32.f32 %v355
      %v388 = vcvt.s32.f32 %v356
      %v389 = vcvt.s32.f32 %v357
      %v390 = vcvt.s32.f32 %v358
      %v391 = vcvt.s32.f32 %v359
      %v392 = vcvt.s32.f32 %v360
      %v393 = vcvt.s32.f32 %v361
      %v394 = vcvt.s32.f32 %v362
      %v395 = vcvt.s32.f32 %v363
      %v396 = vadd.f32 %v364, 0.5
      %v397 = vadd.f32 %v365, 0.5
      %v398 = vadd.f32 %v366, 0.5
      %v399 = vadd.f32 %v367, 0.5
      %v400 = vadd.f32 %v368, 0.5
      %v401 = vadd.f32 %v369, 0.5
      %v402 = vadd.f32 %v370, 0.5
      %v403 = vadd.f32 %v371, 0.5
      %v404 = vadd.f32 %v372, 0.5
      %v405 = vadd.f32 %v373, 0.5
      %v406 = vadd.f32 %v374, 0.5
      %v407 = vadd.f32 %v375, 0.5
      %v408 = vadd.f32 %v376, 0.5
      %v409 = vadd.f32 %v377, 0.5
      %v410 = vadd.f32 %v378, 0.5
      %v411 = vadd.f32 %v379, 0.5
      %v412 = vadd.f32 %v380, 0.5
      %v413 = vadd.f32 %v381, 0.5
      %v414 = vadd.f32 %v382, 0.5
      %v415 = vadd.f32 %v383, 0.5
      %v416 = vadd.f32 %v384, 0.5
      %v417 = vadd.f32 %v385, 0.5
      %v418 = vadd.f32 %v386, 0.5
      %v419 = vadd.f32 %v387, 0.5
      %v420 = vadd.f32 %v388, 0.5
      %v421 = vadd.f32 %v389, 0.5
      %v422 = vadd.f32 %v390, 0.5
      %v423 = vadd.f32 %v391, 0.5
      %v424 = vadd.f32 %v392, 0.5
      %v425 = vadd.f32 %v393, 0.5
      %v426 = vadd.f32 %v394, 0.5
      %v427 = vadd.f32 %v395, 0.5
      %v428 = vmul.f32 %v396, 0.0625
      %v429 = vmul.f32 %v397, 0.0625
      %v430 = vmul.f32 %v398, 0.0625
      %v431 = vmul.f32 %v399, 0.0625
      %v432 = vmul.f32 %v400, 0.0625
      %v433 = vmul.f32 %v401, 0.0625
      %v434 = vmul.f32 %v402, 0.0625
      %v435 = vmul.f32 %v403, 0.0625
      %v436 = vmul.f32 %v404, 0.0625
      %v437 = vmul.f32 %v405, 0.0625
      %v438 = vmul.f32 %v406, 0.0625
      %v439 = vmul.f32 %v407, 0.0625
      %v440 = vmul.f32 %v408, 0.0625
      %v441 = vmul.f32 %v409, 0.0625
      %v442 = vmul.f32 %v410, 0.0625
      %v443 = vmul.f32 %v411, 0.0625
      %v444 = vmul.f32 %v412, 0.0625
      %v445 = vmul.f32 %v413, 0.0625
      %v446 = vmul.f32 %v414, 0.0625
      %v447 = vmul.f32 %v415, 0.0625
      %v448 = vmul.f32 %v416, 0.0625
      %v449 = vmul.f32 %v417, 0.0625
      %v450 = vmul.f32 %v418, 0.0625
      %v451 = vmul.f32 %v419, 0.0625
      %v452 = vmul.f32 %v420, 0.0625
      %v453 = vmul.f32 %v421, 0.0625
      %v454 = vmul.f32 %v422, 0.0625
      %v455 = vmul.f32 %v423, 0.0625
      %v456 = vmul.f32 %v424, 0.0625
      %v457 = vmul.f32 %v425, 0.0625
      %v458 = vmul.f32 %v426, 0.0625
      %v459 = vmul.f32 %v427, 0.0625
      %v460 = vfloor.f32 %v428
      %v461 = vfloor.f32 %v429
      %v462 = vfloor.f32 %v430
      %v463 = vfloor.f32 %v431
      %v464 = vfloor.f32 %v432
      %v465 = vfloor.f32 %v433
      %v466 = vfloor.f32 %v434
      %v467 = vfloor.f32 %v435
      %v468 = vfloor.f32 %v436
      %v469 = vfloor.f32 %v437
      %v470 = vfloor.f32 %v438
      %v471 = vfloor.f32 %v439
      %v472 = vfloor.f32 %v440
      %v473 = vfloor.f32 %v441
      %v474 = vfloor.f32 %v442
      %v475 = vfloor.f32 %v443
      %v476 = vfloor.f32 %v444
      %v477 = vfloor.f32 %v445
      %v478 = vfloor.f32 %v446
      %v479 = vfloor.f32 %v447
      %v480 = vfloor.f32 %v448
      %v481 = vfloor.f32 %v449
      %v482 = vfloor.f32 %v450
      %v483 = vfloor.f32 %v451
      %v484 = vfloor.f32 %v452
      %v485 = vfloor.f32 %v453
      %v486 = vfloor.f32 %v454
      %v487 = vfloor.f32 %v455
      %v488 = vfloor.f32 %v456
      %v489 = vfloor.f32 %v457
      %v490 = vfloor.f32 %v458
      %v491 = vfloor.f32 %v459
      %v492 = vmul.f32 %v460, 16.0
      %v493 = vmul.f32 %v461, 16.0
      %v494 = vmul.f32 %v462, 16.0
      %v495 = vmul.f32 %v463, 16.0
      %v496 = vmul.f32 %v464, 16.0
      %v497 = vmul.f32 %v465, 16.0
      %v498 = vmul.f32 %v466, 16.0
      %v499 = vmul.f32 %v467, 16.0
      %v500 = vmul.f32 %v468, 16.0
      %v501 = vmul.f32 %v469, 16.0
      %v502 = vmul.f32 %v470, 16.0
      %v503 = vmul.f32 %v471, 16.0
      %v504 = vmul.f32 %v472, 16.0
      %v505 = vmul.f32 %v473, 16.0
      %v506 = vmul.f32 %v474, 16.0
      %v507 = vmul.f32 %v475, 16.0
      %v508 = vmul.f32 %v476, 16.0
      %v509 = vmul.f32 %v477, 16.0
      %v510 = vmul.f32 %v478, 16.0
      %v511 = vmul.f32 %v479, 16.0
      %v512 = vmul.f32 %v480, 16.0
      %v513 = vmul.f32 %v481, 16.0
      %v514 = vmul.f32 %v482, 16.0
      %v515 = vmul.f32 %v483, 16.0
      %v516 = vmul.f32 %v484, 16.0
      %v517 = vmul.f32 %v485, 16.0
      %v518 = vmul.f32 %v486, 16.0
      %v519 = vmul.f32 %v487, 16.0
      %v520 = vmul.f32 %v488, 16.0
      %v521 = vmul.f32 %v489, 16.0
      %v522 = vmul.f32 %v490, 16.0
      %v523 = vmul.f32 %v491, 16.0
      %v524 = vsub.f32 %v364, %v492
      %v525 = vsub.f32 %v365, %v493
      %v526 = vsub.f32 %v366, %v494
      %v527 = vsub.f32 %v367, %v495
      %v528 = vsub.f32 %v368, %v496
      %v529 = vsub.f32 %v369, %v497
      %v530 = vsub.f32 %v370, %v498
      %v531 = vsub.f32 %v371, %v499
      %v532 = vsub.f32 %v372, %v500
      %v533 = vsub.f32 %v373, %v501
      %v534 = vsub.f32 %v374, %v502
      %v535 = vsub.f32 %v375, %v503
      %v536 = vsub.f32 %v376, %v504
      %v537 = vsub.f32 %v377, %v505
      %v538 = vsub.f32 %v378, %v506
      %v539 = vsub.f32 %v379, %v507
      %v540 = vsub.f32 %v380, %v508
      %v541 = vsub.f32 %v381, %v509
      %v542 = vsub.f32 %v382, %v510
      %v543 = vsub.f32 %v383, %v511
      %v544 = vsub.f32 %v384, %v512
      %v545 = vsub.f32 %v385, %v513
      %v546 = vsub.f32 %v386, %v514
      %v547 = vsub.f32 %v387, %v515
      %v548 = vsub.f32 %v388, %v516
      %v549 = vsub.f32 %v389, %v517
      %v550 = vsub.f32 %v390, %v518
      %v551 = vsub.f32 %v391, %v519
      %v552 = vsub.f32 %v392, %v520
      %v553 = vsub.f32 %v393, %v521
      %v554 = vsub.f32 %v394, %v522
      %v555 = vsub.f32 %v395, %v523
      %v556 = vrot.slane %v299, 7
      %v557 = vrot.slane %v300, 7
      %v558 = vrot.slane %v301, 7
      %v559 = vrot.slane %v302, 7
      %v560 = vrot.slane %v303, 7
      %v561 = vrot.slane %v304, 7
      %v562 = vrot.slane %v305, 7
      %v563 = vrot.slane %v306, 7
      %v564 = vrot.slane %v307, 7
      %v565 = vrot.slane %v308, 7
      %v566 = vrot.slane %v309, 7
      %v567 = vrot.slane %v310, 7
      %v568 = vrot.slane %v311, 7
      %v569 = vrot.slane %v312, 7
      %v570 = vrot.slane %v313, 7
      %v571 = vrot.slane %v314, 7
      %v572 = vrot.slane %v315, 7
      %v573 = vrot.slane %v316, 7
      %v574 = vrot.slane %v317, 7
      %v575 = vrot.slane %v318, 7
      %v576 = vrot.slane %v319, 7
      %v577 = vrot.slane %v320, 7
      %v578 = vrot.slane %v321, 7
      %v579 = vrot.slane %v322, 7
      %v580 = vrot.slane %v323, 7
      %v581 = vrot.slane %v324, 7
      %v582 = vrot.slane %v325, 7
      %v583 = vrot.slane %v326, 7
      %v584 = vrot.slane %v327, 7
      %v585 = vrot.slane %v328, 7
      %v586 = vrot.slane %v329, 7
      %v587 = vrot.slane %v330, 7
      %vm588 = vcmp.lt.s32.totalorder %v332, 1
      %v589 = vsel %vm588, %v586, %v587
      %v590 = vsel %vm588, %v585, %v586
      %v591 = vsel %vm588, %v584, %v585
      %v592 = vsel %vm588, %v583, %v584
      %v593 = vsel %vm588, %v582, %v583
      %v594 = vsel %vm588, %v581, %v582
      %v595 = vsel %vm588, %v580, %v581
      %v596 = vsel %vm588, %v579, %v580
      %v597 = vsel %vm588, %v578, %v579
      %v598 = vsel %vm588, %v577, %v578
      %v599 = vsel %vm588, %v576, %v577
      %v600 = vsel %vm588, %v575, %v576
      %v601 = vsel %vm588, %v574, %v575
      %v602 = vsel %vm588, %v573, %v574
      %v603 = vsel %vm588, %v572, %v573
      %v604 = vsel %vm588, %v571, %v572
      %v605 = vsel %vm588, %v570, %v571
      %v606 = vsel %vm588, %v569, %v570
      %v607 = vsel %vm588, %v568, %v569
      %v608 = vsel %vm588, %v567, %v568
      %v609 = vsel %vm588, %v566, %v567
      %v610 = vsel %vm588, %v565, %v566
      %v611 = vsel %vm588, %v564, %v565
      %v612 = vsel %vm588, %v563, %v564
      %v613 = vsel %vm588, %v562, %v563
      %v614 = vsel %vm588, %v561, %v562
      %v615 = vsel %vm588, %v560, %v561
      %v616 = vsel %vm588, %v559, %v560
      %v617 = vsel %vm588, %v558, %v559
      %v618 = vsel %vm588, %v557, %v558
      %v619 = vsel %vm588, %v556, %v557
      %v620 = vsel %vm588, %v587, %v556
      %v621 = vadd.f32 %v460, -1.0
      %v622 = vadd.f32 %v461, -1.0
      %v623 = vadd.f32 %v462, -1.0
      %v624 = vadd.f32 %v463, -1.0
      %v625 = vadd.f32 %v464, -1.0
      %v626 = vadd.f32 %v465, -1.0
      %v627 = vadd.f32 %v466, -1.0
      %v628 = vadd.f32 %v467, -1.0
      %v629 = vadd.f32 %v468, -1.0
      %v630 = vadd.f32 %v469, -1.0
      %v631 = vadd.f32 %v470, -1.0
      %v632 = vadd.f32 %v471, -1.0
      %v633 = vadd.f32 %v472, -1.0
      %v634 = vadd.f32 %v473, -1.0
      %v635 = vadd.f32 %v474, -1.0
      %v636 = vadd.f32 %v475, -1.0
      %v637 = vadd.f32 %v476, -1.0
      %v638 = vadd.f32 %v477, -1.0
      %v639 = vadd.f32 %v478, -1.0
      %v640 = vadd.f32 %v479, -1.0
      %v641 = vadd.f32 %v480, -1.0
      %v642 = vadd.f32 %v481, -1.0
      %v643 = vadd.f32 %v482, -1.0
      %v644 = vadd.f32 %v483, -1.0
      %v645 = vadd.f32 %v484, -1.0
      %v646 = vadd.f32 %v485, -1.0
      %v647 = vadd.f32 %v486, -1.0
      %v648 = vadd.f32 %v487, -1.0
      %v649 = vadd.f32 %v488, -1.0
      %v650 = vadd.f32 %v489, -1.0
      %v651 = vadd.f32 %v490, -1.0
      %v652 = vadd.f32 %v491, -1.0
      %vm653 = vcmp.ge.f32.partialorder %v621, 0.0
      %vm654 = vcmp.ge.f32.partialorder %v622, 0.0
      %vm655 = vcmp.ge.f32.partialorder %v623, 0.0
      %vm656 = vcmp.ge.f32.partialorder %v624, 0.0
      %vm657 = vcmp.ge.f32.partialorder %v625, 0.0
      %vm658 = vcmp.ge.f32.partialorder %v626, 0.0
      %vm659 = vcmp.ge.f32.partialorder %v627, 0.0
      %vm660 = vcmp.ge.f32.partialorder %v628, 0.0
      %vm661 = vcmp.ge.f32.partialorder %v629, 0.0
      %vm662 = vcmp.ge.f32.partialorder %v630, 0.0
      %vm663 = vcmp.ge.f32.partialorder %v631, 0.0
      %vm664 = vcmp.ge.f32.partialorder %v632, 0.0
      %vm665 = vcmp.ge.f32.partialorder %v633, 0.0
      %vm666 = vcmp.ge.f32.partialorder %v634, 0.0
      %vm667 = vcmp.ge.f32.partialorder %v635, 0.0
      %vm668 = vcmp.ge.f32.partialorder %v636, 0.0
      %vm669 = vcmp.ge.f32.partialorder %v637, 0.0
      %vm670 = vcmp.ge.f32.partialorder %v638, 0.0
      %vm671 = vcmp.ge.f32.partialorder %v639, 0.0
      %vm672 = vcmp.ge.f32.partialorder %v640, 0.0
      %vm673 = vcmp.ge.f32.partialorder %v641, 0.0
      %vm674 = vcmp.ge.f32.partialorder %v642, 0.0
      %vm675 = vcmp.ge.f32.partialorder %v643, 0.0
      %vm676 = vcmp.ge.f32.partialorder %v644, 0.0
      %vm677 = vcmp.ge.f32.partialorder %v645, 0.0
      %vm678 = vcmp.ge.f32.partialorder %v646, 0.0
      %vm679 = vcmp.ge.f32.partialorder %v647, 0.0
      %vm680 = vcmp.ge.f32.partialorder %v648, 0.0
      %vm681 = vcmp.ge.f32.partialorder %v649, 0.0
      %vm682 = vcmp.ge.f32.partialorder %v650, 0.0
      %vm683 = vcmp.ge.f32.partialorder %v651, 0.0
      %vm684 = vcmp.ge.f32.partialorder %v652, 0.0
      %vm685 = vcmp.le.f32.partialorder %v621, 15.0
      %vm686 = vcmp.le.f32.partialorder %v622, 15.0
      %vm687 = vcmp.le.f32.partialorder %v623, 15.0
      %vm688 = vcmp.le.f32.partialorder %v624, 15.0
      %vm689 = vcmp.le.f32.partialorder %v625, 15.0
      %vm690 = vcmp.le.f32.partialorder %v626, 15.0
      %vm691 = vcmp.le.f32.partialorder %v627, 15.0
      %vm692 = vcmp.le.f32.partialorder %v628, 15.0
      %vm693 = vcmp.le.f32.partialorder %v629, 15.0
      %vm694 = vcmp.le.f32.partialorder %v630, 15.0
      %vm695 = vcmp.le.f32.partialorder %v631, 15.0
      %vm696 = vcmp.le.f32.partialorder %v632, 15.0
      %vm697 = vcmp.le.f32.partialorder %v633, 15.0
      %vm698 = vcmp.le.f32.partialorder %v634, 15.0
      %vm699 = vcmp.le.f32.partialorder %v635, 15.0
      %vm700 = vcmp.le.f32.partialorder %v636, 15.0
      %vm701 = vcmp.le.f32.partialorder %v637, 15.0
      %vm702 = vcmp.le.f32.partialorder %v638, 15.0
      %vm703 = vcmp.le.f32.partialorder %v639, 15.0
      %vm704 = vcmp.le.f32.partialorder %v640, 15.0
      %vm705 = vcmp.le.f32.partialorder %v641, 15.0
      %vm706 = vcmp.le.f32.partialorder %v642, 15.0
      %vm707 = vcmp.le.f32.partialorder %v643, 15.0
      %vm708 = vcmp.le.f32.partialorder %v644, 15.0
      %vm709 = vcmp.le.f32.partialorder %v645, 15.0
      %vm710 = vcmp.le.f32.partialorder %v646, 15.0
      %vm711 = vcmp.le.f32.partialorder %v647, 15.0
      %vm712 = vcmp.le.f32.partialorder %v648, 15.0
      %vm713 = vcmp.le.f32.partialorder %v649, 15.0
      %vm714 = vcmp.le.f32.partialorder %v650, 15.0
      %vm715 = vcmp.le.f32.partialorder %v651, 15.0
      %vm716 = vcmp.le.f32.partialorder %v652, 15.0
      %vm717 = vmand %vm653, %vm685
      %vm718 = vmand %vm654, %vm686
      %vm719 = vmand %vm655, %vm687
      %vm720 = vmand %vm656, %vm688
      %vm721 = vmand %vm657, %vm689
      %vm722 = vmand %vm658, %vm690
      %vm723 = vmand %vm659, %vm691
      %vm724 = vmand %vm660, %vm692
      %vm725 = vmand %vm661, %vm693
      %vm726 = vmand %vm662, %vm694
      %vm727 = vmand %vm663, %vm695
      %vm728 = vmand %vm664, %vm696
      %vm729 = vmand %vm665, %vm697
      %vm730 = vmand %vm666, %vm698
      %vm731 = vmand %vm667, %vm699
      %vm732 = vmand %vm668, %vm700
      %vm733 = vmand %vm669, %vm701
      %vm734 = vmand %vm670, %vm702
      %vm735 = vmand %vm671, %vm703
      %vm736 = vmand %vm672, %vm704
      %vm737 = vmand %vm673, %vm705
      %vm738 = vmand %vm674, %vm706
      %vm739 = vmand %vm675, %vm707
      %vm740 = vmand %vm676, %vm708
      %vm741 = vmand %vm677, %vm709
      %vm742 = vmand %vm678, %vm710
      %vm743 = vmand %vm679, %vm711
      %vm744 = vmand %vm680, %vm712
      %vm745 = vmand %vm681, %vm713
      %vm746 = vmand %vm682, %vm714
      %vm747 = vmand %vm683, %vm715
      %vm748 = vmand %vm684, %vm716
      %v749 = vadd.f32 %v524, -1.0
      %v750 = vadd.f32 %v525, -1.0
      %v751 = vadd.f32 %v526, -1.0
      %v752 = vadd.f32 %v527, -1.0
      %v753 = vadd.f32 %v528, -1.0
      %v754 = vadd.f32 %v529, -1.0
      %v755 = vadd.f32 %v530, -1.0
      %v756 = vadd.f32 %v531, -1.0
      %v757 = vadd.f32 %v532, -1.0
      %v758 = vadd.f32 %v533, -1.0
      %v759 = vadd.f32 %v534, -1.0
      %v760 = vadd.f32 %v535, -1.0
      %v761 = vadd.f32 %v536, -1.0
      %v762 = vadd.f32 %v537, -1.0
      %v763 = vadd.f32 %v538, -1.0
      %v764 = vadd.f32 %v539, -1.0
      %v765 = vadd.f32 %v540, -1.0
      %v766 = vadd.f32 %v541, -1.0
      %v767 = vadd.f32 %v542, -1.0
      %v768 = vadd.f32 %v543, -1.0
      %v769 = vadd.f32 %v544, -1.0
      %v770 = vadd.f32 %v545, -1.0
      %v771 = vadd.f32 %v546, -1.0
      %v772 = vadd.f32 %v547, -1.0
      %v773 = vadd.f32 %v548, -1.0
      %v774 = vadd.f32 %v549, -1.0
      %v775 = vadd.f32 %v550, -1.0
      %v776 = vadd.f32 %v551, -1.0
      %v777 = vadd.f32 %v552, -1.0
      %v778 = vadd.f32 %v553, -1.0
      %v779 = vadd.f32 %v554, -1.0
      %v780 = vadd.f32 %v555, -1.0
      %vm781 = vcmp.ge.f32.partialorder %v749, 0.0
      %vm782 = vcmp.ge.f32.partialorder %v750, 0.0
      %vm783 = vcmp.ge.f32.partialorder %v751, 0.0
      %vm784 = vcmp.ge.f32.partialorder %v752, 0.0
      %vm785 = vcmp.ge.f32.partialorder %v753, 0.0
      %vm786 = vcmp.ge.f32.partialorder %v754, 0.0
      %vm787 = vcmp.ge.f32.partialorder %v755, 0.0
      %vm788 = vcmp.ge.f32.partialorder %v756, 0.0
      %vm789 = vcmp.ge.f32.partialorder %v757, 0.0
      %vm790 = vcmp.ge.f32.partialorder %v758, 0.0
      %vm791 = vcmp.ge.f32.partialorder %v759, 0.0
      %vm792 = vcmp.ge.f32.partialorder %v760, 0.0
      %vm793 = vcmp.ge.f32.partialorder %v761, 0.0
      %vm794 = vcmp.ge.f32.partialorder %v762, 0.0
      %vm795 = vcmp.ge.f32.partialorder %v763, 0.0
      %vm796 = vcmp.ge.f32.partialorder %v764, 0.0
      %vm797 = vcmp.ge.f32.partialorder %v765, 0.0
      %vm798 = vcmp.ge.f32.partialorder %v766, 0.0
      %vm799 = vcmp.ge.f32.partialorder %v767, 0.0
      %vm800 = vcmp.ge.f32.partialorder %v768, 0.0
      %vm801 = vcmp.ge.f32.partialorder %v769, 0.0
      %vm802 = vcmp.ge.f32.partialorder %v770, 0.0
      %vm803 = vcmp.ge.f32.partialorder %v771, 0.0
      %vm804 = vcmp.ge.f32.partialorder %v772, 0.0
      %vm805 = vcmp.ge.f32.partialorder %v773, 0.0
      %vm806 = vcmp.ge.f32.partialorder %v774, 0.0
      %vm807 = vcmp.ge.f32.partialorder %v775, 0.0
      %vm808 = vcmp.ge.f32.partialorder %v776, 0.0
      %vm809 = vcmp.ge.f32.partialorder %v777, 0.0
      %vm810 = vcmp.ge.f32.partialorder %v778, 0.0
      %vm811 = vcmp.ge.f32.partialorder %v779, 0.0
      %vm812 = vcmp.ge.f32.partialorder %v780, 0.0
      %vm813 = vmand %vm717, %vm781
      %vm814 = vmand %vm718, %vm782
      %vm815 = vmand %vm719, %vm783
      %vm816 = vmand %vm720, %vm784
      %vm817 = vmand %vm721, %vm785
      %vm818 = vmand %vm722, %vm786
      %vm819 = vmand %vm723, %vm787
      %vm820 = vmand %vm724, %vm788
      %vm821 = vmand %vm725, %vm789
      %vm822 = vmand %vm726, %vm790
      %vm823 = vmand %vm727, %vm791
      %vm824 = vmand %vm728, %vm792
      %vm825 = vmand %vm729, %vm793
      %vm826 = vmand %vm730, %vm794
      %vm827 = vmand %vm731, %vm795
      %vm828 = vmand %vm732, %vm796
      %vm829 = vmand %vm733, %vm797
      %vm830 = vmand %vm734, %vm798
      %vm831 = vmand %vm735, %vm799
      %vm832 = vmand %vm736, %vm800
      %vm833 = vmand %vm737, %vm801
      %vm834 = vmand %vm738, %vm802
      %vm835 = vmand %vm739, %vm803
      %vm836 = vmand %vm740, %vm804
      %vm837 = vmand %vm741, %vm805
      %vm838 = vmand %vm742, %vm806
      %vm839 = vmand %vm743, %vm807
      %vm840 = vmand %vm744, %vm808
      %vm841 = vmand %vm745, %vm809
      %vm842 = vmand %vm746, %vm810
      %vm843 = vmand %vm747, %vm811
      %vm844 = vmand %vm748, %vm812
      %vm845 = vcmp.le.f32.partialorder %v749, 15.0
      %vm846 = vcmp.le.f32.partialorder %v750, 15.0
      %vm847 = vcmp.le.f32.partialorder %v751, 15.0
      %vm848 = vcmp.le.f32.partialorder %v752, 15.0
      %vm849 = vcmp.le.f32.partialorder %v753, 15.0
      %vm850 = vcmp.le.f32.partialorder %v754, 15.0
      %vm851 = vcmp.le.f32.partialorder %v755, 15.0
      %vm852 = vcmp.le.f32.partialorder %v756, 15.0
      %vm853 = vcmp.le.f32.partialorder %v757, 15.0
      %vm854 = vcmp.le.f32.partialorder %v758, 15.0
      %vm855 = vcmp.le.f32.partialorder %v759, 15.0
      %vm856 = vcmp.le.f32.partialorder %v760, 15.0
      %vm857 = vcmp.le.f32.partialorder %v761, 15.0
      %vm858 = vcmp.le.f32.partialorder %v762, 15.0
      %vm859 = vcmp.le.f32.partialorder %v763, 15.0
      %vm860 = vcmp.le.f32.partialorder %v764, 15.0
      %vm861 = vcmp.le.f32.partialorder %v765, 15.0
      %vm862 = vcmp.le.f32.partialorder %v766, 15.0
      %vm863 = vcmp.le.f32.partialorder %v767, 15.0
      %vm864 = vcmp.le.f32.partialorder %v768, 15.0
      %vm865 = vcmp.le.f32.partialorder %v769, 15.0
      %vm866 = vcmp.le.f32.partialorder %v770, 15.0
      %vm867 = vcmp.le.f32.partialorder %v771, 15.0
      %vm868 = vcmp.le.f32.partialorder %v772, 15.0
      %vm869 = vcmp.le.f32.partialorder %v773, 15.0
      %vm870 = vcmp.le.f32.partialorder %v774, 15.0
      %vm871 = vcmp.le.f32.partialorder %v775, 15.0
      %vm872 = vcmp.le.f32.partialorder %v776, 15.0
      %vm873 = vcmp.le.f32.partialorder %v777, 15.0
      %vm874 = vcmp.le.f32.partialorder %v778, 15.0
      %vm875 = vcmp.le.f32.partialorder %v779, 15.0
      %vm876 = vcmp.le.f32.partialorder %v780, 15.0
      %vm877 = vmand %vm813, %vm845
      %vm878 = vmand %vm814, %vm846
      %vm879 = vmand %vm815, %vm847
      %vm880 = vmand %vm816, %vm848
      %vm881 = vmand %vm817, %vm849
      %vm882 = vmand %vm818, %vm850
      %vm883 = vmand %vm819, %vm851
      %vm884 = vmand %vm820, %vm852
      %vm885 = vmand %vm821, %vm853
      %vm886 = vmand %vm822, %vm854
      %vm887 = vmand %vm823, %vm855
      %vm888 = vmand %vm824, %vm856
      %vm889 = vmand %vm825, %vm857
      %vm890 = vmand %vm826, %vm858
      %vm891 = vmand %vm827, %vm859
      %vm892 = vmand %vm828, %vm860
      %vm893 = vmand %vm829, %vm861
      %vm894 = vmand %vm830, %vm862
      %vm895 = vmand %vm831, %vm863
      %vm896 = vmand %vm832, %vm864
      %vm897 = vmand %vm833, %vm865
      %vm898 = vmand %vm834, %vm866
      %vm899 = vmand %vm835, %vm867
      %vm900 = vmand %vm836, %vm868
      %vm901 = vmand %vm837, %vm869
      %vm902 = vmand %vm838, %vm870
      %vm903 = vmand %vm839, %vm871
      %vm904 = vmand %vm840, %vm872
      %vm905 = vmand %vm841, %vm873
      %vm906 = vmand %vm842, %vm874
      %vm907 = vmand %vm843, %vm875
      %vm908 = vmand %vm844, %vm876
      %v909 = vsel %vm877, 1, 0
      %v910 = vsel %vm878, 1, 0
      %v911 = vsel %vm879, 1, 0
      %v912 = vsel %vm880, 1, 0
      %v913 = vsel %vm881, 1, 0
      %v914 = vsel %vm882, 1, 0
      %v915 = vsel %vm883, 1, 0
      %v916 = vsel %vm884, 1, 0
      %v917 = vsel %vm885, 1, 0
      %v918 = vsel %vm886, 1, 0
      %v919 = vsel %vm887, 1, 0
      %v920 = vsel %vm888, 1, 0
      %v921 = vsel %vm889, 1, 0
      %v922 = vsel %vm890, 1, 0
      %v923 = vsel %vm891, 1, 0
      %v924 = vsel %vm892, 1, 0
      %v925 = vsel %vm893, 1, 0
      %v926 = vsel %vm894, 1, 0
      %v927 = vsel %vm895, 1, 0
      %v928 = vsel %vm896, 1, 0
      %v929 = vsel %vm897, 1, 0
      %v930 = vsel %vm898, 1, 0
      %v931 = vsel %vm899, 1, 0
      %v932 = vsel %vm900, 1, 0
      %v933 = vsel %vm901, 1, 0
      %v934 = vsel %vm902, 1, 0
      %v935 = vsel %vm903, 1, 0
      %v936 = vsel %vm904, 1, 0
      %v937 = vsel %vm905, 1, 0
      %v938 = vsel %vm906, 1, 0
      %v939 = vsel %vm907, 1, 0
      %v940 = vsel %vm908, 1, 0
      %v941 = vcvt.s32.f32 %v909
      %v942 = vcvt.s32.f32 %v910
      %v943 = vcvt.s32.f32 %v911
      %v944 = vcvt.s32.f32 %v912
      %v945 = vcvt.s32.f32 %v913
      %v946 = vcvt.s32.f32 %v914
      %v947 = vcvt.s32.f32 %v915
      %v948 = vcvt.s32.f32 %v916
      %v949 = vcvt.s32.f32 %v917
      %v950 = vcvt.s32.f32 %v918
      %v951 = vcvt.s32.f32 %v919
      %v952 = vcvt.s32.f32 %v920
      %v953 = vcvt.s32.f32 %v921
      %v954 = vcvt.s32.f32 %v922
      %v955 = vcvt.s32.f32 %v923
      %v956 = vcvt.s32.f32 %v924
      %v957 = vcvt.s32.f32 %v925
      %v958 = vcvt.s32.f32 %v926
      %v959 = vcvt.s32.f32 %v927
      %v960 = vcvt.s32.f32 %v928
      %v961 = vcvt.s32.f32 %v929
      %v962 = vcvt.s32.f32 %v930
      %v963 = vcvt.s32.f32 %v931
      %v964 = vcvt.s32.f32 %v932
      %v965 = vcvt.s32.f32 %v933
      %v966 = vcvt.s32.f32 %v934
      %v967 = vcvt.s32.f32 %v935
      %v968 = vcvt.s32.f32 %v936
      %v969 = vcvt.s32.f32 %v937
      %v970 = vcvt.s32.f32 %v938
      %v971 = vcvt.s32.f32 %v939
      %v972 = vcvt.s32.f32 %v940
      %v973 = vmul.f32 %v590, %v941
      %v974 = vmul.f32 %v589, %v942
      %v975 = vmul.f32 %v620, %v943
      %v976 = vmul.f32 %v619, %v944
      %v977 = vmul.f32 %v618, %v945
      %v978 = vmul.f32 %v617, %v946
      %v979 = vmul.f32 %v616, %v947
      %v980 = vmul.f32 %v615, %v948
      %v981 = vmul.f32 %v614, %v949
      %v982 = vmul.f32 %v613, %v950
      %v983 = vmul.f32 %v612, %v951
      %v984 = vmul.f32 %v611, %v952
      %v985 = vmul.f32 %v610, %v953
      %v986 = vmul.f32 %v609, %v954
      %v987 = vmul.f32 %v608, %v955
      %v988 = vmul.f32 %v607, %v956
      %v989 = vmul.f32 %v606, %v957
      %v990 = vmul.f32 %v605, %v958
      %v991 = vmul.f32 %v604, %v959
      %v992 = vmul.f32 %v603, %v960
      %v993 = vmul.f32 %v602, %v961
      %v994 = vmul.f32 %v601, %v962
      %v995 = vmul.f32 %v600, %v963
      %v996 = vmul.f32 %v599, %v964
      %v997 = vmul.f32 %v598, %v965
      %v998 = vmul.f32 %v597, %v966
      %v999 = vmul.f32 %v596, %v967
      %v1000 = vmul.f32 %v595, %v968
      %v1001 = vmul.f32 %v594, %v969
      %v1002 = vmul.f32 %v593, %v970
      %v1003 = vmul.f32 %v592, %v971
      %v1004 = vmul.f32 %v591, %v972
      %v1005 = vld [vmem:[%s1] sm:$0xf]
      %v1006 = vadd.f32 %v524, 0.0
      %v1007 = vadd.f32 %v525, 0.0
      %v1008 = vadd.f32 %v526, 0.0
      %v1009 = vadd.f32 %v527, 0.0
      %v1010 = vadd.f32 %v528, 0.0
      %v1011 = vadd.f32 %v529, 0.0
      %v1012 = vadd.f32 %v530, 0.0
      %v1013 = vadd.f32 %v531, 0.0
      %v1014 = vadd.f32 %v532, 0.0
      %v1015 = vadd.f32 %v533, 0.0
      %v1016 = vadd.f32 %v534, 0.0
      %v1017 = vadd.f32 %v535, 0.0
      %v1018 = vadd.f32 %v536, 0.0
      %v1019 = vadd.f32 %v537, 0.0
      %v1020 = vadd.f32 %v538, 0.0
      %v1021 = vadd.f32 %v539, 0.0
      %v1022 = vadd.f32 %v540, 0.0
      %v1023 = vadd.f32 %v541, 0.0
      %v1024 = vadd.f32 %v542, 0.0
      %v1025 = vadd.f32 %v543, 0.0
      %v1026 = vadd.f32 %v544, 0.0
      %v1027 = vadd.f32 %v545, 0.0
      %v1028 = vadd.f32 %v546, 0.0
      %v1029 = vadd.f32 %v547, 0.0
      %v1030 = vadd.f32 %v548, 0.0
      %v1031 = vadd.f32 %v549, 0.0
      %v1032 = vadd.f32 %v550, 0.0
      %v1033 = vadd.f32 %v551, 0.0
      %v1034 = vadd.f32 %v552, 0.0
      %v1035 = vadd.f32 %v553, 0.0
      %v1036 = vadd.f32 %v554, 0.0
      %v1037 = vadd.f32 %v555, 0.0
      %vm1038 = vcmp.ge.f32.partialorder %v1006, 0.0
      %vm1039 = vcmp.ge.f32.partialorder %v1007, 0.0
      %vm1040 = vcmp.ge.f32.partialorder %v1008, 0.0
      %vm1041 = vcmp.ge.f32.partialorder %v1009, 0.0
      %vm1042 = vcmp.ge.f32.partialorder %v1010, 0.0
      %vm1043 = vcmp.ge.f32.partialorder %v1011, 0.0
      %vm1044 = vcmp.ge.f32.partialorder %v1012, 0.0
      %vm1045 = vcmp.ge.f32.partialorder %v1013, 0.0
      %vm1046 = vcmp.ge.f32.partialorder %v1014, 0.0
      %vm1047 = vcmp.ge.f32.partialorder %v1015, 0.0
      %vm1048 = vcmp.ge.f32.partialorder %v1016, 0.0
      %vm1049 = vcmp.ge.f32.partialorder %v1017, 0.0
      %vm1050 = vcmp.ge.f32.partialorder %v1018, 0.0
      %vm1051 = vcmp.ge.f32.partialorder %v1019, 0.0
      %vm1052 = vcmp.ge.f32.partialorder %v1020, 0.0
      %vm1053 = vcmp.ge.f32.partialorder %v1021, 0.0
      %vm1054 = vcmp.ge.f32.partialorder %v1022, 0.0
      %vm1055 = vcmp.ge.f32.partialorder %v1023, 0.0
      %vm1056 = vcmp.ge.f32.partialorder %v1024, 0.0
      %vm1057 = vcmp.ge.f32.partialorder %v1025, 0.0
      %vm1058 = vcmp.ge.f32.partialorder %v1026, 0.0
      %vm1059 = vcmp.ge.f32.partialorder %v1027, 0.0
      %vm1060 = vcmp.ge.f32.partialorder %v1028, 0.0
      %vm1061 = vcmp.ge.f32.partialorder %v1029, 0.0
      %vm1062 = vcmp.ge.f32.partialorder %v1030, 0.0
      %vm1063 = vcmp.ge.f32.partialorder %v1031, 0.0
      %vm1064 = vcmp.ge.f32.partialorder %v1032, 0.0
      %vm1065 = vcmp.ge.f32.partialorder %v1033, 0.0
      %vm1066 = vcmp.ge.f32.partialorder %v1034, 0.0
      %vm1067 = vcmp.ge.f32.partialorder %v1035, 0.0
      %vm1068 = vcmp.ge.f32.partialorder %v1036, 0.0
      %vm1069 = vcmp.ge.f32.partialorder %v1037, 0.0
      %vm1070 = vmand %vm717, %vm1038
      %vm1071 = vmand %vm718, %vm1039
      %vm1072 = vmand %vm719, %vm1040
      %vm1073 = vmand %vm720, %vm1041
      %vm1074 = vmand %vm721, %vm1042
      %vm1075 = vmand %vm722, %vm1043
      %vm1076 = vmand %vm723, %vm1044
      %vm1077 = vmand %vm724, %vm1045
      %vm1078 = vmand %vm725, %vm1046
      %vm1079 = vmand %vm726, %vm1047
      %vm1080 = vmand %vm727, %vm1048
      %vm1081 = vmand %vm728, %vm1049
      %vm1082 = vmand %vm729, %vm1050
      %vm1083 = vmand %vm730, %vm1051
      %vm1084 = vmand %vm731, %vm1052
      %vm1085 = vmand %vm732, %vm1053
      %vm1086 = vmand %vm733, %vm1054
      %vm1087 = vmand %vm734, %vm1055
      %vm1088 = vmand %vm735, %vm1056
      %vm1089 = vmand %vm736, %vm1057
      %vm1090 = vmand %vm737, %vm1058
      %vm1091 = vmand %vm738, %vm1059
      %vm1092 = vmand %vm739, %vm1060
      %vm1093 = vmand %vm740, %vm1061
      %vm1094 = vmand %vm741, %vm1062
      %vm1095 = vmand %vm742, %vm1063
      %vm1096 = vmand %vm743, %vm1064
      %vm1097 = vmand %vm744, %vm1065
      %vm1098 = vmand %vm745, %vm1066
      %vm1099 = vmand %vm746, %vm1067
      %vm1100 = vmand %vm747, %vm1068
      %vm1101 = vmand %vm748, %vm1069
      %vm1102 = vcmp.le.f32.partialorder %v1006, 15.0
      %vm1103 = vcmp.le.f32.partialorder %v1007, 15.0
      %vm1104 = vcmp.le.f32.partialorder %v1008, 15.0
      %vm1105 = vcmp.le.f32.partialorder %v1009, 15.0
      %vm1106 = vcmp.le.f32.partialorder %v1010, 15.0
      %vm1107 = vcmp.le.f32.partialorder %v1011, 15.0
      %vm1108 = vcmp.le.f32.partialorder %v1012, 15.0
      %vm1109 = vcmp.le.f32.partialorder %v1013, 15.0
      %vm1110 = vcmp.le.f32.partialorder %v1014, 15.0
      %vm1111 = vcmp.le.f32.partialorder %v1015, 15.0
      %vm1112 = vcmp.le.f32.partialorder %v1016, 15.0
      %vm1113 = vcmp.le.f32.partialorder %v1017, 15.0
      %vm1114 = vcmp.le.f32.partialorder %v1018, 15.0
      %vm1115 = vcmp.le.f32.partialorder %v1019, 15.0
      %vm1116 = vcmp.le.f32.partialorder %v1020, 15.0
      %vm1117 = vcmp.le.f32.partialorder %v1021, 15.0
      %vm1118 = vcmp.le.f32.partialorder %v1022, 15.0
      %vm1119 = vcmp.le.f32.partialorder %v1023, 15.0
      %vm1120 = vcmp.le.f32.partialorder %v1024, 15.0
      %vm1121 = vcmp.le.f32.partialorder %v1025, 15.0
      %vm1122 = vcmp.le.f32.partialorder %v1026, 15.0
      %vm1123 = vcmp.le.f32.partialorder %v1027, 15.0
      %vm1124 = vcmp.le.f32.partialorder %v1028, 15.0
      %vm1125 = vcmp.le.f32.partialorder %v1029, 15.0
      %vm1126 = vcmp.le.f32.partialorder %v1030, 15.0
      %vm1127 = vcmp.le.f32.partialorder %v1031, 15.0
      %vm1128 = vcmp.le.f32.partialorder %v1032, 15.0
      %vm1129 = vcmp.le.f32.partialorder %v1033, 15.0
      %vm1130 = vcmp.le.f32.partialorder %v1034, 15.0
      %vm1131 = vcmp.le.f32.partialorder %v1035, 15.0
      %vm1132 = vcmp.le.f32.partialorder %v1036, 15.0
      %vm1133 = vcmp.le.f32.partialorder %v1037, 15.0
      %vm1134 = vmand %vm1070, %vm1102
      %vm1135 = vmand %vm1071, %vm1103
      %vm1136 = vmand %vm1072, %vm1104
      %vm1137 = vmand %vm1073, %vm1105
      %vm1138 = vmand %vm1074, %vm1106
      %vm1139 = vmand %vm1075, %vm1107
      %vm1140 = vmand %vm1076, %vm1108
      %vm1141 = vmand %vm1077, %vm1109
      %vm1142 = vmand %vm1078, %vm1110
      %vm1143 = vmand %vm1079, %vm1111
      %vm1144 = vmand %vm1080, %vm1112
      %vm1145 = vmand %vm1081, %vm1113
      %vm1146 = vmand %vm1082, %vm1114
      %vm1147 = vmand %vm1083, %vm1115
      %vm1148 = vmand %vm1084, %vm1116
      %vm1149 = vmand %vm1085, %vm1117
      %vm1150 = vmand %vm1086, %vm1118
      %vm1151 = vmand %vm1087, %vm1119
      %vm1152 = vmand %vm1088, %vm1120
      %vm1153 = vmand %vm1089, %vm1121
      %vm1154 = vmand %vm1090, %vm1122
      %vm1155 = vmand %vm1091, %vm1123
      %vm1156 = vmand %vm1092, %vm1124
      %vm1157 = vmand %vm1093, %vm1125
      %vm1158 = vmand %vm1094, %vm1126
      %vm1159 = vmand %vm1095, %vm1127
      %vm1160 = vmand %vm1096, %vm1128
      %vm1161 = vmand %vm1097, %vm1129
      %vm1162 = vmand %vm1098, %vm1130
      %vm1163 = vmand %vm1099, %vm1131
      %vm1164 = vmand %vm1100, %vm1132
      %vm1165 = vmand %vm1101, %vm1133
      %v1166 = vsel %vm1134, 1, 0
      %v1167 = vsel %vm1135, 1, 0
      %v1168 = vsel %vm1136, 1, 0
      %v1169 = vsel %vm1137, 1, 0
      %v1170 = vsel %vm1138, 1, 0
      %v1171 = vsel %vm1139, 1, 0
      %v1172 = vsel %vm1140, 1, 0
      %v1173 = vsel %vm1141, 1, 0
      %v1174 = vsel %vm1142, 1, 0
      %v1175 = vsel %vm1143, 1, 0
      %v1176 = vsel %vm1144, 1, 0
      %v1177 = vsel %vm1145, 1, 0
      %v1178 = vsel %vm1146, 1, 0
      %v1179 = vsel %vm1147, 1, 0
      %v1180 = vsel %vm1148, 1, 0
      %v1181 = vsel %vm1149, 1, 0
      %v1182 = vsel %vm1150, 1, 0
      %v1183 = vsel %vm1151, 1, 0
      %v1184 = vsel %vm1152, 1, 0
      %v1185 = vsel %vm1153, 1, 0
      %v1186 = vsel %vm1154, 1, 0
      %v1187 = vsel %vm1155, 1, 0
      %v1188 = vsel %vm1156, 1, 0
      %v1189 = vsel %vm1157, 1, 0
      %v1190 = vsel %vm1158, 1, 0
      %v1191 = vsel %vm1159, 1, 0
      %v1192 = vsel %vm1160, 1, 0
      %v1193 = vsel %vm1161, 1, 0
      %v1194 = vsel %vm1162, 1, 0
      %v1195 = vsel %vm1163, 1, 0
      %v1196 = vsel %vm1164, 1, 0
      %v1197 = vsel %vm1165, 1, 0
      %v1198 = vcvt.s32.f32 %v1166
      %v1199 = vcvt.s32.f32 %v1167
      %v1200 = vcvt.s32.f32 %v1168
      %v1201 = vcvt.s32.f32 %v1169
      %v1202 = vcvt.s32.f32 %v1170
      %v1203 = vcvt.s32.f32 %v1171
      %v1204 = vcvt.s32.f32 %v1172
      %v1205 = vcvt.s32.f32 %v1173
      %v1206 = vcvt.s32.f32 %v1174
      %v1207 = vcvt.s32.f32 %v1175
      %v1208 = vcvt.s32.f32 %v1176
      %v1209 = vcvt.s32.f32 %v1177
      %v1210 = vcvt.s32.f32 %v1178
      %v1211 = vcvt.s32.f32 %v1179
      %v1212 = vcvt.s32.f32 %v1180
      %v1213 = vcvt.s32.f32 %v1181
      %v1214 = vcvt.s32.f32 %v1182
      %v1215 = vcvt.s32.f32 %v1183
      %v1216 = vcvt.s32.f32 %v1184
      %v1217 = vcvt.s32.f32 %v1185
      %v1218 = vcvt.s32.f32 %v1186
      %v1219 = vcvt.s32.f32 %v1187
      %v1220 = vcvt.s32.f32 %v1188
      %v1221 = vcvt.s32.f32 %v1189
      %v1222 = vcvt.s32.f32 %v1190
      %v1223 = vcvt.s32.f32 %v1191
      %v1224 = vcvt.s32.f32 %v1192
      %v1225 = vcvt.s32.f32 %v1193
      %v1226 = vcvt.s32.f32 %v1194
      %v1227 = vcvt.s32.f32 %v1195
      %v1228 = vcvt.s32.f32 %v1196
      %v1229 = vcvt.s32.f32 %v1197
      %v1230 = vmul.f32 %v329, %v1198
      %v1231 = vmul.f32 %v330, %v1199
      %v1232 = vmul.f32 %v299, %v1200
      %v1233 = vmul.f32 %v300, %v1201
      %v1234 = vmul.f32 %v301, %v1202
      %v1235 = vmul.f32 %v302, %v1203
      %v1236 = vmul.f32 %v303, %v1204
      %v1237 = vmul.f32 %v304, %v1205
      %v1238 = vmul.f32 %v305, %v1206
      %v1239 = vmul.f32 %v306, %v1207
      %v1240 = vmul.f32 %v307, %v1208
      %v1241 = vmul.f32 %v308, %v1209
      %v1242 = vmul.f32 %v309, %v1210
      %v1243 = vmul.f32 %v310, %v1211
      %v1244 = vmul.f32 %v311, %v1212
      %v1245 = vmul.f32 %v312, %v1213
      %v1246 = vmul.f32 %v313, %v1214
      %v1247 = vmul.f32 %v314, %v1215
      %v1248 = vmul.f32 %v315, %v1216
      %v1249 = vmul.f32 %v316, %v1217
      %v1250 = vmul.f32 %v317, %v1218
      %v1251 = vmul.f32 %v318, %v1219
      %v1252 = vmul.f32 %v319, %v1220
      %v1253 = vmul.f32 %v320, %v1221
      %v1254 = vmul.f32 %v321, %v1222
      %v1255 = vmul.f32 %v322, %v1223
      %v1256 = vmul.f32 %v323, %v1224
      %v1257 = vmul.f32 %v324, %v1225
      %v1258 = vmul.f32 %v325, %v1226
      %v1259 = vmul.f32 %v326, %v1227
      %v1260 = vmul.f32 %v327, %v1228
      %v1261 = vmul.f32 %v328, %v1229
      %v1262 = vld [vmem:[%s1 + $0x4] sm:$0xf]
      %vm1263 = vcmask 31744
      %v1265 = vsel %vm1263, %v1230, 0
      %v1268 = vsel %vm1263, %v1231, 0
      %v1271 = vsel %vm1263, %v1232, 0
      %v1274 = vsel %vm1263, %v1233, 0
      %v1277 = vsel %vm1263, %v1234, 0
      %v1280 = vsel %vm1263, %v1235, 0
      %v1283 = vsel %vm1263, %v1236, 0
      %v1286 = vsel %vm1263, %v1237, 0
      %v1289 = vsel %vm1263, %v1238, 0
      %v1292 = vsel %vm1263, %v1239, 0
      %v1295 = vsel %vm1263, %v1240, 0
      %v1298 = vsel %vm1263, %v1241, 0
      %v1301 = vsel %vm1263, %v1242, 0
      %v1304 = vsel %vm1263, %v1243, 0
      %v1307 = vsel %vm1263, %v1244, 0
      %v1310 = vsel %vm1263, %v1245, 0
      %v1313 = vsel %vm1263, %v1246, 0
      %v1316 = vsel %vm1263, %v1247, 0
      %v1319 = vsel %vm1263, %v1248, 0
      %v1322 = vsel %vm1263, %v1249, 0
      %v1325 = vsel %vm1263, %v1250, 0
      %v1328 = vsel %vm1263, %v1251, 0
      %v1331 = vsel %vm1263, %v1252, 0
      %v1334 = vsel %vm1263, %v1253, 0
      %v1337 = vsel %vm1263, %v1254, 0
      %v1340 = vsel %vm1263, %v1255, 0
      %v1343 = vsel %vm1263, %v1256, 0
      %v1346 = vsel %vm1263, %v1257, 0
      %v1349 = vsel %vm1263, %v1258, 0
      %v1352 = vsel %vm1263, %v1259, 0
      %v1355 = vsel %vm1263, %v1260, 0
      %v1358 = vsel %vm1263, %v1261, 0
      %vm1360 = vcmask 1043456
      %v1362 = vsel %vm1360, %v1262, 0
      %1364 = vmatprep.subr.mxu0 0.0
      %1365 = vmatpush1.msra.mxu0 0.0
      %1366 = vmatprep.subr.mxu0 0.0
      %1367 = vmatpush1.msra.mxu0 0.0
      %1368 = vmatprep.subr.mxu0 0.0
      %1369 = vmatpush1.msra.mxu0 0.0
      %1370 = vmatprep.subr.mxu0 0.0
      %1371 = vmatpush1.msra.mxu0 0.0
      %1372 = vmatprep.subr.mxu0 0.0
      %1373 = vmatpush1.msra.mxu0 0.0
      %1374 = vmatprep.subr.mxu0 0.0
      %1375 = vmatpush1.msra.mxu0 0.0
      %1376 = vmatprep.subr.mxu0 0.0
      %1377 = vmatpush1.msra.mxu0 0.0
      %1378 = vmatprep.subr.mxu0 0.0
      %1379 = vmatpush1.msra.mxu0 0.0
      %1380 = vmatprep.subr.mxu0 0.0
      %1381 = vmatpush1.msra.mxu0 0.0
      %1382 = vmatprep.subr.mxu0 0.0
      %1383 = vmatpush1.msra.mxu0 0.0
      %1384 = vmatprep.subr.mxu0 0.0
      %1385 = vmatpush1.msra.mxu0 0.0
      %1386 = vmatprep.subr.mxu0 0.0
      %1387 = vmatpush1.msra.mxu0 0.0
      %1388 = vmatprep.subr.mxu0 0.0
      %1389 = vmatpush1.msra.mxu0 0.0
      %1390 = vmatprep.subr.mxu0 0.0
      %1391 = vmatpush1.msra.mxu0 0.0
      %1392 = vmatprep.subr.mxu0 0.0
      %1393 = vmatpush1.msra.mxu0 0.0
      %1394 = vmatprep.subr.mxu0 0.0
      %1395 = vmatpush1.msra.mxu0 %v1362
      %1396 = vmatprep.subr.mxu0 0.0
      %1397 = vmatpush2.msra.mxu0 0.0
      %1398 = vmatprep.subr.mxu0 0.0
      %1399 = vmatpush2.msra.mxu0 0.0
      %1400 = vmatprep.subr.mxu0 0.0
      %1401 = vmatpush2.msra.mxu0 0.0
      %1402 = vmatprep.subr.mxu0 0.0
      %1403 = vmatpush2.msra.mxu0 0.0
      %1404 = vmatprep.subr.mxu0 0.0
      %1405 = vmatpush2.msra.mxu0 0.0
      %1406 = vmatprep.subr.mxu0 0.0
      %1407 = vmatpush2.msra.mxu0 0.0
      %1408 = vmatprep.subr.mxu0 0.0
      %1409 = vmatpush2.msra.mxu0 0.0
      %1410 = vmatprep.subr.mxu0 0.0
      %1411 = vmatpush2.msra.mxu0 0.0
      %1412 = vmatprep.subr.mxu0 0.0
      %1413 = vmatpush2.msra.mxu0 0.0
      %1414 = vmatprep.subr.mxu0 0.0
      %1415 = vmatpush2.msra.mxu0 0.0
      %1416 = vmatprep.subr.mxu0 0.0
      %1417 = vmatpush2.msra.mxu0 0.0
      %1418 = vmatprep.subr.mxu0 0.0
      %1419 = vmatpush2.msra.mxu0 0.0
      %1420 = vmatprep.subr.mxu0 0.0
      %1421 = vmatpush2.msra.mxu0 0.0
      %1422 = vmatprep.subr.mxu0 0.0
      %1423 = vmatpush2.msra.mxu0 0.0
      %1424 = vmatprep.subr.mxu0 0.0
      %1425 = vmatpush2.msra.mxu0 0.0
      %1426 = vmatprep.subr.mxu0 0.0
      %1427 = vmatpush2.msra.mxu0 0.0
      %1428 = vmatprep.mubr.f32.mxu0 0.0
      %1429 = vmatmul.mubr.f32.gmra.mxu0 %v1265
      %v1430 = vpop.f32.mrf.mxu0
      %v1431 = vadd.f32 0.0, %v1430
      %v1432 = vpop.f32.mrf.mxu0
      %1433 = vmatprep.mubr.f32.mxu0 0.0
      %1434 = vmatmul.mubr.f32.gmra.mxu0 %v1268
      %v1435 = vpop.f32.mrf.mxu0
      %v1436 = vadd.f32 0.0, %v1435
      %v1437 = vpop.f32.mrf.mxu0
      %1438 = vmatprep.mubr.f32.mxu0 0.0
      %1439 = vmatmul.mubr.f32.gmra.mxu0 %v1271
      %v1440 = vpop.f32.mrf.mxu0
      %v1441 = vadd.f32 0.0, %v1440
      %v1442 = vpop.f32.mrf.mxu0
      %1443 = vmatprep.mubr.f32.mxu0 0.0
      %1444 = vmatmul.mubr.f32.gmra.mxu0 %v1274
      %v1445 = vpop.f32.mrf.mxu0
      %v1446 = vadd.f32 0.0, %v1445
      %v1447 = vpop.f32.mrf.mxu0
      %1448 = vmatprep.mubr.f32.mxu0 0.0
      %1449 = vmatmul.mubr.f32.gmra.mxu0 %v1277
      %v1450 = vpop.f32.mrf.mxu0
      %v1451 = vadd.f32 0.0, %v1450
      %v1452 = vpop.f32.mrf.mxu0
      %1453 = vmatprep.mubr.f32.mxu0 0.0
      %1454 = vmatmul.mubr.f32.gmra.mxu0 %v1280
      %v1455 = vpop.f32.mrf.mxu0
      %v1456 = vadd.f32 0.0, %v1455
      %v1457 = vpop.f32.mrf.mxu0
      %1458 = vmatprep.mubr.f32.mxu0 0.0
      %1459 = vmatmul.mubr.f32.gmra.mxu0 %v1283
      %v1460 = vpop.f32.mrf.mxu0
      %v1461 = vadd.f32 0.0, %v1460
      %v1462 = vpop.f32.mrf.mxu0
      %1463 = vmatprep.mubr.f32.mxu0 0.0
      %1464 = vmatmul.mubr.f32.gmra.mxu0 %v1286
      %v1465 = vpop.f32.mrf.mxu0
      %v1466 = vadd.f32 0.0, %v1465
      %v1467 = vpop.f32.mrf.mxu0
      %1468 = vmatprep.mubr.f32.mxu0 0.0
      %1469 = vmatmul.mubr.f32.gmra.mxu0 %v1289
      %v1470 = vpop.f32.mrf.mxu0
      %v1471 = vadd.f32 0.0, %v1470
      %v1472 = vpop.f32.mrf.mxu0
      %1473 = vmatprep.mubr.f32.mxu0 0.0
      %1474 = vmatmul.mubr.f32.gmra.mxu0 %v1292
      %v1475 = vpop.f32.mrf.mxu0
      %v1476 = vadd.f32 0.0, %v1475
      %v1477 = vpop.f32.mrf.mxu0
      %1478 = vmatprep.mubr.f32.mxu0 0.0
      %1479 = vmatmul.mubr.f32.gmra.mxu0 %v1295
      %v1480 = vpop.f32.mrf.mxu0
      %v1481 = vadd.f32 0.0, %v1480
      %v1482 = vpop.f32.mrf.mxu0
      %1483 = vmatprep.mubr.f32.mxu0 0.0
      %1484 = vmatmul.mubr.f32.gmra.mxu0 %v1298
      %v1485 = vpop.f32.mrf.mxu0
      %v1486 = vadd.f32 0.0, %v1485
      %v1487 = vpop.f32.mrf.mxu0
      %1488 = vmatprep.mubr.f32.mxu0 0.0
      %1489 = vmatmul.mubr.f32.gmra.mxu0 %v1301
      %v1490 = vpop.f32.mrf.mxu0
      %v1491 = vadd.f32 0.0, %v1490
      %v1492 = vpop.f32.mrf.mxu0
      %1493 = vmatprep.mubr.f32.mxu0 0.0
      %1494 = vmatmul.mubr.f32.gmra.mxu0 %v1304
      %v1495 = vpop.f32.mrf.mxu0
      %v1496 = vadd.f32 0.0, %v1495
      %v1497 = vpop.f32.mrf.mxu0
      %1498 = vmatprep.mubr.f32.mxu0 0.0
      %1499 = vmatmul.mubr.f32.gmra.mxu0 %v1307
      %v1500 = vpop.f32.mrf.mxu0
      %v1501 = vadd.f32 0.0, %v1500
      %v1502 = vpop.f32.mrf.mxu0
      %1503 = vmatprep.mubr.f32.mxu0 0.0
      %1504 = vmatmul.mubr.f32.gmra.mxu0 %v1310
      %v1505 = vpop.f32.mrf.mxu0
      %v1506 = vadd.f32 0.0, %v1505
      %v1507 = vpop.f32.mrf.mxu0
      %1508 = vmatprep.mubr.f32.mxu0 0.0
      %1509 = vmatmul.mubr.f32.gmra.mxu0 %v1313
      %v1510 = vpop.f32.mrf.mxu0
      %v1511 = vadd.f32 0.0, %v1510
      %v1512 = vpop.f32.mrf.mxu0
      %1513 = vmatprep.mubr.f32.mxu0 0.0
      %1514 = vmatmul.mubr.f32.gmra.mxu0 %v1316
      %v1515 = vpop.f32.mrf.mxu0
      %v1516 = vadd.f32 0.0, %v1515
      %v1517 = vpop.f32.mrf.mxu0
      %1518 = vmatprep.mubr.f32.mxu0 0.0
      %1519 = vmatmul.mubr.f32.gmra.mxu0 %v1319
      %v1520 = vpop.f32.mrf.mxu0
      %v1521 = vadd.f32 0.0, %v1520
      %v1522 = vpop.f32.mrf.mxu0
      %1523 = vmatprep.mubr.f32.mxu0 0.0
      %1524 = vmatmul.mubr.f32.gmra.mxu0 %v1322
      %v1525 = vpop.f32.mrf.mxu0
      %v1526 = vadd.f32 0.0, %v1525
      %v1527 = vpop.f32.mrf.mxu0
      %1528 = vmatprep.mubr.f32.mxu0 0.0
      %1529 = vmatmul.mubr.f32.gmra.mxu0 %v1325
      %v1530 = vpop.f32.mrf.mxu0
      %v1531 = vadd.f32 0.0, %v1530
      %v1532 = vpop.f32.mrf.mxu0
      %1533 = vmatprep.mubr.f32.mxu0 0.0
      %1534 = vmatmul.mubr.f32.gmra.mxu0 %v1328
      %v1535 = vpop.f32.mrf.mxu0
      %v1536 = vadd.f32 0.0, %v1535
      %v1537 = vpop.f32.mrf.mxu0
      %1538 = vmatprep.mubr.f32.mxu0 0.0
      %1539 = vmatmul.mubr.f32.gmra.mxu0 %v1331
      %v1540 = vpop.f32.mrf.mxu0
      %v1541 = vadd.f32 0.0, %v1540
      %v1542 = vpop.f32.mrf.mxu0
      %1543 = vmatprep.mubr.f32.mxu0 0.0
      %1544 = vmatmul.mubr.f32.gmra.mxu0 %v1334
      %v1545 = vpop.f32.mrf.mxu0
      %v1546 = vadd.f32 0.0, %v1545
      %v1547 = vpop.f32.mrf.mxu0
      %1548 = vmatprep.mubr.f32.mxu0 0.0
      %1549 = vmatmul.mubr.f32.gmra.mxu0 %v1337
      %v1550 = vpop.f32.mrf.mxu0
      %v1551 = vadd.f32 0.0, %v1550
      %v1552 = vpop.f32.mrf.mxu0
      %1553 = vmatprep.mubr.f32.mxu0 0.0
      %1554 = vmatmul.mubr.f32.gmra.mxu0 %v1340
      %v1555 = vpop.f32.mrf.mxu0
      %v1556 = vadd.f32 0.0, %v1555
      %v1557 = vpop.f32.mrf.mxu0
      %1558 = vmatprep.mubr.f32.mxu0 0.0
      %1559 = vmatmul.mubr.f32.gmra.mxu0 %v1343
      %v1560 = vpop.f32.mrf.mxu0
      %v1561 = vadd.f32 0.0, %v1560
      %v1562 = vpop.f32.mrf.mxu0
      %1563 = vmatprep.mubr.f32.mxu0 0.0
      %1564 = vmatmul.mubr.f32.gmra.mxu0 %v1346
      %v1565 = vpop.f32.mrf.mxu0
      %v1566 = vadd.f32 0.0, %v1565
      %v1567 = vpop.f32.mrf.mxu0
      %1568 = vmatprep.mubr.f32.mxu0 0.0
      %1569 = vmatmul.mubr.f32.gmra.mxu0 %v1349
      %v1570 = vpop.f32.mrf.mxu0
      %v1571 = vadd.f32 0.0, %v1570
      %v1572 = vpop.f32.mrf.mxu0
      %1573 = vmatprep.mubr.f32.mxu0 0.0
      %1574 = vmatmul.mubr.f32.gmra.mxu0 %v1352
      %v1575 = vpop.f32.mrf.mxu0
      %v1576 = vadd.f32 0.0, %v1575
      %v1577 = vpop.f32.mrf.mxu0
      %1578 = vmatprep.mubr.f32.mxu0 0.0
      %1579 = vmatmul.mubr.f32.gmra.mxu0 %v1355
      %v1580 = vpop.f32.mrf.mxu0
      %v1581 = vadd.f32 0.0, %v1580
      %v1582 = vpop.f32.mrf.mxu0
      %1583 = vmatprep.mubr.f32.mxu0 0.0
      %1584 = vmatmul.mubr.f32.gmra.mxu0 %v1358
      %v1585 = vpop.f32.mrf.mxu0
      %v1586 = vadd.f32 0.0, %v1585
      %v1587 = vpop.f32.mrf.mxu0
      %1588 = vdwg.mxu0
      %v1590 = vsel %vm1263, %v973, 0
      %v1593 = vsel %vm1263, %v974, 0
      %v1596 = vsel %vm1263, %v975, 0
      %v1599 = vsel %vm1263, %v976, 0
      %v1602 = vsel %vm1263, %v977, 0
      %v1605 = vsel %vm1263, %v978, 0
      %v1608 = vsel %vm1263, %v979, 0
      %v1611 = vsel %vm1263, %v980, 0
      %v1614 = vsel %vm1263, %v981, 0
      %v1617 = vsel %vm1263, %v982, 0
      %v1620 = vsel %vm1263, %v983, 0
      %v1623 = vsel %vm1263, %v984, 0
      %v1626 = vsel %vm1263, %v985, 0
      %v1629 = vsel %vm1263, %v986, 0
      %v1632 = vsel %vm1263, %v987, 0
      %v1635 = vsel %vm1263, %v988, 0
      %v1638 = vsel %vm1263, %v989, 0
      %v1641 = vsel %vm1263, %v990, 0
      %v1644 = vsel %vm1263, %v991, 0
      %v1647 = vsel %vm1263, %v992, 0
      %v1650 = vsel %vm1263, %v993, 0
      %v1653 = vsel %vm1263, %v994, 0
      %v1656 = vsel %vm1263, %v995, 0
      %v1659 = vsel %vm1263, %v996, 0
      %v1662 = vsel %vm1263, %v997, 0
      %v1665 = vsel %vm1263, %v998, 0
      %v1668 = vsel %vm1263, %v999, 0
      %v1671 = vsel %vm1263, %v1000, 0
      %v1674 = vsel %vm1263, %v1001, 0
      %v1677 = vsel %vm1263, %v1002, 0
      %v1680 = vsel %vm1263, %v1003, 0
      %v1683 = vsel %vm1263, %v1004, 0
      %v1686 = vsel %vm1360, %v1005, 0
      %1688 = vmatprep.subr.mxu0 0.0
      %1689 = vmatpush1.msra.mxu0 0.0
      %1690 = vmatprep.subr.mxu0 0.0
      %1691 = vmatpush1.msra.mxu0 0.0
      %1692 = vmatprep.subr.mxu0 0.0
      %1693 = vmatpush1.msra.mxu0 0.0
      %1694 = vmatprep.subr.mxu0 0.0
      %1695 = vmatpush1.msra.mxu0 0.0
      %1696 = vmatprep.subr.mxu0 0.0
      %1697 = vmatpush1.msra.mxu0 0.0
      %1698 = vmatprep.subr.mxu0 0.0
      %1699 = vmatpush1.msra.mxu0 0.0
      %1700 = vmatprep.subr.mxu0 0.0
      %1701 = vmatpush1.msra.mxu0 0.0
      %1702 = vmatprep.subr.mxu0 0.0
      %1703 = vmatpush1.msra.mxu0 0.0
      %1704 = vmatprep.subr.mxu0 0.0
      %1705 = vmatpush1.msra.mxu0 0.0
      %1706 = vmatprep.subr.mxu0 0.0
      %1707 = vmatpush1.msra.mxu0 0.0
      %1708 = vmatprep.subr.mxu0 0.0
      %1709 = vmatpush1.msra.mxu0 0.0
      %1710 = vmatprep.subr.mxu0 0.0
      %1711 = vmatpush1.msra.mxu0 0.0
      %1712 = vmatprep.subr.mxu0 0.0
      %1713 = vmatpush1.msra.mxu0 0.0
      %1714 = vmatprep.subr.mxu0 0.0
      %1715 = vmatpush1.msra.mxu0 0.0
      %1716 = vmatprep.subr.mxu0 0.0
      %1717 = vmatpush1.msra.mxu0 0.0
      %1718 = vmatprep.subr.mxu0 0.0
      %1719 = vmatpush1.msra.mxu0 %v1686
      %1720 = vmatprep.subr.mxu0 0.0
      %1721 = vmatpush2.msra.mxu0 0.0
      %1722 = vmatprep.subr.mxu0 0.0
      %1723 = vmatpush2.msra.mxu0 0.0
      %1724 = vmatprep.subr.mxu0 0.0
      %1725 = vmatpush2.msra.mxu0 0.0
      %1726 = vmatprep.subr.mxu0 0.0
      %1727 = vmatpush2.msra.mxu0 0.0
      %1728 = vmatprep.subr.mxu0 0.0
      %1729 = vmatpush2.msra.mxu0 0.0
      %1730 = vmatprep.subr.mxu0 0.0
      %1731 = vmatpush2.msra.mxu0 0.0
      %1732 = vmatprep.subr.mxu0 0.0
      %1733 = vmatpush2.msra.mxu0 0.0
      %1734 = vmatprep.subr.mxu0 0.0
      %1735 = vmatpush2.msra.mxu0 0.0
      %1736 = vmatprep.subr.mxu0 0.0
      %1737 = vmatpush2.msra.mxu0 0.0
      %1738 = vmatprep.subr.mxu0 0.0
      %1739 = vmatpush2.msra.mxu0 0.0
      %1740 = vmatprep.subr.mxu0 0.0
      %1741 = vmatpush2.msra.mxu0 0.0
      %1742 = vmatprep.subr.mxu0 0.0
      %1743 = vmatpush2.msra.mxu0 0.0
      %1744 = vmatprep.subr.mxu0 0.0
      %1745 = vmatpush2.msra.mxu0 0.0
      %1746 = vmatprep.subr.mxu0 0.0
      %1747 = vmatpush2.msra.mxu0 0.0
      %1748 = vmatprep.subr.mxu0 0.0
      %1749 = vmatpush2.msra.mxu0 0.0
      %1750 = vmatprep.subr.mxu0 0.0
      %1751 = vmatpush2.msra.mxu0 0.0
      %1752 = vmatprep.mubr.f32.mxu0 0.0
      %1753 = vmatmul.mubr.f32.gmra.mxu0 %v1590
      %v1754 = vpop.f32.mrf.mxu0
      %v1755 = vadd.f32 %v1431, %v1754
      %v1756 = vpop.f32.mrf.mxu0
      %1757 = vmatprep.mubr.f32.mxu0 0.0
      %1758 = vmatmul.mubr.f32.gmra.mxu0 %v1593
      %v1759 = vpop.f32.mrf.mxu0
      %v1760 = vadd.f32 %v1436, %v1759
      %v1761 = vpop.f32.mrf.mxu0
      %1762 = vmatprep.mubr.f32.mxu0 0.0
      %1763 = vmatmul.mubr.f32.gmra.mxu0 %v1596
      %v1764 = vpop.f32.mrf.mxu0
      %v1765 = vadd.f32 %v1441, %v1764
      %v1766 = vpop.f32.mrf.mxu0
      %1767 = vmatprep.mubr.f32.mxu0 0.0
      %1768 = vmatmul.mubr.f32.gmra.mxu0 %v1599
      %v1769 = vpop.f32.mrf.mxu0
      %v1770 = vadd.f32 %v1446, %v1769
      %v1771 = vpop.f32.mrf.mxu0
      %1772 = vmatprep.mubr.f32.mxu0 0.0
      %1773 = vmatmul.mubr.f32.gmra.mxu0 %v1602
      %v1774 = vpop.f32.mrf.mxu0
      %v1775 = vadd.f32 %v1451, %v1774
      %v1776 = vpop.f32.mrf.mxu0
      %1777 = vmatprep.mubr.f32.mxu0 0.0
      %1778 = vmatmul.mubr.f32.gmra.mxu0 %v1605
      %v1779 = vpop.f32.mrf.mxu0
      %v1780 = vadd.f32 %v1456, %v1779
      %v1781 = vpop.f32.mrf.mxu0
      %1782 = vmatprep.mubr.f32.mxu0 0.0
      %1783 = vmatmul.mubr.f32.gmra.mxu0 %v1608
      %v1784 = vpop.f32.mrf.mxu0
      %v1785 = vadd.f32 %v1461, %v1784
      %v1786 = vpop.f32.mrf.mxu0
      %1787 = vmatprep.mubr.f32.mxu0 0.0
      %1788 = vmatmul.mubr.f32.gmra.mxu0 %v1611
      %v1789 = vpop.f32.mrf.mxu0
      %v1790 = vadd.f32 %v1466, %v1789
      %v1791 = vpop.f32.mrf.mxu0
      %1792 = vmatprep.mubr.f32.mxu0 0.0
      %1793 = vmatmul.mubr.f32.gmra.mxu0 %v1614
      %v1794 = vpop.f32.mrf.mxu0
      %v1795 = vadd.f32 %v1471, %v1794
      %v1796 = vpop.f32.mrf.mxu0
      %1797 = vmatprep.mubr.f32.mxu0 0.0
      %1798 = vmatmul.mubr.f32.gmra.mxu0 %v1617
      %v1799 = vpop.f32.mrf.mxu0
      %v1800 = vadd.f32 %v1476, %v1799
      %v1801 = vpop.f32.mrf.mxu0
      %1802 = vmatprep.mubr.f32.mxu0 0.0
      %1803 = vmatmul.mubr.f32.gmra.mxu0 %v1620
      %v1804 = vpop.f32.mrf.mxu0
      %v1805 = vadd.f32 %v1481, %v1804
      %v1806 = vpop.f32.mrf.mxu0
      %1807 = vmatprep.mubr.f32.mxu0 0.0
      %1808 = vmatmul.mubr.f32.gmra.mxu0 %v1623
      %v1809 = vpop.f32.mrf.mxu0
      %v1810 = vadd.f32 %v1486, %v1809
      %v1811 = vpop.f32.mrf.mxu0
      %1812 = vmatprep.mubr.f32.mxu0 0.0
      %1813 = vmatmul.mubr.f32.gmra.mxu0 %v1626
      %v1814 = vpop.f32.mrf.mxu0
      %v1815 = vadd.f32 %v1491, %v1814
      %v1816 = vpop.f32.mrf.mxu0
      %1817 = vmatprep.mubr.f32.mxu0 0.0
      %1818 = vmatmul.mubr.f32.gmra.mxu0 %v1629
      %v1819 = vpop.f32.mrf.mxu0
      %v1820 = vadd.f32 %v1496, %v1819
      %v1821 = vpop.f32.mrf.mxu0
      %1822 = vmatprep.mubr.f32.mxu0 0.0
      %1823 = vmatmul.mubr.f32.gmra.mxu0 %v1632
      %v1824 = vpop.f32.mrf.mxu0
      %v1825 = vadd.f32 %v1501, %v1824
      %v1826 = vpop.f32.mrf.mxu0
      %1827 = vmatprep.mubr.f32.mxu0 0.0
      %1828 = vmatmul.mubr.f32.gmra.mxu0 %v1635
      %v1829 = vpop.f32.mrf.mxu0
      %v1830 = vadd.f32 %v1506, %v1829
      %v1831 = vpop.f32.mrf.mxu0
      %1832 = vmatprep.mubr.f32.mxu0 0.0
      %1833 = vmatmul.mubr.f32.gmra.mxu0 %v1638
      %v1834 = vpop.f32.mrf.mxu0
      %v1835 = vadd.f32 %v1511, %v1834
      %v1836 = vpop.f32.mrf.mxu0
      %1837 = vmatprep.mubr.f32.mxu0 0.0
      %1838 = vmatmul.mubr.f32.gmra.mxu0 %v1641
      %v1839 = vpop.f32.mrf.mxu0
      %v1840 = vadd.f32 %v1516, %v1839
      %v1841 = vpop.f32.mrf.mxu0
      %1842 = vmatprep.mubr.f32.mxu0 0.0
      %1843 = vmatmul.mubr.f32.gmra.mxu0 %v1644
      %v1844 = vpop.f32.mrf.mxu0
      %v1845 = vadd.f32 %v1521, %v1844
      %v1846 = vpop.f32.mrf.mxu0
      %1847 = vmatprep.mubr.f32.mxu0 0.0
      %1848 = vmatmul.mubr.f32.gmra.mxu0 %v1647
      %v1849 = vpop.f32.mrf.mxu0
      %v1850 = vadd.f32 %v1526, %v1849
      %v1851 = vpop.f32.mrf.mxu0
      %1852 = vmatprep.mubr.f32.mxu0 0.0
      %1853 = vmatmul.mubr.f32.gmra.mxu0 %v1650
      %v1854 = vpop.f32.mrf.mxu0
      %v1855 = vadd.f32 %v1531, %v1854
      %v1856 = vpop.f32.mrf.mxu0
      %1857 = vmatprep.mubr.f32.mxu0 0.0
      %1858 = vmatmul.mubr.f32.gmra.mxu0 %v1653
      %v1859 = vpop.f32.mrf.mxu0
      %v1860 = vadd.f32 %v1536, %v1859
      %v1861 = vpop.f32.mrf.mxu0
      %1862 = vmatprep.mubr.f32.mxu0 0.0
      %1863 = vmatmul.mubr.f32.gmra.mxu0 %v1656
      %v1864 = vpop.f32.mrf.mxu0
      %v1865 = vadd.f32 %v1541, %v1864
      %v1866 = vpop.f32.mrf.mxu0
      %1867 = vmatprep.mubr.f32.mxu0 0.0
      %1868 = vmatmul.mubr.f32.gmra.mxu0 %v1659
      %v1869 = vpop.f32.mrf.mxu0
      %v1870 = vadd.f32 %v1546, %v1869
      %v1871 = vpop.f32.mrf.mxu0
      %1872 = vmatprep.mubr.f32.mxu0 0.0
      %1873 = vmatmul.mubr.f32.gmra.mxu0 %v1662
      %v1874 = vpop.f32.mrf.mxu0
      %v1875 = vadd.f32 %v1551, %v1874
      %v1876 = vpop.f32.mrf.mxu0
      %1877 = vmatprep.mubr.f32.mxu0 0.0
      %1878 = vmatmul.mubr.f32.gmra.mxu0 %v1665
      %v1879 = vpop.f32.mrf.mxu0
      %v1880 = vadd.f32 %v1556, %v1879
      %v1881 = vpop.f32.mrf.mxu0
      %1882 = vmatprep.mubr.f32.mxu0 0.0
      %1883 = vmatmul.mubr.f32.gmra.mxu0 %v1668
      %v1884 = vpop.f32.mrf.mxu0
      %v1885 = vadd.f32 %v1561, %v1884
      %v1886 = vpop.f32.mrf.mxu0
      %1887 = vmatprep.mubr.f32.mxu0 0.0
      %1888 = vmatmul.mubr.f32.gmra.mxu0 %v1671
      %v1889 = vpop.f32.mrf.mxu0
      %v1890 = vadd.f32 %v1566, %v1889
      %v1891 = vpop.f32.mrf.mxu0
      %1892 = vmatprep.mubr.f32.mxu0 0.0
      %1893 = vmatmul.mubr.f32.gmra.mxu0 %v1674
      %v1894 = vpop.f32.mrf.mxu0
      %v1895 = vadd.f32 %v1571, %v1894
      %v1896 = vpop.f32.mrf.mxu0
      %1897 = vmatprep.mubr.f32.mxu0 0.0
      %1898 = vmatmul.mubr.f32.gmra.mxu0 %v1677
      %v1899 = vpop.f32.mrf.mxu0
      %v1900 = vadd.f32 %v1576, %v1899
      %v1901 = vpop.f32.mrf.mxu0
      %1902 = vmatprep.mubr.f32.mxu0 0.0
      %1903 = vmatmul.mubr.f32.gmra.mxu0 %v1680
      %v1904 = vpop.f32.mrf.mxu0
      %v1905 = vadd.f32 %v1581, %v1904
      %v1906 = vpop.f32.mrf.mxu0
      %1907 = vmatprep.mubr.f32.mxu0 0.0
      %1908 = vmatmul.mubr.f32.gmra.mxu0 %v1683
      %v1909 = vpop.f32.mrf.mxu0
      %v1910 = vadd.f32 %v1586, %v1909
      %v1911 = vpop.f32.mrf.mxu0
      %1912 = vdwg.mxu0
      %v1913 = vrot.slane %v299, 1
      %v1914 = vrot.slane %v300, 1
      %v1915 = vrot.slane %v301, 1
      %v1916 = vrot.slane %v302, 1
      %v1917 = vrot.slane %v303, 1
      %v1918 = vrot.slane %v304, 1
      %v1919 = vrot.slane %v305, 1
      %v1920 = vrot.slane %v306, 1
      %v1921 = vrot.slane %v307, 1
      %v1922 = vrot.slane %v308, 1
      %v1923 = vrot.slane %v309, 1
      %v1924 = vrot.slane %v310, 1
      %v1925 = vrot.slane %v311, 1
      %v1926 = vrot.slane %v312, 1
      %v1927 = vrot.slane %v313, 1
      %v1928 = vrot.slane %v314, 1
      %v1929 = vrot.slane %v315, 1
      %v1930 = vrot.slane %v316, 1
      %v1931 = vrot.slane %v317, 1
      %v1932 = vrot.slane %v318, 1
      %v1933 = vrot.slane %v319, 1
      %v1934 = vrot.slane %v320, 1
      %v1935 = vrot.slane %v321, 1
      %v1936 = vrot.slane %v322, 1
      %v1937 = vrot.slane %v323, 1
      %v1938 = vrot.slane %v324, 1
      %v1939 = vrot.slane %v325, 1
      %v1940 = vrot.slane %v326, 1
      %v1941 = vrot.slane %v327, 1
      %v1942 = vrot.slane %v328, 1
      %v1943 = vrot.slane %v329, 1
      %v1944 = vrot.slane %v330, 1
      %vm1945 = vcmp.lt.s32.totalorder %v332, 7
      %v1946 = vsel %vm1945, %v1943, %v1944
      %v1947 = vsel %vm1945, %v1942, %v1943
      %v1948 = vsel %vm1945, %v1941, %v1942
      %v1949 = vsel %vm1945, %v1940, %v1941
      %v1950 = vsel %vm1945, %v1939, %v1940
      %v1951 = vsel %vm1945, %v1938, %v1939
      %v1952 = vsel %vm1945, %v1937, %v1938
      %v1953 = vsel %vm1945, %v1936, %v1937
      %v1954 = vsel %vm1945, %v1935, %v1936
      %v1955 = vsel %vm1945, %v1934, %v1935
      %v1956 = vsel %vm1945, %v1933, %v1934
      %v1957 = vsel %vm1945, %v1932, %v1933
      %v1958 = vsel %vm1945, %v1931, %v1932
      %v1959 = vsel %vm1945, %v1930, %v1931
      %v1960 = vsel %vm1945, %v1929, %v1930
      %v1961 = vsel %vm1945, %v1928, %v1929
      %v1962 = vsel %vm1945, %v1927, %v1928
      %v1963 = vsel %vm1945, %v1926, %v1927
      %v1964 = vsel %vm1945, %v1925, %v1926
      %v1965 = vsel %vm1945, %v1924, %v1925
      %v1966 = vsel %vm1945, %v1923, %v1924
      %v1967 = vsel %vm1945, %v1922, %v1923
      %v1968 = vsel %vm1945, %v1921, %v1922
      %v1969 = vsel %vm1945, %v1920, %v1921
      %v1970 = vsel %vm1945, %v1919, %v1920
      %v1971 = vsel %vm1945, %v1918, %v1919
      %v1972 = vsel %vm1945, %v1917, %v1918
      %v1973 = vsel %vm1945, %v1916, %v1917
      %v1974 = vsel %vm1945, %v1915, %v1916
      %v1975 = vsel %vm1945, %v1914, %v1915
      %v1976 = vsel %vm1945, %v1913, %v1914
      %v1977 = vsel %vm1945, %v1944, %v1913
      %v1978 = vadd.f32 %v524, 1.0
      %v1979 = vadd.f32 %v525, 1.0
      %v1980 = vadd.f32 %v526, 1.0
      %v1981 = vadd.f32 %v527, 1.0
      %v1982 = vadd.f32 %v528, 1.0
      %v1983 = vadd.f32 %v529, 1.0
      %v1984 = vadd.f32 %v530, 1.0
      %v1985 = vadd.f32 %v531, 1.0
      %v1986 = vadd.f32 %v532, 1.0
      %v1987 = vadd.f32 %v533, 1.0
      %v1988 = vadd.f32 %v534, 1.0
      %v1989 = vadd.f32 %v535, 1.0
      %v1990 = vadd.f32 %v536, 1.0
      %v1991 = vadd.f32 %v537, 1.0
      %v1992 = vadd.f32 %v538, 1.0
      %v1993 = vadd.f32 %v539, 1.0
      %v1994 = vadd.f32 %v540, 1.0
      %v1995 = vadd.f32 %v541, 1.0
      %v1996 = vadd.f32 %v542, 1.0
      %v1997 = vadd.f32 %v543, 1.0
      %v1998 = vadd.f32 %v544, 1.0
      %v1999 = vadd.f32 %v545, 1.0
      %v2000 = vadd.f32 %v546, 1.0
      %v2001 = vadd.f32 %v547, 1.0
      %v2002 = vadd.f32 %v548, 1.0
      %v2003 = vadd.f32 %v549, 1.0
      %v2004 = vadd.f32 %v550, 1.0
      %v2005 = vadd.f32 %v551, 1.0
      %v2006 = vadd.f32 %v552, 1.0
      %v2007 = vadd.f32 %v553, 1.0
      %v2008 = vadd.f32 %v554, 1.0
      %v2009 = vadd.f32 %v555, 1.0
      %vm2010 = vcmp.ge.f32.partialorder %v1978, 0.0
      %vm2011 = vcmp.ge.f32.partialorder %v1979, 0.0
      %vm2012 = vcmp.ge.f32.partialorder %v1980, 0.0
      %vm2013 = vcmp.ge.f32.partialorder %v1981, 0.0
      %vm2014 = vcmp.ge.f32.partialorder %v1982, 0.0
      %vm2015 = vcmp.ge.f32.partialorder %v1983, 0.0
      %vm2016 = vcmp.ge.f32.partialorder %v1984, 0.0
      %vm2017 = vcmp.ge.f32.partialorder %v1985, 0.0
      %vm2018 = vcmp.ge.f32.partialorder %v1986, 0.0
      %vm2019 = vcmp.ge.f32.partialorder %v1987, 0.0
      %vm2020 = vcmp.ge.f32.partialorder %v1988, 0.0
      %vm2021 = vcmp.ge.f32.partialorder %v1989, 0.0
      %vm2022 = vcmp.ge.f32.partialorder %v1990, 0.0
      %vm2023 = vcmp.ge.f32.partialorder %v1991, 0.0
      %vm2024 = vcmp.ge.f32.partialorder %v1992, 0.0
      %vm2025 = vcmp.ge.f32.partialorder %v1993, 0.0
      %vm2026 = vcmp.ge.f32.partialorder %v1994, 0.0
      %vm2027 = vcmp.ge.f32.partialorder %v1995, 0.0
      %vm2028 = vcmp.ge.f32.partialorder %v1996, 0.0
      %vm2029 = vcmp.ge.f32.partialorder %v1997, 0.0
      %vm2030 = vcmp.ge.f32.partialorder %v1998, 0.0
      %vm2031 = vcmp.ge.f32.partialorder %v1999, 0.0
      %vm2032 = vcmp.ge.f32.partialorder %v2000, 0.0
      %vm2033 = vcmp.ge.f32.partialorder %v2001, 0.0
      %vm2034 = vcmp.ge.f32.partialorder %v2002, 0.0
      %vm2035 = vcmp.ge.f32.partialorder %v2003, 0.0
      %vm2036 = vcmp.ge.f32.partialorder %v2004, 0.0
      %vm2037 = vcmp.ge.f32.partialorder %v2005, 0.0
      %vm2038 = vcmp.ge.f32.partialorder %v2006, 0.0
      %vm2039 = vcmp.ge.f32.partialorder %v2007, 0.0
      %vm2040 = vcmp.ge.f32.partialorder %v2008, 0.0
      %vm2041 = vcmp.ge.f32.partialorder %v2009, 0.0
      %vm2042 = vmand %vm717, %vm2010
      %vm2043 = vmand %vm718, %vm2011
      %vm2044 = vmand %vm719, %vm2012
      %vm2045 = vmand %vm720, %vm2013
      %vm2046 = vmand %vm721, %vm2014
      %vm2047 = vmand %vm722, %vm2015
      %vm2048 = vmand %vm723, %vm2016
      %vm2049 = vmand %vm724, %vm2017
      %vm2050 = vmand %vm725, %vm2018
      %vm2051 = vmand %vm726, %vm2019
      %vm2052 = vmand %vm727, %vm2020
      %vm2053 = vmand %vm728, %vm2021
      %vm2054 = vmand %vm729, %vm2022
      %vm2055 = vmand %vm730, %vm2023
      %vm2056 = vmand %vm731, %vm2024
      %vm2057 = vmand %vm732, %vm2025
      %vm2058 = vmand %vm733, %vm2026
      %vm2059 = vmand %vm734, %vm2027
      %vm2060 = vmand %vm735, %vm2028
      %vm2061 = vmand %vm736, %vm2029
      %vm2062 = vmand %vm737, %vm2030
      %vm2063 = vmand %vm738, %vm2031
      %vm2064 = vmand %vm739, %vm2032
      %vm2065 = vmand %vm740, %vm2033
      %vm2066 = vmand %vm741, %vm2034
      %vm2067 = vmand %vm742, %vm2035
      %vm2068 = vmand %vm743, %vm2036
      %vm2069 = vmand %vm744, %vm2037
      %vm2070 = vmand %vm745, %vm2038
      %vm2071 = vmand %vm746, %vm2039
      %vm2072 = vmand %vm747, %vm2040
      %vm2073 = vmand %vm748, %vm2041
      %vm2074 = vcmp.le.f32.partialorder %v1978, 15.0
      %vm2075 = vcmp.le.f32.partialorder %v1979, 15.0
      %vm2076 = vcmp.le.f32.partialorder %v1980, 15.0
      %vm2077 = vcmp.le.f32.partialorder %v1981, 15.0
      %vm2078 = vcmp.le.f32.partialorder %v1982, 15.0
      %vm2079 = vcmp.le.f32.partialorder %v1983, 15.0
      %vm2080 = vcmp.le.f32.partialorder %v1984, 15.0
      %vm2081 = vcmp.le.f32.partialorder %v1985, 15.0
      %vm2082 = vcmp.le.f32.partialorder %v1986, 15.0
      %vm2083 = vcmp.le.f32.partialorder %v1987, 15.0
      %vm2084 = vcmp.le.f32.partialorder %v1988, 15.0
      %vm2085 = vcmp.le.f32.partialorder %v1989, 15.0
      %vm2086 = vcmp.le.f32.partialorder %v1990, 15.0
      %vm2087 = vcmp.le.f32.partialorder %v1991, 15.0
      %vm2088 = vcmp.le.f32.partialorder %v1992, 15.0
      %vm2089 = vcmp.le.f32.partialorder %v1993, 15.0
      %vm2090 = vcmp.le.f32.partialorder %v1994, 15.0
      %vm2091 = vcmp.le.f32.partialorder %v1995, 15.0
      %vm2092 = vcmp.le.f32.partialorder %v1996, 15.0
      %vm2093 = vcmp.le.f32.partialorder %v1997, 15.0
      %vm2094 = vcmp.le.f32.partialorder %v1998, 15.0
      %vm2095 = vcmp.le.f32.partialorder %v1999, 15.0
      %vm2096 = vcmp.le.f32.partialorder %v2000, 15.0
      %vm2097 = vcmp.le.f32.partialorder %v2001, 15.0
      %vm2098 = vcmp.le.f32.partialorder %v2002, 15.0
      %vm2099 = vcmp.le.f32.partialorder %v2003, 15.0
      %vm2100 = vcmp.le.f32.partialorder %v2004, 15.0
      %vm2101 = vcmp.le.f32.partialorder %v2005, 15.0
      %vm2102 = vcmp.le.f32.partialorder %v2006, 15.0
      %vm2103 = vcmp.le.f32.partialorder %v2007, 15.0
      %vm2104 = vcmp.le.f32.partialorder %v2008, 15.0
      %vm2105 = vcmp.le.f32.partialorder %v2009, 15.0
      %vm2106 = vmand %vm2042, %vm2074
      %vm2107 = vmand %vm2043, %vm2075
      %vm2108 = vmand %vm2044, %vm2076
      %vm2109 = vmand %vm2045, %vm2077
      %vm2110 = vmand %vm2046, %vm2078
      %vm2111 = vmand %vm2047, %vm2079
      %vm2112 = vmand %vm2048, %vm2080
      %vm2113 = vmand %vm2049, %vm2081
      %vm2114 = vmand %vm2050, %vm2082
      %vm2115 = vmand %vm2051, %vm2083
      %vm2116 = vmand %vm2052, %vm2084
      %vm2117 = vmand %vm2053, %vm2085
      %vm2118 = vmand %vm2054, %vm2086
      %vm2119 = vmand %vm2055, %vm2087
      %vm2120 = vmand %vm2056, %vm2088
      %vm2121 = vmand %vm2057, %vm2089
      %vm2122 = vmand %vm2058, %vm2090
      %vm2123 = vmand %vm2059, %vm2091
      %vm2124 = vmand %vm2060, %vm2092
      %vm2125 = vmand %vm2061, %vm2093
      %vm2126 = vmand %vm2062, %vm2094
      %vm2127 = vmand %vm2063, %vm2095
      %vm2128 = vmand %vm2064, %vm2096
      %vm2129 = vmand %vm2065, %vm2097
      %vm2130 = vmand %vm2066, %vm2098
      %vm2131 = vmand %vm2067, %vm2099
      %vm2132 = vmand %vm2068, %vm2100
      %vm2133 = vmand %vm2069, %vm2101
      %vm2134 = vmand %vm2070, %vm2102
      %vm2135 = vmand %vm2071, %vm2103
      %vm2136 = vmand %vm2072, %vm2104
      %vm2137 = vmand %vm2073, %vm2105
      %v2138 = vsel %vm2106, 1, 0
      %v2139 = vsel %vm2107, 1, 0
      %v2140 = vsel %vm2108, 1, 0
      %v2141 = vsel %vm2109, 1, 0
      %v2142 = vsel %vm2110, 1, 0
      %v2143 = vsel %vm2111, 1, 0
      %v2144 = vsel %vm2112, 1, 0
      %v2145 = vsel %vm2113, 1, 0
      %v2146 = vsel %vm2114, 1, 0
      %v2147 = vsel %vm2115, 1, 0
      %v2148 = vsel %vm2116, 1, 0
      %v2149 = vsel %vm2117, 1, 0
      %v2150 = vsel %vm2118, 1, 0
      %v2151 = vsel %vm2119, 1, 0
      %v2152 = vsel %vm2120, 1, 0
      %v2153 = vsel %vm2121, 1, 0
      %v2154 = vsel %vm2122, 1, 0
      %v2155 = vsel %vm2123, 1, 0
      %v2156 = vsel %vm2124, 1, 0
      %v2157 = vsel %vm2125, 1, 0
      %v2158 = vsel %vm2126, 1, 0
      %v2159 = vsel %vm2127, 1, 0
      %v2160 = vsel %vm2128, 1, 0
      %v2161 = vsel %vm2129, 1, 0
      %v2162 = vsel %vm2130, 1, 0
      %v2163 = vsel %vm2131, 1, 0
      %v2164 = vsel %vm2132, 1, 0
      %v2165 = vsel %vm2133, 1, 0
      %v2166 = vsel %vm2134, 1, 0
      %v2167 = vsel %vm2135, 1, 0
      %v2168 = vsel %vm2136, 1, 0
      %v2169 = vsel %vm2137, 1, 0
      %v2170 = vcvt.s32.f32 %v2138
      %v2171 = vcvt.s32.f32 %v2139
      %v2172 = vcvt.s32.f32 %v2140
      %v2173 = vcvt.s32.f32 %v2141
      %v2174 = vcvt.s32.f32 %v2142
      %v2175 = vcvt.s32.f32 %v2143
      %v2176 = vcvt.s32.f32 %v2144
      %v2177 = vcvt.s32.f32 %v2145
      %v2178 = vcvt.s32.f32 %v2146
      %v2179 = vcvt.s32.f32 %v2147
      %v2180 = vcvt.s32.f32 %v2148
      %v2181 = vcvt.s32.f32 %v2149
      %v2182 = vcvt.s32.f32 %v2150
      %v2183 = vcvt.s32.f32 %v2151
      %v2184 = vcvt.s32.f32 %v2152
      %v2185 = vcvt.s32.f32 %v2153
      %v2186 = vcvt.s32.f32 %v2154
      %v2187 = vcvt.s32.f32 %v2155
      %v2188 = vcvt.s32.f32 %v2156
      %v2189 = vcvt.s32.f32 %v2157
      %v2190 = vcvt.s32.f32 %v2158
      %v2191 = vcvt.s32.f32 %v2159
      %v2192 = vcvt.s32.f32 %v2160
      %v2193 = vcvt.s32.f32 %v2161
      %v2194 = vcvt.s32.f32 %v2162
      %v2195 = vcvt.s32.f32 %v2163
      %v2196 = vcvt.s32.f32 %v2164
      %v2197 = vcvt.s32.f32 %v2165
      %v2198 = vcvt.s32.f32 %v2166
      %v2199 = vcvt.s32.f32 %v2167
      %v2200 = vcvt.s32.f32 %v2168
      %v2201 = vcvt.s32.f32 %v2169
      %v2202 = vmul.f32 %v1946, %v2170
      %v2203 = vmul.f32 %v1977, %v2171
      %v2204 = vmul.f32 %v1976, %v2172
      %v2205 = vmul.f32 %v1975, %v2173
      %v2206 = vmul.f32 %v1974, %v2174
      %v2207 = vmul.f32 %v1973, %v2175
      %v2208 = vmul.f32 %v1972, %v2176
      %v2209 = vmul.f32 %v1971, %v2177
      %v2210 = vmul.f32 %v1970, %v2178
      %v2211 = vmul.f32 %v1969, %v2179
      %v2212 = vmul.f32 %v1968, %v2180
      %v2213 = vmul.f32 %v1967, %v2181
      %v2214 = vmul.f32 %v1966, %v2182
      %v2215 = vmul.f32 %v1965, %v2183
      %v2216 = vmul.f32 %v1964, %v2184
      %v2217 = vmul.f32 %v1963, %v2185
      %v2218 = vmul.f32 %v1962, %v2186
      %v2219 = vmul.f32 %v1961, %v2187
      %v2220 = vmul.f32 %v1960, %v2188
      %v2221 = vmul.f32 %v1959, %v2189
      %v2222 = vmul.f32 %v1958, %v2190
      %v2223 = vmul.f32 %v1957, %v2191
      %v2224 = vmul.f32 %v1956, %v2192
      %v2225 = vmul.f32 %v1955, %v2193
      %v2226 = vmul.f32 %v1954, %v2194
      %v2227 = vmul.f32 %v1953, %v2195
      %v2228 = vmul.f32 %v1952, %v2196
      %v2229 = vmul.f32 %v1951, %v2197
      %v2230 = vmul.f32 %v1950, %v2198
      %v2231 = vmul.f32 %v1949, %v2199
      %v2232 = vmul.f32 %v1948, %v2200
      %v2233 = vmul.f32 %v1947, %v2201
      %v2234 = vld [vmem:[%s1 + $0x8] sm:$0xf]
      %v2236 = vsel %vm1263, %v2202, 0
      %v2239 = vsel %vm1263, %v2203, 0
      %v2242 = vsel %vm1263, %v2204, 0
      %v2245 = vsel %vm1263, %v2205, 0
      %v2248 = vsel %vm1263, %v2206, 0
      %v2251 = vsel %vm1263, %v2207, 0
      %v2254 = vsel %vm1263, %v2208, 0
      %v2257 = vsel %vm1263, %v2209, 0
      %v2260 = vsel %vm1263, %v2210, 0
      %v2263 = vsel %vm1263, %v2211, 0
      %v2266 = vsel %vm1263, %v2212, 0
      %v2269 = vsel %vm1263, %v2213, 0
      %v2272 = vsel %vm1263, %v2214, 0
      %v2275 = vsel %vm1263, %v2215, 0
      %v2278 = vsel %vm1263, %v2216, 0
      %v2281 = vsel %vm1263, %v2217, 0
      %v2284 = vsel %vm1263, %v2218, 0
      %v2287 = vsel %vm1263, %v2219, 0
      %v2290 = vsel %vm1263, %v2220, 0
      %v2293 = vsel %vm1263, %v2221, 0
      %v2296 = vsel %vm1263, %v2222, 0
      %v2299 = vsel %vm1263, %v2223, 0
      %v2302 = vsel %vm1263, %v2224, 0
      %v2305 = vsel %vm1263, %v2225, 0
      %v2308 = vsel %vm1263, %v2226, 0
      %v2311 = vsel %vm1263, %v2227, 0
      %v2314 = vsel %vm1263, %v2228, 0
      %v2317 = vsel %vm1263, %v2229, 0
      %v2320 = vsel %vm1263, %v2230, 0
      %v2323 = vsel %vm1263, %v2231, 0
      %v2326 = vsel %vm1263, %v2232, 0
      %v2329 = vsel %vm1263, %v2233, 0
      %v2332 = vsel %vm1360, %v2234, 0
      %2334 = vmatprep.subr.mxu0 0.0
      %2335 = vmatpush1.msra.mxu0 0.0
      %2336 = vmatprep.subr.mxu0 0.0
      %2337 = vmatpush1.msra.mxu0 0.0
      %2338 = vmatprep.subr.mxu0 0.0
      %2339 = vmatpush1.msra.mxu0 0.0
      %2340 = vmatprep.subr.mxu0 0.0
      %2341 = vmatpush1.msra.mxu0 0.0
      %2342 = vmatprep.subr.mxu0 0.0
      %2343 = vmatpush1.msra.mxu0 0.0
      %2344 = vmatprep.subr.mxu0 0.0
      %2345 = vmatpush1.msra.mxu0 0.0
      %2346 = vmatprep.subr.mxu0 0.0
      %2347 = vmatpush1.msra.mxu0 0.0
      %2348 = vmatprep.subr.mxu0 0.0
      %2349 = vmatpush1.msra.mxu0 0.0
      %2350 = vmatprep.subr.mxu0 0.0
      %2351 = vmatpush1.msra.mxu0 0.0
      %2352 = vmatprep.subr.mxu0 0.0
      %2353 = vmatpush1.msra.mxu0 0.0
      %2354 = vmatprep.subr.mxu0 0.0
      %2355 = vmatpush1.msra.mxu0 0.0
      %2356 = vmatprep.subr.mxu0 0.0
      %2357 = vmatpush1.msra.mxu0 0.0
      %2358 = vmatprep.subr.mxu0 0.0
      %2359 = vmatpush1.msra.mxu0 0.0
      %2360 = vmatprep.subr.mxu0 0.0
      %2361 = vmatpush1.msra.mxu0 0.0
      %2362 = vmatprep.subr.mxu0 0.0
      %2363 = vmatpush1.msra.mxu0 0.0
      %2364 = vmatprep.subr.mxu0 0.0
      %2365 = vmatpush1.msra.mxu0 %v2332
      %2366 = vmatprep.subr.mxu0 0.0
      %2367 = vmatpush2.msra.mxu0 0.0
      %2368 = vmatprep.subr.mxu0 0.0
      %2369 = vmatpush2.msra.mxu0 0.0
      %2370 = vmatprep.subr.mxu0 0.0
      %2371 = vmatpush2.msra.mxu0 0.0
      %2372 = vmatprep.subr.mxu0 0.0
      %2373 = vmatpush2.msra.mxu0 0.0
      %2374 = vmatprep.subr.mxu0 0.0
      %2375 = vmatpush2.msra.mxu0 0.0
      %2376 = vmatprep.subr.mxu0 0.0
      %2377 = vmatpush2.msra.mxu0 0.0
      %2378 = vmatprep.subr.mxu0 0.0
      %2379 = vmatpush2.msra.mxu0 0.0
      %2380 = vmatprep.subr.mxu0 0.0
      %2381 = vmatpush2.msra.mxu0 0.0
      %2382 = vmatprep.subr.mxu0 0.0
      %2383 = vmatpush2.msra.mxu0 0.0
      %2384 = vmatprep.subr.mxu0 0.0
      %2385 = vmatpush2.msra.mxu0 0.0
      %2386 = vmatprep.subr.mxu0 0.0
      %2387 = vmatpush2.msra.mxu0 0.0
      %2388 = vmatprep.subr.mxu0 0.0
      %2389 = vmatpush2.msra.mxu0 0.0
      %2390 = vmatprep.subr.mxu0 0.0
      %2391 = vmatpush2.msra.mxu0 0.0
      %2392 = vmatprep.subr.mxu0 0.0
      %2393 = vmatpush2.msra.mxu0 0.0
      %2394 = vmatprep.subr.mxu0 0.0
      %2395 = vmatpush2.msra.mxu0 0.0
      %2396 = vmatprep.subr.mxu0 0.0
      %2397 = vmatpush2.msra.mxu0 0.0
      %2398 = vmatprep.mubr.f32.mxu0 0.0
      %2399 = vmatmul.mubr.f32.gmra.mxu0 %v2236
      %v2400 = vpop.f32.mrf.mxu0
      %v2401 = vadd.f32 0.0, %v2400
      %v2402 = vpop.f32.mrf.mxu0
      %2403 = vmatprep.mubr.f32.mxu0 0.0
      %2404 = vmatmul.mubr.f32.gmra.mxu0 %v2239
      %v2405 = vpop.f32.mrf.mxu0
      %v2406 = vadd.f32 0.0, %v2405
      %v2407 = vpop.f32.mrf.mxu0
      %2408 = vmatprep.mubr.f32.mxu0 0.0
      %2409 = vmatmul.mubr.f32.gmra.mxu0 %v2242
      %v2410 = vpop.f32.mrf.mxu0
      %v2411 = vadd.f32 0.0, %v2410
      %v2412 = vpop.f32.mrf.mxu0
      %2413 = vmatprep.mubr.f32.mxu0 0.0
      %2414 = vmatmul.mubr.f32.gmra.mxu0 %v2245
      %v2415 = vpop.f32.mrf.mxu0
      %v2416 = vadd.f32 0.0, %v2415
      %v2417 = vpop.f32.mrf.mxu0
      %2418 = vmatprep.mubr.f32.mxu0 0.0
      %2419 = vmatmul.mubr.f32.gmra.mxu0 %v2248
      %v2420 = vpop.f32.mrf.mxu0
      %v2421 = vadd.f32 0.0, %v2420
      %v2422 = vpop.f32.mrf.mxu0
      %2423 = vmatprep.mubr.f32.mxu0 0.0
      %2424 = vmatmul.mubr.f32.gmra.mxu0 %v2251
      %v2425 = vpop.f32.mrf.mxu0
      %v2426 = vadd.f32 0.0, %v2425
      %v2427 = vpop.f32.mrf.mxu0
      %2428 = vmatprep.mubr.f32.mxu0 0.0
      %2429 = vmatmul.mubr.f32.gmra.mxu0 %v2254
      %v2430 = vpop.f32.mrf.mxu0
      %v2431 = vadd.f32 0.0, %v2430
      %v2432 = vpop.f32.mrf.mxu0
      %2433 = vmatprep.mubr.f32.mxu0 0.0
      %2434 = vmatmul.mubr.f32.gmra.mxu0 %v2257
      %v2435 = vpop.f32.mrf.mxu0
      %v2436 = vadd.f32 0.0, %v2435
      %v2437 = vpop.f32.mrf.mxu0
      %2438 = vmatprep.mubr.f32.mxu0 0.0
      %2439 = vmatmul.mubr.f32.gmra.mxu0 %v2260
      %v2440 = vpop.f32.mrf.mxu0
      %v2441 = vadd.f32 0.0, %v2440
      %v2442 = vpop.f32.mrf.mxu0
      %2443 = vmatprep.mubr.f32.mxu0 0.0
      %2444 = vmatmul.mubr.f32.gmra.mxu0 %v2263
      %v2445 = vpop.f32.mrf.mxu0
      %v2446 = vadd.f32 0.0, %v2445
      %v2447 = vpop.f32.mrf.mxu0
      %2448 = vmatprep.mubr.f32.mxu0 0.0
      %2449 = vmatmul.mubr.f32.gmra.mxu0 %v2266
      %v2450 = vpop.f32.mrf.mxu0
      %v2451 = vadd.f32 0.0, %v2450
      %v2452 = vpop.f32.mrf.mxu0
      %2453 = vmatprep.mubr.f32.mxu0 0.0
      %2454 = vmatmul.mubr.f32.gmra.mxu0 %v2269
      %v2455 = vpop.f32.mrf.mxu0
      %v2456 = vadd.f32 0.0, %v2455
      %v2457 = vpop.f32.mrf.mxu0
      %2458 = vmatprep.mubr.f32.mxu0 0.0
      %2459 = vmatmul.mubr.f32.gmra.mxu0 %v2272
      %v2460 = vpop.f32.mrf.mxu0
      %v2461 = vadd.f32 0.0, %v2460
      %v2462 = vpop.f32.mrf.mxu0
      %2463 = vmatprep.mubr.f32.mxu0 0.0
      %2464 = vmatmul.mubr.f32.gmra.mxu0 %v2275
      %v2465 = vpop.f32.mrf.mxu0
      %v2466 = vadd.f32 0.0, %v2465
      %v2467 = vpop.f32.mrf.mxu0
      %2468 = vmatprep.mubr.f32.mxu0 0.0
      %2469 = vmatmul.mubr.f32.gmra.mxu0 %v2278
      %v2470 = vpop.f32.mrf.mxu0
      %v2471 = vadd.f32 0.0, %v2470
      %v2472 = vpop.f32.mrf.mxu0
      %2473 = vmatprep.mubr.f32.mxu0 0.0
      %2474 = vmatmul.mubr.f32.gmra.mxu0 %v2281
      %v2475 = vpop.f32.mrf.mxu0
      %v2476 = vadd.f32 0.0, %v2475
      %v2477 = vpop.f32.mrf.mxu0
      %2478 = vmatprep.mubr.f32.mxu0 0.0
      %2479 = vmatmul.mubr.f32.gmra.mxu0 %v2284
      %v2480 = vpop.f32.mrf.mxu0
      %v2481 = vadd.f32 0.0, %v2480
      %v2482 = vpop.f32.mrf.mxu0
      %2483 = vmatprep.mubr.f32.mxu0 0.0
      %2484 = vmatmul.mubr.f32.gmra.mxu0 %v2287
      %v2485 = vpop.f32.mrf.mxu0
      %v2486 = vadd.f32 0.0, %v2485
      %v2487 = vpop.f32.mrf.mxu0
      %2488 = vmatprep.mubr.f32.mxu0 0.0
      %2489 = vmatmul.mubr.f32.gmra.mxu0 %v2290
      %v2490 = vpop.f32.mrf.mxu0
      %v2491 = vadd.f32 0.0, %v2490
      %v2492 = vpop.f32.mrf.mxu0
      %2493 = vmatprep.mubr.f32.mxu0 0.0
      %2494 = vmatmul.mubr.f32.gmra.mxu0 %v2293
      %v2495 = vpop.f32.mrf.mxu0
      %v2496 = vadd.f32 0.0, %v2495
      %v2497 = vpop.f32.mrf.mxu0
      %2498 = vmatprep.mubr.f32.mxu0 0.0
      %2499 = vmatmul.mubr.f32.gmra.mxu0 %v2296
      %v2500 = vpop.f32.mrf.mxu0
      %v2501 = vadd.f32 0.0, %v2500
      %v2502 = vpop.f32.mrf.mxu0
      %2503 = vmatprep.mubr.f32.mxu0 0.0
      %2504 = vmatmul.mubr.f32.gmra.mxu0 %v2299
      %v2505 = vpop.f32.mrf.mxu0
      %v2506 = vadd.f32 0.0, %v2505
      %v2507 = vpop.f32.mrf.mxu0
      %2508 = vmatprep.mubr.f32.mxu0 0.0
      %2509 = vmatmul.mubr.f32.gmra.mxu0 %v2302
      %v2510 = vpop.f32.mrf.mxu0
      %v2511 = vadd.f32 0.0, %v2510
      %v2512 = vpop.f32.mrf.mxu0
      %2513 = vmatprep.mubr.f32.mxu0 0.0
      %2514 = vmatmul.mubr.f32.gmra.mxu0 %v2305
      %v2515 = vpop.f32.mrf.mxu0
      %v2516 = vadd.f32 0.0, %v2515
      %v2517 = vpop.f32.mrf.mxu0
      %2518 = vmatprep.mubr.f32.mxu0 0.0
      %2519 = vmatmul.mubr.f32.gmra.mxu0 %v2308
      %v2520 = vpop.f32.mrf.mxu0
      %v2521 = vadd.f32 0.0, %v2520
      %v2522 = vpop.f32.mrf.mxu0
      %2523 = vmatprep.mubr.f32.mxu0 0.0
      %2524 = vmatmul.mubr.f32.gmra.mxu0 %v2311
      %v2525 = vpop.f32.mrf.mxu0
      %v2526 = vadd.f32 0.0, %v2525
      %v2527 = vpop.f32.mrf.mxu0
      %2528 = vmatprep.mubr.f32.mxu0 0.0
      %2529 = vmatmul.mubr.f32.gmra.mxu0 %v2314
      %v2530 = vpop.f32.mrf.mxu0
      %v2531 = vadd.f32 0.0, %v2530
      %v2532 = vpop.f32.mrf.mxu0
      %2533 = vmatprep.mubr.f32.mxu0 0.0
      %2534 = vmatmul.mubr.f32.gmra.mxu0 %v2317
      %v2535 = vpop.f32.mrf.mxu0
      %v2536 = vadd.f32 0.0, %v2535
      %v2537 = vpop.f32.mrf.mxu0
      %2538 = vmatprep.mubr.f32.mxu0 0.0
      %2539 = vmatmul.mubr.f32.gmra.mxu0 %v2320
      %v2540 = vpop.f32.mrf.mxu0
      %v2541 = vadd.f32 0.0, %v2540
      %v2542 = vpop.f32.mrf.mxu0
      %2543 = vmatprep.mubr.f32.mxu0 0.0
      %2544 = vmatmul.mubr.f32.gmra.mxu0 %v2323
      %v2545 = vpop.f32.mrf.mxu0
      %v2546 = vadd.f32 0.0, %v2545
      %v2547 = vpop.f32.mrf.mxu0
      %2548 = vmatprep.mubr.f32.mxu0 0.0
      %2549 = vmatmul.mubr.f32.gmra.mxu0 %v2326
      %v2550 = vpop.f32.mrf.mxu0
      %v2551 = vadd.f32 0.0, %v2550
      %v2552 = vpop.f32.mrf.mxu0
      %2553 = vmatprep.mubr.f32.mxu0 0.0
      %2554 = vmatmul.mubr.f32.gmra.mxu0 %v2329
      %v2555 = vpop.f32.mrf.mxu0
      %v2556 = vadd.f32 0.0, %v2555
      %v2557 = vpop.f32.mrf.mxu0
      %2558 = vdwg.mxu0
      %v2559 = vadd.f32 %v1755, %v2401
      %v2560 = vadd.f32 %v1760, %v2406
      %v2561 = vadd.f32 %v1765, %v2411
      %v2562 = vadd.f32 %v1770, %v2416
      %v2563 = vadd.f32 %v1775, %v2421
      %v2564 = vadd.f32 %v1780, %v2426
      %v2565 = vadd.f32 %v1785, %v2431
      %v2566 = vadd.f32 %v1790, %v2436
      %v2567 = vadd.f32 %v1795, %v2441
      %v2568 = vadd.f32 %v1800, %v2446
      %v2569 = vadd.f32 %v1805, %v2451
      %v2570 = vadd.f32 %v1810, %v2456
      %v2571 = vadd.f32 %v1815, %v2461
      %v2572 = vadd.f32 %v1820, %v2466
      %v2573 = vadd.f32 %v1825, %v2471
      %v2574 = vadd.f32 %v1830, %v2476
      %v2575 = vadd.f32 %v1835, %v2481
      %v2576 = vadd.f32 %v1840, %v2486
      %v2577 = vadd.f32 %v1845, %v2491
      %v2578 = vadd.f32 %v1850, %v2496
      %v2579 = vadd.f32 %v1855, %v2501
      %v2580 = vadd.f32 %v1860, %v2506
      %v2581 = vadd.f32 %v1865, %v2511
      %v2582 = vadd.f32 %v1870, %v2516
      %v2583 = vadd.f32 %v1875, %v2521
      %v2584 = vadd.f32 %v1880, %v2526
      %v2585 = vadd.f32 %v1885, %v2531
      %v2586 = vadd.f32 %v1890, %v2536
      %v2587 = vadd.f32 %v1895, %v2541
      %v2588 = vadd.f32 %v1900, %v2546
      %v2589 = vadd.f32 %v1905, %v2551
      %v2590 = vadd.f32 %v1910, %v2556
      %v2591 = vadd.f32 %v460, 0.0
      %v2592 = vadd.f32 %v461, 0.0
      %v2593 = vadd.f32 %v462, 0.0
      %v2594 = vadd.f32 %v463, 0.0
      %v2595 = vadd.f32 %v464, 0.0
      %v2596 = vadd.f32 %v465, 0.0
      %v2597 = vadd.f32 %v466, 0.0
      %v2598 = vadd.f32 %v467, 0.0
      %v2599 = vadd.f32 %v468, 0.0
      %v2600 = vadd.f32 %v469, 0.0
      %v2601 = vadd.f32 %v470, 0.0
      %v2602 = vadd.f32 %v471, 0.0
      %v2603 = vadd.f32 %v472, 0.0
      %v2604 = vadd.f32 %v473, 0.0
      %v2605 = vadd.f32 %v474, 0.0
      %v2606 = vadd.f32 %v475, 0.0
      %v2607 = vadd.f32 %v476, 0.0
      %v2608 = vadd.f32 %v477, 0.0
      %v2609 = vadd.f32 %v478, 0.0
      %v2610 = vadd.f32 %v479, 0.0
      %v2611 = vadd.f32 %v480, 0.0
      %v2612 = vadd.f32 %v481, 0.0
      %v2613 = vadd.f32 %v482, 0.0
      %v2614 = vadd.f32 %v483, 0.0
      %v2615 = vadd.f32 %v484, 0.0
      %v2616 = vadd.f32 %v485, 0.0
      %v2617 = vadd.f32 %v486, 0.0
      %v2618 = vadd.f32 %v487, 0.0
      %v2619 = vadd.f32 %v488, 0.0
      %v2620 = vadd.f32 %v489, 0.0
      %v2621 = vadd.f32 %v490, 0.0
      %v2622 = vadd.f32 %v491, 0.0
      %vm2623 = vcmp.ge.f32.partialorder %v2591, 0.0
      %vm2624 = vcmp.ge.f32.partialorder %v2592, 0.0
      %vm2625 = vcmp.ge.f32.partialorder %v2593, 0.0
      %vm2626 = vcmp.ge.f32.partialorder %v2594, 0.0
      %vm2627 = vcmp.ge.f32.partialorder %v2595, 0.0
      %vm2628 = vcmp.ge.f32.partialorder %v2596, 0.0
      %vm2629 = vcmp.ge.f32.partialorder %v2597, 0.0
      %vm2630 = vcmp.ge.f32.partialorder %v2598, 0.0
      %vm2631 = vcmp.ge.f32.partialorder %v2599, 0.0
      %vm2632 = vcmp.ge.f32.partialorder %v2600, 0.0
      %vm2633 = vcmp.ge.f32.partialorder %v2601, 0.0
      %vm2634 = vcmp.ge.f32.partialorder %v2602, 0.0
      %vm2635 = vcmp.ge.f32.partialorder %v2603, 0.0
      %vm2636 = vcmp.ge.f32.partialorder %v2604, 0.0
      %vm2637 = vcmp.ge.f32.partialorder %v2605, 0.0
      %vm2638 = vcmp.ge.f32.partialorder %v2606, 0.0
      %vm2639 = vcmp.ge.f32.partialorder %v2607, 0.0
      %vm2640 = vcmp.ge.f32.partialorder %v2608, 0.0
      %vm2641 = vcmp.ge.f32.partialorder %v2609, 0.0
      %vm2642 = vcmp.ge.f32.partialorder %v2610, 0.0
      %vm2643 = vcmp.ge.f32.partialorder %v2611, 0.0
      %vm2644 = vcmp.ge.f32.partialorder %v2612, 0.0
      %vm2645 = vcmp.ge.f32.partialorder %v2613, 0.0
      %vm2646 = vcmp.ge.f32.partialorder %v2614, 0.0
      %vm2647 = vcmp.ge.f32.partialorder %v2615, 0.0
      %vm2648 = vcmp.ge.f32.partialorder %v2616, 0.0
      %vm2649 = vcmp.ge.f32.partialorder %v2617, 0.0
      %vm2650 = vcmp.ge.f32.partialorder %v2618, 0.0
      %vm2651 = vcmp.ge.f32.partialorder %v2619, 0.0
      %vm2652 = vcmp.ge.f32.partialorder %v2620, 0.0
      %vm2653 = vcmp.ge.f32.partialorder %v2621, 0.0
      %vm2654 = vcmp.ge.f32.partialorder %v2622, 0.0
      %vm2655 = vcmp.le.f32.partialorder %v2591, 15.0
      %vm2656 = vcmp.le.f32.partialorder %v2592, 15.0
      %vm2657 = vcmp.le.f32.partialorder %v2593, 15.0
      %vm2658 = vcmp.le.f32.partialorder %v2594, 15.0
      %vm2659 = vcmp.le.f32.partialorder %v2595, 15.0
      %vm2660 = vcmp.le.f32.partialorder %v2596, 15.0
      %vm2661 = vcmp.le.f32.partialorder %v2597, 15.0
      %vm2662 = vcmp.le.f32.partialorder %v2598, 15.0
      %vm2663 = vcmp.le.f32.partialorder %v2599, 15.0
      %vm2664 = vcmp.le.f32.partialorder %v2600, 15.0
      %vm2665 = vcmp.le.f32.partialorder %v2601, 15.0
      %vm2666 = vcmp.le.f32.partialorder %v2602, 15.0
      %vm2667 = vcmp.le.f32.partialorder %v2603, 15.0
      %vm2668 = vcmp.le.f32.partialorder %v2604, 15.0
      %vm2669 = vcmp.le.f32.partialorder %v2605, 15.0
      %vm2670 = vcmp.le.f32.partialorder %v2606, 15.0
      %vm2671 = vcmp.le.f32.partialorder %v2607, 15.0
      %vm2672 = vcmp.le.f32.partialorder %v2608, 15.0
      %vm2673 = vcmp.le.f32.partialorder %v2609, 15.0
      %vm2674 = vcmp.le.f32.partialorder %v2610, 15.0
      %vm2675 = vcmp.le.f32.partialorder %v2611, 15.0
      %vm2676 = vcmp.le.f32.partialorder %v2612, 15.0
      %vm2677 = vcmp.le.f32.partialorder %v2613, 15.0
      %vm2678 = vcmp.le.f32.partialorder %v2614, 15.0
      %vm2679 = vcmp.le.f32.partialorder %v2615, 15.0
      %vm2680 = vcmp.le.f32.partialorder %v2616, 15.0
      %vm2681 = vcmp.le.f32.partialorder %v2617, 15.0
      %vm2682 = vcmp.le.f32.partialorder %v2618, 15.0
      %vm2683 = vcmp.le.f32.partialorder %v2619, 15.0
      %vm2684 = vcmp.le.f32.partialorder %v2620, 15.0
      %vm2685 = vcmp.le.f32.partialorder %v2621, 15.0
      %vm2686 = vcmp.le.f32.partialorder %v2622, 15.0
      %vm2687 = vmand %vm2623, %vm2655
      %vm2688 = vmand %vm2624, %vm2656
      %vm2689 = vmand %vm2625, %vm2657
      %vm2690 = vmand %vm2626, %vm2658
      %vm2691 = vmand %vm2627, %vm2659
      %vm2692 = vmand %vm2628, %vm2660
      %vm2693 = vmand %vm2629, %vm2661
      %vm2694 = vmand %vm2630, %vm2662
      %vm2695 = vmand %vm2631, %vm2663
      %vm2696 = vmand %vm2632, %vm2664
      %vm2697 = vmand %vm2633, %vm2665
      %vm2698 = vmand %vm2634, %vm2666
      %vm2699 = vmand %vm2635, %vm2667
      %vm2700 = vmand %vm2636, %vm2668
      %vm2701 = vmand %vm2637, %vm2669
      %vm2702 = vmand %vm2638, %vm2670
      %vm2703 = vmand %vm2639, %vm2671
      %vm2704 = vmand %vm2640, %vm2672
      %vm2705 = vmand %vm2641, %vm2673
      %vm2706 = vmand %vm2642, %vm2674
      %vm2707 = vmand %vm2643, %vm2675
      %vm2708 = vmand %vm2644, %vm2676
      %vm2709 = vmand %vm2645, %vm2677
      %vm2710 = vmand %vm2646, %vm2678
      %vm2711 = vmand %vm2647, %vm2679
      %vm2712 = vmand %vm2648, %vm2680
      %vm2713 = vmand %vm2649, %vm2681
      %vm2714 = vmand %vm2650, %vm2682
      %vm2715 = vmand %vm2651, %vm2683
      %vm2716 = vmand %vm2652, %vm2684
      %vm2717 = vmand %vm2653, %vm2685
      %vm2718 = vmand %vm2654, %vm2686
      %vm2719 = vmand %vm2687, %vm781
      %vm2720 = vmand %vm2688, %vm782
      %vm2721 = vmand %vm2689, %vm783
      %vm2722 = vmand %vm2690, %vm784
      %vm2723 = vmand %vm2691, %vm785
      %vm2724 = vmand %vm2692, %vm786
      %vm2725 = vmand %vm2693, %vm787
      %vm2726 = vmand %vm2694, %vm788
      %vm2727 = vmand %vm2695, %vm789
      %vm2728 = vmand %vm2696, %vm790
      %vm2729 = vmand %vm2697, %vm791
      %vm2730 = vmand %vm2698, %vm792
      %vm2731 = vmand %vm2699, %vm793
      %vm2732 = vmand %vm2700, %vm794
      %vm2733 = vmand %vm2701, %vm795
      %vm2734 = vmand %vm2702, %vm796
      %vm2735 = vmand %vm2703, %vm797
      %vm2736 = vmand %vm2704, %vm798
      %vm2737 = vmand %vm2705, %vm799
      %vm2738 = vmand %vm2706, %vm800
      %vm2739 = vmand %vm2707, %vm801
      %vm2740 = vmand %vm2708, %vm802
      %vm2741 = vmand %vm2709, %vm803
      %vm2742 = vmand %vm2710, %vm804
      %vm2743 = vmand %vm2711, %vm805
      %vm2744 = vmand %vm2712, %vm806
      %vm2745 = vmand %vm2713, %vm807
      %vm2746 = vmand %vm2714, %vm808
      %vm2747 = vmand %vm2715, %vm809
      %vm2748 = vmand %vm2716, %vm810
      %vm2749 = vmand %vm2717, %vm811
      %vm2750 = vmand %vm2718, %vm812
      %vm2751 = vmand %vm2719, %vm845
      %vm2752 = vmand %vm2720, %vm846
      %vm2753 = vmand %vm2721, %vm847
      %vm2754 = vmand %vm2722, %vm848
      %vm2755 = vmand %vm2723, %vm849
      %vm2756 = vmand %vm2724, %vm850
      %vm2757 = vmand %vm2725, %vm851
      %vm2758 = vmand %vm2726, %vm852
      %vm2759 = vmand %vm2727, %vm853
      %vm2760 = vmand %vm2728, %vm854
      %vm2761 = vmand %vm2729, %vm855
      %vm2762 = vmand %vm2730, %vm856
      %vm2763 = vmand %vm2731, %vm857
      %vm2764 = vmand %vm2732, %vm858
      %vm2765 = vmand %vm2733, %vm859
      %vm2766 = vmand %vm2734, %vm860
      %vm2767 = vmand %vm2735, %vm861
      %vm2768 = vmand %vm2736, %vm862
      %vm2769 = vmand %vm2737, %vm863
      %vm2770 = vmand %vm2738, %vm864
      %vm2771 = vmand %vm2739, %vm865
      %vm2772 = vmand %vm2740, %vm866
      %vm2773 = vmand %vm2741, %vm867
      %vm2774 = vmand %vm2742, %vm868
      %vm2775 = vmand %vm2743, %vm869
      %vm2776 = vmand %vm2744, %vm870
      %vm2777 = vmand %vm2745, %vm871
      %vm2778 = vmand %vm2746, %vm872
      %vm2779 = vmand %vm2747, %vm873
      %vm2780 = vmand %vm2748, %vm874
      %vm2781 = vmand %vm2749, %vm875
      %vm2782 = vmand %vm2750, %vm876
      %v2783 = vsel %vm2751, 1, 0
      %v2784 = vsel %vm2752, 1, 0
      %v2785 = vsel %vm2753, 1, 0
      %v2786 = vsel %vm2754, 1, 0
      %v2787 = vsel %vm2755, 1, 0
      %v2788 = vsel %vm2756, 1, 0
      %v2789 = vsel %vm2757, 1, 0
      %v2790 = vsel %vm2758, 1, 0
      %v2791 = vsel %vm2759, 1, 0
      %v2792 = vsel %vm2760, 1, 0
      %v2793 = vsel %vm2761, 1, 0
      %v2794 = vsel %vm2762, 1, 0
      %v2795 = vsel %vm2763, 1, 0
      %v2796 = vsel %vm2764, 1, 0
      %v2797 = vsel %vm2765, 1, 0
      %v2798 = vsel %vm2766, 1, 0
      %v2799 = vsel %vm2767, 1, 0
      %v2800 = vsel %vm2768, 1, 0
      %v2801 = vsel %vm2769, 1, 0
      %v2802 = vsel %vm2770, 1, 0
      %v2803 = vsel %vm2771, 1, 0
      %v2804 = vsel %vm2772, 1, 0
      %v2805 = vsel %vm2773, 1, 0
      %v2806 = vsel %vm2774, 1, 0
      %v2807 = vsel %vm2775, 1, 0
      %v2808 = vsel %vm2776, 1, 0
      %v2809 = vsel %vm2777, 1, 0
      %v2810 = vsel %vm2778, 1, 0
      %v2811 = vsel %vm2779, 1, 0
      %v2812 = vsel %vm2780, 1, 0
      %v2813 = vsel %vm2781, 1, 0
      %v2814 = vsel %vm2782, 1, 0
      %v2815 = vcvt.s32.f32 %v2783
      %v2816 = vcvt.s32.f32 %v2784
      %v2817 = vcvt.s32.f32 %v2785
      %v2818 = vcvt.s32.f32 %v2786
      %v2819 = vcvt.s32.f32 %v2787
      %v2820 = vcvt.s32.f32 %v2788
      %v2821 = vcvt.s32.f32 %v2789
      %v2822 = vcvt.s32.f32 %v2790
      %v2823 = vcvt.s32.f32 %v2791
      %v2824 = vcvt.s32.f32 %v2792
      %v2825 = vcvt.s32.f32 %v2793
      %v2826 = vcvt.s32.f32 %v2794
      %v2827 = vcvt.s32.f32 %v2795
      %v2828 = vcvt.s32.f32 %v2796
      %v2829 = vcvt.s32.f32 %v2797
      %v2830 = vcvt.s32.f32 %v2798
      %v2831 = vcvt.s32.f32 %v2799
      %v2832 = vcvt.s32.f32 %v2800
      %v2833 = vcvt.s32.f32 %v2801
      %v2834 = vcvt.s32.f32 %v2802
      %v2835 = vcvt.s32.f32 %v2803
      %v2836 = vcvt.s32.f32 %v2804
      %v2837 = vcvt.s32.f32 %v2805
      %v2838 = vcvt.s32.f32 %v2806
      %v2839 = vcvt.s32.f32 %v2807
      %v2840 = vcvt.s32.f32 %v2808
      %v2841 = vcvt.s32.f32 %v2809
      %v2842 = vcvt.s32.f32 %v2810
      %v2843 = vcvt.s32.f32 %v2811
      %v2844 = vcvt.s32.f32 %v2812
      %v2845 = vcvt.s32.f32 %v2813
      %v2846 = vcvt.s32.f32 %v2814
      %v2847 = vmul.f32 %v620, %v2815
      %v2848 = vmul.f32 %v619, %v2816
      %v2849 = vmul.f32 %v618, %v2817
      %v2850 = vmul.f32 %v617, %v2818
      %v2851 = vmul.f32 %v616, %v2819
      %v2852 = vmul.f32 %v615, %v2820
      %v2853 = vmul.f32 %v614, %v2821
      %v2854 = vmul.f32 %v613, %v2822
      %v2855 = vmul.f32 %v612, %v2823
      %v2856 = vmul.f32 %v611, %v2824
      %v2857 = vmul.f32 %v610, %v2825
      %v2858 = vmul.f32 %v609, %v2826
      %v2859 = vmul.f32 %v608, %v2827
      %v2860 = vmul.f32 %v607, %v2828
      %v2861 = vmul.f32 %v606, %v2829
      %v2862 = vmul.f32 %v605, %v2830
      %v2863 = vmul.f32 %v604, %v2831
      %v2864 = vmul.f32 %v603, %v2832
      %v2865 = vmul.f32 %v602, %v2833
      %v2866 = vmul.f32 %v601, %v2834
      %v2867 = vmul.f32 %v600, %v2835
      %v2868 = vmul.f32 %v599, %v2836
      %v2869 = vmul.f32 %v598, %v2837
      %v2870 = vmul.f32 %v597, %v2838
      %v2871 = vmul.f32 %v596, %v2839
      %v2872 = vmul.f32 %v595, %v2840
      %v2873 = vmul.f32 %v594, %v2841
      %v2874 = vmul.f32 %v593, %v2842
      %v2875 = vmul.f32 %v592, %v2843
      %v2876 = vmul.f32 %v591, %v2844
      %v2877 = vmul.f32 %v590, %v2845
      %v2878 = vmul.f32 %v589, %v2846
      %v2879 = vld [vmem:[%s1 + $0xc] sm:$0xf]
      %v2881 = vsel %vm1263, %v2847, 0
      %v2884 = vsel %vm1263, %v2848, 0
      %v2887 = vsel %vm1263, %v2849, 0
      %v2890 = vsel %vm1263, %v2850, 0
      %v2893 = vsel %vm1263, %v2851, 0
      %v2896 = vsel %vm1263, %v2852, 0
      %v2899 = vsel %vm1263, %v2853, 0
      %v2902 = vsel %vm1263, %v2854, 0
      %v2905 = vsel %vm1263, %v2855, 0
      %v2908 = vsel %vm1263, %v2856, 0
      %v2911 = vsel %vm1263, %v2857, 0
      %v2914 = vsel %vm1263, %v2858, 0
      %v2917 = vsel %vm1263, %v2859, 0
      %v2920 = vsel %vm1263, %v2860, 0
      %v2923 = vsel %vm1263, %v2861, 0
      %v2926 = vsel %vm1263, %v2862, 0
      %v2929 = vsel %vm1263, %v2863, 0
      %v2932 = vsel %vm1263, %v2864, 0
      %v2935 = vsel %vm1263, %v2865, 0
      %v2938 = vsel %vm1263, %v2866, 0
      %v2941 = vsel %vm1263, %v2867, 0
      %v2944 = vsel %vm1263, %v2868, 0
      %v2947 = vsel %vm1263, %v2869, 0
      %v2950 = vsel %vm1263, %v2870, 0
      %v2953 = vsel %vm1263, %v2871, 0
      %v2956 = vsel %vm1263, %v2872, 0
      %v2959 = vsel %vm1263, %v2873, 0
      %v2962 = vsel %vm1263, %v2874, 0
      %v2965 = vsel %vm1263, %v2875, 0
      %v2968 = vsel %vm1263, %v2876, 0
      %v2971 = vsel %vm1263, %v2877, 0
      %v2974 = vsel %vm1263, %v2878, 0
      %v2977 = vsel %vm1360, %v2879, 0
      %2979 = vmatprep.subr.mxu0 0.0
      %2980 = vmatpush1.msra.mxu0 0.0
      %2981 = vmatprep.subr.mxu0 0.0
      %2982 = vmatpush1.msra.mxu0 0.0
      %2983 = vmatprep.subr.mxu0 0.0
      %2984 = vmatpush1.msra.mxu0 0.0
      %2985 = vmatprep.subr.mxu0 0.0
      %2986 = vmatpush1.msra.mxu0 0.0
      %2987 = vmatprep.subr.mxu0 0.0
      %2988 = vmatpush1.msra.mxu0 0.0
      %2989 = vmatprep.subr.mxu0 0.0
      %2990 = vmatpush1.msra.mxu0 0.0
      %2991 = vmatprep.subr.mxu0 0.0
      %2992 = vmatpush1.msra.mxu0 0.0
      %2993 = vmatprep.subr.mxu0 0.0
      %2994 = vmatpush1.msra.mxu0 0.0
      %2995 = vmatprep.subr.mxu0 0.0
      %2996 = vmatpush1.msra.mxu0 0.0
      %2997 = vmatprep.subr.mxu0 0.0
      %2998 = vmatpush1.msra.mxu0 0.0
      %2999 = vmatprep.subr.mxu0 0.0
      %3000 = vmatpush1.msra.mxu0 0.0
      %3001 = vmatprep.subr.mxu0 0.0
      %3002 = vmatpush1.msra.mxu0 0.0
      %3003 = vmatprep.subr.mxu0 0.0
      %3004 = vmatpush1.msra.mxu0 0.0
      %3005 = vmatprep.subr.mxu0 0.0
      %3006 = vmatpush1.msra.mxu0 0.0
      %3007 = vmatprep.subr.mxu0 0.0
      %3008 = vmatpush1.msra.mxu0 0.0
      %3009 = vmatprep.subr.mxu0 0.0
      %3010 = vmatpush1.msra.mxu0 %v2977
      %3011 = vmatprep.subr.mxu0 0.0
      %3012 = vmatpush2.msra.mxu0 0.0
      %3013 = vmatprep.subr.mxu0 0.0
      %3014 = vmatpush2.msra.mxu0 0.0
      %3015 = vmatprep.subr.mxu0 0.0
      %3016 = vmatpush2.msra.mxu0 0.0
      %3017 = vmatprep.subr.mxu0 0.0
      %3018 = vmatpush2.msra.mxu0 0.0
      %3019 = vmatprep.subr.mxu0 0.0
      %3020 = vmatpush2.msra.mxu0 0.0
      %3021 = vmatprep.subr.mxu0 0.0
      %3022 = vmatpush2.msra.mxu0 0.0
      %3023 = vmatprep.subr.mxu0 0.0
      %3024 = vmatpush2.msra.mxu0 0.0
      %3025 = vmatprep.subr.mxu0 0.0
      %3026 = vmatpush2.msra.mxu0 0.0
      %3027 = vmatprep.subr.mxu0 0.0
      %3028 = vmatpush2.msra.mxu0 0.0
      %3029 = vmatprep.subr.mxu0 0.0
      %3030 = vmatpush2.msra.mxu0 0.0
      %3031 = vmatprep.subr.mxu0 0.0
      %3032 = vmatpush2.msra.mxu0 0.0
      %3033 = vmatprep.subr.mxu0 0.0
      %3034 = vmatpush2.msra.mxu0 0.0
      %3035 = vmatprep.subr.mxu0 0.0
      %3036 = vmatpush2.msra.mxu0 0.0
      %3037 = vmatprep.subr.mxu0 0.0
      %3038 = vmatpush2.msra.mxu0 0.0
      %3039 = vmatprep.subr.mxu0 0.0
      %3040 = vmatpush2.msra.mxu0 0.0
      %3041 = vmatprep.subr.mxu0 0.0
      %3042 = vmatpush2.msra.mxu0 0.0
      %3043 = vmatprep.mubr.f32.mxu0 0.0
      %3044 = vmatmul.mubr.f32.gmra.mxu0 %v2881
      %v3045 = vpop.f32.mrf.mxu0
      %v3046 = vadd.f32 0.0, %v3045
      %v3047 = vpop.f32.mrf.mxu0
      %3048 = vmatprep.mubr.f32.mxu0 0.0
      %3049 = vmatmul.mubr.f32.gmra.mxu0 %v2884
      %v3050 = vpop.f32.mrf.mxu0
      %v3051 = vadd.f32 0.0, %v3050
      %v3052 = vpop.f32.mrf.mxu0
      %3053 = vmatprep.mubr.f32.mxu0 0.0
      %3054 = vmatmul.mubr.f32.gmra.mxu0 %v2887
      %v3055 = vpop.f32.mrf.mxu0
      %v3056 = vadd.f32 0.0, %v3055
      %v3057 = vpop.f32.mrf.mxu0
      %3058 = vmatprep.mubr.f32.mxu0 0.0
      %3059 = vmatmul.mubr.f32.gmra.mxu0 %v2890
      %v3060 = vpop.f32.mrf.mxu0
      %v3061 = vadd.f32 0.0, %v3060
      %v3062 = vpop.f32.mrf.mxu0
      %3063 = vmatprep.mubr.f32.mxu0 0.0
      %3064 = vmatmul.mubr.f32.gmra.mxu0 %v2893
      %v3065 = vpop.f32.mrf.mxu0
      %v3066 = vadd.f32 0.0, %v3065
      %v3067 = vpop.f32.mrf.mxu0
      %3068 = vmatprep.mubr.f32.mxu0 0.0
      %3069 = vmatmul.mubr.f32.gmra.mxu0 %v2896
      %v3070 = vpop.f32.mrf.mxu0
      %v3071 = vadd.f32 0.0, %v3070
      %v3072 = vpop.f32.mrf.mxu0
      %3073 = vmatprep.mubr.f32.mxu0 0.0
      %3074 = vmatmul.mubr.f32.gmra.mxu0 %v2899
      %v3075 = vpop.f32.mrf.mxu0
      %v3076 = vadd.f32 0.0, %v3075
      %v3077 = vpop.f32.mrf.mxu0
      %3078 = vmatprep.mubr.f32.mxu0 0.0
      %3079 = vmatmul.mubr.f32.gmra.mxu0 %v2902
      %v3080 = vpop.f32.mrf.mxu0
      %v3081 = vadd.f32 0.0, %v3080
      %v3082 = vpop.f32.mrf.mxu0
      %3083 = vmatprep.mubr.f32.mxu0 0.0
      %3084 = vmatmul.mubr.f32.gmra.mxu0 %v2905
      %v3085 = vpop.f32.mrf.mxu0
      %v3086 = vadd.f32 0.0, %v3085
      %v3087 = vpop.f32.mrf.mxu0
      %3088 = vmatprep.mubr.f32.mxu0 0.0
      %3089 = vmatmul.mubr.f32.gmra.mxu0 %v2908
      %v3090 = vpop.f32.mrf.mxu0
      %v3091 = vadd.f32 0.0, %v3090
      %v3092 = vpop.f32.mrf.mxu0
      %3093 = vmatprep.mubr.f32.mxu0 0.0
      %3094 = vmatmul.mubr.f32.gmra.mxu0 %v2911
      %v3095 = vpop.f32.mrf.mxu0
      %v3096 = vadd.f32 0.0, %v3095
      %v3097 = vpop.f32.mrf.mxu0
      %3098 = vmatprep.mubr.f32.mxu0 0.0
      %3099 = vmatmul.mubr.f32.gmra.mxu0 %v2914
      %v3100 = vpop.f32.mrf.mxu0
      %v3101 = vadd.f32 0.0, %v3100
      %v3102 = vpop.f32.mrf.mxu0
      %3103 = vmatprep.mubr.f32.mxu0 0.0
      %3104 = vmatmul.mubr.f32.gmra.mxu0 %v2917
      %v3105 = vpop.f32.mrf.mxu0
      %v3106 = vadd.f32 0.0, %v3105
      %v3107 = vpop.f32.mrf.mxu0
      %3108 = vmatprep.mubr.f32.mxu0 0.0
      %3109 = vmatmul.mubr.f32.gmra.mxu0 %v2920
      %v3110 = vpop.f32.mrf.mxu0
      %v3111 = vadd.f32 0.0, %v3110
      %v3112 = vpop.f32.mrf.mxu0
      %3113 = vmatprep.mubr.f32.mxu0 0.0
      %3114 = vmatmul.mubr.f32.gmra.mxu0 %v2923
      %v3115 = vpop.f32.mrf.mxu0
      %v3116 = vadd.f32 0.0, %v3115
      %v3117 = vpop.f32.mrf.mxu0
      %3118 = vmatprep.mubr.f32.mxu0 0.0
      %3119 = vmatmul.mubr.f32.gmra.mxu0 %v2926
      %v3120 = vpop.f32.mrf.mxu0
      %v3121 = vadd.f32 0.0, %v3120
      %v3122 = vpop.f32.mrf.mxu0
      %3123 = vmatprep.mubr.f32.mxu0 0.0
      %3124 = vmatmul.mubr.f32.gmra.mxu0 %v2929
      %v3125 = vpop.f32.mrf.mxu0
      %v3126 = vadd.f32 0.0, %v3125
      %v3127 = vpop.f32.mrf.mxu0
      %3128 = vmatprep.mubr.f32.mxu0 0.0
      %3129 = vmatmul.mubr.f32.gmra.mxu0 %v2932
      %v3130 = vpop.f32.mrf.mxu0
      %v3131 = vadd.f32 0.0, %v3130
      %v3132 = vpop.f32.mrf.mxu0
      %3133 = vmatprep.mubr.f32.mxu0 0.0
      %3134 = vmatmul.mubr.f32.gmra.mxu0 %v2935
      %v3135 = vpop.f32.mrf.mxu0
      %v3136 = vadd.f32 0.0, %v3135
      %v3137 = vpop.f32.mrf.mxu0
      %3138 = vmatprep.mubr.f32.mxu0 0.0
      %3139 = vmatmul.mubr.f32.gmra.mxu0 %v2938
      %v3140 = vpop.f32.mrf.mxu0
      %v3141 = vadd.f32 0.0, %v3140
      %v3142 = vpop.f32.mrf.mxu0
      %3143 = vmatprep.mubr.f32.mxu0 0.0
      %3144 = vmatmul.mubr.f32.gmra.mxu0 %v2941
      %v3145 = vpop.f32.mrf.mxu0
      %v3146 = vadd.f32 0.0, %v3145
      %v3147 = vpop.f32.mrf.mxu0
      %3148 = vmatprep.mubr.f32.mxu0 0.0
      %3149 = vmatmul.mubr.f32.gmra.mxu0 %v2944
      %v3150 = vpop.f32.mrf.mxu0
      %v3151 = vadd.f32 0.0, %v3150
      %v3152 = vpop.f32.mrf.mxu0
      %3153 = vmatprep.mubr.f32.mxu0 0.0
      %3154 = vmatmul.mubr.f32.gmra.mxu0 %v2947
      %v3155 = vpop.f32.mrf.mxu0
      %v3156 = vadd.f32 0.0, %v3155
      %v3157 = vpop.f32.mrf.mxu0
      %3158 = vmatprep.mubr.f32.mxu0 0.0
      %3159 = vmatmul.mubr.f32.gmra.mxu0 %v2950
      %v3160 = vpop.f32.mrf.mxu0
      %v3161 = vadd.f32 0.0, %v3160
      %v3162 = vpop.f32.mrf.mxu0
      %3163 = vmatprep.mubr.f32.mxu0 0.0
      %3164 = vmatmul.mubr.f32.gmra.mxu0 %v2953
      %v3165 = vpop.f32.mrf.mxu0
      %v3166 = vadd.f32 0.0, %v3165
      %v3167 = vpop.f32.mrf.mxu0
      %3168 = vmatprep.mubr.f32.mxu0 0.0
      %3169 = vmatmul.mubr.f32.gmra.mxu0 %v2956
      %v3170 = vpop.f32.mrf.mxu0
      %v3171 = vadd.f32 0.0, %v3170
      %v3172 = vpop.f32.mrf.mxu0
      %3173 = vmatprep.mubr.f32.mxu0 0.0
      %3174 = vmatmul.mubr.f32.gmra.mxu0 %v2959
      %v3175 = vpop.f32.mrf.mxu0
      %v3176 = vadd.f32 0.0, %v3175
      %v3177 = vpop.f32.mrf.mxu0
      %3178 = vmatprep.mubr.f32.mxu0 0.0
      %3179 = vmatmul.mubr.f32.gmra.mxu0 %v2962
      %v3180 = vpop.f32.mrf.mxu0
      %v3181 = vadd.f32 0.0, %v3180
      %v3182 = vpop.f32.mrf.mxu0
      %3183 = vmatprep.mubr.f32.mxu0 0.0
      %3184 = vmatmul.mubr.f32.gmra.mxu0 %v2965
      %v3185 = vpop.f32.mrf.mxu0
      %v3186 = vadd.f32 0.0, %v3185
      %v3187 = vpop.f32.mrf.mxu0
      %3188 = vmatprep.mubr.f32.mxu0 0.0
      %3189 = vmatmul.mubr.f32.gmra.mxu0 %v2968
      %v3190 = vpop.f32.mrf.mxu0
      %v3191 = vadd.f32 0.0, %v3190
      %v3192 = vpop.f32.mrf.mxu0
      %3193 = vmatprep.mubr.f32.mxu0 0.0
      %3194 = vmatmul.mubr.f32.gmra.mxu0 %v2971
      %v3195 = vpop.f32.mrf.mxu0
      %v3196 = vadd.f32 0.0, %v3195
      %v3197 = vpop.f32.mrf.mxu0
      %3198 = vmatprep.mubr.f32.mxu0 0.0
      %3199 = vmatmul.mubr.f32.gmra.mxu0 %v2974
      %v3200 = vpop.f32.mrf.mxu0
      %v3201 = vadd.f32 0.0, %v3200
      %v3202 = vpop.f32.mrf.mxu0
      %3203 = vdwg.mxu0
      %v3204 = vadd.f32 %v2559, %v3046
      %v3205 = vadd.f32 %v2560, %v3051
      %v3206 = vadd.f32 %v2561, %v3056
      %v3207 = vadd.f32 %v2562, %v3061
      %v3208 = vadd.f32 %v2563, %v3066
      %v3209 = vadd.f32 %v2564, %v3071
      %v3210 = vadd.f32 %v2565, %v3076
      %v3211 = vadd.f32 %v2566, %v3081
      %v3212 = vadd.f32 %v2567, %v3086
      %v3213 = vadd.f32 %v2568, %v3091
      %v3214 = vadd.f32 %v2569, %v3096
      %v3215 = vadd.f32 %v2570, %v3101
      %v3216 = vadd.f32 %v2571, %v3106
      %v3217 = vadd.f32 %v2572, %v3111
      %v3218 = vadd.f32 %v2573, %v3116
      %v3219 = vadd.f32 %v2574, %v3121
      %v3220 = vadd.f32 %v2575, %v3126
      %v3221 = vadd.f32 %v2576, %v3131
      %v3222 = vadd.f32 %v2577, %v3136
      %v3223 = vadd.f32 %v2578, %v3141
      %v3224 = vadd.f32 %v2579, %v3146
      %v3225 = vadd.f32 %v2580, %v3151
      %v3226 = vadd.f32 %v2581, %v3156
      %v3227 = vadd.f32 %v2582, %v3161
      %v3228 = vadd.f32 %v2583, %v3166
      %v3229 = vadd.f32 %v2584, %v3171
      %v3230 = vadd.f32 %v2585, %v3176
      %v3231 = vadd.f32 %v2586, %v3181
      %v3232 = vadd.f32 %v2587, %v3186
      %v3233 = vadd.f32 %v2588, %v3191
      %v3234 = vadd.f32 %v2589, %v3196
      %v3235 = vadd.f32 %v2590, %v3201
      %vm3236 = vmand %vm2687, %vm1038
      %vm3237 = vmand %vm2688, %vm1039
      %vm3238 = vmand %vm2689, %vm1040
      %vm3239 = vmand %vm2690, %vm1041
      %vm3240 = vmand %vm2691, %vm1042
      %vm3241 = vmand %vm2692, %vm1043
      %vm3242 = vmand %vm2693, %vm1044
      %vm3243 = vmand %vm2694, %vm1045
      %vm3244 = vmand %vm2695, %vm1046
      %vm3245 = vmand %vm2696, %vm1047
      %vm3246 = vmand %vm2697, %vm1048
      %vm3247 = vmand %vm2698, %vm1049
      %vm3248 = vmand %vm2699, %vm1050
      %vm3249 = vmand %vm2700, %vm1051
      %vm3250 = vmand %vm2701, %vm1052
      %vm3251 = vmand %vm2702, %vm1053
      %vm3252 = vmand %vm2703, %vm1054
      %vm3253 = vmand %vm2704, %vm1055
      %vm3254 = vmand %vm2705, %vm1056
      %vm3255 = vmand %vm2706, %vm1057
      %vm3256 = vmand %vm2707, %vm1058
      %vm3257 = vmand %vm2708, %vm1059
      %vm3258 = vmand %vm2709, %vm1060
      %vm3259 = vmand %vm2710, %vm1061
      %vm3260 = vmand %vm2711, %vm1062
      %vm3261 = vmand %vm2712, %vm1063
      %vm3262 = vmand %vm2713, %vm1064
      %vm3263 = vmand %vm2714, %vm1065
      %vm3264 = vmand %vm2715, %vm1066
      %vm3265 = vmand %vm2716, %vm1067
      %vm3266 = vmand %vm2717, %vm1068
      %vm3267 = vmand %vm2718, %vm1069
      %vm3268 = vmand %vm3236, %vm1102
      %vm3269 = vmand %vm3237, %vm1103
      %vm3270 = vmand %vm3238, %vm1104
      %vm3271 = vmand %vm3239, %vm1105
      %vm3272 = vmand %vm3240, %vm1106
      %vm3273 = vmand %vm3241, %vm1107
      %vm3274 = vmand %vm3242, %vm1108
      %vm3275 = vmand %vm3243, %vm1109
      %vm3276 = vmand %vm3244, %vm1110
      %vm3277 = vmand %vm3245, %vm1111
      %vm3278 = vmand %vm3246, %vm1112
      %vm3279 = vmand %vm3247, %vm1113
      %vm3280 = vmand %vm3248, %vm1114
      %vm3281 = vmand %vm3249, %vm1115
      %vm3282 = vmand %vm3250, %vm1116
      %vm3283 = vmand %vm3251, %vm1117
      %vm3284 = vmand %vm3252, %vm1118
      %vm3285 = vmand %vm3253, %vm1119
      %vm3286 = vmand %vm3254, %vm1120
      %vm3287 = vmand %vm3255, %vm1121
      %vm3288 = vmand %vm3256, %vm1122
      %vm3289 = vmand %vm3257, %vm1123
      %vm3290 = vmand %vm3258, %vm1124
      %vm3291 = vmand %vm3259, %vm1125
      %vm3292 = vmand %vm3260, %vm1126
      %vm3293 = vmand %vm3261, %vm1127
      %vm3294 = vmand %vm3262, %vm1128
      %vm3295 = vmand %vm3263, %vm1129
      %vm3296 = vmand %vm3264, %vm1130
      %vm3297 = vmand %vm3265, %vm1131
      %vm3298 = vmand %vm3266, %vm1132
      %vm3299 = vmand %vm3267, %vm1133
      %v3300 = vsel %vm3268, 1, 0
      %v3301 = vsel %vm3269, 1, 0
      %v3302 = vsel %vm3270, 1, 0
      %v3303 = vsel %vm3271, 1, 0
      %v3304 = vsel %vm3272, 1, 0
      %v3305 = vsel %vm3273, 1, 0
      %v3306 = vsel %vm3274, 1, 0
      %v3307 = vsel %vm3275, 1, 0
      %v3308 = vsel %vm3276, 1, 0
      %v3309 = vsel %vm3277, 1, 0
      %v3310 = vsel %vm3278, 1, 0
      %v3311 = vsel %vm3279, 1, 0
      %v3312 = vsel %vm3280, 1, 0
      %v3313 = vsel %vm3281, 1, 0
      %v3314 = vsel %vm3282, 1, 0
      %v3315 = vsel %vm3283, 1, 0
      %v3316 = vsel %vm3284, 1, 0
      %v3317 = vsel %vm3285, 1, 0
      %v3318 = vsel %vm3286, 1, 0
      %v3319 = vsel %vm3287, 1, 0
      %v3320 = vsel %vm3288, 1, 0
      %v3321 = vsel %vm3289, 1, 0
      %v3322 = vsel %vm3290, 1, 0
      %v3323 = vsel %vm3291, 1, 0
      %v3324 = vsel %vm3292, 1, 0
      %v3325 = vsel %vm3293, 1, 0
      %v3326 = vsel %vm3294, 1, 0
      %v3327 = vsel %vm3295, 1, 0
      %v3328 = vsel %vm3296, 1, 0
      %v3329 = vsel %vm3297, 1, 0
      %v3330 = vsel %vm3298, 1, 0
      %v3331 = vsel %vm3299, 1, 0
      %v3332 = vcvt.s32.f32 %v3300
      %v3333 = vcvt.s32.f32 %v3301
      %v3334 = vcvt.s32.f32 %v3302
      %v3335 = vcvt.s32.f32 %v3303
      %v3336 = vcvt.s32.f32 %v3304
      %v3337 = vcvt.s32.f32 %v3305
      %v3338 = vcvt.s32.f32 %v3306
      %v3339 = vcvt.s32.f32 %v3307
      %v3340 = vcvt.s32.f32 %v3308
      %v3341 = vcvt.s32.f32 %v3309
      %v3342 = vcvt.s32.f32 %v3310
      %v3343 = vcvt.s32.f32 %v3311
      %v3344 = vcvt.s32.f32 %v3312
      %v3345 = vcvt.s32.f32 %v3313
      %v3346 = vcvt.s32.f32 %v3314
      %v3347 = vcvt.s32.f32 %v3315
      %v3348 = vcvt.s32.f32 %v3316
      %v3349 = vcvt.s32.f32 %v3317
      %v3350 = vcvt.s32.f32 %v3318
      %v3351 = vcvt.s32.f32 %v3319
      %v3352 = vcvt.s32.f32 %v3320
      %v3353 = vcvt.s32.f32 %v3321
      %v3354 = vcvt.s32.f32 %v3322
      %v3355 = vcvt.s32.f32 %v3323
      %v3356 = vcvt.s32.f32 %v3324
      %v3357 = vcvt.s32.f32 %v3325
      %v3358 = vcvt.s32.f32 %v3326
      %v3359 = vcvt.s32.f32 %v3327
      %v3360 = vcvt.s32.f32 %v3328
      %v3361 = vcvt.s32.f32 %v3329
      %v3362 = vcvt.s32.f32 %v3330
      %v3363 = vcvt.s32.f32 %v3331
      %v3364 = vmul.f32 %v299, %v3332
      %v3365 = vmul.f32 %v300, %v3333
      %v3366 = vmul.f32 %v301, %v3334
      %v3367 = vmul.f32 %v302, %v3335
      %v3368 = vmul.f32 %v303, %v3336
      %v3369 = vmul.f32 %v304, %v3337
      %v3370 = vmul.f32 %v305, %v3338
      %v3371 = vmul.f32 %v306, %v3339
      %v3372 = vmul.f32 %v307, %v3340
      %v3373 = vmul.f32 %v308, %v3341
      %v3374 = vmul.f32 %v309, %v3342
      %v3375 = vmul.f32 %v310, %v3343
      %v3376 = vmul.f32 %v311, %v3344
      %v3377 = vmul.f32 %v312, %v3345
      %v3378 = vmul.f32 %v313, %v3346
      %v3379 = vmul.f32 %v314, %v3347
      %v3380 = vmul.f32 %v315, %v3348
      %v3381 = vmul.f32 %v316, %v3349
      %v3382 = vmul.f32 %v317, %v3350
      %v3383 = vmul.f32 %v318, %v3351
      %v3384 = vmul.f32 %v319, %v3352
      %v3385 = vmul.f32 %v320, %v3353
      %v3386 = vmul.f32 %v321, %v3354
      %v3387 = vmul.f32 %v322, %v3355
      %v3388 = vmul.f32 %v323, %v3356
      %v3389 = vmul.f32 %v324, %v3357
      %v3390 = vmul.f32 %v325, %v3358
      %v3391 = vmul.f32 %v326, %v3359
      %v3392 = vmul.f32 %v327, %v3360
      %v3393 = vmul.f32 %v328, %v3361
      %v3394 = vmul.f32 %v329, %v3362
      %v3395 = vmul.f32 %v330, %v3363
      %v3396 = vld [vmem:[%s1 + $0x10] sm:$0xf]
      %v3398 = vsel %vm1263, %v3364, 0
      %v3401 = vsel %vm1263, %v3365, 0
      %v3404 = vsel %vm1263, %v3366, 0
      %v3407 = vsel %vm1263, %v3367, 0
      %v3410 = vsel %vm1263, %v3368, 0
      %v3413 = vsel %vm1263, %v3369, 0
      %v3416 = vsel %vm1263, %v3370, 0
      %v3419 = vsel %vm1263, %v3371, 0
      %v3422 = vsel %vm1263, %v3372, 0
      %v3425 = vsel %vm1263, %v3373, 0
      %v3428 = vsel %vm1263, %v3374, 0
      %v3431 = vsel %vm1263, %v3375, 0
      %v3434 = vsel %vm1263, %v3376, 0
      %v3437 = vsel %vm1263, %v3377, 0
      %v3440 = vsel %vm1263, %v3378, 0
      %v3443 = vsel %vm1263, %v3379, 0
      %v3446 = vsel %vm1263, %v3380, 0
      %v3449 = vsel %vm1263, %v3381, 0
      %v3452 = vsel %vm1263, %v3382, 0
      %v3455 = vsel %vm1263, %v3383, 0
      %v3458 = vsel %vm1263, %v3384, 0
      %v3461 = vsel %vm1263, %v3385, 0
      %v3464 = vsel %vm1263, %v3386, 0
      %v3467 = vsel %vm1263, %v3387, 0
      %v3470 = vsel %vm1263, %v3388, 0
      %v3473 = vsel %vm1263, %v3389, 0
      %v3476 = vsel %vm1263, %v3390, 0
      %v3479 = vsel %vm1263, %v3391, 0
      %v3482 = vsel %vm1263, %v3392, 0
      %v3485 = vsel %vm1263, %v3393, 0
      %v3488 = vsel %vm1263, %v3394, 0
      %v3491 = vsel %vm1263, %v3395, 0
      %v3494 = vsel %vm1360, %v3396, 0
      %3496 = vmatprep.subr.mxu0 0.0
      %3497 = vmatpush1.msra.mxu0 0.0
      %3498 = vmatprep.subr.mxu0 0.0
      %3499 = vmatpush1.msra.mxu0 0.0
      %3500 = vmatprep.subr.mxu0 0.0
      %3501 = vmatpush1.msra.mxu0 0.0
      %3502 = vmatprep.subr.mxu0 0.0
      %3503 = vmatpush1.msra.mxu0 0.0
      %3504 = vmatprep.subr.mxu0 0.0
      %3505 = vmatpush1.msra.mxu0 0.0
      %3506 = vmatprep.subr.mxu0 0.0
      %3507 = vmatpush1.msra.mxu0 0.0
      %3508 = vmatprep.subr.mxu0 0.0
      %3509 = vmatpush1.msra.mxu0 0.0
      %3510 = vmatprep.subr.mxu0 0.0
      %3511 = vmatpush1.msra.mxu0 0.0
      %3512 = vmatprep.subr.mxu0 0.0
      %3513 = vmatpush1.msra.mxu0 0.0
      %3514 = vmatprep.subr.mxu0 0.0
      %3515 = vmatpush1.msra.mxu0 0.0
      %3516 = vmatprep.subr.mxu0 0.0
      %3517 = vmatpush1.msra.mxu0 0.0
      %3518 = vmatprep.subr.mxu0 0.0
      %3519 = vmatpush1.msra.mxu0 0.0
      %3520 = vmatprep.subr.mxu0 0.0
      %3521 = vmatpush1.msra.mxu0 0.0
      %3522 = vmatprep.subr.mxu0 0.0
      %3523 = vmatpush1.msra.mxu0 0.0
      %3524 = vmatprep.subr.mxu0 0.0
      %3525 = vmatpush1.msra.mxu0 0.0
      %3526 = vmatprep.subr.mxu0 0.0
      %3527 = vmatpush1.msra.mxu0 %v3494
      %3528 = vmatprep.subr.mxu0 0.0
      %3529 = vmatpush2.msra.mxu0 0.0
      %3530 = vmatprep.subr.mxu0 0.0
      %3531 = vmatpush2.msra.mxu0 0.0
      %3532 = vmatprep.subr.mxu0 0.0
      %3533 = vmatpush2.msra.mxu0 0.0
      %3534 = vmatprep.subr.mxu0 0.0
      %3535 = vmatpush2.msra.mxu0 0.0
      %3536 = vmatprep.subr.mxu0 0.0
      %3537 = vmatpush2.msra.mxu0 0.0
      %3538 = vmatprep.subr.mxu0 0.0
      %3539 = vmatpush2.msra.mxu0 0.0
      %3540 = vmatprep.subr.mxu0 0.0
      %3541 = vmatpush2.msra.mxu0 0.0
      %3542 = vmatprep.subr.mxu0 0.0
      %3543 = vmatpush2.msra.mxu0 0.0
      %3544 = vmatprep.subr.mxu0 0.0
      %3545 = vmatpush2.msra.mxu0 0.0
      %3546 = vmatprep.subr.mxu0 0.0
      %3547 = vmatpush2.msra.mxu0 0.0
      %3548 = vmatprep.subr.mxu0 0.0
      %3549 = vmatpush2.msra.mxu0 0.0
      %3550 = vmatprep.subr.mxu0 0.0
      %3551 = vmatpush2.msra.mxu0 0.0
      %3552 = vmatprep.subr.mxu0 0.0
      %3553 = vmatpush2.msra.mxu0 0.0
      %3554 = vmatprep.subr.mxu0 0.0
      %3555 = vmatpush2.msra.mxu0 0.0
      %3556 = vmatprep.subr.mxu0 0.0
      %3557 = vmatpush2.msra.mxu0 0.0
      %3558 = vmatprep.subr.mxu0 0.0
      %3559 = vmatpush2.msra.mxu0 0.0
      %3560 = vmatprep.mubr.f32.mxu0 0.0
      %3561 = vmatmul.mubr.f32.gmra.mxu0 %v3398
      %v3562 = vpop.f32.mrf.mxu0
      %v3563 = vadd.f32 0.0, %v3562
      %v3564 = vpop.f32.mrf.mxu0
      %3565 = vmatprep.mubr.f32.mxu0 0.0
      %3566 = vmatmul.mubr.f32.gmra.mxu0 %v3401
      %v3567 = vpop.f32.mrf.mxu0
      %v3568 = vadd.f32 0.0, %v3567
      %v3569 = vpop.f32.mrf.mxu0
      %3570 = vmatprep.mubr.f32.mxu0 0.0
      %3571 = vmatmul.mubr.f32.gmra.mxu0 %v3404
      %v3572 = vpop.f32.mrf.mxu0
      %v3573 = vadd.f32 0.0, %v3572
      %v3574 = vpop.f32.mrf.mxu0
      %3575 = vmatprep.mubr.f32.mxu0 0.0
      %3576 = vmatmul.mubr.f32.gmra.mxu0 %v3407
      %v3577 = vpop.f32.mrf.mxu0
      %v3578 = vadd.f32 0.0, %v3577
      %v3579 = vpop.f32.mrf.mxu0
      %3580 = vmatprep.mubr.f32.mxu0 0.0
      %3581 = vmatmul.mubr.f32.gmra.mxu0 %v3410
      %v3582 = vpop.f32.mrf.mxu0
      %v3583 = vadd.f32 0.0, %v3582
      %v3584 = vpop.f32.mrf.mxu0
      %3585 = vmatprep.mubr.f32.mxu0 0.0
      %3586 = vmatmul.mubr.f32.gmra.mxu0 %v3413
      %v3587 = vpop.f32.mrf.mxu0
      %v3588 = vadd.f32 0.0, %v3587
      %v3589 = vpop.f32.mrf.mxu0
      %3590 = vmatprep.mubr.f32.mxu0 0.0
      %3591 = vmatmul.mubr.f32.gmra.mxu0 %v3416
      %v3592 = vpop.f32.mrf.mxu0
      %v3593 = vadd.f32 0.0, %v3592
      %v3594 = vpop.f32.mrf.mxu0
      %3595 = vmatprep.mubr.f32.mxu0 0.0
      %3596 = vmatmul.mubr.f32.gmra.mxu0 %v3419
      %v3597 = vpop.f32.mrf.mxu0
      %v3598 = vadd.f32 0.0, %v3597
      %v3599 = vpop.f32.mrf.mxu0
      %3600 = vmatprep.mubr.f32.mxu0 0.0
      %3601 = vmatmul.mubr.f32.gmra.mxu0 %v3422
      %v3602 = vpop.f32.mrf.mxu0
      %v3603 = vadd.f32 0.0, %v3602
      %v3604 = vpop.f32.mrf.mxu0
      %3605 = vmatprep.mubr.f32.mxu0 0.0
      %3606 = vmatmul.mubr.f32.gmra.mxu0 %v3425
      %v3607 = vpop.f32.mrf.mxu0
      %v3608 = vadd.f32 0.0, %v3607
      %v3609 = vpop.f32.mrf.mxu0
      %3610 = vmatprep.mubr.f32.mxu0 0.0
      %3611 = vmatmul.mubr.f32.gmra.mxu0 %v3428
      %v3612 = vpop.f32.mrf.mxu0
      %v3613 = vadd.f32 0.0, %v3612
      %v3614 = vpop.f32.mrf.mxu0
      %3615 = vmatprep.mubr.f32.mxu0 0.0
      %3616 = vmatmul.mubr.f32.gmra.mxu0 %v3431
      %v3617 = vpop.f32.mrf.mxu0
      %v3618 = vadd.f32 0.0, %v3617
      %v3619 = vpop.f32.mrf.mxu0
      %3620 = vmatprep.mubr.f32.mxu0 0.0
      %3621 = vmatmul.mubr.f32.gmra.mxu0 %v3434
      %v3622 = vpop.f32.mrf.mxu0
      %v3623 = vadd.f32 0.0, %v3622
      %v3624 = vpop.f32.mrf.mxu0
      %3625 = vmatprep.mubr.f32.mxu0 0.0
      %3626 = vmatmul.mubr.f32.gmra.mxu0 %v3437
      %v3627 = vpop.f32.mrf.mxu0
      %v3628 = vadd.f32 0.0, %v3627
      %v3629 = vpop.f32.mrf.mxu0
      %3630 = vmatprep.mubr.f32.mxu0 0.0
      %3631 = vmatmul.mubr.f32.gmra.mxu0 %v3440
      %v3632 = vpop.f32.mrf.mxu0
      %v3633 = vadd.f32 0.0, %v3632
      %v3634 = vpop.f32.mrf.mxu0
      %3635 = vmatprep.mubr.f32.mxu0 0.0
      %3636 = vmatmul.mubr.f32.gmra.mxu0 %v3443
      %v3637 = vpop.f32.mrf.mxu0
      %v3638 = vadd.f32 0.0, %v3637
      %v3639 = vpop.f32.mrf.mxu0
      %3640 = vmatprep.mubr.f32.mxu0 0.0
      %3641 = vmatmul.mubr.f32.gmra.mxu0 %v3446
      %v3642 = vpop.f32.mrf.mxu0
      %v3643 = vadd.f32 0.0, %v3642
      %v3644 = vpop.f32.mrf.mxu0
      %3645 = vmatprep.mubr.f32.mxu0 0.0
      %3646 = vmatmul.mubr.f32.gmra.mxu0 %v3449
      %v3647 = vpop.f32.mrf.mxu0
      %v3648 = vadd.f32 0.0, %v3647
      %v3649 = vpop.f32.mrf.mxu0
      %3650 = vmatprep.mubr.f32.mxu0 0.0
      %3651 = vmatmul.mubr.f32.gmra.mxu0 %v3452
      %v3652 = vpop.f32.mrf.mxu0
      %v3653 = vadd.f32 0.0, %v3652
      %v3654 = vpop.f32.mrf.mxu0
      %3655 = vmatprep.mubr.f32.mxu0 0.0
      %3656 = vmatmul.mubr.f32.gmra.mxu0 %v3455
      %v3657 = vpop.f32.mrf.mxu0
      %v3658 = vadd.f32 0.0, %v3657
      %v3659 = vpop.f32.mrf.mxu0
      %3660 = vmatprep.mubr.f32.mxu0 0.0
      %3661 = vmatmul.mubr.f32.gmra.mxu0 %v3458
      %v3662 = vpop.f32.mrf.mxu0
      %v3663 = vadd.f32 0.0, %v3662
      %v3664 = vpop.f32.mrf.mxu0
      %3665 = vmatprep.mubr.f32.mxu0 0.0
      %3666 = vmatmul.mubr.f32.gmra.mxu0 %v3461
      %v3667 = vpop.f32.mrf.mxu0
      %v3668 = vadd.f32 0.0, %v3667
      %v3669 = vpop.f32.mrf.mxu0
      %3670 = vmatprep.mubr.f32.mxu0 0.0
      %3671 = vmatmul.mubr.f32.gmra.mxu0 %v3464
      %v3672 = vpop.f32.mrf.mxu0
      %v3673 = vadd.f32 0.0, %v3672
      %v3674 = vpop.f32.mrf.mxu0
      %3675 = vmatprep.mubr.f32.mxu0 0.0
      %3676 = vmatmul.mubr.f32.gmra.mxu0 %v3467
      %v3677 = vpop.f32.mrf.mxu0
      %v3678 = vadd.f32 0.0, %v3677
      %v3679 = vpop.f32.mrf.mxu0
      %3680 = vmatprep.mubr.f32.mxu0 0.0
      %3681 = vmatmul.mubr.f32.gmra.mxu0 %v3470
      %v3682 = vpop.f32.mrf.mxu0
      %v3683 = vadd.f32 0.0, %v3682
      %v3684 = vpop.f32.mrf.mxu0
      %3685 = vmatprep.mubr.f32.mxu0 0.0
      %3686 = vmatmul.mubr.f32.gmra.mxu0 %v3473
      %v3687 = vpop.f32.mrf.mxu0
      %v3688 = vadd.f32 0.0, %v3687
      %v3689 = vpop.f32.mrf.mxu0
      %3690 = vmatprep.mubr.f32.mxu0 0.0
      %3691 = vmatmul.mubr.f32.gmra.mxu0 %v3476
      %v3692 = vpop.f32.mrf.mxu0
      %v3693 = vadd.f32 0.0, %v3692
      %v3694 = vpop.f32.mrf.mxu0
      %3695 = vmatprep.mubr.f32.mxu0 0.0
      %3696 = vmatmul.mubr.f32.gmra.mxu0 %v3479
      %v3697 = vpop.f32.mrf.mxu0
      %v3698 = vadd.f32 0.0, %v3697
      %v3699 = vpop.f32.mrf.mxu0
      %3700 = vmatprep.mubr.f32.mxu0 0.0
      %3701 = vmatmul.mubr.f32.gmra.mxu0 %v3482
      %v3702 = vpop.f32.mrf.mxu0
      %v3703 = vadd.f32 0.0, %v3702
      %v3704 = vpop.f32.mrf.mxu0
      %3705 = vmatprep.mubr.f32.mxu0 0.0
      %3706 = vmatmul.mubr.f32.gmra.mxu0 %v3485
      %v3707 = vpop.f32.mrf.mxu0
      %v3708 = vadd.f32 0.0, %v3707
      %v3709 = vpop.f32.mrf.mxu0
      %3710 = vmatprep.mubr.f32.mxu0 0.0
      %3711 = vmatmul.mubr.f32.gmra.mxu0 %v3488
      %v3712 = vpop.f32.mrf.mxu0
      %v3713 = vadd.f32 0.0, %v3712
      %v3714 = vpop.f32.mrf.mxu0
      %3715 = vmatprep.mubr.f32.mxu0 0.0
      %3716 = vmatmul.mubr.f32.gmra.mxu0 %v3491
      %v3717 = vpop.f32.mrf.mxu0
      %v3718 = vadd.f32 0.0, %v3717
      %v3719 = vpop.f32.mrf.mxu0
      %3720 = vdwg.mxu0
      %v3721 = vadd.f32 %v3204, %v3563
      %v3722 = vadd.f32 %v3205, %v3568
      %v3723 = vadd.f32 %v3206, %v3573
      %v3724 = vadd.f32 %v3207, %v3578
      %v3725 = vadd.f32 %v3208, %v3583
      %v3726 = vadd.f32 %v3209, %v3588
      %v3727 = vadd.f32 %v3210, %v3593
      %v3728 = vadd.f32 %v3211, %v3598
      %v3729 = vadd.f32 %v3212, %v3603
      %v3730 = vadd.f32 %v3213, %v3608
      %v3731 = vadd.f32 %v3214, %v3613
      %v3732 = vadd.f32 %v3215, %v3618
      %v3733 = vadd.f32 %v3216, %v3623
      %v3734 = vadd.f32 %v3217, %v3628
      %v3735 = vadd.f32 %v3218, %v3633
      %v3736 = vadd.f32 %v3219, %v3638
      %v3737 = vadd.f32 %v3220, %v3643
      %v3738 = vadd.f32 %v3221, %v3648
      %v3739 = vadd.f32 %v3222, %v3653
      %v3740 = vadd.f32 %v3223, %v3658
      %v3741 = vadd.f32 %v3224, %v3663
      %v3742 = vadd.f32 %v3225, %v3668
      %v3743 = vadd.f32 %v3226, %v3673
      %v3744 = vadd.f32 %v3227, %v3678
      %v3745 = vadd.f32 %v3228, %v3683
      %v3746 = vadd.f32 %v3229, %v3688
      %v3747 = vadd.f32 %v3230, %v3693
      %v3748 = vadd.f32 %v3231, %v3698
      %v3749 = vadd.f32 %v3232, %v3703
      %v3750 = vadd.f32 %v3233, %v3708
      %v3751 = vadd.f32 %v3234, %v3713
      %v3752 = vadd.f32 %v3235, %v3718
      %vm3753 = vmand %vm2687, %vm2010
      %vm3754 = vmand %vm2688, %vm2011
      %vm3755 = vmand %vm2689, %vm2012
      %vm3756 = vmand %vm2690, %vm2013
      %vm3757 = vmand %vm2691, %vm2014
      %vm3758 = vmand %vm2692, %vm2015
      %vm3759 = vmand %vm2693, %vm2016
      %vm3760 = vmand %vm2694, %vm2017
      %vm3761 = vmand %vm2695, %vm2018
      %vm3762 = vmand %vm2696, %vm2019
      %vm3763 = vmand %vm2697, %vm2020
      %vm3764 = vmand %vm2698, %vm2021
      %vm3765 = vmand %vm2699, %vm2022
      %vm3766 = vmand %vm2700, %vm2023
      %vm3767 = vmand %vm2701, %vm2024
      %vm3768 = vmand %vm2702, %vm2025
      %vm3769 = vmand %vm2703, %vm2026
      %vm3770 = vmand %vm2704, %vm2027
      %vm3771 = vmand %vm2705, %vm2028
      %vm3772 = vmand %vm2706, %vm2029
      %vm3773 = vmand %vm2707, %vm2030
      %vm3774 = vmand %vm2708, %vm2031
      %vm3775 = vmand %vm2709, %vm2032
      %vm3776 = vmand %vm2710, %vm2033
      %vm3777 = vmand %vm2711, %vm2034
      %vm3778 = vmand %vm2712, %vm2035
      %vm3779 = vmand %vm2713, %vm2036
      %vm3780 = vmand %vm2714, %vm2037
      %vm3781 = vmand %vm2715, %vm2038
      %vm3782 = vmand %vm2716, %vm2039
      %vm3783 = vmand %vm2717, %vm2040
      %vm3784 = vmand %vm2718, %vm2041
      %vm3785 = vmand %vm3753, %vm2074
      %vm3786 = vmand %vm3754, %vm2075
      %vm3787 = vmand %vm3755, %vm2076
      %vm3788 = vmand %vm3756, %vm2077
      %vm3789 = vmand %vm3757, %vm2078
      %vm3790 = vmand %vm3758, %vm2079
      %vm3791 = vmand %vm3759, %vm2080
      %vm3792 = vmand %vm3760, %vm2081
      %vm3793 = vmand %vm3761, %vm2082
      %vm3794 = vmand %vm3762, %vm2083
      %vm3795 = vmand %vm3763, %vm2084
      %vm3796 = vmand %vm3764, %vm2085
      %vm3797 = vmand %vm3765, %vm2086
      %vm3798 = vmand %vm3766, %vm2087
      %vm3799 = vmand %vm3767, %vm2088
      %vm3800 = vmand %vm3768, %vm2089
      %vm3801 = vmand %vm3769, %vm2090
      %vm3802 = vmand %vm3770, %vm2091
      %vm3803 = vmand %vm3771, %vm2092
      %vm3804 = vmand %vm3772, %vm2093
      %vm3805 = vmand %vm3773, %vm2094
      %vm3806 = vmand %vm3774, %vm2095
      %vm3807 = vmand %vm3775, %vm2096
      %vm3808 = vmand %vm3776, %vm2097
      %vm3809 = vmand %vm3777, %vm2098
      %vm3810 = vmand %vm3778, %vm2099
      %vm3811 = vmand %vm3779, %vm2100
      %vm3812 = vmand %vm3780, %vm2101
      %vm3813 = vmand %vm3781, %vm2102
      %vm3814 = vmand %vm3782, %vm2103
      %vm3815 = vmand %vm3783, %vm2104
      %vm3816 = vmand %vm3784, %vm2105
      %v3817 = vsel %vm3785, 1, 0
      %v3818 = vsel %vm3786, 1, 0
      %v3819 = vsel %vm3787, 1, 0
      %v3820 = vsel %vm3788, 1, 0
      %v3821 = vsel %vm3789, 1, 0
      %v3822 = vsel %vm3790, 1, 0
      %v3823 = vsel %vm3791, 1, 0
      %v3824 = vsel %vm3792, 1, 0
      %v3825 = vsel %vm3793, 1, 0
      %v3826 = vsel %vm3794, 1, 0
      %v3827 = vsel %vm3795, 1, 0
      %v3828 = vsel %vm3796, 1, 0
      %v3829 = vsel %vm3797, 1, 0
      %v3830 = vsel %vm3798, 1, 0
      %v3831 = vsel %vm3799, 1, 0
      %v3832 = vsel %vm3800, 1, 0
      %v3833 = vsel %vm3801, 1, 0
      %v3834 = vsel %vm3802, 1, 0
      %v3835 = vsel %vm3803, 1, 0
      %v3836 = vsel %vm3804, 1, 0
      %v3837 = vsel %vm3805, 1, 0
      %v3838 = vsel %vm3806, 1, 0
      %v3839 = vsel %vm3807, 1, 0
      %v3840 = vsel %vm3808, 1, 0
      %v3841 = vsel %vm3809, 1, 0
      %v3842 = vsel %vm3810, 1, 0
      %v3843 = vsel %vm3811, 1, 0
      %v3844 = vsel %vm3812, 1, 0
      %v3845 = vsel %vm3813, 1, 0
      %v3846 = vsel %vm3814, 1, 0
      %v3847 = vsel %vm3815, 1, 0
      %v3848 = vsel %vm3816, 1, 0
      %v3849 = vcvt.s32.f32 %v3817
      %v3850 = vcvt.s32.f32 %v3818
      %v3851 = vcvt.s32.f32 %v3819
      %v3852 = vcvt.s32.f32 %v3820
      %v3853 = vcvt.s32.f32 %v3821
      %v3854 = vcvt.s32.f32 %v3822
      %v3855 = vcvt.s32.f32 %v3823
      %v3856 = vcvt.s32.f32 %v3824
      %v3857 = vcvt.s32.f32 %v3825
      %v3858 = vcvt.s32.f32 %v3826
      %v3859 = vcvt.s32.f32 %v3827
      %v3860 = vcvt.s32.f32 %v3828
      %v3861 = vcvt.s32.f32 %v3829
      %v3862 = vcvt.s32.f32 %v3830
      %v3863 = vcvt.s32.f32 %v3831
      %v3864 = vcvt.s32.f32 %v3832
      %v3865 = vcvt.s32.f32 %v3833
      %v3866 = vcvt.s32.f32 %v3834
      %v3867 = vcvt.s32.f32 %v3835
      %v3868 = vcvt.s32.f32 %v3836
      %v3869 = vcvt.s32.f32 %v3837
      %v3870 = vcvt.s32.f32 %v3838
      %v3871 = vcvt.s32.f32 %v3839
      %v3872 = vcvt.s32.f32 %v3840
      %v3873 = vcvt.s32.f32 %v3841
      %v3874 = vcvt.s32.f32 %v3842
      %v3875 = vcvt.s32.f32 %v3843
      %v3876 = vcvt.s32.f32 %v3844
      %v3877 = vcvt.s32.f32 %v3845
      %v3878 = vcvt.s32.f32 %v3846
      %v3879 = vcvt.s32.f32 %v3847
      %v3880 = vcvt.s32.f32 %v3848
      %v3881 = vmul.f32 %v1976, %v3849
      %v3882 = vmul.f32 %v1975, %v3850
      %v3883 = vmul.f32 %v1974, %v3851
      %v3884 = vmul.f32 %v1973, %v3852
      %v3885 = vmul.f32 %v1972, %v3853
      %v3886 = vmul.f32 %v1971, %v3854
      %v3887 = vmul.f32 %v1970, %v3855
      %v3888 = vmul.f32 %v1969, %v3856
      %v3889 = vmul.f32 %v1968, %v3857
      %v3890 = vmul.f32 %v1967, %v3858
      %v3891 = vmul.f32 %v1966, %v3859
      %v3892 = vmul.f32 %v1965, %v3860
      %v3893 = vmul.f32 %v1964, %v3861
      %v3894 = vmul.f32 %v1963, %v3862
      %v3895 = vmul.f32 %v1962, %v3863
      %v3896 = vmul.f32 %v1961, %v3864
      %v3897 = vmul.f32 %v1960, %v3865
      %v3898 = vmul.f32 %v1959, %v3866
      %v3899 = vmul.f32 %v1958, %v3867
      %v3900 = vmul.f32 %v1957, %v3868
      %v3901 = vmul.f32 %v1956, %v3869
      %v3902 = vmul.f32 %v1955, %v3870
      %v3903 = vmul.f32 %v1954, %v3871
      %v3904 = vmul.f32 %v1953, %v3872
      %v3905 = vmul.f32 %v1952, %v3873
      %v3906 = vmul.f32 %v1951, %v3874
      %v3907 = vmul.f32 %v1950, %v3875
      %v3908 = vmul.f32 %v1949, %v3876
      %v3909 = vmul.f32 %v1948, %v3877
      %v3910 = vmul.f32 %v1947, %v3878
      %v3911 = vmul.f32 %v1946, %v3879
      %v3912 = vmul.f32 %v1977, %v3880
      %v3913 = vld [vmem:[%s1 + $0x14] sm:$0xf]
      %v3915 = vsel %vm1263, %v3881, 0
      %v3918 = vsel %vm1263, %v3882, 0
      %v3921 = vsel %vm1263, %v3883, 0
      %v3924 = vsel %vm1263, %v3884, 0
      %v3927 = vsel %vm1263, %v3885, 0
      %v3930 = vsel %vm1263, %v3886, 0
      %v3933 = vsel %vm1263, %v3887, 0
      %v3936 = vsel %vm1263, %v3888, 0
      %v3939 = vsel %vm1263, %v3889, 0
      %v3942 = vsel %vm1263, %v3890, 0
      %v3945 = vsel %vm1263, %v3891, 0
      %v3948 = vsel %vm1263, %v3892, 0
      %v3951 = vsel %vm1263, %v3893, 0
      %v3954 = vsel %vm1263, %v3894, 0
      %v3957 = vsel %vm1263, %v3895, 0
      %v3960 = vsel %vm1263, %v3896, 0
      %v3963 = vsel %vm1263, %v3897, 0
      %v3966 = vsel %vm1263, %v3898, 0
      %v3969 = vsel %vm1263, %v3899, 0
      %v3972 = vsel %vm1263, %v3900, 0
      %v3975 = vsel %vm1263, %v3901, 0
      %v3978 = vsel %vm1263, %v3902, 0
      %v3981 = vsel %vm1263, %v3903, 0
      %v3984 = vsel %vm1263, %v3904, 0
      %v3987 = vsel %vm1263, %v3905, 0
      %v3990 = vsel %vm1263, %v3906, 0
      %v3993 = vsel %vm1263, %v3907, 0
      %v3996 = vsel %vm1263, %v3908, 0
      %v3999 = vsel %vm1263, %v3909, 0
      %v4002 = vsel %vm1263, %v3910, 0
      %v4005 = vsel %vm1263, %v3911, 0
      %v4008 = vsel %vm1263, %v3912, 0
      %v4011 = vsel %vm1360, %v3913, 0
      %4013 = vmatprep.subr.mxu0 0.0
      %4014 = vmatpush1.msra.mxu0 0.0
      %4015 = vmatprep.subr.mxu0 0.0
      %4016 = vmatpush1.msra.mxu0 0.0
      %4017 = vmatprep.subr.mxu0 0.0
      %4018 = vmatpush1.msra.mxu0 0.0
      %4019 = vmatprep.subr.mxu0 0.0
      %4020 = vmatpush1.msra.mxu0 0.0
      %4021 = vmatprep.subr.mxu0 0.0
      %4022 = vmatpush1.msra.mxu0 0.0
      %4023 = vmatprep.subr.mxu0 0.0
      %4024 = vmatpush1.msra.mxu0 0.0
      %4025 = vmatprep.subr.mxu0 0.0
      %4026 = vmatpush1.msra.mxu0 0.0
      %4027 = vmatprep.subr.mxu0 0.0
      %4028 = vmatpush1.msra.mxu0 0.0
      %4029 = vmatprep.subr.mxu0 0.0
      %4030 = vmatpush1.msra.mxu0 0.0
      %4031 = vmatprep.subr.mxu0 0.0
      %4032 = vmatpush1.msra.mxu0 0.0
      %4033 = vmatprep.subr.mxu0 0.0
      %4034 = vmatpush1.msra.mxu0 0.0
      %4035 = vmatprep.subr.mxu0 0.0
      %4036 = vmatpush1.msra.mxu0 0.0
      %4037 = vmatprep.subr.mxu0 0.0
      %4038 = vmatpush1.msra.mxu0 0.0
      %4039 = vmatprep.subr.mxu0 0.0
      %4040 = vmatpush1.msra.mxu0 0.0
      %4041 = vmatprep.subr.mxu0 0.0
      %4042 = vmatpush1.msra.mxu0 0.0
      %4043 = vmatprep.subr.mxu0 0.0
      %4044 = vmatpush1.msra.mxu0 %v4011
      %4045 = vmatprep.subr.mxu0 0.0
      %4046 = vmatpush2.msra.mxu0 0.0
      %4047 = vmatprep.subr.mxu0 0.0
      %4048 = vmatpush2.msra.mxu0 0.0
      %4049 = vmatprep.subr.mxu0 0.0
      %4050 = vmatpush2.msra.mxu0 0.0
      %4051 = vmatprep.subr.mxu0 0.0
      %4052 = vmatpush2.msra.mxu0 0.0
      %4053 = vmatprep.subr.mxu0 0.0
      %4054 = vmatpush2.msra.mxu0 0.0
      %4055 = vmatprep.subr.mxu0 0.0
      %4056 = vmatpush2.msra.mxu0 0.0
      %4057 = vmatprep.subr.mxu0 0.0
      %4058 = vmatpush2.msra.mxu0 0.0
      %4059 = vmatprep.subr.mxu0 0.0
      %4060 = vmatpush2.msra.mxu0 0.0
      %4061 = vmatprep.subr.mxu0 0.0
      %4062 = vmatpush2.msra.mxu0 0.0
      %4063 = vmatprep.subr.mxu0 0.0
      %4064 = vmatpush2.msra.mxu0 0.0
      %4065 = vmatprep.subr.mxu0 0.0
      %4066 = vmatpush2.msra.mxu0 0.0
      %4067 = vmatprep.subr.mxu0 0.0
      %4068 = vmatpush2.msra.mxu0 0.0
      %4069 = vmatprep.subr.mxu0 0.0
      %4070 = vmatpush2.msra.mxu0 0.0
      %4071 = vmatprep.subr.mxu0 0.0
      %4072 = vmatpush2.msra.mxu0 0.0
      %4073 = vmatprep.subr.mxu0 0.0
      %4074 = vmatpush2.msra.mxu0 0.0
      %4075 = vmatprep.subr.mxu0 0.0
      %4076 = vmatpush2.msra.mxu0 0.0
      %4077 = vmatprep.mubr.f32.mxu0 0.0
      %4078 = vmatmul.mubr.f32.gmra.mxu0 %v3915
      %v4079 = vpop.f32.mrf.mxu0
      %v4080 = vadd.f32 0.0, %v4079
      %v4081 = vpop.f32.mrf.mxu0
      %4082 = vmatprep.mubr.f32.mxu0 0.0
      %4083 = vmatmul.mubr.f32.gmra.mxu0 %v3918
      %v4084 = vpop.f32.mrf.mxu0
      %v4085 = vadd.f32 0.0, %v4084
      %v4086 = vpop.f32.mrf.mxu0
      %4087 = vmatprep.mubr.f32.mxu0 0.0
      %4088 = vmatmul.mubr.f32.gmra.mxu0 %v3921
      %v4089 = vpop.f32.mrf.mxu0
      %v4090 = vadd.f32 0.0, %v4089
      %v4091 = vpop.f32.mrf.mxu0
      %4092 = vmatprep.mubr.f32.mxu0 0.0
      %4093 = vmatmul.mubr.f32.gmra.mxu0 %v3924
      %v4094 = vpop.f32.mrf.mxu0
      %v4095 = vadd.f32 0.0, %v4094
      %v4096 = vpop.f32.mrf.mxu0
      %4097 = vmatprep.mubr.f32.mxu0 0.0
      %4098 = vmatmul.mubr.f32.gmra.mxu0 %v3927
      %v4099 = vpop.f32.mrf.mxu0
      %v4100 = vadd.f32 0.0, %v4099
      %v4101 = vpop.f32.mrf.mxu0
      %4102 = vmatprep.mubr.f32.mxu0 0.0
      %4103 = vmatmul.mubr.f32.gmra.mxu0 %v3930
      %v4104 = vpop.f32.mrf.mxu0
      %v4105 = vadd.f32 0.0, %v4104
      %v4106 = vpop.f32.mrf.mxu0
      %4107 = vmatprep.mubr.f32.mxu0 0.0
      %4108 = vmatmul.mubr.f32.gmra.mxu0 %v3933
      %v4109 = vpop.f32.mrf.mxu0
      %v4110 = vadd.f32 0.0, %v4109
      %v4111 = vpop.f32.mrf.mxu0
      %4112 = vmatprep.mubr.f32.mxu0 0.0
      %4113 = vmatmul.mubr.f32.gmra.mxu0 %v3936
      %v4114 = vpop.f32.mrf.mxu0
      %v4115 = vadd.f32 0.0, %v4114
      %v4116 = vpop.f32.mrf.mxu0
      %4117 = vmatprep.mubr.f32.mxu0 0.0
      %4118 = vmatmul.mubr.f32.gmra.mxu0 %v3939
      %v4119 = vpop.f32.mrf.mxu0
      %v4120 = vadd.f32 0.0, %v4119
      %v4121 = vpop.f32.mrf.mxu0
      %4122 = vmatprep.mubr.f32.mxu0 0.0
      %4123 = vmatmul.mubr.f32.gmra.mxu0 %v3942
      %v4124 = vpop.f32.mrf.mxu0
      %v4125 = vadd.f32 0.0, %v4124
      %v4126 = vpop.f32.mrf.mxu0
      %4127 = vmatprep.mubr.f32.mxu0 0.0
      %4128 = vmatmul.mubr.f32.gmra.mxu0 %v3945
      %v4129 = vpop.f32.mrf.mxu0
      %v4130 = vadd.f32 0.0, %v4129
      %v4131 = vpop.f32.mrf.mxu0
      %4132 = vmatprep.mubr.f32.mxu0 0.0
      %4133 = vmatmul.mubr.f32.gmra.mxu0 %v3948
      %v4134 = vpop.f32.mrf.mxu0
      %v4135 = vadd.f32 0.0, %v4134
      %v4136 = vpop.f32.mrf.mxu0
      %4137 = vmatprep.mubr.f32.mxu0 0.0
      %4138 = vmatmul.mubr.f32.gmra.mxu0 %v3951
      %v4139 = vpop.f32.mrf.mxu0
      %v4140 = vadd.f32 0.0, %v4139
      %v4141 = vpop.f32.mrf.mxu0
      %4142 = vmatprep.mubr.f32.mxu0 0.0
      %4143 = vmatmul.mubr.f32.gmra.mxu0 %v3954
      %v4144 = vpop.f32.mrf.mxu0
      %v4145 = vadd.f32 0.0, %v4144
      %v4146 = vpop.f32.mrf.mxu0
      %4147 = vmatprep.mubr.f32.mxu0 0.0
      %4148 = vmatmul.mubr.f32.gmra.mxu0 %v3957
      %v4149 = vpop.f32.mrf.mxu0
      %v4150 = vadd.f32 0.0, %v4149
      %v4151 = vpop.f32.mrf.mxu0
      %4152 = vmatprep.mubr.f32.mxu0 0.0
      %4153 = vmatmul.mubr.f32.gmra.mxu0 %v3960
      %v4154 = vpop.f32.mrf.mxu0
      %v4155 = vadd.f32 0.0, %v4154
      %v4156 = vpop.f32.mrf.mxu0
      %4157 = vmatprep.mubr.f32.mxu0 0.0
      %4158 = vmatmul.mubr.f32.gmra.mxu0 %v3963
      %v4159 = vpop.f32.mrf.mxu0
      %v4160 = vadd.f32 0.0, %v4159
      %v4161 = vpop.f32.mrf.mxu0
      %4162 = vmatprep.mubr.f32.mxu0 0.0
      %4163 = vmatmul.mubr.f32.gmra.mxu0 %v3966
      %v4164 = vpop.f32.mrf.mxu0
      %v4165 = vadd.f32 0.0, %v4164
      %v4166 = vpop.f32.mrf.mxu0
      %4167 = vmatprep.mubr.f32.mxu0 0.0
      %4168 = vmatmul.mubr.f32.gmra.mxu0 %v3969
      %v4169 = vpop.f32.mrf.mxu0
      %v4170 = vadd.f32 0.0, %v4169
      %v4171 = vpop.f32.mrf.mxu0
      %4172 = vmatprep.mubr.f32.mxu0 0.0
      %4173 = vmatmul.mubr.f32.gmra.mxu0 %v3972
      %v4174 = vpop.f32.mrf.mxu0
      %v4175 = vadd.f32 0.0, %v4174
      %v4176 = vpop.f32.mrf.mxu0
      %4177 = vmatprep.mubr.f32.mxu0 0.0
      %4178 = vmatmul.mubr.f32.gmra.mxu0 %v3975
      %v4179 = vpop.f32.mrf.mxu0
      %v4180 = vadd.f32 0.0, %v4179
      %v4181 = vpop.f32.mrf.mxu0
      %4182 = vmatprep.mubr.f32.mxu0 0.0
      %4183 = vmatmul.mubr.f32.gmra.mxu0 %v3978
      %v4184 = vpop.f32.mrf.mxu0
      %v4185 = vadd.f32 0.0, %v4184
      %v4186 = vpop.f32.mrf.mxu0
      %4187 = vmatprep.mubr.f32.mxu0 0.0
      %4188 = vmatmul.mubr.f32.gmra.mxu0 %v3981
      %v4189 = vpop.f32.mrf.mxu0
      %v4190 = vadd.f32 0.0, %v4189
      %v4191 = vpop.f32.mrf.mxu0
      %4192 = vmatprep.mubr.f32.mxu0 0.0
      %4193 = vmatmul.mubr.f32.gmra.mxu0 %v3984
      %v4194 = vpop.f32.mrf.mxu0
      %v4195 = vadd.f32 0.0, %v4194
      %v4196 = vpop.f32.mrf.mxu0
      %4197 = vmatprep.mubr.f32.mxu0 0.0
      %4198 = vmatmul.mubr.f32.gmra.mxu0 %v3987
      %v4199 = vpop.f32.mrf.mxu0
      %v4200 = vadd.f32 0.0, %v4199
      %v4201 = vpop.f32.mrf.mxu0
      %4202 = vmatprep.mubr.f32.mxu0 0.0
      %4203 = vmatmul.mubr.f32.gmra.mxu0 %v3990
      %v4204 = vpop.f32.mrf.mxu0
      %v4205 = vadd.f32 0.0, %v4204
      %v4206 = vpop.f32.mrf.mxu0
      %4207 = vmatprep.mubr.f32.mxu0 0.0
      %4208 = vmatmul.mubr.f32.gmra.mxu0 %v3993
      %v4209 = vpop.f32.mrf.mxu0
      %v4210 = vadd.f32 0.0, %v4209
      %v4211 = vpop.f32.mrf.mxu0
      %4212 = vmatprep.mubr.f32.mxu0 0.0
      %4213 = vmatmul.mubr.f32.gmra.mxu0 %v3996
      %v4214 = vpop.f32.mrf.mxu0
      %v4215 = vadd.f32 0.0, %v4214
      %v4216 = vpop.f32.mrf.mxu0
      %4217 = vmatprep.mubr.f32.mxu0 0.0
      %4218 = vmatmul.mubr.f32.gmra.mxu0 %v3999
      %v4219 = vpop.f32.mrf.mxu0
      %v4220 = vadd.f32 0.0, %v4219
      %v4221 = vpop.f32.mrf.mxu0
      %4222 = vmatprep.mubr.f32.mxu0 0.0
      %4223 = vmatmul.mubr.f32.gmra.mxu0 %v4002
      %v4224 = vpop.f32.mrf.mxu0
      %v4225 = vadd.f32 0.0, %v4224
      %v4226 = vpop.f32.mrf.mxu0
      %4227 = vmatprep.mubr.f32.mxu0 0.0
      %4228 = vmatmul.mubr.f32.gmra.mxu0 %v4005
      %v4229 = vpop.f32.mrf.mxu0
      %v4230 = vadd.f32 0.0, %v4229
      %v4231 = vpop.f32.mrf.mxu0
      %4232 = vmatprep.mubr.f32.mxu0 0.0
      %4233 = vmatmul.mubr.f32.gmra.mxu0 %v4008
      %v4234 = vpop.f32.mrf.mxu0
      %v4235 = vadd.f32 0.0, %v4234
      %v4236 = vpop.f32.mrf.mxu0
      %4237 = vdwg.mxu0
      %v4238 = vadd.f32 %v3721, %v4080
      %v4239 = vadd.f32 %v3722, %v4085
      %v4240 = vadd.f32 %v3723, %v4090
      %v4241 = vadd.f32 %v3724, %v4095
      %v4242 = vadd.f32 %v3725, %v4100
      %v4243 = vadd.f32 %v3726, %v4105
      %v4244 = vadd.f32 %v3727, %v4110
      %v4245 = vadd.f32 %v3728, %v4115
      %v4246 = vadd.f32 %v3729, %v4120
      %v4247 = vadd.f32 %v3730, %v4125
      %v4248 = vadd.f32 %v3731, %v4130
      %v4249 = vadd.f32 %v3732, %v4135
      %v4250 = vadd.f32 %v3733, %v4140
      %v4251 = vadd.f32 %v3734, %v4145
      %v4252 = vadd.f32 %v3735, %v4150
      %v4253 = vadd.f32 %v3736, %v4155
      %v4254 = vadd.f32 %v3737, %v4160
      %v4255 = vadd.f32 %v3738, %v4165
      %v4256 = vadd.f32 %v3739, %v4170
      %v4257 = vadd.f32 %v3740, %v4175
      %v4258 = vadd.f32 %v3741, %v4180
      %v4259 = vadd.f32 %v3742, %v4185
      %v4260 = vadd.f32 %v3743, %v4190
      %v4261 = vadd.f32 %v3744, %v4195
      %v4262 = vadd.f32 %v3745, %v4200
      %v4263 = vadd.f32 %v3746, %v4205
      %v4264 = vadd.f32 %v3747, %v4210
      %v4265 = vadd.f32 %v3748, %v4215
      %v4266 = vadd.f32 %v3749, %v4220
      %v4267 = vadd.f32 %v3750, %v4225
      %v4268 = vadd.f32 %v3751, %v4230
      %v4269 = vadd.f32 %v3752, %v4235
      %v4270 = vadd.f32 %v460, 1.0
      %v4271 = vadd.f32 %v461, 1.0
      %v4272 = vadd.f32 %v462, 1.0
      %v4273 = vadd.f32 %v463, 1.0
      %v4274 = vadd.f32 %v464, 1.0
      %v4275 = vadd.f32 %v465, 1.0
      %v4276 = vadd.f32 %v466, 1.0
      %v4277 = vadd.f32 %v467, 1.0
      %v4278 = vadd.f32 %v468, 1.0
      %v4279 = vadd.f32 %v469, 1.0
      %v4280 = vadd.f32 %v470, 1.0
      %v4281 = vadd.f32 %v471, 1.0
      %v4282 = vadd.f32 %v472, 1.0
      %v4283 = vadd.f32 %v473, 1.0
      %v4284 = vadd.f32 %v474, 1.0
      %v4285 = vadd.f32 %v475, 1.0
      %v4286 = vadd.f32 %v476, 1.0
      %v4287 = vadd.f32 %v477, 1.0
      %v4288 = vadd.f32 %v478, 1.0
      %v4289 = vadd.f32 %v479, 1.0
      %v4290 = vadd.f32 %v480, 1.0
      %v4291 = vadd.f32 %v481, 1.0
      %v4292 = vadd.f32 %v482, 1.0
      %v4293 = vadd.f32 %v483, 1.0
      %v4294 = vadd.f32 %v484, 1.0
      %v4295 = vadd.f32 %v485, 1.0
      %v4296 = vadd.f32 %v486, 1.0
      %v4297 = vadd.f32 %v487, 1.0
      %v4298 = vadd.f32 %v488, 1.0
      %v4299 = vadd.f32 %v489, 1.0
      %v4300 = vadd.f32 %v490, 1.0
      %v4301 = vadd.f32 %v491, 1.0
      %vm4302 = vcmp.ge.f32.partialorder %v4270, 0.0
      %vm4303 = vcmp.ge.f32.partialorder %v4271, 0.0
      %vm4304 = vcmp.ge.f32.partialorder %v4272, 0.0
      %vm4305 = vcmp.ge.f32.partialorder %v4273, 0.0
      %vm4306 = vcmp.ge.f32.partialorder %v4274, 0.0
      %vm4307 = vcmp.ge.f32.partialorder %v4275, 0.0
      %vm4308 = vcmp.ge.f32.partialorder %v4276, 0.0
      %vm4309 = vcmp.ge.f32.partialorder %v4277, 0.0
      %vm4310 = vcmp.ge.f32.partialorder %v4278, 0.0
      %vm4311 = vcmp.ge.f32.partialorder %v4279, 0.0
      %vm4312 = vcmp.ge.f32.partialorder %v4280, 0.0
      %vm4313 = vcmp.ge.f32.partialorder %v4281, 0.0
      %vm4314 = vcmp.ge.f32.partialorder %v4282, 0.0
      %vm4315 = vcmp.ge.f32.partialorder %v4283, 0.0
      %vm4316 = vcmp.ge.f32.partialorder %v4284, 0.0
      %vm4317 = vcmp.ge.f32.partialorder %v4285, 0.0
      %vm4318 = vcmp.ge.f32.partialorder %v4286, 0.0
      %vm4319 = vcmp.ge.f32.partialorder %v4287, 0.0
      %vm4320 = vcmp.ge.f32.partialorder %v4288, 0.0
      %vm4321 = vcmp.ge.f32.partialorder %v4289, 0.0
      %vm4322 = vcmp.ge.f32.partialorder %v4290, 0.0
      %vm4323 = vcmp.ge.f32.partialorder %v4291, 0.0
      %vm4324 = vcmp.ge.f32.partialorder %v4292, 0.0
      %vm4325 = vcmp.ge.f32.partialorder %v4293, 0.0
      %vm4326 = vcmp.ge.f32.partialorder %v4294, 0.0
      %vm4327 = vcmp.ge.f32.partialorder %v4295, 0.0
      %vm4328 = vcmp.ge.f32.partialorder %v4296, 0.0
      %vm4329 = vcmp.ge.f32.partialorder %v4297, 0.0
      %vm4330 = vcmp.ge.f32.partialorder %v4298, 0.0
      %vm4331 = vcmp.ge.f32.partialorder %v4299, 0.0
      %vm4332 = vcmp.ge.f32.partialorder %v4300, 0.0
      %vm4333 = vcmp.ge.f32.partialorder %v4301, 0.0
      %vm4334 = vcmp.le.f32.partialorder %v4270, 15.0
      %vm4335 = vcmp.le.f32.partialorder %v4271, 15.0
      %vm4336 = vcmp.le.f32.partialorder %v4272, 15.0
      %vm4337 = vcmp.le.f32.partialorder %v4273, 15.0
      %vm4338 = vcmp.le.f32.partialorder %v4274, 15.0
      %vm4339 = vcmp.le.f32.partialorder %v4275, 15.0
      %vm4340 = vcmp.le.f32.partialorder %v4276, 15.0
      %vm4341 = vcmp.le.f32.partialorder %v4277, 15.0
      %vm4342 = vcmp.le.f32.partialorder %v4278, 15.0
      %vm4343 = vcmp.le.f32.partialorder %v4279, 15.0
      %vm4344 = vcmp.le.f32.partialorder %v4280, 15.0
      %vm4345 = vcmp.le.f32.partialorder %v4281, 15.0
      %vm4346 = vcmp.le.f32.partialorder %v4282, 15.0
      %vm4347 = vcmp.le.f32.partialorder %v4283, 15.0
      %vm4348 = vcmp.le.f32.partialorder %v4284, 15.0
      %vm4349 = vcmp.le.f32.partialorder %v4285, 15.0
      %vm4350 = vcmp.le.f32.partialorder %v4286, 15.0
      %vm4351 = vcmp.le.f32.partialorder %v4287, 15.0
      %vm4352 = vcmp.le.f32.partialorder %v4288, 15.0
      %vm4353 = vcmp.le.f32.partialorder %v4289, 15.0
      %vm4354 = vcmp.le.f32.partialorder %v4290, 15.0
      %vm4355 = vcmp.le.f32.partialorder %v4291, 15.0
      %vm4356 = vcmp.le.f32.partialorder %v4292, 15.0
      %vm4357 = vcmp.le.f32.partialorder %v4293, 15.0
      %vm4358 = vcmp.le.f32.partialorder %v4294, 15.0
      %vm4359 = vcmp.le.f32.partialorder %v4295, 15.0
      %vm4360 = vcmp.le.f32.partialorder %v4296, 15.0
      %vm4361 = vcmp.le.f32.partialorder %v4297, 15.0
      %vm4362 = vcmp.le.f32.partialorder %v4298, 15.0
      %vm4363 = vcmp.le.f32.partialorder %v4299, 15.0
      %vm4364 = vcmp.le.f32.partialorder %v4300, 15.0
      %vm4365 = vcmp.le.f32.partialorder %v4301, 15.0
      %vm4366 = vmand %vm4302, %vm4334
      %vm4367 = vmand %vm4303, %vm4335
      %vm4368 = vmand %vm4304, %vm4336
      %vm4369 = vmand %vm4305, %vm4337
      %vm4370 = vmand %vm4306, %vm4338
      %vm4371 = vmand %vm4307, %vm4339
      %vm4372 = vmand %vm4308, %vm4340
      %vm4373 = vmand %vm4309, %vm4341
      %vm4374 = vmand %vm4310, %vm4342
      %vm4375 = vmand %vm4311, %vm4343
      %vm4376 = vmand %vm4312, %vm4344
      %vm4377 = vmand %vm4313, %vm4345
      %vm4378 = vmand %vm4314, %vm4346
      %vm4379 = vmand %vm4315, %vm4347
      %vm4380 = vmand %vm4316, %vm4348
      %vm4381 = vmand %vm4317, %vm4349
      %vm4382 = vmand %vm4318, %vm4350
      %vm4383 = vmand %vm4319, %vm4351
      %vm4384 = vmand %vm4320, %vm4352
      %vm4385 = vmand %vm4321, %vm4353
      %vm4386 = vmand %vm4322, %vm4354
      %vm4387 = vmand %vm4323, %vm4355
      %vm4388 = vmand %vm4324, %vm4356
      %vm4389 = vmand %vm4325, %vm4357
      %vm4390 = vmand %vm4326, %vm4358
      %vm4391 = vmand %vm4327, %vm4359
      %vm4392 = vmand %vm4328, %vm4360
      %vm4393 = vmand %vm4329, %vm4361
      %vm4394 = vmand %vm4330, %vm4362
      %vm4395 = vmand %vm4331, %vm4363
      %vm4396 = vmand %vm4332, %vm4364
      %vm4397 = vmand %vm4333, %vm4365
      %vm4398 = vmand %vm4366, %vm781
      %vm4399 = vmand %vm4367, %vm782
      %vm4400 = vmand %vm4368, %vm783
      %vm4401 = vmand %vm4369, %vm784
      %vm4402 = vmand %vm4370, %vm785
      %vm4403 = vmand %vm4371, %vm786
      %vm4404 = vmand %vm4372, %vm787
      %vm4405 = vmand %vm4373, %vm788
      %vm4406 = vmand %vm4374, %vm789
      %vm4407 = vmand %vm4375, %vm790
      %vm4408 = vmand %vm4376, %vm791
      %vm4409 = vmand %vm4377, %vm792
      %vm4410 = vmand %vm4378, %vm793
      %vm4411 = vmand %vm4379, %vm794
      %vm4412 = vmand %vm4380, %vm795
      %vm4413 = vmand %vm4381, %vm796
      %vm4414 = vmand %vm4382, %vm797
      %vm4415 = vmand %vm4383, %vm798
      %vm4416 = vmand %vm4384, %vm799
      %vm4417 = vmand %vm4385, %vm800
      %vm4418 = vmand %vm4386, %vm801
      %vm4419 = vmand %vm4387, %vm802
      %vm4420 = vmand %vm4388, %vm803
      %vm4421 = vmand %vm4389, %vm804
      %vm4422 = vmand %vm4390, %vm805
      %vm4423 = vmand %vm4391, %vm806
      %vm4424 = vmand %vm4392, %vm807
      %vm4425 = vmand %vm4393, %vm808
      %vm4426 = vmand %vm4394, %vm809
      %vm4427 = vmand %vm4395, %vm810
      %vm4428 = vmand %vm4396, %vm811
      %vm4429 = vmand %vm4397, %vm812
      %vm4430 = vmand %vm4398, %vm845
      %vm4431 = vmand %vm4399, %vm846
      %vm4432 = vmand %vm4400, %vm847
      %vm4433 = vmand %vm4401, %vm848
      %vm4434 = vmand %vm4402, %vm849
      %vm4435 = vmand %vm4403, %vm850
      %vm4436 = vmand %vm4404, %vm851
      %vm4437 = vmand %vm4405, %vm852
      %vm4438 = vmand %vm4406, %vm853
      %vm4439 = vmand %vm4407, %vm854
      %vm4440 = vmand %vm4408, %vm855
      %vm4441 = vmand %vm4409, %vm856
      %vm4442 = vmand %vm4410, %vm857
      %vm4443 = vmand %vm4411, %vm858
      %vm4444 = vmand %vm4412, %vm859
      %vm4445 = vmand %vm4413, %vm860
      %vm4446 = vmand %vm4414, %vm861
      %vm4447 = vmand %vm4415, %vm862
      %vm4448 = vmand %vm4416, %vm863
      %vm4449 = vmand %vm4417, %vm864
      %vm4450 = vmand %vm4418, %vm865
      %vm4451 = vmand %vm4419, %vm866
      %vm4452 = vmand %vm4420, %vm867
      %vm4453 = vmand %vm4421, %vm868
      %vm4454 = vmand %vm4422, %vm869
      %vm4455 = vmand %vm4423, %vm870
      %vm4456 = vmand %vm4424, %vm871
      %vm4457 = vmand %vm4425, %vm872
      %vm4458 = vmand %vm4426, %vm873
      %vm4459 = vmand %vm4427, %vm874
      %vm4460 = vmand %vm4428, %vm875
      %vm4461 = vmand %vm4429, %vm876
      %v4462 = vsel %vm4430, 1, 0
      %v4463 = vsel %vm4431, 1, 0
      %v4464 = vsel %vm4432, 1, 0
      %v4465 = vsel %vm4433, 1, 0
      %v4466 = vsel %vm4434, 1, 0
      %v4467 = vsel %vm4435, 1, 0
      %v4468 = vsel %vm4436, 1, 0
      %v4469 = vsel %vm4437, 1, 0
      %v4470 = vsel %vm4438, 1, 0
      %v4471 = vsel %vm4439, 1, 0
      %v4472 = vsel %vm4440, 1, 0
      %v4473 = vsel %vm4441, 1, 0
      %v4474 = vsel %vm4442, 1, 0
      %v4475 = vsel %vm4443, 1, 0
      %v4476 = vsel %vm4444, 1, 0
      %v4477 = vsel %vm4445, 1, 0
      %v4478 = vsel %vm4446, 1, 0
      %v4479 = vsel %vm4447, 1, 0
      %v4480 = vsel %vm4448, 1, 0
      %v4481 = vsel %vm4449, 1, 0
      %v4482 = vsel %vm4450, 1, 0
      %v4483 = vsel %vm4451, 1, 0
      %v4484 = vsel %vm4452, 1, 0
      %v4485 = vsel %vm4453, 1, 0
      %v4486 = vsel %vm4454, 1, 0
      %v4487 = vsel %vm4455, 1, 0
      %v4488 = vsel %vm4456, 1, 0
      %v4489 = vsel %vm4457, 1, 0
      %v4490 = vsel %vm4458, 1, 0
      %v4491 = vsel %vm4459, 1, 0
      %v4492 = vsel %vm4460, 1, 0
      %v4493 = vsel %vm4461, 1, 0
      %v4494 = vcvt.s32.f32 %v4462
      %v4495 = vcvt.s32.f32 %v4463
      %v4496 = vcvt.s32.f32 %v4464
      %v4497 = vcvt.s32.f32 %v4465
      %v4498 = vcvt.s32.f32 %v4466
      %v4499 = vcvt.s32.f32 %v4467
      %v4500 = vcvt.s32.f32 %v4468
      %v4501 = vcvt.s32.f32 %v4469
      %v4502 = vcvt.s32.f32 %v4470
      %v4503 = vcvt.s32.f32 %v4471
      %v4504 = vcvt.s32.f32 %v4472
      %v4505 = vcvt.s32.f32 %v4473
      %v4506 = vcvt.s32.f32 %v4474
      %v4507 = vcvt.s32.f32 %v4475
      %v4508 = vcvt.s32.f32 %v4476
      %v4509 = vcvt.s32.f32 %v4477
      %v4510 = vcvt.s32.f32 %v4478
      %v4511 = vcvt.s32.f32 %v4479
      %v4512 = vcvt.s32.f32 %v4480
      %v4513 = vcvt.s32.f32 %v4481
      %v4514 = vcvt.s32.f32 %v4482
      %v4515 = vcvt.s32.f32 %v4483
      %v4516 = vcvt.s32.f32 %v4484
      %v4517 = vcvt.s32.f32 %v4485
      %v4518 = vcvt.s32.f32 %v4486
      %v4519 = vcvt.s32.f32 %v4487
      %v4520 = vcvt.s32.f32 %v4488
      %v4521 = vcvt.s32.f32 %v4489
      %v4522 = vcvt.s32.f32 %v4490
      %v4523 = vcvt.s32.f32 %v4491
      %v4524 = vcvt.s32.f32 %v4492
      %v4525 = vcvt.s32.f32 %v4493
      %v4526 = vmul.f32 %v618, %v4494
      %v4527 = vmul.f32 %v617, %v4495
      %v4528 = vmul.f32 %v616, %v4496
      %v4529 = vmul.f32 %v615, %v4497
      %v4530 = vmul.f32 %v614, %v4498
      %v4531 = vmul.f32 %v613, %v4499
      %v4532 = vmul.f32 %v612, %v4500
      %v4533 = vmul.f32 %v611, %v4501
      %v4534 = vmul.f32 %v610, %v4502
      %v4535 = vmul.f32 %v609, %v4503
      %v4536 = vmul.f32 %v608, %v4504
      %v4537 = vmul.f32 %v607, %v4505
      %v4538 = vmul.f32 %v606, %v4506
      %v4539 = vmul.f32 %v605, %v4507
      %v4540 = vmul.f32 %v604, %v4508
      %v4541 = vmul.f32 %v603, %v4509
      %v4542 = vmul.f32 %v602, %v4510
      %v4543 = vmul.f32 %v601, %v4511
      %v4544 = vmul.f32 %v600, %v4512
      %v4545 = vmul.f32 %v599, %v4513
      %v4546 = vmul.f32 %v598, %v4514
      %v4547 = vmul.f32 %v597, %v4515
      %v4548 = vmul.f32 %v596, %v4516
      %v4549 = vmul.f32 %v595, %v4517
      %v4550 = vmul.f32 %v594, %v4518
      %v4551 = vmul.f32 %v593, %v4519
      %v4552 = vmul.f32 %v592, %v4520
      %v4553 = vmul.f32 %v591, %v4521
      %v4554 = vmul.f32 %v590, %v4522
      %v4555 = vmul.f32 %v589, %v4523
      %v4556 = vmul.f32 %v620, %v4524
      %v4557 = vmul.f32 %v619, %v4525
      %v4558 = vld [vmem:[%s1 + $0x18] sm:$0xf]
      %v4560 = vsel %vm1263, %v4526, 0
      %v4563 = vsel %vm1263, %v4527, 0
      %v4566 = vsel %vm1263, %v4528, 0
      %v4569 = vsel %vm1263, %v4529, 0
      %v4572 = vsel %vm1263, %v4530, 0
      %v4575 = vsel %vm1263, %v4531, 0
      %v4578 = vsel %vm1263, %v4532, 0
      %v4581 = vsel %vm1263, %v4533, 0
      %v4584 = vsel %vm1263, %v4534, 0
      %v4587 = vsel %vm1263, %v4535, 0
      %v4590 = vsel %vm1263, %v4536, 0
      %v4593 = vsel %vm1263, %v4537, 0
      %v4596 = vsel %vm1263, %v4538, 0
      %v4599 = vsel %vm1263, %v4539, 0
      %v4602 = vsel %vm1263, %v4540, 0
      %v4605 = vsel %vm1263, %v4541, 0
      %v4608 = vsel %vm1263, %v4542, 0
      %v4611 = vsel %vm1263, %v4543, 0
      %v4614 = vsel %vm1263, %v4544, 0
      %v4617 = vsel %vm1263, %v4545, 0
      %v4620 = vsel %vm1263, %v4546, 0
      %v4623 = vsel %vm1263, %v4547, 0
      %v4626 = vsel %vm1263, %v4548, 0
      %v4629 = vsel %vm1263, %v4549, 0
      %v4632 = vsel %vm1263, %v4550, 0
      %v4635 = vsel %vm1263, %v4551, 0
      %v4638 = vsel %vm1263, %v4552, 0
      %v4641 = vsel %vm1263, %v4553, 0
      %v4644 = vsel %vm1263, %v4554, 0
      %v4647 = vsel %vm1263, %v4555, 0
      %v4650 = vsel %vm1263, %v4556, 0
      %v4653 = vsel %vm1263, %v4557, 0
      %v4656 = vsel %vm1360, %v4558, 0
      %4658 = vmatprep.subr.mxu0 0.0
      %4659 = vmatpush1.msra.mxu0 0.0
      %4660 = vmatprep.subr.mxu0 0.0
      %4661 = vmatpush1.msra.mxu0 0.0
      %4662 = vmatprep.subr.mxu0 0.0
      %4663 = vmatpush1.msra.mxu0 0.0
      %4664 = vmatprep.subr.mxu0 0.0
      %4665 = vmatpush1.msra.mxu0 0.0
      %4666 = vmatprep.subr.mxu0 0.0
      %4667 = vmatpush1.msra.mxu0 0.0
      %4668 = vmatprep.subr.mxu0 0.0
      %4669 = vmatpush1.msra.mxu0 0.0
      %4670 = vmatprep.subr.mxu0 0.0
      %4671 = vmatpush1.msra.mxu0 0.0
      %4672 = vmatprep.subr.mxu0 0.0
      %4673 = vmatpush1.msra.mxu0 0.0
      %4674 = vmatprep.subr.mxu0 0.0
      %4675 = vmatpush1.msra.mxu0 0.0
      %4676 = vmatprep.subr.mxu0 0.0
      %4677 = vmatpush1.msra.mxu0 0.0
      %4678 = vmatprep.subr.mxu0 0.0
      %4679 = vmatpush1.msra.mxu0 0.0
      %4680 = vmatprep.subr.mxu0 0.0
      %4681 = vmatpush1.msra.mxu0 0.0
      %4682 = vmatprep.subr.mxu0 0.0
      %4683 = vmatpush1.msra.mxu0 0.0
      %4684 = vmatprep.subr.mxu0 0.0
      %4685 = vmatpush1.msra.mxu0 0.0
      %4686 = vmatprep.subr.mxu0 0.0
      %4687 = vmatpush1.msra.mxu0 0.0
      %4688 = vmatprep.subr.mxu0 0.0
      %4689 = vmatpush1.msra.mxu0 %v4656
      %4690 = vmatprep.subr.mxu0 0.0
      %4691 = vmatpush2.msra.mxu0 0.0
      %4692 = vmatprep.subr.mxu0 0.0
      %4693 = vmatpush2.msra.mxu0 0.0
      %4694 = vmatprep.subr.mxu0 0.0
      %4695 = vmatpush2.msra.mxu0 0.0
      %4696 = vmatprep.subr.mxu0 0.0
      %4697 = vmatpush2.msra.mxu0 0.0
      %4698 = vmatprep.subr.mxu0 0.0
      %4699 = vmatpush2.msra.mxu0 0.0
      %4700 = vmatprep.subr.mxu0 0.0
      %4701 = vmatpush2.msra.mxu0 0.0
      %4702 = vmatprep.subr.mxu0 0.0
      %4703 = vmatpush2.msra.mxu0 0.0
      %4704 = vmatprep.subr.mxu0 0.0
      %4705 = vmatpush2.msra.mxu0 0.0
      %4706 = vmatprep.subr.mxu0 0.0
      %4707 = vmatpush2.msra.mxu0 0.0
      %4708 = vmatprep.subr.mxu0 0.0
      %4709 = vmatpush2.msra.mxu0 0.0
      %4710 = vmatprep.subr.mxu0 0.0
      %4711 = vmatpush2.msra.mxu0 0.0
      %4712 = vmatprep.subr.mxu0 0.0
      %4713 = vmatpush2.msra.mxu0 0.0
      %4714 = vmatprep.subr.mxu0 0.0
      %4715 = vmatpush2.msra.mxu0 0.0
      %4716 = vmatprep.subr.mxu0 0.0
      %4717 = vmatpush2.msra.mxu0 0.0
      %4718 = vmatprep.subr.mxu0 0.0
      %4719 = vmatpush2.msra.mxu0 0.0
      %4720 = vmatprep.subr.mxu0 0.0
      %4721 = vmatpush2.msra.mxu0 0.0
      %4722 = vmatprep.mubr.f32.mxu0 0.0
      %4723 = vmatmul.mubr.f32.gmra.mxu0 %v4560
      %v4724 = vpop.f32.mrf.mxu0
      %v4725 = vadd.f32 0.0, %v4724
      %v4726 = vpop.f32.mrf.mxu0
      %4727 = vmatprep.mubr.f32.mxu0 0.0
      %4728 = vmatmul.mubr.f32.gmra.mxu0 %v4563
      %v4729 = vpop.f32.mrf.mxu0
      %v4730 = vadd.f32 0.0, %v4729
      %v4731 = vpop.f32.mrf.mxu0
      %4732 = vmatprep.mubr.f32.mxu0 0.0
      %4733 = vmatmul.mubr.f32.gmra.mxu0 %v4566
      %v4734 = vpop.f32.mrf.mxu0
      %v4735 = vadd.f32 0.0, %v4734
      %v4736 = vpop.f32.mrf.mxu0
      %4737 = vmatprep.mubr.f32.mxu0 0.0
      %4738 = vmatmul.mubr.f32.gmra.mxu0 %v4569
      %v4739 = vpop.f32.mrf.mxu0
      %v4740 = vadd.f32 0.0, %v4739
      %v4741 = vpop.f32.mrf.mxu0
      %4742 = vmatprep.mubr.f32.mxu0 0.0
      %4743 = vmatmul.mubr.f32.gmra.mxu0 %v4572
      %v4744 = vpop.f32.mrf.mxu0
      %v4745 = vadd.f32 0.0, %v4744
      %v4746 = vpop.f32.mrf.mxu0
      %4747 = vmatprep.mubr.f32.mxu0 0.0
      %4748 = vmatmul.mubr.f32.gmra.mxu0 %v4575
      %v4749 = vpop.f32.mrf.mxu0
      %v4750 = vadd.f32 0.0, %v4749
      %v4751 = vpop.f32.mrf.mxu0
      %4752 = vmatprep.mubr.f32.mxu0 0.0
      %4753 = vmatmul.mubr.f32.gmra.mxu0 %v4578
      %v4754 = vpop.f32.mrf.mxu0
      %v4755 = vadd.f32 0.0, %v4754
      %v4756 = vpop.f32.mrf.mxu0
      %4757 = vmatprep.mubr.f32.mxu0 0.0
      %4758 = vmatmul.mubr.f32.gmra.mxu0 %v4581
      %v4759 = vpop.f32.mrf.mxu0
      %v4760 = vadd.f32 0.0, %v4759
      %v4761 = vpop.f32.mrf.mxu0
      %4762 = vmatprep.mubr.f32.mxu0 0.0
      %4763 = vmatmul.mubr.f32.gmra.mxu0 %v4584
      %v4764 = vpop.f32.mrf.mxu0
      %v4765 = vadd.f32 0.0, %v4764
      %v4766 = vpop.f32.mrf.mxu0
      %4767 = vmatprep.mubr.f32.mxu0 0.0
      %4768 = vmatmul.mubr.f32.gmra.mxu0 %v4587
      %v4769 = vpop.f32.mrf.mxu0
      %v4770 = vadd.f32 0.0, %v4769
      %v4771 = vpop.f32.mrf.mxu0
      %4772 = vmatprep.mubr.f32.mxu0 0.0
      %4773 = vmatmul.mubr.f32.gmra.mxu0 %v4590
      %v4774 = vpop.f32.mrf.mxu0
      %v4775 = vadd.f32 0.0, %v4774
      %v4776 = vpop.f32.mrf.mxu0
      %4777 = vmatprep.mubr.f32.mxu0 0.0
      %4778 = vmatmul.mubr.f32.gmra.mxu0 %v4593
      %v4779 = vpop.f32.mrf.mxu0
      %v4780 = vadd.f32 0.0, %v4779
      %v4781 = vpop.f32.mrf.mxu0
      %4782 = vmatprep.mubr.f32.mxu0 0.0
      %4783 = vmatmul.mubr.f32.gmra.mxu0 %v4596
      %v4784 = vpop.f32.mrf.mxu0
      %v4785 = vadd.f32 0.0, %v4784
      %v4786 = vpop.f32.mrf.mxu0
      %4787 = vmatprep.mubr.f32.mxu0 0.0
      %4788 = vmatmul.mubr.f32.gmra.mxu0 %v4599
      %v4789 = vpop.f32.mrf.mxu0
      %v4790 = vadd.f32 0.0, %v4789
      %v4791 = vpop.f32.mrf.mxu0
      %4792 = vmatprep.mubr.f32.mxu0 0.0
      %4793 = vmatmul.mubr.f32.gmra.mxu0 %v4602
      %v4794 = vpop.f32.mrf.mxu0
      %v4795 = vadd.f32 0.0, %v4794
      %v4796 = vpop.f32.mrf.mxu0
      %4797 = vmatprep.mubr.f32.mxu0 0.0
      %4798 = vmatmul.mubr.f32.gmra.mxu0 %v4605
      %v4799 = vpop.f32.mrf.mxu0
      %v4800 = vadd.f32 0.0, %v4799
      %v4801 = vpop.f32.mrf.mxu0
      %4802 = vmatprep.mubr.f32.mxu0 0.0
      %4803 = vmatmul.mubr.f32.gmra.mxu0 %v4608
      %v4804 = vpop.f32.mrf.mxu0
      %v4805 = vadd.f32 0.0, %v4804
      %v4806 = vpop.f32.mrf.mxu0
      %4807 = vmatprep.mubr.f32.mxu0 0.0
      %4808 = vmatmul.mubr.f32.gmra.mxu0 %v4611
      %v4809 = vpop.f32.mrf.mxu0
      %v4810 = vadd.f32 0.0, %v4809
      %v4811 = vpop.f32.mrf.mxu0
      %4812 = vmatprep.mubr.f32.mxu0 0.0
      %4813 = vmatmul.mubr.f32.gmra.mxu0 %v4614
      %v4814 = vpop.f32.mrf.mxu0
      %v4815 = vadd.f32 0.0, %v4814
      %v4816 = vpop.f32.mrf.mxu0
      %4817 = vmatprep.mubr.f32.mxu0 0.0
      %4818 = vmatmul.mubr.f32.gmra.mxu0 %v4617
      %v4819 = vpop.f32.mrf.mxu0
      %v4820 = vadd.f32 0.0, %v4819
      %v4821 = vpop.f32.mrf.mxu0
      %4822 = vmatprep.mubr.f32.mxu0 0.0
      %4823 = vmatmul.mubr.f32.gmra.mxu0 %v4620
      %v4824 = vpop.f32.mrf.mxu0
      %v4825 = vadd.f32 0.0, %v4824
      %v4826 = vpop.f32.mrf.mxu0
      %4827 = vmatprep.mubr.f32.mxu0 0.0
      %4828 = vmatmul.mubr.f32.gmra.mxu0 %v4623
      %v4829 = vpop.f32.mrf.mxu0
      %v4830 = vadd.f32 0.0, %v4829
      %v4831 = vpop.f32.mrf.mxu0
      %4832 = vmatprep.mubr.f32.mxu0 0.0
      %4833 = vmatmul.mubr.f32.gmra.mxu0 %v4626
      %v4834 = vpop.f32.mrf.mxu0
      %v4835 = vadd.f32 0.0, %v4834
      %v4836 = vpop.f32.mrf.mxu0
      %4837 = vmatprep.mubr.f32.mxu0 0.0
      %4838 = vmatmul.mubr.f32.gmra.mxu0 %v4629
      %v4839 = vpop.f32.mrf.mxu0
      %v4840 = vadd.f32 0.0, %v4839
      %v4841 = vpop.f32.mrf.mxu0
      %4842 = vmatprep.mubr.f32.mxu0 0.0
      %4843 = vmatmul.mubr.f32.gmra.mxu0 %v4632
      %v4844 = vpop.f32.mrf.mxu0
      %v4845 = vadd.f32 0.0, %v4844
      %v4846 = vpop.f32.mrf.mxu0
      %4847 = vmatprep.mubr.f32.mxu0 0.0
      %4848 = vmatmul.mubr.f32.gmra.mxu0 %v4635
      %v4849 = vpop.f32.mrf.mxu0
      %v4850 = vadd.f32 0.0, %v4849
      %v4851 = vpop.f32.mrf.mxu0
      %4852 = vmatprep.mubr.f32.mxu0 0.0
      %4853 = vmatmul.mubr.f32.gmra.mxu0 %v4638
      %v4854 = vpop.f32.mrf.mxu0
      %v4855 = vadd.f32 0.0, %v4854
      %v4856 = vpop.f32.mrf.mxu0
      %4857 = vmatprep.mubr.f32.mxu0 0.0
      %4858 = vmatmul.mubr.f32.gmra.mxu0 %v4641
      %v4859 = vpop.f32.mrf.mxu0
      %v4860 = vadd.f32 0.0, %v4859
      %v4861 = vpop.f32.mrf.mxu0
      %4862 = vmatprep.mubr.f32.mxu0 0.0
      %4863 = vmatmul.mubr.f32.gmra.mxu0 %v4644
      %v4864 = vpop.f32.mrf.mxu0
      %v4865 = vadd.f32 0.0, %v4864
      %v4866 = vpop.f32.mrf.mxu0
      %4867 = vmatprep.mubr.f32.mxu0 0.0
      %4868 = vmatmul.mubr.f32.gmra.mxu0 %v4647
      %v4869 = vpop.f32.mrf.mxu0
      %v4870 = vadd.f32 0.0, %v4869
      %v4871 = vpop.f32.mrf.mxu0
      %4872 = vmatprep.mubr.f32.mxu0 0.0
      %4873 = vmatmul.mubr.f32.gmra.mxu0 %v4650
      %v4874 = vpop.f32.mrf.mxu0
      %v4875 = vadd.f32 0.0, %v4874
      %v4876 = vpop.f32.mrf.mxu0
      %4877 = vmatprep.mubr.f32.mxu0 0.0
      %4878 = vmatmul.mubr.f32.gmra.mxu0 %v4653
      %v4879 = vpop.f32.mrf.mxu0
      %v4880 = vadd.f32 0.0, %v4879
      %v4881 = vpop.f32.mrf.mxu0
      %4882 = vdwg.mxu0
      %v4883 = vadd.f32 %v4238, %v4725
      %v4884 = vadd.f32 %v4239, %v4730
      %v4885 = vadd.f32 %v4240, %v4735
      %v4886 = vadd.f32 %v4241, %v4740
      %v4887 = vadd.f32 %v4242, %v4745
      %v4888 = vadd.f32 %v4243, %v4750
      %v4889 = vadd.f32 %v4244, %v4755
      %v4890 = vadd.f32 %v4245, %v4760
      %v4891 = vadd.f32 %v4246, %v4765
      %v4892 = vadd.f32 %v4247, %v4770
      %v4893 = vadd.f32 %v4248, %v4775
      %v4894 = vadd.f32 %v4249, %v4780
      %v4895 = vadd.f32 %v4250, %v4785
      %v4896 = vadd.f32 %v4251, %v4790
      %v4897 = vadd.f32 %v4252, %v4795
      %v4898 = vadd.f32 %v4253, %v4800
      %v4899 = vadd.f32 %v4254, %v4805
      %v4900 = vadd.f32 %v4255, %v4810
      %v4901 = vadd.f32 %v4256, %v4815
      %v4902 = vadd.f32 %v4257, %v4820
      %v4903 = vadd.f32 %v4258, %v4825
      %v4904 = vadd.f32 %v4259, %v4830
      %v4905 = vadd.f32 %v4260, %v4835
      %v4906 = vadd.f32 %v4261, %v4840
      %v4907 = vadd.f32 %v4262, %v4845
      %v4908 = vadd.f32 %v4263, %v4850
      %v4909 = vadd.f32 %v4264, %v4855
      %v4910 = vadd.f32 %v4265, %v4860
      %v4911 = vadd.f32 %v4266, %v4865
      %v4912 = vadd.f32 %v4267, %v4870
      %v4913 = vadd.f32 %v4268, %v4875
      %v4914 = vadd.f32 %v4269, %v4880
      %vm4915 = vmand %vm4366, %vm1038
      %vm4916 = vmand %vm4367, %vm1039
      %vm4917 = vmand %vm4368, %vm1040
      %vm4918 = vmand %vm4369, %vm1041
      %vm4919 = vmand %vm4370, %vm1042
      %vm4920 = vmand %vm4371, %vm1043
      %vm4921 = vmand %vm4372, %vm1044
      %vm4922 = vmand %vm4373, %vm1045
      %vm4923 = vmand %vm4374, %vm1046
      %vm4924 = vmand %vm4375, %vm1047
      %vm4925 = vmand %vm4376, %vm1048
      %vm4926 = vmand %vm4377, %vm1049
      %vm4927 = vmand %vm4378, %vm1050
      %vm4928 = vmand %vm4379, %vm1051
      %vm4929 = vmand %vm4380, %vm1052
      %vm4930 = vmand %vm4381, %vm1053
      %vm4931 = vmand %vm4382, %vm1054
      %vm4932 = vmand %vm4383, %vm1055
      %vm4933 = vmand %vm4384, %vm1056
      %vm4934 = vmand %vm4385, %vm1057
      %vm4935 = vmand %vm4386, %vm1058
      %vm4936 = vmand %vm4387, %vm1059
      %vm4937 = vmand %vm4388, %vm1060
      %vm4938 = vmand %vm4389, %vm1061
      %vm4939 = vmand %vm4390, %vm1062
      %vm4940 = vmand %vm4391, %vm1063
      %vm4941 = vmand %vm4392, %vm1064
      %vm4942 = vmand %vm4393, %vm1065
      %vm4943 = vmand %vm4394, %vm1066
      %vm4944 = vmand %vm4395, %vm1067
      %vm4945 = vmand %vm4396, %vm1068
      %vm4946 = vmand %vm4397, %vm1069
      %vm4947 = vmand %vm4915, %vm1102
      %vm4948 = vmand %vm4916, %vm1103
      %vm4949 = vmand %vm4917, %vm1104
      %vm4950 = vmand %vm4918, %vm1105
      %vm4951 = vmand %vm4919, %vm1106
      %vm4952 = vmand %vm4920, %vm1107
      %vm4953 = vmand %vm4921, %vm1108
      %vm4954 = vmand %vm4922, %vm1109
      %vm4955 = vmand %vm4923, %vm1110
      %vm4956 = vmand %vm4924, %vm1111
      %vm4957 = vmand %vm4925, %vm1112
      %vm4958 = vmand %vm4926, %vm1113
      %vm4959 = vmand %vm4927, %vm1114
      %vm4960 = vmand %vm4928, %vm1115
      %vm4961 = vmand %vm4929, %vm1116
      %vm4962 = vmand %vm4930, %vm1117
      %vm4963 = vmand %vm4931, %vm1118
      %vm4964 = vmand %vm4932, %vm1119
      %vm4965 = vmand %vm4933, %vm1120
      %vm4966 = vmand %vm4934, %vm1121
      %vm4967 = vmand %vm4935, %vm1122
      %vm4968 = vmand %vm4936, %vm1123
      %vm4969 = vmand %vm4937, %vm1124
      %vm4970 = vmand %vm4938, %vm1125
      %vm4971 = vmand %vm4939, %vm1126
      %vm4972 = vmand %vm4940, %vm1127
      %vm4973 = vmand %vm4941, %vm1128
      %vm4974 = vmand %vm4942, %vm1129
      %vm4975 = vmand %vm4943, %vm1130
      %vm4976 = vmand %vm4944, %vm1131
      %vm4977 = vmand %vm4945, %vm1132
      %vm4978 = vmand %vm4946, %vm1133
      %v4979 = vsel %vm4947, 1, 0
      %v4980 = vsel %vm4948, 1, 0
      %v4981 = vsel %vm4949, 1, 0
      %v4982 = vsel %vm4950, 1, 0
      %v4983 = vsel %vm4951, 1, 0
      %v4984 = vsel %vm4952, 1, 0
      %v4985 = vsel %vm4953, 1, 0
      %v4986 = vsel %vm4954, 1, 0
      %v4987 = vsel %vm4955, 1, 0
      %v4988 = vsel %vm4956, 1, 0
      %v4989 = vsel %vm4957, 1, 0
      %v4990 = vsel %vm4958, 1, 0
      %v4991 = vsel %vm4959, 1, 0
      %v4992 = vsel %vm4960, 1, 0
      %v4993 = vsel %vm4961, 1, 0
      %v4994 = vsel %vm4962, 1, 0
      %v4995 = vsel %vm4963, 1, 0
      %v4996 = vsel %vm4964, 1, 0
      %v4997 = vsel %vm4965, 1, 0
      %v4998 = vsel %vm4966, 1, 0
      %v4999 = vsel %vm4967, 1, 0
      %v5000 = vsel %vm4968, 1, 0
      %v5001 = vsel %vm4969, 1, 0
      %v5002 = vsel %vm4970, 1, 0
      %v5003 = vsel %vm4971, 1, 0
      %v5004 = vsel %vm4972, 1, 0
      %v5005 = vsel %vm4973, 1, 0
      %v5006 = vsel %vm4974, 1, 0
      %v5007 = vsel %vm4975, 1, 0
      %v5008 = vsel %vm4976, 1, 0
      %v5009 = vsel %vm4977, 1, 0
      %v5010 = vsel %vm4978, 1, 0
      %v5011 = vcvt.s32.f32 %v4979
      %v5012 = vcvt.s32.f32 %v4980
      %v5013 = vcvt.s32.f32 %v4981
      %v5014 = vcvt.s32.f32 %v4982
      %v5015 = vcvt.s32.f32 %v4983
      %v5016 = vcvt.s32.f32 %v4984
      %v5017 = vcvt.s32.f32 %v4985
      %v5018 = vcvt.s32.f32 %v4986
      %v5019 = vcvt.s32.f32 %v4987
      %v5020 = vcvt.s32.f32 %v4988
      %v5021 = vcvt.s32.f32 %v4989
      %v5022 = vcvt.s32.f32 %v4990
      %v5023 = vcvt.s32.f32 %v4991
      %v5024 = vcvt.s32.f32 %v4992
      %v5025 = vcvt.s32.f32 %v4993
      %v5026 = vcvt.s32.f32 %v4994
      %v5027 = vcvt.s32.f32 %v4995
      %v5028 = vcvt.s32.f32 %v4996
      %v5029 = vcvt.s32.f32 %v4997
      %v5030 = vcvt.s32.f32 %v4998
      %v5031 = vcvt.s32.f32 %v4999
      %v5032 = vcvt.s32.f32 %v5000
      %v5033 = vcvt.s32.f32 %v5001
      %v5034 = vcvt.s32.f32 %v5002
      %v5035 = vcvt.s32.f32 %v5003
      %v5036 = vcvt.s32.f32 %v5004
      %v5037 = vcvt.s32.f32 %v5005
      %v5038 = vcvt.s32.f32 %v5006
      %v5039 = vcvt.s32.f32 %v5007
      %v5040 = vcvt.s32.f32 %v5008
      %v5041 = vcvt.s32.f32 %v5009
      %v5042 = vcvt.s32.f32 %v5010
      %v5043 = vmul.f32 %v301, %v5011
      %v5044 = vmul.f32 %v302, %v5012
      %v5045 = vmul.f32 %v303, %v5013
      %v5046 = vmul.f32 %v304, %v5014
      %v5047 = vmul.f32 %v305, %v5015
      %v5048 = vmul.f32 %v306, %v5016
      %v5049 = vmul.f32 %v307, %v5017
      %v5050 = vmul.f32 %v308, %v5018
      %v5051 = vmul.f32 %v309, %v5019
      %v5052 = vmul.f32 %v310, %v5020
      %v5053 = vmul.f32 %v311, %v5021
      %v5054 = vmul.f32 %v312, %v5022
      %v5055 = vmul.f32 %v313, %v5023
      %v5056 = vmul.f32 %v314, %v5024
      %v5057 = vmul.f32 %v315, %v5025
      %v5058 = vmul.f32 %v316, %v5026
      %v5059 = vmul.f32 %v317, %v5027
      %v5060 = vmul.f32 %v318, %v5028
      %v5061 = vmul.f32 %v319, %v5029
      %v5062 = vmul.f32 %v320, %v5030
      %v5063 = vmul.f32 %v321, %v5031
      %v5064 = vmul.f32 %v322, %v5032
      %v5065 = vmul.f32 %v323, %v5033
      %v5066 = vmul.f32 %v324, %v5034
      %v5067 = vmul.f32 %v325, %v5035
      %v5068 = vmul.f32 %v326, %v5036
      %v5069 = vmul.f32 %v327, %v5037
      %v5070 = vmul.f32 %v328, %v5038
      %v5071 = vmul.f32 %v329, %v5039
      %v5072 = vmul.f32 %v330, %v5040
      %v5073 = vmul.f32 %v299, %v5041
      %v5074 = vmul.f32 %v300, %v5042
      %v5075 = vld [vmem:[%s1 + $0x1c] sm:$0xf]
      %v5077 = vsel %vm1263, %v5043, 0
      %v5080 = vsel %vm1263, %v5044, 0
      %v5083 = vsel %vm1263, %v5045, 0
      %v5086 = vsel %vm1263, %v5046, 0
      %v5089 = vsel %vm1263, %v5047, 0
      %v5092 = vsel %vm1263, %v5048, 0
      %v5095 = vsel %vm1263, %v5049, 0
      %v5098 = vsel %vm1263, %v5050, 0
      %v5101 = vsel %vm1263, %v5051, 0
      %v5104 = vsel %vm1263, %v5052, 0
      %v5107 = vsel %vm1263, %v5053, 0
      %v5110 = vsel %vm1263, %v5054, 0
      %v5113 = vsel %vm1263, %v5055, 0
      %v5116 = vsel %vm1263, %v5056, 0
      %v5119 = vsel %vm1263, %v5057, 0
      %v5122 = vsel %vm1263, %v5058, 0
      %v5125 = vsel %vm1263, %v5059, 0
      %v5128 = vsel %vm1263, %v5060, 0
      %v5131 = vsel %vm1263, %v5061, 0
      %v5134 = vsel %vm1263, %v5062, 0
      %v5137 = vsel %vm1263, %v5063, 0
      %v5140 = vsel %vm1263, %v5064, 0
      %v5143 = vsel %vm1263, %v5065, 0
      %v5146 = vsel %vm1263, %v5066, 0
      %v5149 = vsel %vm1263, %v5067, 0
      %v5152 = vsel %vm1263, %v5068, 0
      %v5155 = vsel %vm1263, %v5069, 0
      %v5158 = vsel %vm1263, %v5070, 0
      %v5161 = vsel %vm1263, %v5071, 0
      %v5164 = vsel %vm1263, %v5072, 0
      %v5167 = vsel %vm1263, %v5073, 0
      %v5170 = vsel %vm1263, %v5074, 0
      %v5173 = vsel %vm1360, %v5075, 0
      %5175 = vmatprep.subr.mxu0 0.0
      %5176 = vmatpush1.msra.mxu0 0.0
      %5177 = vmatprep.subr.mxu0 0.0
      %5178 = vmatpush1.msra.mxu0 0.0
      %5179 = vmatprep.subr.mxu0 0.0
      %5180 = vmatpush1.msra.mxu0 0.0
      %5181 = vmatprep.subr.mxu0 0.0
      %5182 = vmatpush1.msra.mxu0 0.0
      %5183 = vmatprep.subr.mxu0 0.0
      %5184 = vmatpush1.msra.mxu0 0.0
      %5185 = vmatprep.subr.mxu0 0.0
      %5186 = vmatpush1.msra.mxu0 0.0
      %5187 = vmatprep.subr.mxu0 0.0
      %5188 = vmatpush1.msra.mxu0 0.0
      %5189 = vmatprep.subr.mxu0 0.0
      %5190 = vmatpush1.msra.mxu0 0.0
      %5191 = vmatprep.subr.mxu0 0.0
      %5192 = vmatpush1.msra.mxu0 0.0
      %5193 = vmatprep.subr.mxu0 0.0
      %5194 = vmatpush1.msra.mxu0 0.0
      %5195 = vmatprep.subr.mxu0 0.0
      %5196 = vmatpush1.msra.mxu0 0.0
      %5197 = vmatprep.subr.mxu0 0.0
      %5198 = vmatpush1.msra.mxu0 0.0
      %5199 = vmatprep.subr.mxu0 0.0
      %5200 = vmatpush1.msra.mxu0 0.0
      %5201 = vmatprep.subr.mxu0 0.0
      %5202 = vmatpush1.msra.mxu0 0.0
      %5203 = vmatprep.subr.mxu0 0.0
      %5204 = vmatpush1.msra.mxu0 0.0
      %5205 = vmatprep.subr.mxu0 0.0
      %5206 = vmatpush1.msra.mxu0 %v5173
      %5207 = vmatprep.subr.mxu0 0.0
      %5208 = vmatpush2.msra.mxu0 0.0
      %5209 = vmatprep.subr.mxu0 0.0
      %5210 = vmatpush2.msra.mxu0 0.0
      %5211 = vmatprep.subr.mxu0 0.0
      %5212 = vmatpush2.msra.mxu0 0.0
      %5213 = vmatprep.subr.mxu0 0.0
      %5214 = vmatpush2.msra.mxu0 0.0
      %5215 = vmatprep.subr.mxu0 0.0
      %5216 = vmatpush2.msra.mxu0 0.0
      %5217 = vmatprep.subr.mxu0 0.0
      %5218 = vmatpush2.msra.mxu0 0.0
      %5219 = vmatprep.subr.mxu0 0.0
      %5220 = vmatpush2.msra.mxu0 0.0
      %5221 = vmatprep.subr.mxu0 0.0
      %5222 = vmatpush2.msra.mxu0 0.0
      %5223 = vmatprep.subr.mxu0 0.0
      %5224 = vmatpush2.msra.mxu0 0.0
      %5225 = vmatprep.subr.mxu0 0.0
      %5226 = vmatpush2.msra.mxu0 0.0
      %5227 = vmatprep.subr.mxu0 0.0
      %5228 = vmatpush2.msra.mxu0 0.0
      %5229 = vmatprep.subr.mxu0 0.0
      %5230 = vmatpush2.msra.mxu0 0.0
      %5231 = vmatprep.subr.mxu0 0.0
      %5232 = vmatpush2.msra.mxu0 0.0
      %5233 = vmatprep.subr.mxu0 0.0
      %5234 = vmatpush2.msra.mxu0 0.0
      %5235 = vmatprep.subr.mxu0 0.0
      %5236 = vmatpush2.msra.mxu0 0.0
      %5237 = vmatprep.subr.mxu0 0.0
      %5238 = vmatpush2.msra.mxu0 0.0
      %5239 = vmatprep.mubr.f32.mxu0 0.0
      %5240 = vmatmul.mubr.f32.gmra.mxu0 %v5077
      %v5241 = vpop.f32.mrf.mxu0
      %v5242 = vadd.f32 0.0, %v5241
      %v5243 = vpop.f32.mrf.mxu0
      %5244 = vmatprep.mubr.f32.mxu0 0.0
      %5245 = vmatmul.mubr.f32.gmra.mxu0 %v5080
      %v5246 = vpop.f32.mrf.mxu0
      %v5247 = vadd.f32 0.0, %v5246
      %v5248 = vpop.f32.mrf.mxu0
      %5249 = vmatprep.mubr.f32.mxu0 0.0
      %5250 = vmatmul.mubr.f32.gmra.mxu0 %v5083
      %v5251 = vpop.f32.mrf.mxu0
      %v5252 = vadd.f32 0.0, %v5251
      %v5253 = vpop.f32.mrf.mxu0
      %5254 = vmatprep.mubr.f32.mxu0 0.0
      %5255 = vmatmul.mubr.f32.gmra.mxu0 %v5086
      %v5256 = vpop.f32.mrf.mxu0
      %v5257 = vadd.f32 0.0, %v5256
      %v5258 = vpop.f32.mrf.mxu0
      %5259 = vmatprep.mubr.f32.mxu0 0.0
      %5260 = vmatmul.mubr.f32.gmra.mxu0 %v5089
      %v5261 = vpop.f32.mrf.mxu0
      %v5262 = vadd.f32 0.0, %v5261
      %v5263 = vpop.f32.mrf.mxu0
      %5264 = vmatprep.mubr.f32.mxu0 0.0
      %5265 = vmatmul.mubr.f32.gmra.mxu0 %v5092
      %v5266 = vpop.f32.mrf.mxu0
      %v5267 = vadd.f32 0.0, %v5266
      %v5268 = vpop.f32.mrf.mxu0
      %5269 = vmatprep.mubr.f32.mxu0 0.0
      %5270 = vmatmul.mubr.f32.gmra.mxu0 %v5095
      %v5271 = vpop.f32.mrf.mxu0
      %v5272 = vadd.f32 0.0, %v5271
      %v5273 = vpop.f32.mrf.mxu0
      %5274 = vmatprep.mubr.f32.mxu0 0.0
      %5275 = vmatmul.mubr.f32.gmra.mxu0 %v5098
      %v5276 = vpop.f32.mrf.mxu0
      %v5277 = vadd.f32 0.0, %v5276
      %v5278 = vpop.f32.mrf.mxu0
      %5279 = vmatprep.mubr.f32.mxu0 0.0
      %5280 = vmatmul.mubr.f32.gmra.mxu0 %v5101
      %v5281 = vpop.f32.mrf.mxu0
      %v5282 = vadd.f32 0.0, %v5281
      %v5283 = vpop.f32.mrf.mxu0
      %5284 = vmatprep.mubr.f32.mxu0 0.0
      %5285 = vmatmul.mubr.f32.gmra.mxu0 %v5104
      %v5286 = vpop.f32.mrf.mxu0
      %v5287 = vadd.f32 0.0, %v5286
      %v5288 = vpop.f32.mrf.mxu0
      %5289 = vmatprep.mubr.f32.mxu0 0.0
      %5290 = vmatmul.mubr.f32.gmra.mxu0 %v5107
      %v5291 = vpop.f32.mrf.mxu0
      %v5292 = vadd.f32 0.0, %v5291
      %v5293 = vpop.f32.mrf.mxu0
      %5294 = vmatprep.mubr.f32.mxu0 0.0
      %5295 = vmatmul.mubr.f32.gmra.mxu0 %v5110
      %v5296 = vpop.f32.mrf.mxu0
      %v5297 = vadd.f32 0.0, %v5296
      %v5298 = vpop.f32.mrf.mxu0
      %5299 = vmatprep.mubr.f32.mxu0 0.0
      %5300 = vmatmul.mubr.f32.gmra.mxu0 %v5113
      %v5301 = vpop.f32.mrf.mxu0
      %v5302 = vadd.f32 0.0, %v5301
      %v5303 = vpop.f32.mrf.mxu0
      %5304 = vmatprep.mubr.f32.mxu0 0.0
      %5305 = vmatmul.mubr.f32.gmra.mxu0 %v5116
      %v5306 = vpop.f32.mrf.mxu0
      %v5307 = vadd.f32 0.0, %v5306
      %v5308 = vpop.f32.mrf.mxu0
      %5309 = vmatprep.mubr.f32.mxu0 0.0
      %5310 = vmatmul.mubr.f32.gmra.mxu0 %v5119
      %v5311 = vpop.f32.mrf.mxu0
      %v5312 = vadd.f32 0.0, %v5311
      %v5313 = vpop.f32.mrf.mxu0
      %5314 = vmatprep.mubr.f32.mxu0 0.0
      %5315 = vmatmul.mubr.f32.gmra.mxu0 %v5122
      %v5316 = vpop.f32.mrf.mxu0
      %v5317 = vadd.f32 0.0, %v5316
      %v5318 = vpop.f32.mrf.mxu0
      %5319 = vmatprep.mubr.f32.mxu0 0.0
      %5320 = vmatmul.mubr.f32.gmra.mxu0 %v5125
      %v5321 = vpop.f32.mrf.mxu0
      %v5322 = vadd.f32 0.0, %v5321
      %v5323 = vpop.f32.mrf.mxu0
      %5324 = vmatprep.mubr.f32.mxu0 0.0
      %5325 = vmatmul.mubr.f32.gmra.mxu0 %v5128
      %v5326 = vpop.f32.mrf.mxu0
      %v5327 = vadd.f32 0.0, %v5326
      %v5328 = vpop.f32.mrf.mxu0
      %5329 = vmatprep.mubr.f32.mxu0 0.0
      %5330 = vmatmul.mubr.f32.gmra.mxu0 %v5131
      %v5331 = vpop.f32.mrf.mxu0
      %v5332 = vadd.f32 0.0, %v5331
      %v5333 = vpop.f32.mrf.mxu0
      %5334 = vmatprep.mubr.f32.mxu0 0.0
      %5335 = vmatmul.mubr.f32.gmra.mxu0 %v5134
      %v5336 = vpop.f32.mrf.mxu0
      %v5337 = vadd.f32 0.0, %v5336
      %v5338 = vpop.f32.mrf.mxu0
      %5339 = vmatprep.mubr.f32.mxu0 0.0
      %5340 = vmatmul.mubr.f32.gmra.mxu0 %v5137
      %v5341 = vpop.f32.mrf.mxu0
      %v5342 = vadd.f32 0.0, %v5341
      %v5343 = vpop.f32.mrf.mxu0
      %5344 = vmatprep.mubr.f32.mxu0 0.0
      %5345 = vmatmul.mubr.f32.gmra.mxu0 %v5140
      %v5346 = vpop.f32.mrf.mxu0
      %v5347 = vadd.f32 0.0, %v5346
      %v5348 = vpop.f32.mrf.mxu0
      %5349 = vmatprep.mubr.f32.mxu0 0.0
      %5350 = vmatmul.mubr.f32.gmra.mxu0 %v5143
      %v5351 = vpop.f32.mrf.mxu0
      %v5352 = vadd.f32 0.0, %v5351
      %v5353 = vpop.f32.mrf.mxu0
      %5354 = vmatprep.mubr.f32.mxu0 0.0
      %5355 = vmatmul.mubr.f32.gmra.mxu0 %v5146
      %v5356 = vpop.f32.mrf.mxu0
      %v5357 = vadd.f32 0.0, %v5356
      %v5358 = vpop.f32.mrf.mxu0
      %5359 = vmatprep.mubr.f32.mxu0 0.0
      %5360 = vmatmul.mubr.f32.gmra.mxu0 %v5149
      %v5361 = vpop.f32.mrf.mxu0
      %v5362 = vadd.f32 0.0, %v5361
      %v5363 = vpop.f32.mrf.mxu0
      %5364 = vmatprep.mubr.f32.mxu0 0.0
      %5365 = vmatmul.mubr.f32.gmra.mxu0 %v5152
      %v5366 = vpop.f32.mrf.mxu0
      %v5367 = vadd.f32 0.0, %v5366
      %v5368 = vpop.f32.mrf.mxu0
      %5369 = vmatprep.mubr.f32.mxu0 0.0
      %5370 = vmatmul.mubr.f32.gmra.mxu0 %v5155
      %v5371 = vpop.f32.mrf.mxu0
      %v5372 = vadd.f32 0.0, %v5371
      %v5373 = vpop.f32.mrf.mxu0
      %5374 = vmatprep.mubr.f32.mxu0 0.0
      %5375 = vmatmul.mubr.f32.gmra.mxu0 %v5158
      %v5376 = vpop.f32.mrf.mxu0
      %v5377 = vadd.f32 0.0, %v5376
      %v5378 = vpop.f32.mrf.mxu0
      %5379 = vmatprep.mubr.f32.mxu0 0.0
      %5380 = vmatmul.mubr.f32.gmra.mxu0 %v5161
      %v5381 = vpop.f32.mrf.mxu0
      %v5382 = vadd.f32 0.0, %v5381
      %v5383 = vpop.f32.mrf.mxu0
      %5384 = vmatprep.mubr.f32.mxu0 0.0
      %5385 = vmatmul.mubr.f32.gmra.mxu0 %v5164
      %v5386 = vpop.f32.mrf.mxu0
      %v5387 = vadd.f32 0.0, %v5386
      %v5388 = vpop.f32.mrf.mxu0
      %5389 = vmatprep.mubr.f32.mxu0 0.0
      %5390 = vmatmul.mubr.f32.gmra.mxu0 %v5167
      %v5391 = vpop.f32.mrf.mxu0
      %v5392 = vadd.f32 0.0, %v5391
      %v5393 = vpop.f32.mrf.mxu0
      %5394 = vmatprep.mubr.f32.mxu0 0.0
      %5395 = vmatmul.mubr.f32.gmra.mxu0 %v5170
      %v5396 = vpop.f32.mrf.mxu0
      %v5397 = vadd.f32 0.0, %v5396
      %v5398 = vpop.f32.mrf.mxu0
      %5399 = vdwg.mxu0
      %v5400 = vadd.f32 %v4883, %v5242
      %v5401 = vadd.f32 %v4884, %v5247
      %v5402 = vadd.f32 %v4885, %v5252
      %v5403 = vadd.f32 %v4886, %v5257
      %v5404 = vadd.f32 %v4887, %v5262
      %v5405 = vadd.f32 %v4888, %v5267
      %v5406 = vadd.f32 %v4889, %v5272
      %v5407 = vadd.f32 %v4890, %v5277
      %v5408 = vadd.f32 %v4891, %v5282
      %v5409 = vadd.f32 %v4892, %v5287
      %v5410 = vadd.f32 %v4893, %v5292
      %v5411 = vadd.f32 %v4894, %v5297
      %v5412 = vadd.f32 %v4895, %v5302
      %v5413 = vadd.f32 %v4896, %v5307
      %v5414 = vadd.f32 %v4897, %v5312
      %v5415 = vadd.f32 %v4898, %v5317
      %v5416 = vadd.f32 %v4899, %v5322
      %v5417 = vadd.f32 %v4900, %v5327
      %v5418 = vadd.f32 %v4901, %v5332
      %v5419 = vadd.f32 %v4902, %v5337
      %v5420 = vadd.f32 %v4903, %v5342
      %v5421 = vadd.f32 %v4904, %v5347
      %v5422 = vadd.f32 %v4905, %v5352
      %v5423 = vadd.f32 %v4906, %v5357
      %v5424 = vadd.f32 %v4907, %v5362
      %v5425 = vadd.f32 %v4908, %v5367
      %v5426 = vadd.f32 %v4909, %v5372
      %v5427 = vadd.f32 %v4910, %v5377
      %v5428 = vadd.f32 %v4911, %v5382
      %v5429 = vadd.f32 %v4912, %v5387
      %v5430 = vadd.f32 %v4913, %v5392
      %v5431 = vadd.f32 %v4914, %v5397
      %vm5432 = vmand %vm4366, %vm2010
      %vm5433 = vmand %vm4367, %vm2011
      %vm5434 = vmand %vm4368, %vm2012
      %vm5435 = vmand %vm4369, %vm2013
      %vm5436 = vmand %vm4370, %vm2014
      %vm5437 = vmand %vm4371, %vm2015
      %vm5438 = vmand %vm4372, %vm2016
      %vm5439 = vmand %vm4373, %vm2017
      %vm5440 = vmand %vm4374, %vm2018
      %vm5441 = vmand %vm4375, %vm2019
      %vm5442 = vmand %vm4376, %vm2020
      %vm5443 = vmand %vm4377, %vm2021
      %vm5444 = vmand %vm4378, %vm2022
      %vm5445 = vmand %vm4379, %vm2023
      %vm5446 = vmand %vm4380, %vm2024
      %vm5447 = vmand %vm4381, %vm2025
      %vm5448 = vmand %vm4382, %vm2026
      %vm5449 = vmand %vm4383, %vm2027
      %vm5450 = vmand %vm4384, %vm2028
      %vm5451 = vmand %vm4385, %vm2029
      %vm5452 = vmand %vm4386, %vm2030
      %vm5453 = vmand %vm4387, %vm2031
      %vm5454 = vmand %vm4388, %vm2032
      %vm5455 = vmand %vm4389, %vm2033
      %vm5456 = vmand %vm4390, %vm2034
      %vm5457 = vmand %vm4391, %vm2035
      %vm5458 = vmand %vm4392, %vm2036
      %vm5459 = vmand %vm4393, %vm2037
      %vm5460 = vmand %vm4394, %vm2038
      %vm5461 = vmand %vm4395, %vm2039
      %vm5462 = vmand %vm4396, %vm2040
      %vm5463 = vmand %vm4397, %vm2041
      %vm5464 = vmand %vm5432, %vm2074
      %vm5465 = vmand %vm5433, %vm2075
      %vm5466 = vmand %vm5434, %vm2076
      %vm5467 = vmand %vm5435, %vm2077
      %vm5468 = vmand %vm5436, %vm2078
      %vm5469 = vmand %vm5437, %vm2079
      %vm5470 = vmand %vm5438, %vm2080
      %vm5471 = vmand %vm5439, %vm2081
      %vm5472 = vmand %vm5440, %vm2082
      %vm5473 = vmand %vm5441, %vm2083
      %vm5474 = vmand %vm5442, %vm2084
      %vm5475 = vmand %vm5443, %vm2085
      %vm5476 = vmand %vm5444, %vm2086
      %vm5477 = vmand %vm5445, %vm2087
      %vm5478 = vmand %vm5446, %vm2088
      %vm5479 = vmand %vm5447, %vm2089
      %vm5480 = vmand %vm5448, %vm2090
      %vm5481 = vmand %vm5449, %vm2091
      %vm5482 = vmand %vm5450, %vm2092
      %vm5483 = vmand %vm5451, %vm2093
      %vm5484 = vmand %vm5452, %vm2094
      %vm5485 = vmand %vm5453, %vm2095
      %vm5486 = vmand %vm5454, %vm2096
      %vm5487 = vmand %vm5455, %vm2097
      %vm5488 = vmand %vm5456, %vm2098
      %vm5489 = vmand %vm5457, %vm2099
      %vm5490 = vmand %vm5458, %vm2100
      %vm5491 = vmand %vm5459, %vm2101
      %vm5492 = vmand %vm5460, %vm2102
      %vm5493 = vmand %vm5461, %vm2103
      %vm5494 = vmand %vm5462, %vm2104
      %vm5495 = vmand %vm5463, %vm2105
      %v5496 = vsel %vm5464, 1, 0
      %v5497 = vsel %vm5465, 1, 0
      %v5498 = vsel %vm5466, 1, 0
      %v5499 = vsel %vm5467, 1, 0
      %v5500 = vsel %vm5468, 1, 0
      %v5501 = vsel %vm5469, 1, 0
      %v5502 = vsel %vm5470, 1, 0
      %v5503 = vsel %vm5471, 1, 0
      %v5504 = vsel %vm5472, 1, 0
      %v5505 = vsel %vm5473, 1, 0
      %v5506 = vsel %vm5474, 1, 0
      %v5507 = vsel %vm5475, 1, 0
      %v5508 = vsel %vm5476, 1, 0
      %v5509 = vsel %vm5477, 1, 0
      %v5510 = vsel %vm5478, 1, 0
      %v5511 = vsel %vm5479, 1, 0
      %v5512 = vsel %vm5480, 1, 0
      %v5513 = vsel %vm5481, 1, 0
      %v5514 = vsel %vm5482, 1, 0
      %v5515 = vsel %vm5483, 1, 0
      %v5516 = vsel %vm5484, 1, 0
      %v5517 = vsel %vm5485, 1, 0
      %v5518 = vsel %vm5486, 1, 0
      %v5519 = vsel %vm5487, 1, 0
      %v5520 = vsel %vm5488, 1, 0
      %v5521 = vsel %vm5489, 1, 0
      %v5522 = vsel %vm5490, 1, 0
      %v5523 = vsel %vm5491, 1, 0
      %v5524 = vsel %vm5492, 1, 0
      %v5525 = vsel %vm5493, 1, 0
      %v5526 = vsel %vm5494, 1, 0
      %v5527 = vsel %vm5495, 1, 0
      %v5528 = vcvt.s32.f32 %v5496
      %v5529 = vcvt.s32.f32 %v5497
      %v5530 = vcvt.s32.f32 %v5498
      %v5531 = vcvt.s32.f32 %v5499
      %v5532 = vcvt.s32.f32 %v5500
      %v5533 = vcvt.s32.f32 %v5501
      %v5534 = vcvt.s32.f32 %v5502
      %v5535 = vcvt.s32.f32 %v5503
      %v5536 = vcvt.s32.f32 %v5504
      %v5537 = vcvt.s32.f32 %v5505
      %v5538 = vcvt.s32.f32 %v5506
      %v5539 = vcvt.s32.f32 %v5507
      %v5540 = vcvt.s32.f32 %v5508
      %v5541 = vcvt.s32.f32 %v5509
      %v5542 = vcvt.s32.f32 %v5510
      %v5543 = vcvt.s32.f32 %v5511
      %v5544 = vcvt.s32.f32 %v5512
      %v5545 = vcvt.s32.f32 %v5513
      %v5546 = vcvt.s32.f32 %v5514
      %v5547 = vcvt.s32.f32 %v5515
      %v5548 = vcvt.s32.f32 %v5516
      %v5549 = vcvt.s32.f32 %v5517
      %v5550 = vcvt.s32.f32 %v5518
      %v5551 = vcvt.s32.f32 %v5519
      %v5552 = vcvt.s32.f32 %v5520
      %v5553 = vcvt.s32.f32 %v5521
      %v5554 = vcvt.s32.f32 %v5522
      %v5555 = vcvt.s32.f32 %v5523
      %v5556 = vcvt.s32.f32 %v5524
      %v5557 = vcvt.s32.f32 %v5525
      %v5558 = vcvt.s32.f32 %v5526
      %v5559 = vcvt.s32.f32 %v5527
      %v5560 = vmul.f32 %v1974, %v5528
      %v5561 = vmul.f32 %v1973, %v5529
      %v5562 = vmul.f32 %v1972, %v5530
      %v5563 = vmul.f32 %v1971, %v5531
      %v5564 = vmul.f32 %v1970, %v5532
      %v5565 = vmul.f32 %v1969, %v5533
      %v5566 = vmul.f32 %v1968, %v5534
      %v5567 = vmul.f32 %v1967, %v5535
      %v5568 = vmul.f32 %v1966, %v5536
      %v5569 = vmul.f32 %v1965, %v5537
      %v5570 = vmul.f32 %v1964, %v5538
      %v5571 = vmul.f32 %v1963, %v5539
      %v5572 = vmul.f32 %v1962, %v5540
      %v5573 = vmul.f32 %v1961, %v5541
      %v5574 = vmul.f32 %v1960, %v5542
      %v5575 = vmul.f32 %v1959, %v5543
      %v5576 = vmul.f32 %v1958, %v5544
      %v5577 = vmul.f32 %v1957, %v5545
      %v5578 = vmul.f32 %v1956, %v5546
      %v5579 = vmul.f32 %v1955, %v5547
      %v5580 = vmul.f32 %v1954, %v5548
      %v5581 = vmul.f32 %v1953, %v5549
      %v5582 = vmul.f32 %v1952, %v5550
      %v5583 = vmul.f32 %v1951, %v5551
      %v5584 = vmul.f32 %v1950, %v5552
      %v5585 = vmul.f32 %v1949, %v5553
      %v5586 = vmul.f32 %v1948, %v5554
      %v5587 = vmul.f32 %v1947, %v5555
      %v5588 = vmul.f32 %v1946, %v5556
      %v5589 = vmul.f32 %v1977, %v5557
      %v5590 = vmul.f32 %v1976, %v5558
      %v5591 = vmul.f32 %v1975, %v5559
      %v5592 = vld [vmem:[%s1 + $0x20] sm:$0xf]
      %v5594 = vsel %vm1263, %v5560, 0
      %v5597 = vsel %vm1263, %v5561, 0
      %v5600 = vsel %vm1263, %v5562, 0
      %v5603 = vsel %vm1263, %v5563, 0
      %v5606 = vsel %vm1263, %v5564, 0
      %v5609 = vsel %vm1263, %v5565, 0
      %v5612 = vsel %vm1263, %v5566, 0
      %v5615 = vsel %vm1263, %v5567, 0
      %v5618 = vsel %vm1263, %v5568, 0
      %v5621 = vsel %vm1263, %v5569, 0
      %v5624 = vsel %vm1263, %v5570, 0
      %v5627 = vsel %vm1263, %v5571, 0
      %v5630 = vsel %vm1263, %v5572, 0
      %v5633 = vsel %vm1263, %v5573, 0
      %v5636 = vsel %vm1263, %v5574, 0
      %v5639 = vsel %vm1263, %v5575, 0
      %v5642 = vsel %vm1263, %v5576, 0
      %v5645 = vsel %vm1263, %v5577, 0
      %v5648 = vsel %vm1263, %v5578, 0
      %v5651 = vsel %vm1263, %v5579, 0
      %v5654 = vsel %vm1263, %v5580, 0
      %v5657 = vsel %vm1263, %v5581, 0
      %v5660 = vsel %vm1263, %v5582, 0
      %v5663 = vsel %vm1263, %v5583, 0
      %v5666 = vsel %vm1263, %v5584, 0
      %v5669 = vsel %vm1263, %v5585, 0
      %v5672 = vsel %vm1263, %v5586, 0
      %v5675 = vsel %vm1263, %v5587, 0
      %v5678 = vsel %vm1263, %v5588, 0
      %v5681 = vsel %vm1263, %v5589, 0
      %v5684 = vsel %vm1263, %v5590, 0
      %v5687 = vsel %vm1263, %v5591, 0
      %v5690 = vsel %vm1360, %v5592, 0
      %5692 = vmatprep.subr.mxu0 0.0
      %5693 = vmatpush1.msra.mxu0 0.0
      %5694 = vmatprep.subr.mxu0 0.0
      %5695 = vmatpush1.msra.mxu0 0.0
      %5696 = vmatprep.subr.mxu0 0.0
      %5697 = vmatpush1.msra.mxu0 0.0
      %5698 = vmatprep.subr.mxu0 0.0
      %5699 = vmatpush1.msra.mxu0 0.0
      %5700 = vmatprep.subr.mxu0 0.0
      %5701 = vmatpush1.msra.mxu0 0.0
      %5702 = vmatprep.subr.mxu0 0.0
      %5703 = vmatpush1.msra.mxu0 0.0
      %5704 = vmatprep.subr.mxu0 0.0
      %5705 = vmatpush1.msra.mxu0 0.0
      %5706 = vmatprep.subr.mxu0 0.0
      %5707 = vmatpush1.msra.mxu0 0.0
      %5708 = vmatprep.subr.mxu0 0.0
      %5709 = vmatpush1.msra.mxu0 0.0
      %5710 = vmatprep.subr.mxu0 0.0
      %5711 = vmatpush1.msra.mxu0 0.0
      %5712 = vmatprep.subr.mxu0 0.0
      %5713 = vmatpush1.msra.mxu0 0.0
      %5714 = vmatprep.subr.mxu0 0.0
      %5715 = vmatpush1.msra.mxu0 0.0
      %5716 = vmatprep.subr.mxu0 0.0
      %5717 = vmatpush1.msra.mxu0 0.0
      %5718 = vmatprep.subr.mxu0 0.0
      %5719 = vmatpush1.msra.mxu0 0.0
      %5720 = vmatprep.subr.mxu0 0.0
      %5721 = vmatpush1.msra.mxu0 0.0
      %5722 = vmatprep.subr.mxu0 0.0
      %5723 = vmatpush1.msra.mxu0 %v5690
      %5724 = vmatprep.subr.mxu0 0.0
      %5725 = vmatpush2.msra.mxu0 0.0
      %5726 = vmatprep.subr.mxu0 0.0
      %5727 = vmatpush2.msra.mxu0 0.0
      %5728 = vmatprep.subr.mxu0 0.0
      %5729 = vmatpush2.msra.mxu0 0.0
      %5730 = vmatprep.subr.mxu0 0.0
      %5731 = vmatpush2.msra.mxu0 0.0
      %5732 = vmatprep.subr.mxu0 0.0
      %5733 = vmatpush2.msra.mxu0 0.0
      %5734 = vmatprep.subr.mxu0 0.0
      %5735 = vmatpush2.msra.mxu0 0.0
      %5736 = vmatprep.subr.mxu0 0.0
      %5737 = vmatpush2.msra.mxu0 0.0
      %5738 = vmatprep.subr.mxu0 0.0
      %5739 = vmatpush2.msra.mxu0 0.0
      %5740 = vmatprep.subr.mxu0 0.0
      %5741 = vmatpush2.msra.mxu0 0.0
      %5742 = vmatprep.subr.mxu0 0.0
      %5743 = vmatpush2.msra.mxu0 0.0
      %5744 = vmatprep.subr.mxu0 0.0
      %5745 = vmatpush2.msra.mxu0 0.0
      %5746 = vmatprep.subr.mxu0 0.0
      %5747 = vmatpush2.msra.mxu0 0.0
      %5748 = vmatprep.subr.mxu0 0.0
      %5749 = vmatpush2.msra.mxu0 0.0
      %5750 = vmatprep.subr.mxu0 0.0
      %5751 = vmatpush2.msra.mxu0 0.0
      %5752 = vmatprep.subr.mxu0 0.0
      %5753 = vmatpush2.msra.mxu0 0.0
      %5754 = vmatprep.subr.mxu0 0.0
      %5755 = vmatpush2.msra.mxu0 0.0
      %5756 = vmatprep.mubr.f32.mxu0 0.0
      %5757 = vmatmul.mubr.f32.gmra.mxu0 %v5594
      %v5758 = vpop.f32.mrf.mxu0
      %v5759 = vadd.f32 0.0, %v5758
      %v5760 = vpop.f32.mrf.mxu0
      %5761 = vmatprep.mubr.f32.mxu0 0.0
      %5762 = vmatmul.mubr.f32.gmra.mxu0 %v5597
      %v5763 = vpop.f32.mrf.mxu0
      %v5764 = vadd.f32 0.0, %v5763
      %v5765 = vpop.f32.mrf.mxu0
      %5766 = vmatprep.mubr.f32.mxu0 0.0
      %5767 = vmatmul.mubr.f32.gmra.mxu0 %v5600
      %v5768 = vpop.f32.mrf.mxu0
      %v5769 = vadd.f32 0.0, %v5768
      %v5770 = vpop.f32.mrf.mxu0
      %5771 = vmatprep.mubr.f32.mxu0 0.0
      %5772 = vmatmul.mubr.f32.gmra.mxu0 %v5603
      %v5773 = vpop.f32.mrf.mxu0
      %v5774 = vadd.f32 0.0, %v5773
      %v5775 = vpop.f32.mrf.mxu0
      %5776 = vmatprep.mubr.f32.mxu0 0.0
      %5777 = vmatmul.mubr.f32.gmra.mxu0 %v5606
      %v5778 = vpop.f32.mrf.mxu0
      %v5779 = vadd.f32 0.0, %v5778
      %v5780 = vpop.f32.mrf.mxu0
      %5781 = vmatprep.mubr.f32.mxu0 0.0
      %5782 = vmatmul.mubr.f32.gmra.mxu0 %v5609
      %v5783 = vpop.f32.mrf.mxu0
      %v5784 = vadd.f32 0.0, %v5783
      %v5785 = vpop.f32.mrf.mxu0
      %5786 = vmatprep.mubr.f32.mxu0 0.0
      %5787 = vmatmul.mubr.f32.gmra.mxu0 %v5612
      %v5788 = vpop.f32.mrf.mxu0
      %v5789 = vadd.f32 0.0, %v5788
      %v5790 = vpop.f32.mrf.mxu0
      %5791 = vmatprep.mubr.f32.mxu0 0.0
      %5792 = vmatmul.mubr.f32.gmra.mxu0 %v5615
      %v5793 = vpop.f32.mrf.mxu0
      %v5794 = vadd.f32 0.0, %v5793
      %v5795 = vpop.f32.mrf.mxu0
      %5796 = vmatprep.mubr.f32.mxu0 0.0
      %5797 = vmatmul.mubr.f32.gmra.mxu0 %v5618
      %v5798 = vpop.f32.mrf.mxu0
      %v5799 = vadd.f32 0.0, %v5798
      %v5800 = vpop.f32.mrf.mxu0
      %5801 = vmatprep.mubr.f32.mxu0 0.0
      %5802 = vmatmul.mubr.f32.gmra.mxu0 %v5621
      %v5803 = vpop.f32.mrf.mxu0
      %v5804 = vadd.f32 0.0, %v5803
      %v5805 = vpop.f32.mrf.mxu0
      %5806 = vmatprep.mubr.f32.mxu0 0.0
      %5807 = vmatmul.mubr.f32.gmra.mxu0 %v5624
      %v5808 = vpop.f32.mrf.mxu0
      %v5809 = vadd.f32 0.0, %v5808
      %v5810 = vpop.f32.mrf.mxu0
      %5811 = vmatprep.mubr.f32.mxu0 0.0
      %5812 = vmatmul.mubr.f32.gmra.mxu0 %v5627
      %v5813 = vpop.f32.mrf.mxu0
      %v5814 = vadd.f32 0.0, %v5813
      %v5815 = vpop.f32.mrf.mxu0
      %5816 = vmatprep.mubr.f32.mxu0 0.0
      %5817 = vmatmul.mubr.f32.gmra.mxu0 %v5630
      %v5818 = vpop.f32.mrf.mxu0
      %v5819 = vadd.f32 0.0, %v5818
      %v5820 = vpop.f32.mrf.mxu0
      %5821 = vmatprep.mubr.f32.mxu0 0.0
      %5822 = vmatmul.mubr.f32.gmra.mxu0 %v5633
      %v5823 = vpop.f32.mrf.mxu0
      %v5824 = vadd.f32 0.0, %v5823
      %v5825 = vpop.f32.mrf.mxu0
      %5826 = vmatprep.mubr.f32.mxu0 0.0
      %5827 = vmatmul.mubr.f32.gmra.mxu0 %v5636
      %v5828 = vpop.f32.mrf.mxu0
      %v5829 = vadd.f32 0.0, %v5828
      %v5830 = vpop.f32.mrf.mxu0
      %5831 = vmatprep.mubr.f32.mxu0 0.0
      %5832 = vmatmul.mubr.f32.gmra.mxu0 %v5639
      %v5833 = vpop.f32.mrf.mxu0
      %v5834 = vadd.f32 0.0, %v5833
      %v5835 = vpop.f32.mrf.mxu0
      %5836 = vmatprep.mubr.f32.mxu0 0.0
      %5837 = vmatmul.mubr.f32.gmra.mxu0 %v5642
      %v5838 = vpop.f32.mrf.mxu0
      %v5839 = vadd.f32 0.0, %v5838
      %v5840 = vpop.f32.mrf.mxu0
      %5841 = vmatprep.mubr.f32.mxu0 0.0
      %5842 = vmatmul.mubr.f32.gmra.mxu0 %v5645
      %v5843 = vpop.f32.mrf.mxu0
      %v5844 = vadd.f32 0.0, %v5843
      %v5845 = vpop.f32.mrf.mxu0
      %5846 = vmatprep.mubr.f32.mxu0 0.0
      %5847 = vmatmul.mubr.f32.gmra.mxu0 %v5648
      %v5848 = vpop.f32.mrf.mxu0
      %v5849 = vadd.f32 0.0, %v5848
      %v5850 = vpop.f32.mrf.mxu0
      %5851 = vmatprep.mubr.f32.mxu0 0.0
      %5852 = vmatmul.mubr.f32.gmra.mxu0 %v5651
      %v5853 = vpop.f32.mrf.mxu0
      %v5854 = vadd.f32 0.0, %v5853
      %v5855 = vpop.f32.mrf.mxu0
      %5856 = vmatprep.mubr.f32.mxu0 0.0
      %5857 = vmatmul.mubr.f32.gmra.mxu0 %v5654
      %v5858 = vpop.f32.mrf.mxu0
      %v5859 = vadd.f32 0.0, %v5858
      %v5860 = vpop.f32.mrf.mxu0
      %5861 = vmatprep.mubr.f32.mxu0 0.0
      %5862 = vmatmul.mubr.f32.gmra.mxu0 %v5657
      %v5863 = vpop.f32.mrf.mxu0
      %v5864 = vadd.f32 0.0, %v5863
      %v5865 = vpop.f32.mrf.mxu0
      %5866 = vmatprep.mubr.f32.mxu0 0.0
      %5867 = vmatmul.mubr.f32.gmra.mxu0 %v5660
      %v5868 = vpop.f32.mrf.mxu0
      %v5869 = vadd.f32 0.0, %v5868
      %v5870 = vpop.f32.mrf.mxu0
      %5871 = vmatprep.mubr.f32.mxu0 0.0
      %5872 = vmatmul.mubr.f32.gmra.mxu0 %v5663
      %v5873 = vpop.f32.mrf.mxu0
      %v5874 = vadd.f32 0.0, %v5873
      %v5875 = vpop.f32.mrf.mxu0
      %5876 = vmatprep.mubr.f32.mxu0 0.0
      %5877 = vmatmul.mubr.f32.gmra.mxu0 %v5666
      %v5878 = vpop.f32.mrf.mxu0
      %v5879 = vadd.f32 0.0, %v5878
      %v5880 = vpop.f32.mrf.mxu0
      %5881 = vmatprep.mubr.f32.mxu0 0.0
      %5882 = vmatmul.mubr.f32.gmra.mxu0 %v5669
      %v5883 = vpop.f32.mrf.mxu0
      %v5884 = vadd.f32 0.0, %v5883
      %v5885 = vpop.f32.mrf.mxu0
      %5886 = vmatprep.mubr.f32.mxu0 0.0
      %5887 = vmatmul.mubr.f32.gmra.mxu0 %v5672
      %v5888 = vpop.f32.mrf.mxu0
      %v5889 = vadd.f32 0.0, %v5888
      %v5890 = vpop.f32.mrf.mxu0
      %5891 = vmatprep.mubr.f32.mxu0 0.0
      %5892 = vmatmul.mubr.f32.gmra.mxu0 %v5675
      %v5893 = vpop.f32.mrf.mxu0
      %v5894 = vadd.f32 0.0, %v5893
      %v5895 = vpop.f32.mrf.mxu0
      %5896 = vmatprep.mubr.f32.mxu0 0.0
      %5897 = vmatmul.mubr.f32.gmra.mxu0 %v5678
      %v5898 = vpop.f32.mrf.mxu0
      %v5899 = vadd.f32 0.0, %v5898
      %v5900 = vpop.f32.mrf.mxu0
      %5901 = vmatprep.mubr.f32.mxu0 0.0
      %5902 = vmatmul.mubr.f32.gmra.mxu0 %v5681
      %v5903 = vpop.f32.mrf.mxu0
      %v5904 = vadd.f32 0.0, %v5903
      %v5905 = vpop.f32.mrf.mxu0
      %5906 = vmatprep.mubr.f32.mxu0 0.0
      %5907 = vmatmul.mubr.f32.gmra.mxu0 %v5684
      %v5908 = vpop.f32.mrf.mxu0
      %v5909 = vadd.f32 0.0, %v5908
      %v5910 = vpop.f32.mrf.mxu0
      %5911 = vmatprep.mubr.f32.mxu0 0.0
      %5912 = vmatmul.mubr.f32.gmra.mxu0 %v5687
      %v5913 = vpop.f32.mrf.mxu0
      %v5914 = vadd.f32 0.0, %v5913
      %v5915 = vpop.f32.mrf.mxu0
      %5916 = vdwg.mxu0
      %v5917 = vadd.f32 %v5400, %v5759
      %v5918 = vadd.f32 %v5401, %v5764
      %v5919 = vadd.f32 %v5402, %v5769
      %v5920 = vadd.f32 %v5403, %v5774
      %v5921 = vadd.f32 %v5404, %v5779
      %v5922 = vadd.f32 %v5405, %v5784
      %v5923 = vadd.f32 %v5406, %v5789
      %v5924 = vadd.f32 %v5407, %v5794
      %v5925 = vadd.f32 %v5408, %v5799
      %v5926 = vadd.f32 %v5409, %v5804
      %v5927 = vadd.f32 %v5410, %v5809
      %v5928 = vadd.f32 %v5411, %v5814
      %v5929 = vadd.f32 %v5412, %v5819
      %v5930 = vadd.f32 %v5413, %v5824
      %v5931 = vadd.f32 %v5414, %v5829
      %v5932 = vadd.f32 %v5415, %v5834
      %v5933 = vadd.f32 %v5416, %v5839
      %v5934 = vadd.f32 %v5417, %v5844
      %v5935 = vadd.f32 %v5418, %v5849
      %v5936 = vadd.f32 %v5419, %v5854
      %v5937 = vadd.f32 %v5420, %v5859
      %v5938 = vadd.f32 %v5421, %v5864
      %v5939 = vadd.f32 %v5422, %v5869
      %v5940 = vadd.f32 %v5423, %v5874
      %v5941 = vadd.f32 %v5424, %v5879
      %v5942 = vadd.f32 %v5425, %v5884
      %v5943 = vadd.f32 %v5426, %v5889
      %v5944 = vadd.f32 %v5427, %v5894
      %v5945 = vadd.f32 %v5428, %v5899
      %v5946 = vadd.f32 %v5429, %v5904
      %v5947 = vadd.f32 %v5430, %v5909
      %v5948 = vadd.f32 %v5431, %v5914
      %v5949 = vmax.f32 %v5917, 0.0
      %v5950 = vmax.f32 %v5918, 0.0
      %v5951 = vmax.f32 %v5919, 0.0
      %v5952 = vmax.f32 %v5920, 0.0
      %v5953 = vmax.f32 %v5921, 0.0
      %v5954 = vmax.f32 %v5922, 0.0
      %v5955 = vmax.f32 %v5923, 0.0
      %v5956 = vmax.f32 %v5924, 0.0
      %v5957 = vmax.f32 %v5925, 0.0
      %v5958 = vmax.f32 %v5926, 0.0
      %v5959 = vmax.f32 %v5927, 0.0
      %v5960 = vmax.f32 %v5928, 0.0
      %v5961 = vmax.f32 %v5929, 0.0
      %v5962 = vmax.f32 %v5930, 0.0
      %v5963 = vmax.f32 %v5931, 0.0
      %v5964 = vmax.f32 %v5932, 0.0
      %v5965 = vmax.f32 %v5933, 0.0
      %v5966 = vmax.f32 %v5934, 0.0
      %v5967 = vmax.f32 %v5935, 0.0
      %v5968 = vmax.f32 %v5936, 0.0
      %v5969 = vmax.f32 %v5937, 0.0
      %v5970 = vmax.f32 %v5938, 0.0
      %v5971 = vmax.f32 %v5939, 0.0
      %v5972 = vmax.f32 %v5940, 0.0
      %v5973 = vmax.f32 %v5941, 0.0
      %v5974 = vmax.f32 %v5942, 0.0
      %v5975 = vmax.f32 %v5943, 0.0
      %v5976 = vmax.f32 %v5944, 0.0
      %v5977 = vmax.f32 %v5945, 0.0
      %v5978 = vmax.f32 %v5946, 0.0
      %v5979 = vmax.f32 %v5947, 0.0
      %v5980 = vmax.f32 %v5948, 0.0
      %v5981 = vrot.slane %v5949, 1
      %v5982 = vrot.slane %v5950, 1
      %v5983 = vrot.slane %v5951, 1
      %v5984 = vrot.slane %v5952, 1
      %v5985 = vrot.slane %v5953, 1
      %v5986 = vrot.slane %v5954, 1
      %v5987 = vrot.slane %v5955, 1
      %v5988 = vrot.slane %v5956, 1
      %v5989 = vrot.slane %v5957, 1
      %v5990 = vrot.slane %v5958, 1
      %v5991 = vrot.slane %v5959, 1
      %v5992 = vrot.slane %v5960, 1
      %v5993 = vrot.slane %v5961, 1
      %v5994 = vrot.slane %v5962, 1
      %v5995 = vrot.slane %v5963, 1
      %v5996 = vrot.slane %v5964, 1
      %v5997 = vrot.slane %v5965, 1
      %v5998 = vrot.slane %v5966, 1
      %v5999 = vrot.slane %v5967, 1
      %v6000 = vrot.slane %v5968, 1
      %v6001 = vrot.slane %v5969, 1
      %v6002 = vrot.slane %v5970, 1
      %v6003 = vrot.slane %v5971, 1
      %v6004 = vrot.slane %v5972, 1
      %v6005 = vrot.slane %v5973, 1
      %v6006 = vrot.slane %v5974, 1
      %v6007 = vrot.slane %v5975, 1
      %v6008 = vrot.slane %v5976, 1
      %v6009 = vrot.slane %v5977, 1
      %v6010 = vrot.slane %v5978, 1
      %v6011 = vrot.slane %v5979, 1
      %v6012 = vrot.slane %v5980, 1
      %v6013 = vsel %vm1945, %v6011, %v6012
      %v6014 = vsel %vm1945, %v6010, %v6011
      %v6015 = vsel %vm1945, %v6009, %v6010
      %v6016 = vsel %vm1945, %v6008, %v6009
      %v6017 = vsel %vm1945, %v6007, %v6008
      %v6018 = vsel %vm1945, %v6006, %v6007
      %v6019 = vsel %vm1945, %v6005, %v6006
      %v6020 = vsel %vm1945, %v6004, %v6005
      %v6021 = vsel %vm1945, %v6003, %v6004
      %v6022 = vsel %vm1945, %v6002, %v6003
      %v6023 = vsel %vm1945, %v6001, %v6002
      %v6024 = vsel %vm1945, %v6000, %v6001
      %v6025 = vsel %vm1945, %v5999, %v6000
      %v6026 = vsel %vm1945, %v5998, %v5999
      %v6027 = vsel %vm1945, %v5997, %v5998
      %v6028 = vsel %vm1945, %v5996, %v5997
      %v6029 = vsel %vm1945, %v5995, %v5996
      %v6030 = vsel %vm1945, %v5994, %v5995
      %v6031 = vsel %vm1945, %v5993, %v5994
      %v6032 = vsel %vm1945, %v5992, %v5993
      %v6033 = vsel %vm1945, %v5991, %v5992
      %v6034 = vsel %vm1945, %v5990, %v5991
      %v6035 = vsel %vm1945, %v5989, %v5990
      %v6036 = vsel %vm1945, %v5988, %v5989
      %v6037 = vsel %vm1945, %v5987, %v5988
      %v6038 = vsel %vm1945, %v5986, %v5987
      %v6039 = vsel %vm1945, %v5985, %v5986
      %v6040 = vsel %vm1945, %v5984, %v5985
      %v6041 = vsel %vm1945, %v5983, %v5984
      %v6042 = vsel %vm1945, %v5982, %v5983
      %v6043 = vsel %vm1945, %v5981, %v5982
      %v6044 = vsel %vm1945, %v6012, %v5981
      %v6045 = vmax.f32 %v5949, %v6043
      %v6046 = vmax.f32 %v5950, %v6042
      %v6047 = vmax.f32 %v5951, %v6041
      %v6048 = vmax.f32 %v5952, %v6040
      %v6049 = vmax.f32 %v5953, %v6039
      %v6050 = vmax.f32 %v5954, %v6038
      %v6051 = vmax.f32 %v5955, %v6037
      %v6052 = vmax.f32 %v5956, %v6036
      %v6053 = vmax.f32 %v5957, %v6035
      %v6054 = vmax.f32 %v5958, %v6034
      %v6055 = vmax.f32 %v5959, %v6033
      %v6056 = vmax.f32 %v5960, %v6032
      %v6057 = vmax.f32 %v5961, %v6031
      %v6058 = vmax.f32 %v5962, %v6030
      %v6059 = vmax.f32 %v5963, %v6029
      %v6060 = vmax.f32 %v5964, %v6028
      %v6061 = vmax.f32 %v5965, %v6027
      %v6062 = vmax.f32 %v5966, %v6026
      %v6063 = vmax.f32 %v5967, %v6025
      %v6064 = vmax.f32 %v5968, %v6024
      %v6065 = vmax.f32 %v5969, %v6023
      %v6066 = vmax.f32 %v5970, %v6022
      %v6067 = vmax.f32 %v5971, %v6021
      %v6068 = vmax.f32 %v5972, %v6020
      %v6069 = vmax.f32 %v5973, %v6019
      %v6070 = vmax.f32 %v5974, %v6018
      %v6071 = vmax.f32 %v5975, %v6017
      %v6072 = vmax.f32 %v5976, %v6016
      %v6073 = vmax.f32 %v5977, %v6015
      %v6074 = vmax.f32 %v5978, %v6014
      %v6075 = vmax.f32 %v5979, %v6013
      %v6076 = vmax.f32 %v5980, %v6044
      %v6077 = vrot.slane %v6045, 2
      %v6078 = vrot.slane %v6046, 2
      %v6079 = vrot.slane %v6047, 2
      %v6080 = vrot.slane %v6048, 2
      %v6081 = vrot.slane %v6049, 2
      %v6082 = vrot.slane %v6050, 2
      %v6083 = vrot.slane %v6051, 2
      %v6084 = vrot.slane %v6052, 2
      %v6085 = vrot.slane %v6053, 2
      %v6086 = vrot.slane %v6054, 2
      %v6087 = vrot.slane %v6055, 2
      %v6088 = vrot.slane %v6056, 2
      %v6089 = vrot.slane %v6057, 2
      %v6090 = vrot.slane %v6058, 2
      %v6091 = vrot.slane %v6059, 2
      %v6092 = vrot.slane %v6060, 2
      %v6093 = vrot.slane %v6061, 2
      %v6094 = vrot.slane %v6062, 2
      %v6095 = vrot.slane %v6063, 2
      %v6096 = vrot.slane %v6064, 2
      %v6097 = vrot.slane %v6065, 2
      %v6098 = vrot.slane %v6066, 2
      %v6099 = vrot.slane %v6067, 2
      %v6100 = vrot.slane %v6068, 2
      %v6101 = vrot.slane %v6069, 2
      %v6102 = vrot.slane %v6070, 2
      %v6103 = vrot.slane %v6071, 2
      %v6104 = vrot.slane %v6072, 2
      %v6105 = vrot.slane %v6073, 2
      %v6106 = vrot.slane %v6074, 2
      %v6107 = vrot.slane %v6075, 2
      %v6108 = vrot.slane %v6076, 2
      %vm6109 = vcmp.lt.s32.totalorder %v332, 6
      %v6110 = vsel %vm6109, %v6107, %v6108
      %v6111 = vsel %vm6109, %v6106, %v6107
      %v6112 = vsel %vm6109, %v6105, %v6106
      %v6113 = vsel %vm6109, %v6104, %v6105
      %v6114 = vsel %vm6109, %v6103, %v6104
      %v6115 = vsel %vm6109, %v6102, %v6103
      %v6116 = vsel %vm6109, %v6101, %v6102
      %v6117 = vsel %vm6109, %v6100, %v6101
      %v6118 = vsel %vm6109, %v6099, %v6100
      %v6119 = vsel %vm6109, %v6098, %v6099
      %v6120 = vsel %vm6109, %v6097, %v6098
      %v6121 = vsel %vm6109, %v6096, %v6097
      %v6122 = vsel %vm6109, %v6095, %v6096
      %v6123 = vsel %vm6109, %v6094, %v6095
      %v6124 = vsel %vm6109, %v6093, %v6094
      %v6125 = vsel %vm6109, %v6092, %v6093
      %v6126 = vsel %vm6109, %v6091, %v6092
      %v6127 = vsel %vm6109, %v6090, %v6091
      %v6128 = vsel %vm6109, %v6089, %v6090
      %v6129 = vsel %vm6109, %v6088, %v6089
      %v6130 = vsel %vm6109, %v6087, %v6088
      %v6131 = vsel %vm6109, %v6086, %v6087
      %v6132 = vsel %vm6109, %v6085, %v6086
      %v6133 = vsel %vm6109, %v6084, %v6085
      %v6134 = vsel %vm6109, %v6083, %v6084
      %v6135 = vsel %vm6109, %v6082, %v6083
      %v6136 = vsel %vm6109, %v6081, %v6082
      %v6137 = vsel %vm6109, %v6080, %v6081
      %v6138 = vsel %vm6109, %v6079, %v6080
      %v6139 = vsel %vm6109, %v6078, %v6079
      %v6140 = vsel %vm6109, %v6077, %v6078
      %v6141 = vsel %vm6109, %v6108, %v6077
      %v6142 = vmax.f32 %v6045, %v6140
      %v6143 = vmax.f32 %v6046, %v6139
      %v6144 = vmax.f32 %v6047, %v6138
      %v6145 = vmax.f32 %v6048, %v6137
      %v6146 = vmax.f32 %v6049, %v6136
      %v6147 = vmax.f32 %v6050, %v6135
      %v6148 = vmax.f32 %v6051, %v6134
      %v6149 = vmax.f32 %v6052, %v6133
      %v6150 = vmax.f32 %v6053, %v6132
      %v6151 = vmax.f32 %v6054, %v6131
      %v6152 = vmax.f32 %v6055, %v6130
      %v6153 = vmax.f32 %v6056, %v6129
      %v6154 = vmax.f32 %v6057, %v6128
      %v6155 = vmax.f32 %v6058, %v6127
      %v6156 = vmax.f32 %v6059, %v6126
      %v6157 = vmax.f32 %v6060, %v6125
      %v6158 = vmax.f32 %v6061, %v6124
      %v6159 = vmax.f32 %v6062, %v6123
      %v6160 = vmax.f32 %v6063, %v6122
      %v6161 = vmax.f32 %v6064, %v6121
      %v6162 = vmax.f32 %v6065, %v6120
      %v6163 = vmax.f32 %v6066, %v6119
      %v6164 = vmax.f32 %v6067, %v6118
      %v6165 = vmax.f32 %v6068, %v6117
      %v6166 = vmax.f32 %v6069, %v6116
      %v6167 = vmax.f32 %v6070, %v6115
      %v6168 = vmax.f32 %v6071, %v6114
      %v6169 = vmax.f32 %v6072, %v6113
      %v6170 = vmax.f32 %v6073, %v6112
      %v6171 = vmax.f32 %v6074, %v6111
      %v6172 = vmax.f32 %v6075, %v6110
      %v6173 = vmax.f32 %v6076, %v6141
      %v6174 = vmax.f32 %v6142, %v6144
      %v6175 = vmax.f32 %v6143, %v6145
      %v6176 = vmax.f32 %v6146, %v6148
      %v6177 = vmax.f32 %v6147, %v6149
      %v6178 = vmax.f32 %v6150, %v6152
      %v6179 = vmax.f32 %v6151, %v6153
      %v6180 = vmax.f32 %v6154, %v6156
      %v6181 = vmax.f32 %v6155, %v6157
      %v6182 = vmax.f32 %v6158, %v6160
      %v6183 = vmax.f32 %v6159, %v6161
      %v6184 = vmax.f32 %v6162, %v6164
      %v6185 = vmax.f32 %v6163, %v6165
      %v6186 = vmax.f32 %v6166, %v6168
      %v6187 = vmax.f32 %v6167, %v6169
      %v6188 = vmax.f32 %v6170, %v6172
      %v6189 = vmax.f32 %v6171, %v6173
      %v6190 = vmax.f32 %v6174, %v6176
      %v6191 = vmax.f32 %v6175, %v6177
      %v6192 = vmax.f32 %v6178, %v6180
      %v6193 = vmax.f32 %v6179, %v6181
      %v6194 = vmax.f32 %v6182, %v6184
      %v6195 = vmax.f32 %v6183, %v6185
      %v6196 = vmax.f32 %v6186, %v6188
      %v6197 = vmax.f32 %v6187, %v6189
      %v6198 = vld [vmem:[%s2] sm:$0xff]
      %v6199 = vld [vmem:[%s2 + $0x8] sm:$0xff]
      %v6200 = vld [vmem:[%s2 + $0x10] sm:$0xff]
      %v6201 = vld [vmem:[%s2 + $0x18] sm:$0xff]
      %v6202 = vld [vmem:[%s2 + $0x20] sm:$0xff]
      %v6203 = vld [vmem:[%s2 + $0x28] sm:$0xff]
      %v6204 = vld [vmem:[%s2 + $0x30] sm:$0xff]
      %v6205 = vld [vmem:[%s2 + $0x38] sm:$0xff]
      %v6206 = vld [vmem:[%s2 + $0x40] sm:$0xff]
      %v6207 = vld [vmem:[%s2 + $0x48] sm:$0xff]
      %v6208 = vld [vmem:[%s2 + $0x50] sm:$0xff]
      %v6209 = vld [vmem:[%s2 + $0x58] sm:$0xff]
      %v6210 = vld [vmem:[%s2 + $0x60] sm:$0xff]
      %v6211 = vld [vmem:[%s2 + $0x68] sm:$0xff]
      %v6212 = vld [vmem:[%s2 + $0x70] sm:$0xff]
      %v6213 = vld [vmem:[%s2 + $0x78] sm:$0xff]
      %v6215 = vrot.slane %v6190, 4
      %vm6216 = vcmask 261120
      %v6217 = vsel %vm6216, %v6215, 0
      %6219 = vmatprep.subr.mxu0 0.0
      %6220 = vmatpush1.msra.mxu0 0.0
      %6221 = vmatprep.subr.mxu0 0.0
      %6222 = vmatpush1.msra.mxu0 0.0
      %6223 = vmatprep.subr.mxu0 0.0
      %6224 = vmatpush1.msra.mxu0 0.0
      %6225 = vmatprep.subr.mxu0 0.0
      %6226 = vmatpush1.msra.mxu0 0.0
      %6227 = vmatprep.subr.mxu0 0.0
      %6228 = vmatpush1.msra.mxu0 0.0
      %6229 = vmatprep.subr.mxu0 0.0
      %6230 = vmatpush1.msra.mxu0 0.0
      %6231 = vmatprep.subr.mxu0 0.0
      %6232 = vmatpush1.msra.mxu0 0.0
      %6233 = vmatprep.subr.mxu0 0.0
      %6234 = vmatpush1.msra.mxu0 0.0
      %6235 = vmatprep.subr.mxu0 0.0
      %6236 = vmatpush1.msra.mxu0 0.0
      %6237 = vmatprep.subr.mxu0 0.0
      %6238 = vmatpush1.msra.mxu0 0.0
      %6239 = vmatprep.subr.mxu0 0.0
      %6240 = vmatpush1.msra.mxu0 0.0
      %6241 = vmatprep.subr.mxu0 0.0
      %6242 = vmatpush1.msra.mxu0 0.0
      %6243 = vmatprep.subr.mxu0 %v6213
      %6244 = vmatpush1.msra.mxu0 %v6212
      %6245 = vmatprep.subr.mxu0 %v6211
      %6246 = vmatpush1.msra.mxu0 %v6210
      %6247 = vmatprep.subr.mxu0 %v6209
      %6248 = vmatpush1.msra.mxu0 %v6208
      %6249 = vmatprep.subr.mxu0 %v6207
      %6250 = vmatpush1.msra.mxu0 %v6206
      %6251 = vmatprep.subr.mxu0 0.0
      %6252 = vmatpush2.msra.mxu0 0.0
      %6253 = vmatprep.subr.mxu0 0.0
      %6254 = vmatpush2.msra.mxu0 0.0
      %6255 = vmatprep.subr.mxu0 0.0
      %6256 = vmatpush2.msra.mxu0 0.0
      %6257 = vmatprep.subr.mxu0 0.0
      %6258 = vmatpush2.msra.mxu0 0.0
      %6259 = vmatprep.subr.mxu0 0.0
      %6260 = vmatpush2.msra.mxu0 0.0
      %6261 = vmatprep.subr.mxu0 0.0
      %6262 = vmatpush2.msra.mxu0 0.0
      %6263 = vmatprep.subr.mxu0 0.0
      %6264 = vmatpush2.msra.mxu0 0.0
      %6265 = vmatprep.subr.mxu0 0.0
      %6266 = vmatpush2.msra.mxu0 0.0
      %6267 = vmatprep.subr.mxu0 0.0
      %6268 = vmatpush2.msra.mxu0 0.0
      %6269 = vmatprep.subr.mxu0 0.0
      %6270 = vmatpush2.msra.mxu0 0.0
      %6271 = vmatprep.subr.mxu0 0.0
      %6272 = vmatpush2.msra.mxu0 0.0
      %6273 = vmatprep.subr.mxu0 0.0
      %6274 = vmatpush2.msra.mxu0 0.0
      %6275 = vmatprep.subr.mxu0 0.0
      %6276 = vmatpush2.msra.mxu0 0.0
      %6277 = vmatprep.subr.mxu0 0.0
      %6278 = vmatpush2.msra.mxu0 0.0
      %6279 = vmatprep.subr.mxu0 0.0
      %6280 = vmatpush2.msra.mxu0 0.0
      %6281 = vmatprep.subr.mxu0 0.0
      %6282 = vmatpush2.msra.mxu0 0.0
      %6283 = vmatprep.mubr.f32.mxu0 0.0
      %6284 = vmatmul.mubr.f32.gmra.mxu0 %v6217
      %v6285 = vpop.f32.mrf.mxu0
      %v6286 = vadd.f32 0.0, %v6285
      %v6287 = vpop.f32.mrf.mxu0
      %v6288 = vadd.f32 0.0, %v6287
      %6289 = vdwg.mxu0
      %v6290 = vsel %vm6216, %v6190, 0
      %6292 = vmatprep.subr.mxu0 0.0
      %6293 = vmatpush1.msra.mxu0 0.0
      %6294 = vmatprep.subr.mxu0 0.0
      %6295 = vmatpush1.msra.mxu0 0.0
      %6296 = vmatprep.subr.mxu0 0.0
      %6297 = vmatpush1.msra.mxu0 0.0
      %6298 = vmatprep.subr.mxu0 0.0
      %6299 = vmatpush1.msra.mxu0 0.0
      %6300 = vmatprep.subr.mxu0 0.0
      %6301 = vmatpush1.msra.mxu0 0.0
      %6302 = vmatprep.subr.mxu0 0.0
      %6303 = vmatpush1.msra.mxu0 0.0
      %6304 = vmatprep.subr.mxu0 0.0
      %6305 = vmatpush1.msra.mxu0 0.0
      %6306 = vmatprep.subr.mxu0 0.0
      %6307 = vmatpush1.msra.mxu0 0.0
      %6308 = vmatprep.subr.mxu0 0.0
      %6309 = vmatpush1.msra.mxu0 0.0
      %6310 = vmatprep.subr.mxu0 0.0
      %6311 = vmatpush1.msra.mxu0 0.0
      %6312 = vmatprep.subr.mxu0 0.0
      %6313 = vmatpush1.msra.mxu0 0.0
      %6314 = vmatprep.subr.mxu0 0.0
      %6315 = vmatpush1.msra.mxu0 0.0
      %6316 = vmatprep.subr.mxu0 %v6205
      %6317 = vmatpush1.msra.mxu0 %v6204
      %6318 = vmatprep.subr.mxu0 %v6203
      %6319 = vmatpush1.msra.mxu0 %v6202
      %6320 = vmatprep.subr.mxu0 %v6201
      %6321 = vmatpush1.msra.mxu0 %v6200
      %6322 = vmatprep.subr.mxu0 %v6199
      %6323 = vmatpush1.msra.mxu0 %v6198
      %6324 = vmatprep.subr.mxu0 0.0
      %6325 = vmatpush2.msra.mxu0 0.0
      %6326 = vmatprep.subr.mxu0 0.0
      %6327 = vmatpush2.msra.mxu0 0.0
      %6328 = vmatprep.subr.mxu0 0.0
      %6329 = vmatpush2.msra.mxu0 0.0
      %6330 = vmatprep.subr.mxu0 0.0
      %6331 = vmatpush2.msra.mxu0 0.0
      %6332 = vmatprep.subr.mxu0 0.0
      %6333 = vmatpush2.msra.mxu0 0.0
      %6334 = vmatprep.subr.mxu0 0.0
      %6335 = vmatpush2.msra.mxu0 0.0
      %6336 = vmatprep.subr.mxu0 0.0
      %6337 = vmatpush2.msra.mxu0 0.0
      %6338 = vmatprep.subr.mxu0 0.0
      %6339 = vmatpush2.msra.mxu0 0.0
      %6340 = vmatprep.subr.mxu0 0.0
      %6341 = vmatpush2.msra.mxu0 0.0
      %6342 = vmatprep.subr.mxu0 0.0
      %6343 = vmatpush2.msra.mxu0 0.0
      %6344 = vmatprep.subr.mxu0 0.0
      %6345 = vmatpush2.msra.mxu0 0.0
      %6346 = vmatprep.subr.mxu0 0.0
      %6347 = vmatpush2.msra.mxu0 0.0
      %6348 = vmatprep.subr.mxu0 0.0
      %6349 = vmatpush2.msra.mxu0 0.0
      %6350 = vmatprep.subr.mxu0 0.0
      %6351 = vmatpush2.msra.mxu0 0.0
      %6352 = vmatprep.subr.mxu0 0.0
      %6353 = vmatpush2.msra.mxu0 0.0
      %6354 = vmatprep.subr.mxu0 0.0
      %6355 = vmatpush2.msra.mxu0 0.0
      %6356 = vmatprep.mubr.f32.mxu0 0.0
      %6357 = vmatmul.mubr.f32.gmra.mxu0 %v6290
      %v6358 = vpop.f32.mrf.mxu0
      %v6359 = vadd.f32 %v6286, %v6358
      %v6360 = vpop.f32.mrf.mxu0
      %v6361 = vadd.f32 %v6288, %v6360
      %6362 = vdwg.mxu0
      %v6363 = vld [vmem:[%s2 + $0x80] sm:$0xff]
      %v6364 = vld [vmem:[%s2 + $0x88] sm:$0xff]
      %v6365 = vld [vmem:[%s2 + $0x90] sm:$0xff]
      %v6366 = vld [vmem:[%s2 + $0x98] sm:$0xff]
      %v6367 = vld [vmem:[%s2 + $0xa0] sm:$0xff]
      %v6368 = vld [vmem:[%s2 + $0xa8] sm:$0xff]
      %v6369 = vld [vmem:[%s2 + $0xb0] sm:$0xff]
      %v6370 = vld [vmem:[%s2 + $0xb8] sm:$0xff]
      %v6372 = vsel %vm6216, %v6191, 0
      %6374 = vmatprep.subr.mxu0 0.0
      %6375 = vmatpush1.msra.mxu0 0.0
      %6376 = vmatprep.subr.mxu0 0.0
      %6377 = vmatpush1.msra.mxu0 0.0
      %6378 = vmatprep.subr.mxu0 0.0
      %6379 = vmatpush1.msra.mxu0 0.0
      %6380 = vmatprep.subr.mxu0 0.0
      %6381 = vmatpush1.msra.mxu0 0.0
      %6382 = vmatprep.subr.mxu0 0.0
      %6383 = vmatpush1.msra.mxu0 0.0
      %6384 = vmatprep.subr.mxu0 0.0
      %6385 = vmatpush1.msra.mxu0 0.0
      %6386 = vmatprep.subr.mxu0 0.0
      %6387 = vmatpush1.msra.mxu0 0.0
      %6388 = vmatprep.subr.mxu0 0.0
      %6389 = vmatpush1.msra.mxu0 0.0
      %6390 = vmatprep.subr.mxu0 0.0
      %6391 = vmatpush1.msra.mxu0 0.0
      %6392 = vmatprep.subr.mxu0 0.0
      %6393 = vmatpush1.msra.mxu0 0.0
      %6394 = vmatprep.subr.mxu0 0.0
      %6395 = vmatpush1.msra.mxu0 0.0
      %6396 = vmatprep.subr.mxu0 0.0
      %6397 = vmatpush1.msra.mxu0 0.0
      %6398 = vmatprep.subr.mxu0 %v6370
      %6399 = vmatpush1.msra.mxu0 %v6369
      %6400 = vmatprep.subr.mxu0 %v6368
      %6401 = vmatpush1.msra.mxu0 %v6367
      %6402 = vmatprep.subr.mxu0 %v6366
      %6403 = vmatpush1.msra.mxu0 %v6365
      %6404 = vmatprep.subr.mxu0 %v6364
      %6405 = vmatpush1.msra.mxu0 %v6363
      %6406 = vmatprep.subr.mxu0 0.0
      %6407 = vmatpush2.msra.mxu0 0.0
      %6408 = vmatprep.subr.mxu0 0.0
      %6409 = vmatpush2.msra.mxu0 0.0
      %6410 = vmatprep.subr.mxu0 0.0
      %6411 = vmatpush2.msra.mxu0 0.0
      %6412 = vmatprep.subr.mxu0 0.0
      %6413 = vmatpush2.msra.mxu0 0.0
      %6414 = vmatprep.subr.mxu0 0.0
      %6415 = vmatpush2.msra.mxu0 0.0
      %6416 = vmatprep.subr.mxu0 0.0
      %6417 = vmatpush2.msra.mxu0 0.0
      %6418 = vmatprep.subr.mxu0 0.0
      %6419 = vmatpush2.msra.mxu0 0.0
      %6420 = vmatprep.subr.mxu0 0.0
      %6421 = vmatpush2.msra.mxu0 0.0
      %6422 = vmatprep.subr.mxu0 0.0
      %6423 = vmatpush2.msra.mxu0 0.0
      %6424 = vmatprep.subr.mxu0 0.0
      %6425 = vmatpush2.msra.mxu0 0.0
      %6426 = vmatprep.subr.mxu0 0.0
      %6427 = vmatpush2.msra.mxu0 0.0
      %6428 = vmatprep.subr.mxu0 0.0
      %6429 = vmatpush2.msra.mxu0 0.0
      %6430 = vmatprep.subr.mxu0 0.0
      %6431 = vmatpush2.msra.mxu0 0.0
      %6432 = vmatprep.subr.mxu0 0.0
      %6433 = vmatpush2.msra.mxu0 0.0
      %6434 = vmatprep.subr.mxu0 0.0
      %6435 = vmatpush2.msra.mxu0 0.0
      %6436 = vmatprep.subr.mxu0 0.0
      %6437 = vmatpush2.msra.mxu0 0.0
      %6438 = vmatprep.mubr.f32.mxu0 0.0
      %6439 = vmatmul.mubr.f32.gmra.mxu0 %v6372
      %v6440 = vpop.f32.mrf.mxu0
      %v6441 = vadd.f32 0.0, %v6440
      %v6442 = vpop.f32.mrf.mxu0
      %v6443 = vadd.f32 0.0, %v6442
      %6444 = vdwg.mxu0
      %v6445 = vadd.f32 %v6359, %v6441
      %v6446 = vadd.f32 %v6361, %v6443
      %v6447 = vld [vmem:[%s2 + $0xc0] sm:$0xff]
      %v6448 = vld [vmem:[%s2 + $0xc8] sm:$0xff]
      %v6449 = vld [vmem:[%s2 + $0xd0] sm:$0xff]
      %v6450 = vld [vmem:[%s2 + $0xd8] sm:$0xff]
      %v6451 = vld [vmem:[%s2 + $0xe0] sm:$0xff]
      %v6452 = vld [vmem:[%s2 + $0xe8] sm:$0xff]
      %v6453 = vld [vmem:[%s2 + $0xf0] sm:$0xff]
      %v6454 = vld [vmem:[%s2 + $0xf8] sm:$0xff]
      %v6455 = vrot.slane %v6191, 4
      %v6456 = vsel %vm6216, %v6455, 0
      %6458 = vmatprep.subr.mxu0 0.0
      %6459 = vmatpush1.msra.mxu0 0.0
      %6460 = vmatprep.subr.mxu0 0.0
      %6461 = vmatpush1.msra.mxu0 0.0
      %6462 = vmatprep.subr.mxu0 0.0
      %6463 = vmatpush1.msra.mxu0 0.0
      %6464 = vmatprep.subr.mxu0 0.0
      %6465 = vmatpush1.msra.mxu0 0.0
      %6466 = vmatprep.subr.mxu0 0.0
      %6467 = vmatpush1.msra.mxu0 0.0
      %6468 = vmatprep.subr.mxu0 0.0
      %6469 = vmatpush1.msra.mxu0 0.0
      %6470 = vmatprep.subr.mxu0 0.0
      %6471 = vmatpush1.msra.mxu0 0.0
      %6472 = vmatprep.subr.mxu0 0.0
      %6473 = vmatpush1.msra.mxu0 0.0
      %6474 = vmatprep.subr.mxu0 0.0
      %6475 = vmatpush1.msra.mxu0 0.0
      %6476 = vmatprep.subr.mxu0 0.0
      %6477 = vmatpush1.msra.mxu0 0.0
      %6478 = vmatprep.subr.mxu0 0.0
      %6479 = vmatpush1.msra.mxu0 0.0
      %6480 = vmatprep.subr.mxu0 0.0
      %6481 = vmatpush1.msra.mxu0 0.0
      %6482 = vmatprep.subr.mxu0 %v6454
      %6483 = vmatpush1.msra.mxu0 %v6453
      %6484 = vmatprep.subr.mxu0 %v6452
      %6485 = vmatpush1.msra.mxu0 %v6451
      %6486 = vmatprep.subr.mxu0 %v6450
      %6487 = vmatpush1.msra.mxu0 %v6449
      %6488 = vmatprep.subr.mxu0 %v6448
      %6489 = vmatpush1.msra.mxu0 %v6447
      %6490 = vmatprep.subr.mxu0 0.0
      %6491 = vmatpush2.msra.mxu0 0.0
      %6492 = vmatprep.subr.mxu0 0.0
      %6493 = vmatpush2.msra.mxu0 0.0
      %6494 = vmatprep.subr.mxu0 0.0
      %6495 = vmatpush2.msra.mxu0 0.0
      %6496 = vmatprep.subr.mxu0 0.0
      %6497 = vmatpush2.msra.mxu0 0.0
      %6498 = vmatprep.subr.mxu0 0.0
      %6499 = vmatpush2.msra.mxu0 0.0
      %6500 = vmatprep.subr.mxu0 0.0
      %6501 = vmatpush2.msra.mxu0 0.0
      %6502 = vmatprep.subr.mxu0 0.0
      %6503 = vmatpush2.msra.mxu0 0.0
      %6504 = vmatprep.subr.mxu0 0.0
      %6505 = vmatpush2.msra.mxu0 0.0
      %6506 = vmatprep.subr.mxu0 0.0
      %6507 = vmatpush2.msra.mxu0 0.0
      %6508 = vmatprep.subr.mxu0 0.0
      %6509 = vmatpush2.msra.mxu0 0.0
      %6510 = vmatprep.subr.mxu0 0.0
      %6511 = vmatpush2.msra.mxu0 0.0
      %6512 = vmatprep.subr.mxu0 0.0
      %6513 = vmatpush2.msra.mxu0 0.0
      %6514 = vmatprep.subr.mxu0 0.0
      %6515 = vmatpush2.msra.mxu0 0.0
      %6516 = vmatprep.subr.mxu0 0.0
      %6517 = vmatpush2.msra.mxu0 0.0
      %6518 = vmatprep.subr.mxu0 0.0
      %6519 = vmatpush2.msra.mxu0 0.0
      %6520 = vmatprep.subr.mxu0 0.0
      %6521 = vmatpush2.msra.mxu0 0.0
      %6522 = vmatprep.mubr.f32.mxu0 0.0
      %6523 = vmatmul.mubr.f32.gmra.mxu0 %v6456
      %v6524 = vpop.f32.mrf.mxu0
      %v6525 = vadd.f32 0.0, %v6524
      %v6526 = vpop.f32.mrf.mxu0
      %v6527 = vadd.f32 0.0, %v6526
      %6528 = vdwg.mxu0
      %v6529 = vadd.f32 %v6445, %v6525
      %v6530 = vadd.f32 %v6446, %v6527
      %v6531 = vld [vmem:[%s2 + $0x100] sm:$0xff]
      %v6532 = vld [vmem:[%s2 + $0x108] sm:$0xff]
      %v6533 = vld [vmem:[%s2 + $0x110] sm:$0xff]
      %v6534 = vld [vmem:[%s2 + $0x118] sm:$0xff]
      %v6535 = vld [vmem:[%s2 + $0x120] sm:$0xff]
      %v6536 = vld [vmem:[%s2 + $0x128] sm:$0xff]
      %v6537 = vld [vmem:[%s2 + $0x130] sm:$0xff]
      %v6538 = vld [vmem:[%s2 + $0x138] sm:$0xff]
      %v6540 = vsel %vm6216, %v6192, 0
      %6542 = vmatprep.subr.mxu0 0.0
      %6543 = vmatpush1.msra.mxu0 0.0
      %6544 = vmatprep.subr.mxu0 0.0
      %6545 = vmatpush1.msra.mxu0 0.0
      %6546 = vmatprep.subr.mxu0 0.0
      %6547 = vmatpush1.msra.mxu0 0.0
      %6548 = vmatprep.subr.mxu0 0.0
      %6549 = vmatpush1.msra.mxu0 0.0
      %6550 = vmatprep.subr.mxu0 0.0
      %6551 = vmatpush1.msra.mxu0 0.0
      %6552 = vmatprep.subr.mxu0 0.0
      %6553 = vmatpush1.msra.mxu0 0.0
      %6554 = vmatprep.subr.mxu0 0.0
      %6555 = vmatpush1.msra.mxu0 0.0
      %6556 = vmatprep.subr.mxu0 0.0
      %6557 = vmatpush1.msra.mxu0 0.0
      %6558 = vmatprep.subr.mxu0 0.0
      %6559 = vmatpush1.msra.mxu0 0.0
      %6560 = vmatprep.subr.mxu0 0.0
      %6561 = vmatpush1.msra.mxu0 0.0
      %6562 = vmatprep.subr.mxu0 0.0
      %6563 = vmatpush1.msra.mxu0 0.0
      %6564 = vmatprep.subr.mxu0 0.0
      %6565 = vmatpush1.msra.mxu0 0.0
      %6566 = vmatprep.subr.mxu0 %v6538
      %6567 = vmatpush1.msra.mxu0 %v6537
      %6568 = vmatprep.subr.mxu0 %v6536
      %6569 = vmatpush1.msra.mxu0 %v6535
      %6570 = vmatprep.subr.mxu0 %v6534
      %6571 = vmatpush1.msra.mxu0 %v6533
      %6572 = vmatprep.subr.mxu0 %v6532
      %6573 = vmatpush1.msra.mxu0 %v6531
      %6574 = vmatprep.subr.mxu0 0.0
      %6575 = vmatpush2.msra.mxu0 0.0
      %6576 = vmatprep.subr.mxu0 0.0
      %6577 = vmatpush2.msra.mxu0 0.0
      %6578 = vmatprep.subr.mxu0 0.0
      %6579 = vmatpush2.msra.mxu0 0.0
      %6580 = vmatprep.subr.mxu0 0.0
      %6581 = vmatpush2.msra.mxu0 0.0
      %6582 = vmatprep.subr.mxu0 0.0
      %6583 = vmatpush2.msra.mxu0 0.0
      %6584 = vmatprep.subr.mxu0 0.0
      %6585 = vmatpush2.msra.mxu0 0.0
      %6586 = vmatprep.subr.mxu0 0.0
      %6587 = vmatpush2.msra.mxu0 0.0
      %6588 = vmatprep.subr.mxu0 0.0
      %6589 = vmatpush2.msra.mxu0 0.0
      %6590 = vmatprep.subr.mxu0 0.0
      %6591 = vmatpush2.msra.mxu0 0.0
      %6592 = vmatprep.subr.mxu0 0.0
      %6593 = vmatpush2.msra.mxu0 0.0
      %6594 = vmatprep.subr.mxu0 0.0
      %6595 = vmatpush2.msra.mxu0 0.0
      %6596 = vmatprep.subr.mxu0 0.0
      %6597 = vmatpush2.msra.mxu0 0.0
      %6598 = vmatprep.subr.mxu0 0.0
      %6599 = vmatpush2.msra.mxu0 0.0
      %6600 = vmatprep.subr.mxu0 0.0
      %6601 = vmatpush2.msra.mxu0 0.0
      %6602 = vmatprep.subr.mxu0 0.0
      %6603 = vmatpush2.msra.mxu0 0.0
      %6604 = vmatprep.subr.mxu0 0.0
      %6605 = vmatpush2.msra.mxu0 0.0
      %6606 = vmatprep.mubr.f32.mxu0 0.0
      %6607 = vmatmul.mubr.f32.gmra.mxu0 %v6540
      %v6608 = vpop.f32.mrf.mxu0
      %v6609 = vadd.f32 0.0, %v6608
      %v6610 = vpop.f32.mrf.mxu0
      %v6611 = vadd.f32 0.0, %v6610
      %6612 = vdwg.mxu0
      %v6613 = vadd.f32 %v6529, %v6609
      %v6614 = vadd.f32 %v6530, %v6611
      %v6615 = vld [vmem:[%s2 + $0x140] sm:$0xff]
      %v6616 = vld [vmem:[%s2 + $0x148] sm:$0xff]
      %v6617 = vld [vmem:[%s2 + $0x150] sm:$0xff]
      %v6618 = vld [vmem:[%s2 + $0x158] sm:$0xff]
      %v6619 = vld [vmem:[%s2 + $0x160] sm:$0xff]
      %v6620 = vld [vmem:[%s2 + $0x168] sm:$0xff]
      %v6621 = vld [vmem:[%s2 + $0x170] sm:$0xff]
      %v6622 = vld [vmem:[%s2 + $0x178] sm:$0xff]
      %v6623 = vrot.slane %v6192, 4
      %v6624 = vsel %vm6216, %v6623, 0
      %6626 = vmatprep.subr.mxu0 0.0
      %6627 = vmatpush1.msra.mxu0 0.0
      %6628 = vmatprep.subr.mxu0 0.0
      %6629 = vmatpush1.msra.mxu0 0.0
      %6630 = vmatprep.subr.mxu0 0.0
      %6631 = vmatpush1.msra.mxu0 0.0
      %6632 = vmatprep.subr.mxu0 0.0
      %6633 = vmatpush1.msra.mxu0 0.0
      %6634 = vmatprep.subr.mxu0 0.0
      %6635 = vmatpush1.msra.mxu0 0.0
      %6636 = vmatprep.subr.mxu0 0.0
      %6637 = vmatpush1.msra.mxu0 0.0
      %6638 = vmatprep.subr.mxu0 0.0
      %6639 = vmatpush1.msra.mxu0 0.0
      %6640 = vmatprep.subr.mxu0 0.0
      %6641 = vmatpush1.msra.mxu0 0.0
      %6642 = vmatprep.subr.mxu0 0.0
      %6643 = vmatpush1.msra.mxu0 0.0
      %6644 = vmatprep.subr.mxu0 0.0
      %6645 = vmatpush1.msra.mxu0 0.0
      %6646 = vmatprep.subr.mxu0 0.0
      %6647 = vmatpush1.msra.mxu0 0.0
      %6648 = vmatprep.subr.mxu0 0.0
      %6649 = vmatpush1.msra.mxu0 0.0
      %6650 = vmatprep.subr.mxu0 %v6622
      %6651 = vmatpush1.msra.mxu0 %v6621
      %6652 = vmatprep.subr.mxu0 %v6620
      %6653 = vmatpush1.msra.mxu0 %v6619
      %6654 = vmatprep.subr.mxu0 %v6618
      %6655 = vmatpush1.msra.mxu0 %v6617
      %6656 = vmatprep.subr.mxu0 %v6616
      %6657 = vmatpush1.msra.mxu0 %v6615
      %6658 = vmatprep.subr.mxu0 0.0
      %6659 = vmatpush2.msra.mxu0 0.0
      %6660 = vmatprep.subr.mxu0 0.0
      %6661 = vmatpush2.msra.mxu0 0.0
      %6662 = vmatprep.subr.mxu0 0.0
      %6663 = vmatpush2.msra.mxu0 0.0
      %6664 = vmatprep.subr.mxu0 0.0
      %6665 = vmatpush2.msra.mxu0 0.0
      %6666 = vmatprep.subr.mxu0 0.0
      %6667 = vmatpush2.msra.mxu0 0.0
      %6668 = vmatprep.subr.mxu0 0.0
      %6669 = vmatpush2.msra.mxu0 0.0
      %6670 = vmatprep.subr.mxu0 0.0
      %6671 = vmatpush2.msra.mxu0 0.0
      %6672 = vmatprep.subr.mxu0 0.0
      %6673 = vmatpush2.msra.mxu0 0.0
      %6674 = vmatprep.subr.mxu0 0.0
      %6675 = vmatpush2.msra.mxu0 0.0
      %6676 = vmatprep.subr.mxu0 0.0
      %6677 = vmatpush2.msra.mxu0 0.0
      %6678 = vmatprep.subr.mxu0 0.0
      %6679 = vmatpush2.msra.mxu0 0.0
      %6680 = vmatprep.subr.mxu0 0.0
      %6681 = vmatpush2.msra.mxu0 0.0
      %6682 = vmatprep.subr.mxu0 0.0
      %6683 = vmatpush2.msra.mxu0 0.0
      %6684 = vmatprep.subr.mxu0 0.0
      %6685 = vmatpush2.msra.mxu0 0.0
      %6686 = vmatprep.subr.mxu0 0.0
      %6687 = vmatpush2.msra.mxu0 0.0
      %6688 = vmatprep.subr.mxu0 0.0
      %6689 = vmatpush2.msra.mxu0 0.0
      %6690 = vmatprep.mubr.f32.mxu0 0.0
      %6691 = vmatmul.mubr.f32.gmra.mxu0 %v6624
      %v6692 = vpop.f32.mrf.mxu0
      %v6693 = vadd.f32 0.0, %v6692
      %v6694 = vpop.f32.mrf.mxu0
      %v6695 = vadd.f32 0.0, %v6694
      %6696 = vdwg.mxu0
      %v6697 = vadd.f32 %v6613, %v6693
      %v6698 = vadd.f32 %v6614, %v6695
      %v6699 = vld [vmem:[%s2 + $0x180] sm:$0xff]
      %v6700 = vld [vmem:[%s2 + $0x188] sm:$0xff]
      %v6701 = vld [vmem:[%s2 + $0x190] sm:$0xff]
      %v6702 = vld [vmem:[%s2 + $0x198] sm:$0xff]
      %v6703 = vld [vmem:[%s2 + $0x1a0] sm:$0xff]
      %v6704 = vld [vmem:[%s2 + $0x1a8] sm:$0xff]
      %v6705 = vld [vmem:[%s2 + $0x1b0] sm:$0xff]
      %v6706 = vld [vmem:[%s2 + $0x1b8] sm:$0xff]
      %v6708 = vsel %vm6216, %v6193, 0
      %6710 = vmatprep.subr.mxu0 0.0
      %6711 = vmatpush1.msra.mxu0 0.0
      %6712 = vmatprep.subr.mxu0 0.0
      %6713 = vmatpush1.msra.mxu0 0.0
      %6714 = vmatprep.subr.mxu0 0.0
      %6715 = vmatpush1.msra.mxu0 0.0
      %6716 = vmatprep.subr.mxu0 0.0
      %6717 = vmatpush1.msra.mxu0 0.0
      %6718 = vmatprep.subr.mxu0 0.0
      %6719 = vmatpush1.msra.mxu0 0.0
      %6720 = vmatprep.subr.mxu0 0.0
      %6721 = vmatpush1.msra.mxu0 0.0
      %6722 = vmatprep.subr.mxu0 0.0
      %6723 = vmatpush1.msra.mxu0 0.0
      %6724 = vmatprep.subr.mxu0 0.0
      %6725 = vmatpush1.msra.mxu0 0.0
      %6726 = vmatprep.subr.mxu0 0.0
      %6727 = vmatpush1.msra.mxu0 0.0
      %6728 = vmatprep.subr.mxu0 0.0
      %6729 = vmatpush1.msra.mxu0 0.0
      %6730 = vmatprep.subr.mxu0 0.0
      %6731 = vmatpush1.msra.mxu0 0.0
      %6732 = vmatprep.subr.mxu0 0.0
      %6733 = vmatpush1.msra.mxu0 0.0
      %6734 = vmatprep.subr.mxu0 %v6706
      %6735 = vmatpush1.msra.mxu0 %v6705
      %6736 = vmatprep.subr.mxu0 %v6704
      %6737 = vmatpush1.msra.mxu0 %v6703
      %6738 = vmatprep.subr.mxu0 %v6702
      %6739 = vmatpush1.msra.mxu0 %v6701
      %6740 = vmatprep.subr.mxu0 %v6700
      %6741 = vmatpush1.msra.mxu0 %v6699
      %6742 = vmatprep.subr.mxu0 0.0
      %6743 = vmatpush2.msra.mxu0 0.0
      %6744 = vmatprep.subr.mxu0 0.0
      %6745 = vmatpush2.msra.mxu0 0.0
      %6746 = vmatprep.subr.mxu0 0.0
      %6747 = vmatpush2.msra.mxu0 0.0
      %6748 = vmatprep.subr.mxu0 0.0
      %6749 = vmatpush2.msra.mxu0 0.0
      %6750 = vmatprep.subr.mxu0 0.0
      %6751 = vmatpush2.msra.mxu0 0.0
      %6752 = vmatprep.subr.mxu0 0.0
      %6753 = vmatpush2.msra.mxu0 0.0
      %6754 = vmatprep.subr.mxu0 0.0
      %6755 = vmatpush2.msra.mxu0 0.0
      %6756 = vmatprep.subr.mxu0 0.0
      %6757 = vmatpush2.msra.mxu0 0.0
      %6758 = vmatprep.subr.mxu0 0.0
      %6759 = vmatpush2.msra.mxu0 0.0
      %6760 = vmatprep.subr.mxu0 0.0
      %6761 = vmatpush2.msra.mxu0 0.0
      %6762 = vmatprep.subr.mxu0 0.0
      %6763 = vmatpush2.msra.mxu0 0.0
      %6764 = vmatprep.subr.mxu0 0.0
      %6765 = vmatpush2.msra.mxu0 0.0
      %6766 = vmatprep.subr.mxu0 0.0
      %6767 = vmatpush2.msra.mxu0 0.0
      %6768 = vmatprep.subr.mxu0 0.0
      %6769 = vmatpush2.msra.mxu0 0.0
      %6770 = vmatprep.subr.mxu0 0.0
      %6771 = vmatpush2.msra.mxu0 0.0
      %6772 = vmatprep.subr.mxu0 0.0
      %6773 = vmatpush2.msra.mxu0 0.0
      %6774 = vmatprep.mubr.f32.mxu0 0.0
      %6775 = vmatmul.mubr.f32.gmra.mxu0 %v6708
      %v6776 = vpop.f32.mrf.mxu0
      %v6777 = vadd.f32 0.0, %v6776
      %v6778 = vpop.f32.mrf.mxu0
      %v6779 = vadd.f32 0.0, %v6778
      %6780 = vdwg.mxu0
      %v6781 = vadd.f32 %v6697, %v6777
      %v6782 = vadd.f32 %v6698, %v6779
      %v6783 = vld [vmem:[%s2 + $0x1c0] sm:$0xff]
      %v6784 = vld [vmem:[%s2 + $0x1c8] sm:$0xff]
      %v6785 = vld [vmem:[%s2 + $0x1d0] sm:$0xff]
      %v6786 = vld [vmem:[%s2 + $0x1d8] sm:$0xff]
      %v6787 = vld [vmem:[%s2 + $0x1e0] sm:$0xff]
      %v6788 = vld [vmem:[%s2 + $0x1e8] sm:$0xff]
      %v6789 = vld [vmem:[%s2 + $0x1f0] sm:$0xff]
      %v6790 = vld [vmem:[%s2 + $0x1f8] sm:$0xff]
      %v6791 = vrot.slane %v6193, 4
      %v6792 = vsel %vm6216, %v6791, 0
      %6794 = vmatprep.subr.mxu0 0.0
      %6795 = vmatpush1.msra.mxu0 0.0
      %6796 = vmatprep.subr.mxu0 0.0
      %6797 = vmatpush1.msra.mxu0 0.0
      %6798 = vmatprep.subr.mxu0 0.0
      %6799 = vmatpush1.msra.mxu0 0.0
      %6800 = vmatprep.subr.mxu0 0.0
      %6801 = vmatpush1.msra.mxu0 0.0
      %6802 = vmatprep.subr.mxu0 0.0
      %6803 = vmatpush1.msra.mxu0 0.0
      %6804 = vmatprep.subr.mxu0 0.0
      %6805 = vmatpush1.msra.mxu0 0.0
      %6806 = vmatprep.subr.mxu0 0.0
      %6807 = vmatpush1.msra.mxu0 0.0
      %6808 = vmatprep.subr.mxu0 0.0
      %6809 = vmatpush1.msra.mxu0 0.0
      %6810 = vmatprep.subr.mxu0 0.0
      %6811 = vmatpush1.msra.mxu0 0.0
      %6812 = vmatprep.subr.mxu0 0.0
      %6813 = vmatpush1.msra.mxu0 0.0
      %6814 = vmatprep.subr.mxu0 0.0
      %6815 = vmatpush1.msra.mxu0 0.0
      %6816 = vmatprep.subr.mxu0 0.0
      %6817 = vmatpush1.msra.mxu0 0.0
      %6818 = vmatprep.subr.mxu0 %v6790
      %6819 = vmatpush1.msra.mxu0 %v6789
      %6820 = vmatprep.subr.mxu0 %v6788
      %6821 = vmatpush1.msra.mxu0 %v6787
      %6822 = vmatprep.subr.mxu0 %v6786
      %6823 = vmatpush1.msra.mxu0 %v6785
      %6824 = vmatprep.subr.mxu0 %v6784
      %6825 = vmatpush1.msra.mxu0 %v6783
      %6826 = vmatprep.subr.mxu0 0.0
      %6827 = vmatpush2.msra.mxu0 0.0
      %6828 = vmatprep.subr.mxu0 0.0
      %6829 = vmatpush2.msra.mxu0 0.0
      %6830 = vmatprep.subr.mxu0 0.0
      %6831 = vmatpush2.msra.mxu0 0.0
      %6832 = vmatprep.subr.mxu0 0.0
      %6833 = vmatpush2.msra.mxu0 0.0
      %6834 = vmatprep.subr.mxu0 0.0
      %6835 = vmatpush2.msra.mxu0 0.0
      %6836 = vmatprep.subr.mxu0 0.0
      %6837 = vmatpush2.msra.mxu0 0.0
      %6838 = vmatprep.subr.mxu0 0.0
      %6839 = vmatpush2.msra.mxu0 0.0
      %6840 = vmatprep.subr.mxu0 0.0
      %6841 = vmatpush2.msra.mxu0 0.0
      %6842 = vmatprep.subr.mxu0 0.0
      %6843 = vmatpush2.msra.mxu0 0.0
      %6844 = vmatprep.subr.mxu0 0.0
      %6845 = vmatpush2.msra.mxu0 0.0
      %6846 = vmatprep.subr.mxu0 0.0
      %6847 = vmatpush2.msra.mxu0 0.0
      %6848 = vmatprep.subr.mxu0 0.0
      %6849 = vmatpush2.msra.mxu0 0.0
      %6850 = vmatprep.subr.mxu0 0.0
      %6851 = vmatpush2.msra.mxu0 0.0
      %6852 = vmatprep.subr.mxu0 0.0
      %6853 = vmatpush2.msra.mxu0 0.0
      %6854 = vmatprep.subr.mxu0 0.0
      %6855 = vmatpush2.msra.mxu0 0.0
      %6856 = vmatprep.subr.mxu0 0.0
      %6857 = vmatpush2.msra.mxu0 0.0
      %6858 = vmatprep.mubr.f32.mxu0 0.0
      %6859 = vmatmul.mubr.f32.gmra.mxu0 %v6792
      %v6860 = vpop.f32.mrf.mxu0
      %v6861 = vadd.f32 0.0, %v6860
      %v6862 = vpop.f32.mrf.mxu0
      %v6863 = vadd.f32 0.0, %v6862
      %6864 = vdwg.mxu0
      %v6865 = vadd.f32 %v6781, %v6861
      %v6866 = vadd.f32 %v6782, %v6863
      %v6867 = vld [vmem:[%s2 + $0x200] sm:$0xff]
      %v6868 = vld [vmem:[%s2 + $0x208] sm:$0xff]
      %v6869 = vld [vmem:[%s2 + $0x210] sm:$0xff]
      %v6870 = vld [vmem:[%s2 + $0x218] sm:$0xff]
      %v6871 = vld [vmem:[%s2 + $0x220] sm:$0xff]
      %v6872 = vld [vmem:[%s2 + $0x228] sm:$0xff]
      %v6873 = vld [vmem:[%s2 + $0x230] sm:$0xff]
      %v6874 = vld [vmem:[%s2 + $0x238] sm:$0xff]
      %v6876 = vsel %vm6216, %v6194, 0
      %6878 = vmatprep.subr.mxu0 0.0
      %6879 = vmatpush1.msra.mxu0 0.0
      %6880 = vmatprep.subr.mxu0 0.0
      %6881 = vmatpush1.msra.mxu0 0.0
      %6882 = vmatprep.subr.mxu0 0.0
      %6883 = vmatpush1.msra.mxu0 0.0
      %6884 = vmatprep.subr.mxu0 0.0
      %6885 = vmatpush1.msra.mxu0 0.0
      %6886 = vmatprep.subr.mxu0 0.0
      %6887 = vmatpush1.msra.mxu0 0.0
      %6888 = vmatprep.subr.mxu0 0.0
      %6889 = vmatpush1.msra.mxu0 0.0
      %6890 = vmatprep.subr.mxu0 0.0
      %6891 = vmatpush1.msra.mxu0 0.0
      %6892 = vmatprep.subr.mxu0 0.0
      %6893 = vmatpush1.msra.mxu0 0.0
      %6894 = vmatprep.subr.mxu0 0.0
      %6895 = vmatpush1.msra.mxu0 0.0
      %6896 = vmatprep.subr.mxu0 0.0
      %6897 = vmatpush1.msra.mxu0 0.0
      %6898 = vmatprep.subr.mxu0 0.0
      %6899 = vmatpush1.msra.mxu0 0.0
      %6900 = vmatprep.subr.mxu0 0.0
      %6901 = vmatpush1.msra.mxu0 0.0
      %6902 = vmatprep.subr.mxu0 %v6874
      %6903 = vmatpush1.msra.mxu0 %v6873
      %6904 = vmatprep.subr.mxu0 %v6872
      %6905 = vmatpush1.msra.mxu0 %v6871
      %6906 = vmatprep.subr.mxu0 %v6870
      %6907 = vmatpush1.msra.mxu0 %v6869
      %6908 = vmatprep.subr.mxu0 %v6868
      %6909 = vmatpush1.msra.mxu0 %v6867
      %6910 = vmatprep.subr.mxu0 0.0
      %6911 = vmatpush2.msra.mxu0 0.0
      %6912 = vmatprep.subr.mxu0 0.0
      %6913 = vmatpush2.msra.mxu0 0.0
      %6914 = vmatprep.subr.mxu0 0.0
      %6915 = vmatpush2.msra.mxu0 0.0
      %6916 = vmatprep.subr.mxu0 0.0
      %6917 = vmatpush2.msra.mxu0 0.0
      %6918 = vmatprep.subr.mxu0 0.0
      %6919 = vmatpush2.msra.mxu0 0.0
      %6920 = vmatprep.subr.mxu0 0.0
      %6921 = vmatpush2.msra.mxu0 0.0
      %6922 = vmatprep.subr.mxu0 0.0
      %6923 = vmatpush2.msra.mxu0 0.0
      %6924 = vmatprep.subr.mxu0 0.0
      %6925 = vmatpush2.msra.mxu0 0.0
      %6926 = vmatprep.subr.mxu0 0.0
      %6927 = vmatpush2.msra.mxu0 0.0
      %6928 = vmatprep.subr.mxu0 0.0
      %6929 = vmatpush2.msra.mxu0 0.0
      %6930 = vmatprep.subr.mxu0 0.0
      %6931 = vmatpush2.msra.mxu0 0.0
      %6932 = vmatprep.subr.mxu0 0.0
      %6933 = vmatpush2.msra.mxu0 0.0
      %6934 = vmatprep.subr.mxu0 0.0
      %6935 = vmatpush2.msra.mxu0 0.0
      %6936 = vmatprep.subr.mxu0 0.0
      %6937 = vmatpush2.msra.mxu0 0.0
      %6938 = vmatprep.subr.mxu0 0.0
      %6939 = vmatpush2.msra.mxu0 0.0
      %6940 = vmatprep.subr.mxu0 0.0
      %6941 = vmatpush2.msra.mxu0 0.0
      %6942 = vmatprep.mubr.f32.mxu0 0.0
      %6943 = vmatmul.mubr.f32.gmra.mxu0 %v6876
      %v6944 = vpop.f32.mrf.mxu0
      %v6945 = vadd.f32 0.0, %v6944
      %v6946 = vpop.f32.mrf.mxu0
      %v6947 = vadd.f32 0.0, %v6946
      %6948 = vdwg.mxu0
      %v6949 = vadd.f32 %v6865, %v6945
      %v6950 = vadd.f32 %v6866, %v6947
      %v6951 = vld [vmem:[%s2 + $0x240] sm:$0xff]
      %v6952 = vld [vmem:[%s2 + $0x248] sm:$0xff]
      %v6953 = vld [vmem:[%s2 + $0x250] sm:$0xff]
      %v6954 = vld [vmem:[%s2 + $0x258] sm:$0xff]
      %v6955 = vld [vmem:[%s2 + $0x260] sm:$0xff]
      %v6956 = vld [vmem:[%s2 + $0x268] sm:$0xff]
      %v6957 = vld [vmem:[%s2 + $0x270] sm:$0xff]
      %v6958 = vld [vmem:[%s2 + $0x278] sm:$0xff]
      %v6959 = vrot.slane %v6194, 4
      %v6960 = vsel %vm6216, %v6959, 0
      %6962 = vmatprep.subr.mxu0 0.0
      %6963 = vmatpush1.msra.mxu0 0.0
      %6964 = vmatprep.subr.mxu0 0.0
      %6965 = vmatpush1.msra.mxu0 0.0
      %6966 = vmatprep.subr.mxu0 0.0
      %6967 = vmatpush1.msra.mxu0 0.0
      %6968 = vmatprep.subr.mxu0 0.0
      %6969 = vmatpush1.msra.mxu0 0.0
      %6970 = vmatprep.subr.mxu0 0.0
      %6971 = vmatpush1.msra.mxu0 0.0
      %6972 = vmatprep.subr.mxu0 0.0
      %6973 = vmatpush1.msra.mxu0 0.0
      %6974 = vmatprep.subr.mxu0 0.0
      %6975 = vmatpush1.msra.mxu0 0.0
      %6976 = vmatprep.subr.mxu0 0.0
      %6977 = vmatpush1.msra.mxu0 0.0
      %6978 = vmatprep.subr.mxu0 0.0
      %6979 = vmatpush1.msra.mxu0 0.0
      %6980 = vmatprep.subr.mxu0 0.0
      %6981 = vmatpush1.msra.mxu0 0.0
      %6982 = vmatprep.subr.mxu0 0.0
      %6983 = vmatpush1.msra.mxu0 0.0
      %6984 = vmatprep.subr.mxu0 0.0
      %6985 = vmatpush1.msra.mxu0 0.0
      %6986 = vmatprep.subr.mxu0 %v6958
      %6987 = vmatpush1.msra.mxu0 %v6957
      %6988 = vmatprep.subr.mxu0 %v6956
      %6989 = vmatpush1.msra.mxu0 %v6955
      %6990 = vmatprep.subr.mxu0 %v6954
      %6991 = vmatpush1.msra.mxu0 %v6953
      %6992 = vmatprep.subr.mxu0 %v6952
      %6993 = vmatpush1.msra.mxu0 %v6951
      %6994 = vmatprep.subr.mxu0 0.0
      %6995 = vmatpush2.msra.mxu0 0.0
      %6996 = vmatprep.subr.mxu0 0.0
      %6997 = vmatpush2.msra.mxu0 0.0
      %6998 = vmatprep.subr.mxu0 0.0
      %6999 = vmatpush2.msra.mxu0 0.0
      %7000 = vmatprep.subr.mxu0 0.0
      %7001 = vmatpush2.msra.mxu0 0.0
      %7002 = vmatprep.subr.mxu0 0.0
      %7003 = vmatpush2.msra.mxu0 0.0
      %7004 = vmatprep.subr.mxu0 0.0
      %7005 = vmatpush2.msra.mxu0 0.0
      %7006 = vmatprep.subr.mxu0 0.0
      %7007 = vmatpush2.msra.mxu0 0.0
      %7008 = vmatprep.subr.mxu0 0.0
      %7009 = vmatpush2.msra.mxu0 0.0
      %7010 = vmatprep.subr.mxu0 0.0
      %7011 = vmatpush2.msra.mxu0 0.0
      %7012 = vmatprep.subr.mxu0 0.0
      %7013 = vmatpush2.msra.mxu0 0.0
      %7014 = vmatprep.subr.mxu0 0.0
      %7015 = vmatpush2.msra.mxu0 0.0
      %7016 = vmatprep.subr.mxu0 0.0
      %7017 = vmatpush2.msra.mxu0 0.0
      %7018 = vmatprep.subr.mxu0 0.0
      %7019 = vmatpush2.msra.mxu0 0.0
      %7020 = vmatprep.subr.mxu0 0.0
      %7021 = vmatpush2.msra.mxu0 0.0
      %7022 = vmatprep.subr.mxu0 0.0
      %7023 = vmatpush2.msra.mxu0 0.0
      %7024 = vmatprep.subr.mxu0 0.0
      %7025 = vmatpush2.msra.mxu0 0.0
      %7026 = vmatprep.mubr.f32.mxu0 0.0
      %7027 = vmatmul.mubr.f32.gmra.mxu0 %v6960
      %v7028 = vpop.f32.mrf.mxu0
      %v7029 = vadd.f32 0.0, %v7028
      %v7030 = vpop.f32.mrf.mxu0
      %v7031 = vadd.f32 0.0, %v7030
      %7032 = vdwg.mxu0
      %v7033 = vadd.f32 %v6949, %v7029
      %v7034 = vadd.f32 %v6950, %v7031
      %v7035 = vld [vmem:[%s2 + $0x280] sm:$0xff]
      %v7036 = vld [vmem:[%s2 + $0x288] sm:$0xff]
      %v7037 = vld [vmem:[%s2 + $0x290] sm:$0xff]
      %v7038 = vld [vmem:[%s2 + $0x298] sm:$0xff]
      %v7039 = vld [vmem:[%s2 + $0x2a0] sm:$0xff]
      %v7040 = vld [vmem:[%s2 + $0x2a8] sm:$0xff]
      %v7041 = vld [vmem:[%s2 + $0x2b0] sm:$0xff]
      %v7042 = vld [vmem:[%s2 + $0x2b8] sm:$0xff]
      %v7044 = vsel %vm6216, %v6195, 0
      %7046 = vmatprep.subr.mxu0 0.0
      %7047 = vmatpush1.msra.mxu0 0.0
      %7048 = vmatprep.subr.mxu0 0.0
      %7049 = vmatpush1.msra.mxu0 0.0
      %7050 = vmatprep.subr.mxu0 0.0
      %7051 = vmatpush1.msra.mxu0 0.0
      %7052 = vmatprep.subr.mxu0 0.0
      %7053 = vmatpush1.msra.mxu0 0.0
      %7054 = vmatprep.subr.mxu0 0.0
      %7055 = vmatpush1.msra.mxu0 0.0
      %7056 = vmatprep.subr.mxu0 0.0
      %7057 = vmatpush1.msra.mxu0 0.0
      %7058 = vmatprep.subr.mxu0 0.0
      %7059 = vmatpush1.msra.mxu0 0.0
      %7060 = vmatprep.subr.mxu0 0.0
      %7061 = vmatpush1.msra.mxu0 0.0
      %7062 = vmatprep.subr.mxu0 0.0
      %7063 = vmatpush1.msra.mxu0 0.0
      %7064 = vmatprep.subr.mxu0 0.0
      %7065 = vmatpush1.msra.mxu0 0.0
      %7066 = vmatprep.subr.mxu0 0.0
      %7067 = vmatpush1.msra.mxu0 0.0
      %7068 = vmatprep.subr.mxu0 0.0
      %7069 = vmatpush1.msra.mxu0 0.0
      %7070 = vmatprep.subr.mxu0 %v7042
      %7071 = vmatpush1.msra.mxu0 %v7041
      %7072 = vmatprep.subr.mxu0 %v7040
      %7073 = vmatpush1.msra.mxu0 %v7039
      %7074 = vmatprep.subr.mxu0 %v7038
      %7075 = vmatpush1.msra.mxu0 %v7037
      %7076 = vmatprep.subr.mxu0 %v7036
      %7077 = vmatpush1.msra.mxu0 %v7035
      %7078 = vmatprep.subr.mxu0 0.0
      %7079 = vmatpush2.msra.mxu0 0.0
      %7080 = vmatprep.subr.mxu0 0.0
      %7081 = vmatpush2.msra.mxu0 0.0
      %7082 = vmatprep.subr.mxu0 0.0
      %7083 = vmatpush2.msra.mxu0 0.0
      %7084 = vmatprep.subr.mxu0 0.0
      %7085 = vmatpush2.msra.mxu0 0.0
      %7086 = vmatprep.subr.mxu0 0.0
      %7087 = vmatpush2.msra.mxu0 0.0
      %7088 = vmatprep.subr.mxu0 0.0
      %7089 = vmatpush2.msra.mxu0 0.0
      %7090 = vmatprep.subr.mxu0 0.0
      %7091 = vmatpush2.msra.mxu0 0.0
      %7092 = vmatprep.subr.mxu0 0.0
      %7093 = vmatpush2.msra.mxu0 0.0
      %7094 = vmatprep.subr.mxu0 0.0
      %7095 = vmatpush2.msra.mxu0 0.0
      %7096 = vmatprep.subr.mxu0 0.0
      %7097 = vmatpush2.msra.mxu0 0.0
      %7098 = vmatprep.subr.mxu0 0.0
      %7099 = vmatpush2.msra.mxu0 0.0
      %7100 = vmatprep.subr.mxu0 0.0
      %7101 = vmatpush2.msra.mxu0 0.0
      %7102 = vmatprep.subr.mxu0 0.0
      %7103 = vmatpush2.msra.mxu0 0.0
      %7104 = vmatprep.subr.mxu0 0.0
      %7105 = vmatpush2.msra.mxu0 0.0
      %7106 = vmatprep.subr.mxu0 0.0
      %7107 = vmatpush2.msra.mxu0 0.0
      %7108 = vmatprep.subr.mxu0 0.0
      %7109 = vmatpush2.msra.mxu0 0.0
      %7110 = vmatprep.mubr.f32.mxu0 0.0
      %7111 = vmatmul.mubr.f32.gmra.mxu0 %v7044
      %v7112 = vpop.f32.mrf.mxu0
      %v7113 = vadd.f32 0.0, %v7112
      %v7114 = vpop.f32.mrf.mxu0
      %v7115 = vadd.f32 0.0, %v7114
      %7116 = vdwg.mxu0
      %v7117 = vadd.f32 %v7033, %v7113
      %v7118 = vadd.f32 %v7034, %v7115
      %v7119 = vld [vmem:[%s2 + $0x2c0] sm:$0xff]
      %v7120 = vld [vmem:[%s2 + $0x2c8] sm:$0xff]
      %v7121 = vld [vmem:[%s2 + $0x2d0] sm:$0xff]
      %v7122 = vld [vmem:[%s2 + $0x2d8] sm:$0xff]
      %v7123 = vld [vmem:[%s2 + $0x2e0] sm:$0xff]
      %v7124 = vld [vmem:[%s2 + $0x2e8] sm:$0xff]
      %v7125 = vld [vmem:[%s2 + $0x2f0] sm:$0xff]
      %v7126 = vld [vmem:[%s2 + $0x2f8] sm:$0xff]
      %v7127 = vrot.slane %v6195, 4
      %v7128 = vsel %vm6216, %v7127, 0
      %7130 = vmatprep.subr.mxu0 0.0
      %7131 = vmatpush1.msra.mxu0 0.0
      %7132 = vmatprep.subr.mxu0 0.0
      %7133 = vmatpush1.msra.mxu0 0.0
      %7134 = vmatprep.subr.mxu0 0.0
      %7135 = vmatpush1.msra.mxu0 0.0
      %7136 = vmatprep.subr.mxu0 0.0
      %7137 = vmatpush1.msra.mxu0 0.0
      %7138 = vmatprep.subr.mxu0 0.0
      %7139 = vmatpush1.msra.mxu0 0.0
      %7140 = vmatprep.subr.mxu0 0.0
      %7141 = vmatpush1.msra.mxu0 0.0
      %7142 = vmatprep.subr.mxu0 0.0
      %7143 = vmatpush1.msra.mxu0 0.0
      %7144 = vmatprep.subr.mxu0 0.0
      %7145 = vmatpush1.msra.mxu0 0.0
      %7146 = vmatprep.subr.mxu0 0.0
      %7147 = vmatpush1.msra.mxu0 0.0
      %7148 = vmatprep.subr.mxu0 0.0
      %7149 = vmatpush1.msra.mxu0 0.0
      %7150 = vmatprep.subr.mxu0 0.0
      %7151 = vmatpush1.msra.mxu0 0.0
      %7152 = vmatprep.subr.mxu0 0.0
      %7153 = vmatpush1.msra.mxu0 0.0
      %7154 = vmatprep.subr.mxu0 %v7126
      %7155 = vmatpush1.msra.mxu0 %v7125
      %7156 = vmatprep.subr.mxu0 %v7124
      %7157 = vmatpush1.msra.mxu0 %v7123
      %7158 = vmatprep.subr.mxu0 %v7122
      %7159 = vmatpush1.msra.mxu0 %v7121
      %7160 = vmatprep.subr.mxu0 %v7120
      %7161 = vmatpush1.msra.mxu0 %v7119
      %7162 = vmatprep.subr.mxu0 0.0
      %7163 = vmatpush2.msra.mxu0 0.0
      %7164 = vmatprep.subr.mxu0 0.0
      %7165 = vmatpush2.msra.mxu0 0.0
      %7166 = vmatprep.subr.mxu0 0.0
      %7167 = vmatpush2.msra.mxu0 0.0
      %7168 = vmatprep.subr.mxu0 0.0
      %7169 = vmatpush2.msra.mxu0 0.0
      %7170 = vmatprep.subr.mxu0 0.0
      %7171 = vmatpush2.msra.mxu0 0.0
      %7172 = vmatprep.subr.mxu0 0.0
      %7173 = vmatpush2.msra.mxu0 0.0
      %7174 = vmatprep.subr.mxu0 0.0
      %7175 = vmatpush2.msra.mxu0 0.0
      %7176 = vmatprep.subr.mxu0 0.0
      %7177 = vmatpush2.msra.mxu0 0.0
      %7178 = vmatprep.subr.mxu0 0.0
      %7179 = vmatpush2.msra.mxu0 0.0
      %7180 = vmatprep.subr.mxu0 0.0
      %7181 = vmatpush2.msra.mxu0 0.0
      %7182 = vmatprep.subr.mxu0 0.0
      %7183 = vmatpush2.msra.mxu0 0.0
      %7184 = vmatprep.subr.mxu0 0.0
      %7185 = vmatpush2.msra.mxu0 0.0
      %7186 = vmatprep.subr.mxu0 0.0
      %7187 = vmatpush2.msra.mxu0 0.0
      %7188 = vmatprep.subr.mxu0 0.0
      %7189 = vmatpush2.msra.mxu0 0.0
      %7190 = vmatprep.subr.mxu0 0.0
      %7191 = vmatpush2.msra.mxu0 0.0
      %7192 = vmatprep.subr.mxu0 0.0
      %7193 = vmatpush2.msra.mxu0 0.0
      %7194 = vmatprep.mubr.f32.mxu0 0.0
      %7195 = vmatmul.mubr.f32.gmra.mxu0 %v7128
      %v7196 = vpop.f32.mrf.mxu0
      %v7197 = vadd.f32 0.0, %v7196
      %v7198 = vpop.f32.mrf.mxu0
      %v7199 = vadd.f32 0.0, %v7198
      %7200 = vdwg.mxu0
      %v7201 = vadd.f32 %v7117, %v7197
      %v7202 = vadd.f32 %v7118, %v7199
      %v7203 = vld [vmem:[%s2 + $0x300] sm:$0xff]
      %v7204 = vld [vmem:[%s2 + $0x308] sm:$0xff]
      %v7205 = vld [vmem:[%s2 + $0x310] sm:$0xff]
      %v7206 = vld [vmem:[%s2 + $0x318] sm:$0xff]
      %v7207 = vld [vmem:[%s2 + $0x320] sm:$0xff]
      %v7208 = vld [vmem:[%s2 + $0x328] sm:$0xff]
      %v7209 = vld [vmem:[%s2 + $0x330] sm:$0xff]
      %v7210 = vld [vmem:[%s2 + $0x338] sm:$0xff]
      %v7212 = vsel %vm6216, %v6196, 0
      %7214 = vmatprep.subr.mxu0 0.0
      %7215 = vmatpush1.msra.mxu0 0.0
      %7216 = vmatprep.subr.mxu0 0.0
      %7217 = vmatpush1.msra.mxu0 0.0
      %7218 = vmatprep.subr.mxu0 0.0
      %7219 = vmatpush1.msra.mxu0 0.0
      %7220 = vmatprep.subr.mxu0 0.0
      %7221 = vmatpush1.msra.mxu0 0.0
      %7222 = vmatprep.subr.mxu0 0.0
      %7223 = vmatpush1.msra.mxu0 0.0
      %7224 = vmatprep.subr.mxu0 0.0
      %7225 = vmatpush1.msra.mxu0 0.0
      %7226 = vmatprep.subr.mxu0 0.0
      %7227 = vmatpush1.msra.mxu0 0.0
      %7228 = vmatprep.subr.mxu0 0.0
      %7229 = vmatpush1.msra.mxu0 0.0
      %7230 = vmatprep.subr.mxu0 0.0
      %7231 = vmatpush1.msra.mxu0 0.0
      %7232 = vmatprep.subr.mxu0 0.0
      %7233 = vmatpush1.msra.mxu0 0.0
      %7234 = vmatprep.subr.mxu0 0.0
      %7235 = vmatpush1.msra.mxu0 0.0
      %7236 = vmatprep.subr.mxu0 0.0
      %7237 = vmatpush1.msra.mxu0 0.0
      %7238 = vmatprep.subr.mxu0 %v7210
      %7239 = vmatpush1.msra.mxu0 %v7209
      %7240 = vmatprep.subr.mxu0 %v7208
      %7241 = vmatpush1.msra.mxu0 %v7207
      %7242 = vmatprep.subr.mxu0 %v7206
      %7243 = vmatpush1.msra.mxu0 %v7205
      %7244 = vmatprep.subr.mxu0 %v7204
      %7245 = vmatpush1.msra.mxu0 %v7203
      %7246 = vmatprep.subr.mxu0 0.0
      %7247 = vmatpush2.msra.mxu0 0.0
      %7248 = vmatprep.subr.mxu0 0.0
      %7249 = vmatpush2.msra.mxu0 0.0
      %7250 = vmatprep.subr.mxu0 0.0
      %7251 = vmatpush2.msra.mxu0 0.0
      %7252 = vmatprep.subr.mxu0 0.0
      %7253 = vmatpush2.msra.mxu0 0.0
      %7254 = vmatprep.subr.mxu0 0.0
      %7255 = vmatpush2.msra.mxu0 0.0
      %7256 = vmatprep.subr.mxu0 0.0
      %7257 = vmatpush2.msra.mxu0 0.0
      %7258 = vmatprep.subr.mxu0 0.0
      %7259 = vmatpush2.msra.mxu0 0.0
      %7260 = vmatprep.subr.mxu0 0.0
      %7261 = vmatpush2.msra.mxu0 0.0
      %7262 = vmatprep.subr.mxu0 0.0
      %7263 = vmatpush2.msra.mxu0 0.0
      %7264 = vmatprep.subr.mxu0 0.0
      %7265 = vmatpush2.msra.mxu0 0.0
      %7266 = vmatprep.subr.mxu0 0.0
      %7267 = vmatpush2.msra.mxu0 0.0
      %7268 = vmatprep.subr.mxu0 0.0
      %7269 = vmatpush2.msra.mxu0 0.0
      %7270 = vmatprep.subr.mxu0 0.0
      %7271 = vmatpush2.msra.mxu0 0.0
      %7272 = vmatprep.subr.mxu0 0.0
      %7273 = vmatpush2.msra.mxu0 0.0
      %7274 = vmatprep.subr.mxu0 0.0
      %7275 = vmatpush2.msra.mxu0 0.0
      %7276 = vmatprep.subr.mxu0 0.0
      %7277 = vmatpush2.msra.mxu0 0.0
      %7278 = vmatprep.mubr.f32.mxu0 0.0
      %7279 = vmatmul.mubr.f32.gmra.mxu0 %v7212
      %v7280 = vpop.f32.mrf.mxu0
      %v7281 = vadd.f32 0.0, %v7280
      %v7282 = vpop.f32.mrf.mxu0
      %v7283 = vadd.f32 0.0, %v7282
      %7284 = vdwg.mxu0
      %v7285 = vadd.f32 %v7201, %v7281
      %v7286 = vadd.f32 %v7202, %v7283
      %v7287 = vld [vmem:[%s2 + $0x340] sm:$0xff]
      %v7288 = vld [vmem:[%s2 + $0x348] sm:$0xff]
      %v7289 = vld [vmem:[%s2 + $0x350] sm:$0xff]
      %v7290 = vld [vmem:[%s2 + $0x358] sm:$0xff]
      %v7291 = vld [vmem:[%s2 + $0x360] sm:$0xff]
      %v7292 = vld [vmem:[%s2 + $0x368] sm:$0xff]
      %v7293 = vld [vmem:[%s2 + $0x370] sm:$0xff]
      %v7294 = vld [vmem:[%s2 + $0x378] sm:$0xff]
      %v7295 = vrot.slane %v6196, 4
      %v7296 = vsel %vm6216, %v7295, 0
      %7298 = vmatprep.subr.mxu0 0.0
      %7299 = vmatpush1.msra.mxu0 0.0
      %7300 = vmatprep.subr.mxu0 0.0
      %7301 = vmatpush1.msra.mxu0 0.0
      %7302 = vmatprep.subr.mxu0 0.0
      %7303 = vmatpush1.msra.mxu0 0.0
      %7304 = vmatprep.subr.mxu0 0.0
      %7305 = vmatpush1.msra.mxu0 0.0
      %7306 = vmatprep.subr.mxu0 0.0
      %7307 = vmatpush1.msra.mxu0 0.0
      %7308 = vmatprep.subr.mxu0 0.0
      %7309 = vmatpush1.msra.mxu0 0.0
      %7310 = vmatprep.subr.mxu0 0.0
      %7311 = vmatpush1.msra.mxu0 0.0
      %7312 = vmatprep.subr.mxu0 0.0
      %7313 = vmatpush1.msra.mxu0 0.0
      %7314 = vmatprep.subr.mxu0 0.0
      %7315 = vmatpush1.msra.mxu0 0.0
      %7316 = vmatprep.subr.mxu0 0.0
      %7317 = vmatpush1.msra.mxu0 0.0
      %7318 = vmatprep.subr.mxu0 0.0
      %7319 = vmatpush1.msra.mxu0 0.0
      %7320 = vmatprep.subr.mxu0 0.0
      %7321 = vmatpush1.msra.mxu0 0.0
      %7322 = vmatprep.subr.mxu0 %v7294
      %7323 = vmatpush1.msra.mxu0 %v7293
      %7324 = vmatprep.subr.mxu0 %v7292
      %7325 = vmatpush1.msra.mxu0 %v7291
      %7326 = vmatprep.subr.mxu0 %v7290
      %7327 = vmatpush1.msra.mxu0 %v7289
      %7328 = vmatprep.subr.mxu0 %v7288
      %7329 = vmatpush1.msra.mxu0 %v7287
      %7330 = vmatprep.subr.mxu0 0.0
      %7331 = vmatpush2.msra.mxu0 0.0
      %7332 = vmatprep.subr.mxu0 0.0
      %7333 = vmatpush2.msra.mxu0 0.0
      %7334 = vmatprep.subr.mxu0 0.0
      %7335 = vmatpush2.msra.mxu0 0.0
      %7336 = vmatprep.subr.mxu0 0.0
      %7337 = vmatpush2.msra.mxu0 0.0
      %7338 = vmatprep.subr.mxu0 0.0
      %7339 = vmatpush2.msra.mxu0 0.0
      %7340 = vmatprep.subr.mxu0 0.0
      %7341 = vmatpush2.msra.mxu0 0.0
      %7342 = vmatprep.subr.mxu0 0.0
      %7343 = vmatpush2.msra.mxu0 0.0
      %7344 = vmatprep.subr.mxu0 0.0
      %7345 = vmatpush2.msra.mxu0 0.0
      %7346 = vmatprep.subr.mxu0 0.0
      %7347 = vmatpush2.msra.mxu0 0.0
      %7348 = vmatprep.subr.mxu0 0.0
      %7349 = vmatpush2.msra.mxu0 0.0
      %7350 = vmatprep.subr.mxu0 0.0
      %7351 = vmatpush2.msra.mxu0 0.0
      %7352 = vmatprep.subr.mxu0 0.0
      %7353 = vmatpush2.msra.mxu0 0.0
      %7354 = vmatprep.subr.mxu0 0.0
      %7355 = vmatpush2.msra.mxu0 0.0
      %7356 = vmatprep.subr.mxu0 0.0
      %7357 = vmatpush2.msra.mxu0 0.0
      %7358 = vmatprep.subr.mxu0 0.0
      %7359 = vmatpush2.msra.mxu0 0.0
      %7360 = vmatprep.subr.mxu0 0.0
      %7361 = vmatpush2.msra.mxu0 0.0
      %7362 = vmatprep.mubr.f32.mxu0 0.0
      %7363 = vmatmul.mubr.f32.gmra.mxu0 %v7296
      %v7364 = vpop.f32.mrf.mxu0
      %v7365 = vadd.f32 0.0, %v7364
      %v7366 = vpop.f32.mrf.mxu0
      %v7367 = vadd.f32 0.0, %v7366
      %7368 = vdwg.mxu0
      %v7369 = vadd.f32 %v7285, %v7365
      %v7370 = vadd.f32 %v7286, %v7367
      %v7371 = vld [vmem:[%s2 + $0x380] sm:$0xff]
      %v7372 = vld [vmem:[%s2 + $0x388] sm:$0xff]
      %v7373 = vld [vmem:[%s2 + $0x390] sm:$0xff]
      %v7374 = vld [vmem:[%s2 + $0x398] sm:$0xff]
      %v7375 = vld [vmem:[%s2 + $0x3a0] sm:$0xff]
      %v7376 = vld [vmem:[%s2 + $0x3a8] sm:$0xff]
      %v7377 = vld [vmem:[%s2 + $0x3b0] sm:$0xff]
      %v7378 = vld [vmem:[%s2 + $0x3b8] sm:$0xff]
      %v7380 = vsel %vm6216, %v6197, 0
      %7382 = vmatprep.subr.mxu0 0.0
      %7383 = vmatpush1.msra.mxu0 0.0
      %7384 = vmatprep.subr.mxu0 0.0
      %7385 = vmatpush1.msra.mxu0 0.0
      %7386 = vmatprep.subr.mxu0 0.0
      %7387 = vmatpush1.msra.mxu0 0.0
      %7388 = vmatprep.subr.mxu0 0.0
      %7389 = vmatpush1.msra.mxu0 0.0
      %7390 = vmatprep.subr.mxu0 0.0
      %7391 = vmatpush1.msra.mxu0 0.0
      %7392 = vmatprep.subr.mxu0 0.0
      %7393 = vmatpush1.msra.mxu0 0.0
      %7394 = vmatprep.subr.mxu0 0.0
      %7395 = vmatpush1.msra.mxu0 0.0
      %7396 = vmatprep.subr.mxu0 0.0
      %7397 = vmatpush1.msra.mxu0 0.0
      %7398 = vmatprep.subr.mxu0 0.0
      %7399 = vmatpush1.msra.mxu0 0.0
      %7400 = vmatprep.subr.mxu0 0.0
      %7401 = vmatpush1.msra.mxu0 0.0
      %7402 = vmatprep.subr.mxu0 0.0
      %7403 = vmatpush1.msra.mxu0 0.0
      %7404 = vmatprep.subr.mxu0 0.0
      %7405 = vmatpush1.msra.mxu0 0.0
      %7406 = vmatprep.subr.mxu0 %v7378
      %7407 = vmatpush1.msra.mxu0 %v7377
      %7408 = vmatprep.subr.mxu0 %v7376
      %7409 = vmatpush1.msra.mxu0 %v7375
      %7410 = vmatprep.subr.mxu0 %v7374
      %7411 = vmatpush1.msra.mxu0 %v7373
      %7412 = vmatprep.subr.mxu0 %v7372
      %7413 = vmatpush1.msra.mxu0 %v7371
      %7414 = vmatprep.subr.mxu0 0.0
      %7415 = vmatpush2.msra.mxu0 0.0
      %7416 = vmatprep.subr.mxu0 0.0
      %7417 = vmatpush2.msra.mxu0 0.0
      %7418 = vmatprep.subr.mxu0 0.0
      %7419 = vmatpush2.msra.mxu0 0.0
      %7420 = vmatprep.subr.mxu0 0.0
      %7421 = vmatpush2.msra.mxu0 0.0
      %7422 = vmatprep.subr.mxu0 0.0
      %7423 = vmatpush2.msra.mxu0 0.0
      %7424 = vmatprep.subr.mxu0 0.0
      %7425 = vmatpush2.msra.mxu0 0.0
      %7426 = vmatprep.subr.mxu0 0.0
      %7427 = vmatpush2.msra.mxu0 0.0
      %7428 = vmatprep.subr.mxu0 0.0
      %7429 = vmatpush2.msra.mxu0 0.0
      %7430 = vmatprep.subr.mxu0 0.0
      %7431 = vmatpush2.msra.mxu0 0.0
      %7432 = vmatprep.subr.mxu0 0.0
      %7433 = vmatpush2.msra.mxu0 0.0
      %7434 = vmatprep.subr.mxu0 0.0
      %7435 = vmatpush2.msra.mxu0 0.0
      %7436 = vmatprep.subr.mxu0 0.0
      %7437 = vmatpush2.msra.mxu0 0.0
      %7438 = vmatprep.subr.mxu0 0.0
      %7439 = vmatpush2.msra.mxu0 0.0
      %7440 = vmatprep.subr.mxu0 0.0
      %7441 = vmatpush2.msra.mxu0 0.0
      %7442 = vmatprep.subr.mxu0 0.0
      %7443 = vmatpush2.msra.mxu0 0.0
      %7444 = vmatprep.subr.mxu0 0.0
      %7445 = vmatpush2.msra.mxu0 0.0
      %7446 = vmatprep.mubr.f32.mxu0 0.0
      %7447 = vmatmul.mubr.f32.gmra.mxu0 %v7380
      %v7448 = vpop.f32.mrf.mxu0
      %v7449 = vadd.f32 0.0, %v7448
      %v7450 = vpop.f32.mrf.mxu0
      %v7451 = vadd.f32 0.0, %v7450
      %7452 = vdwg.mxu0
      %v7453 = vadd.f32 %v7369, %v7449
      %v7454 = vadd.f32 %v7370, %v7451
      %v7455 = vld [vmem:[%s2 + $0x3c0] sm:$0xff]
      %v7456 = vld [vmem:[%s2 + $0x3c8] sm:$0xff]
      %v7457 = vld [vmem:[%s2 + $0x3d0] sm:$0xff]
      %v7458 = vld [vmem:[%s2 + $0x3d8] sm:$0xff]
      %v7459 = vld [vmem:[%s2 + $0x3e0] sm:$0xff]
      %v7460 = vld [vmem:[%s2 + $0x3e8] sm:$0xff]
      %v7461 = vld [vmem:[%s2 + $0x3f0] sm:$0xff]
      %v7462 = vld [vmem:[%s2 + $0x3f8] sm:$0xff]
      %v7463 = vrot.slane %v6197, 4
      %v7464 = vsel %vm6216, %v7463, 0
      %7466 = vmatprep.subr.mxu0 0.0
      %7467 = vmatpush1.msra.mxu0 0.0
      %7468 = vmatprep.subr.mxu0 0.0
      %7469 = vmatpush1.msra.mxu0 0.0
      %7470 = vmatprep.subr.mxu0 0.0
      %7471 = vmatpush1.msra.mxu0 0.0
      %7472 = vmatprep.subr.mxu0 0.0
      %7473 = vmatpush1.msra.mxu0 0.0
      %7474 = vmatprep.subr.mxu0 0.0
      %7475 = vmatpush1.msra.mxu0 0.0
      %7476 = vmatprep.subr.mxu0 0.0
      %7477 = vmatpush1.msra.mxu0 0.0
      %7478 = vmatprep.subr.mxu0 0.0
      %7479 = vmatpush1.msra.mxu0 0.0
      %7480 = vmatprep.subr.mxu0 0.0
      %7481 = vmatpush1.msra.mxu0 0.0
      %7482 = vmatprep.subr.mxu0 0.0
      %7483 = vmatpush1.msra.mxu0 0.0
      %7484 = vmatprep.subr.mxu0 0.0
      %7485 = vmatpush1.msra.mxu0 0.0
      %7486 = vmatprep.subr.mxu0 0.0
      %7487 = vmatpush1.msra.mxu0 0.0
      %7488 = vmatprep.subr.mxu0 0.0
      %7489 = vmatpush1.msra.mxu0 0.0
      %7490 = vmatprep.subr.mxu0 %v7462
      %7491 = vmatpush1.msra.mxu0 %v7461
      %7492 = vmatprep.subr.mxu0 %v7460
      %7493 = vmatpush1.msra.mxu0 %v7459
      %7494 = vmatprep.subr.mxu0 %v7458
      %7495 = vmatpush1.msra.mxu0 %v7457
      %7496 = vmatprep.subr.mxu0 %v7456
      %7497 = vmatpush1.msra.mxu0 %v7455
      %7498 = vmatprep.subr.mxu0 0.0
      %7499 = vmatpush2.msra.mxu0 0.0
      %7500 = vmatprep.subr.mxu0 0.0
      %7501 = vmatpush2.msra.mxu0 0.0
      %7502 = vmatprep.subr.mxu0 0.0
      %7503 = vmatpush2.msra.mxu0 0.0
      %7504 = vmatprep.subr.mxu0 0.0
      %7505 = vmatpush2.msra.mxu0 0.0
      %7506 = vmatprep.subr.mxu0 0.0
      %7507 = vmatpush2.msra.mxu0 0.0
      %7508 = vmatprep.subr.mxu0 0.0
      %7509 = vmatpush2.msra.mxu0 0.0
      %7510 = vmatprep.subr.mxu0 0.0
      %7511 = vmatpush2.msra.mxu0 0.0
      %7512 = vmatprep.subr.mxu0 0.0
      %7513 = vmatpush2.msra.mxu0 0.0
      %7514 = vmatprep.subr.mxu0 0.0
      %7515 = vmatpush2.msra.mxu0 0.0
      %7516 = vmatprep.subr.mxu0 0.0
      %7517 = vmatpush2.msra.mxu0 0.0
      %7518 = vmatprep.subr.mxu0 0.0
      %7519 = vmatpush2.msra.mxu0 0.0
      %7520 = vmatprep.subr.mxu0 0.0
      %7521 = vmatpush2.msra.mxu0 0.0
      %7522 = vmatprep.subr.mxu0 0.0
      %7523 = vmatpush2.msra.mxu0 0.0
      %7524 = vmatprep.subr.mxu0 0.0
      %7525 = vmatpush2.msra.mxu0 0.0
      %7526 = vmatprep.subr.mxu0 0.0
      %7527 = vmatpush2.msra.mxu0 0.0
      %7528 = vmatprep.subr.mxu0 0.0
      %7529 = vmatpush2.msra.mxu0 0.0
      %7530 = vmatprep.mubr.f32.mxu0 0.0
      %7531 = vmatmul.mubr.f32.gmra.mxu0 %v7464
      %v7532 = vpop.f32.mrf.mxu0
      %v7533 = vadd.f32 0.0, %v7532
      %v7534 = vpop.f32.mrf.mxu0
      %v7535 = vadd.f32 0.0, %v7534
      %7536 = vdwg.mxu0
      %v7537 = vadd.f32 %v7453, %v7533
      %v7538 = vadd.f32 %v7454, %v7535
      %v7539 = vld [vmem:[%s3] sm:$0x3]
      %v7541 = vlaneseq
      %v7542 = vshrl.u32 %v7541, 7
      %v7543 = vsub.s32 0, %v7542
      %v7544 = vrot.slane %v7539, %v7543
      %v7545 = vlaneseq
      %v7546 = vshrl.u32 %v7545, 7
      %v7547 = vsub.s32 1, %v7546
      %v7548 = vrot.slane %v7539, %v7547
      %v7551 = vadd.f32 %v7537, %v7544
      %v7552 = vadd.f32 %v7538, %v7548
      %v7553 = vmax.f32 %v7551, 0.0
      %v7554 = vmax.f32 %v7552, 0.0
      %v7555 = vld [vmem:[%s4] sm:$0xff]
      %v7556 = vld [vmem:[%s4 + $0x8] sm:$0xff]
      %v7557 = vld [vmem:[%s4 + $0x10] sm:$0xff]
      %v7558 = vld [vmem:[%s4 + $0x18] sm:$0xff]
      %v7559 = vld [vmem:[%s4 + $0x20] sm:$0xff]
      %v7560 = vld [vmem:[%s4 + $0x28] sm:$0xff]
      %v7561 = vld [vmem:[%s4 + $0x30] sm:$0xff]
      %v7562 = vld [vmem:[%s4 + $0x38] sm:$0xff]
      %v7563 = vld [vmem:[%s4 + $0x40] sm:$0xff]
      %v7564 = vld [vmem:[%s4 + $0x48] sm:$0xff]
      %v7565 = vld [vmem:[%s4 + $0x50] sm:$0xff]
      %v7566 = vld [vmem:[%s4 + $0x58] sm:$0xff]
      %v7567 = vld [vmem:[%s4 + $0x60] sm:$0xff]
      %v7568 = vld [vmem:[%s4 + $0x68] sm:$0xff]
      %v7569 = vld [vmem:[%s4 + $0x70] sm:$0xff]
      %v7570 = vld [vmem:[%s4 + $0x78] sm:$0xff]
      %v7571 = vld [vmem:[%s4 + $0x80] sm:$0xff]
      %v7572 = vld [vmem:[%s4 + $0x88] sm:$0xff]
      %v7573 = vld [vmem:[%s4 + $0x90] sm:$0xff]
      %v7574 = vld [vmem:[%s4 + $0x98] sm:$0xff]
      %v7575 = vld [vmem:[%s4 + $0xa0] sm:$0xff]
      %v7576 = vld [vmem:[%s4 + $0xa8] sm:$0xff]
      %v7577 = vld [vmem:[%s4 + $0xb0] sm:$0xff]
      %v7578 = vld [vmem:[%s4 + $0xb8] sm:$0xff]
      %v7579 = vld [vmem:[%s4 + $0xc0] sm:$0xff]
      %v7580 = vld [vmem:[%s4 + $0xc8] sm:$0xff]
      %v7581 = vld [vmem:[%s4 + $0xd0] sm:$0xff]
      %v7582 = vld [vmem:[%s4 + $0xd8] sm:$0xff]
      %v7583 = vld [vmem:[%s4 + $0xe0] sm:$0xff]
      %v7584 = vld [vmem:[%s4 + $0xe8] sm:$0xff]
      %v7585 = vld [vmem:[%s4 + $0xf0] sm:$0xff]
      %v7586 = vld [vmem:[%s4 + $0xf8] sm:$0xff]
      %v7587 = vld [vmem:[%s5] sm:$0x1]
      %7588 = vmatprep.subr.mxu0 0.0
      %7589 = vmatpush1.msra.mxu0 %v7570
      %7590 = vmatprep.subr.mxu0 0.0
      %7591 = vmatpush1.msra.mxu0 %v7569
      %7592 = vmatprep.subr.mxu0 0.0
      %7593 = vmatpush1.msra.mxu0 %v7568
      %7594 = vmatprep.subr.mxu0 0.0
      %7595 = vmatpush1.msra.mxu0 %v7567
      %7596 = vmatprep.subr.mxu0 0.0
      %7597 = vmatpush1.msra.mxu0 %v7566
      %7598 = vmatprep.subr.mxu0 0.0
      %7599 = vmatpush1.msra.mxu0 %v7565
      %7600 = vmatprep.subr.mxu0 0.0
      %7601 = vmatpush1.msra.mxu0 %v7564
      %7602 = vmatprep.subr.mxu0 0.0
      %7603 = vmatpush1.msra.mxu0 %v7563
      %7604 = vmatprep.subr.mxu0 0.0
      %7605 = vmatpush1.msra.mxu0 %v7562
      %7606 = vmatprep.subr.mxu0 0.0
      %7607 = vmatpush1.msra.mxu0 %v7561
      %7608 = vmatprep.subr.mxu0 0.0
      %7609 = vmatpush1.msra.mxu0 %v7560
      %7610 = vmatprep.subr.mxu0 0.0
      %7611 = vmatpush1.msra.mxu0 %v7559
      %7612 = vmatprep.subr.mxu0 0.0
      %7613 = vmatpush1.msra.mxu0 %v7558
      %7614 = vmatprep.subr.mxu0 0.0
      %7615 = vmatpush1.msra.mxu0 %v7557
      %7616 = vmatprep.subr.mxu0 0.0
      %7617 = vmatpush1.msra.mxu0 %v7556
      %7618 = vmatprep.subr.mxu0 0.0
      %7619 = vmatpush1.msra.mxu0 %v7555
      %7620 = vmatprep.subr.mxu0 0.0
      %7621 = vmatpush2.msra.mxu0 %v7586
      %7622 = vmatprep.subr.mxu0 0.0
      %7623 = vmatpush2.msra.mxu0 %v7585
      %7624 = vmatprep.subr.mxu0 0.0
      %7625 = vmatpush2.msra.mxu0 %v7584
      %7626 = vmatprep.subr.mxu0 0.0
      %7627 = vmatpush2.msra.mxu0 %v7583
      %7628 = vmatprep.subr.mxu0 0.0
      %7629 = vmatpush2.msra.mxu0 %v7582
      %7630 = vmatprep.subr.mxu0 0.0
      %7631 = vmatpush2.msra.mxu0 %v7581
      %7632 = vmatprep.subr.mxu0 0.0
      %7633 = vmatpush2.msra.mxu0 %v7580
      %7634 = vmatprep.subr.mxu0 0.0
      %7635 = vmatpush2.msra.mxu0 %v7579
      %7636 = vmatprep.subr.mxu0 0.0
      %7637 = vmatpush2.msra.mxu0 %v7578
      %7638 = vmatprep.subr.mxu0 0.0
      %7639 = vmatpush2.msra.mxu0 %v7577
      %7640 = vmatprep.subr.mxu0 0.0
      %7641 = vmatpush2.msra.mxu0 %v7576
      %7642 = vmatprep.subr.mxu0 0.0
      %7643 = vmatpush2.msra.mxu0 %v7575
      %7644 = vmatprep.subr.mxu0 0.0
      %7645 = vmatpush2.msra.mxu0 %v7574
      %7646 = vmatprep.subr.mxu0 0.0
      %7647 = vmatpush2.msra.mxu0 %v7573
      %7648 = vmatprep.subr.mxu0 0.0
      %7649 = vmatpush2.msra.mxu0 %v7572
      %7650 = vmatprep.subr.mxu0 0.0
      %7651 = vmatpush2.msra.mxu0 %v7571
      %7652 = vmatprep.mubr.f32.mxu0 %v7554
      %7653 = vmatmul.mubr.f32.gmra.mxu0 %v7553
      %v7654 = vpop.f32.mrf.mxu0
      %v7655 = vadd.f32 %v7587, %v7654
      %v7656 = vpop.f32.mrf.mxu0
      %7657 = vdwg.mxu0
      %v7658 = vlaneseq
      %v7659 = vand.u32 %v7658, 127
      %v7660 = vadd.s32 %v7659, 128
      %v7661 = vcvt.s32.f32 %v7659
      %v7662 = vcvt.s32.f32 %v7660
      %v7663 = vadd.f32 %v7661, 0.5
      %v7664 = vadd.f32 %v7662, 0.5
      %v7665 = vmul.f32 %v7663, 0.0625
      %v7666 = vmul.f32 %v7664, 0.0625
      %v7667 = vfloor.f32 %v7665
      %v7668 = vfloor.f32 %v7666
      %v7669 = vmul.f32 %v7667, 16.0
      %v7670 = vmul.f32 %v7668, 16.0
      %v7671 = vsub.f32 %v7661, %v7669
      %v7672 = vsub.f32 %v7662, %v7670
      %v7673 = vmul.f32 %v7671, 2.0
      %v7674 = vmul.f32 %v7672, 2.0
      %v7675 = vrcp.pop 15.0
      %v7676 = vmul.f32 %v7673, %v7675
      %v7677 = vmul.f32 %v7674, %v7675
      %v7678 = vsub.f32 %v7676, 1.0
      %v7679 = vsub.f32 %v7677, 1.0
      %v7680 = vmul.f32 %v7667, 2.0
      %v7681 = vmul.f32 %v7668, 2.0
      %v7682 = vmul.f32 %v7680, %v7675
      %v7683 = vmul.f32 %v7681, %v7675
      %v7684 = vsub.f32 %v7682, 1.0
      %v7685 = vsub.f32 %v7683, 1.0
      %7687 = vset.pattern.permute.xlu0 0
      %7688 = vperm.xlu0 %7687, %v7655
      %v7689 = vpop.permute.xlu0 %7688
      %v7691 = vmul.f32 %v7689, %v7678
      %v7692 = vmul.f32 %v7689, %v7679
      %7693 = vset.pattern.permute.xlu0 1
      %7694 = vperm.xlu0 %7693, %v7655
      %v7695 = vpop.permute.xlu0 %7694
      %v7697 = vmul.f32 %v7695, %v7684
      %v7698 = vmul.f32 %v7695, %v7685
      %v7699 = vadd.f32 %v7691, %v7697
      %v7700 = vadd.f32 %v7692, %v7698
      %7701 = vset.pattern.permute.xlu0 2
      %7702 = vperm.xlu0 %7701, %v7655
      %v7703 = vpop.permute.xlu0 %7702
      %v7705 = vadd.f32 %v7699, %v7703
      %v7706 = vadd.f32 %v7700, %v7703
      %7707 = vset.pattern.permute.xlu0 3
      %7708 = vperm.xlu0 %7707, %v7655
      %v7709 = vpop.permute.xlu0 %7708
      %v7711 = vmul.f32 %v7709, %v7678
      %v7712 = vmul.f32 %v7709, %v7679
      %7713 = vset.pattern.permute.xlu0 4
      %7714 = vperm.xlu0 %7713, %v7655
      %v7715 = vpop.permute.xlu0 %7714
      %v7717 = vmul.f32 %v7715, %v7684
      %v7718 = vmul.f32 %v7715, %v7685
      %v7719 = vadd.f32 %v7711, %v7717
      %v7720 = vadd.f32 %v7712, %v7718
      %7721 = vset.pattern.permute.xlu0 5
      %7722 = vperm.xlu0 %7721, %v7655
      %v7723 = vpop.permute.xlu0 %7722
      %v7725 = vadd.f32 %v7719, %v7723
      %v7726 = vadd.f32 %v7720, %v7723
      %v7727 = vadd.f32 %v7705, 1.0
      %v7728 = vadd.f32 %v7706, 1.0
      %v7729 = vmul.f32 %v7727, 0.5
      %v7730 = vmul.f32 %v7728, 0.5
      %v7731 = vmul.f32 %v7729, 15.0
      %v7732 = vmul.f32 %v7730, 15.0
      %v7733 = vadd.f32 %v7725, 1.0
      %v7734 = vadd.f32 %v7726, 1.0
      %v7735 = vmul.f32 %v7733, 0.5
      %v7736 = vmul.f32 %v7734, 0.5
      %v7737 = vmul.f32 %v7735, 15.0
      %v7738 = vmul.f32 %v7736, 15.0
      %v7739 = vfloor.f32 %v7731
      %v7740 = vfloor.f32 %v7732
      %v7741 = vfloor.f32 %v7737
      %v7742 = vfloor.f32 %v7738
      %v7743 = vsub.f32 %v7731, %v7739
      %v7744 = vsub.f32 %v7732, %v7740
      %v7745 = vsub.f32 %v7737, %v7741
      %v7746 = vsub.f32 %v7738, %v7742
      %v7747 = vlaneseq
      %v7748 = vshrl.u32 %v7747, 7
      %v7749 = vsub.s32 0, %v7748
      %v7750 = vrot.slane %v7741, %v7749
      %v7751 = vlaneseq
      %v7752 = vshrl.u32 %v7751, 7
      %v7753 = vsub.s32 0, %v7752
      %v7754 = vrot.slane %v7742, %v7753
      %vm7755 = vcmp.eq.f32.partialorder %v460, %v7750
      %vm7756 = vcmp.eq.f32.partialorder %v460, %v7754
      %vm7757 = vcmp.eq.f32.partialorder %v461, %v7750
      %vm7758 = vcmp.eq.f32.partialorder %v461, %v7754
      %vm7759 = vcmp.eq.f32.partialorder %v462, %v7750
      %vm7760 = vcmp.eq.f32.partialorder %v462, %v7754
      %vm7761 = vcmp.eq.f32.partialorder %v463, %v7750
      %vm7762 = vcmp.eq.f32.partialorder %v463, %v7754
      %vm7763 = vcmp.eq.f32.partialorder %v464, %v7750
      %vm7764 = vcmp.eq.f32.partialorder %v464, %v7754
      %vm7765 = vcmp.eq.f32.partialorder %v465, %v7750
      %vm7766 = vcmp.eq.f32.partialorder %v465, %v7754
      %vm7767 = vcmp.eq.f32.partialorder %v466, %v7750
      %vm7768 = vcmp.eq.f32.partialorder %v466, %v7754
      %vm7769 = vcmp.eq.f32.partialorder %v467, %v7750
      %vm7770 = vcmp.eq.f32.partialorder %v467, %v7754
      %vm7771 = vcmp.eq.f32.partialorder %v468, %v7750
      %vm7772 = vcmp.eq.f32.partialorder %v468, %v7754
      %vm7773 = vcmp.eq.f32.partialorder %v469, %v7750
      %vm7774 = vcmp.eq.f32.partialorder %v469, %v7754
      %vm7775 = vcmp.eq.f32.partialorder %v470, %v7750
      %vm7776 = vcmp.eq.f32.partialorder %v470, %v7754
      %vm7777 = vcmp.eq.f32.partialorder %v471, %v7750
      %vm7778 = vcmp.eq.f32.partialorder %v471, %v7754
      %vm7779 = vcmp.eq.f32.partialorder %v472, %v7750
      %vm7780 = vcmp.eq.f32.partialorder %v472, %v7754
      %vm7781 = vcmp.eq.f32.partialorder %v473, %v7750
      %vm7782 = vcmp.eq.f32.partialorder %v473, %v7754
      %vm7783 = vcmp.eq.f32.partialorder %v474, %v7750
      %vm7784 = vcmp.eq.f32.partialorder %v474, %v7754
      %vm7785 = vcmp.eq.f32.partialorder %v475, %v7750
      %vm7786 = vcmp.eq.f32.partialorder %v475, %v7754
      %vm7787 = vcmp.eq.f32.partialorder %v476, %v7750
      %vm7788 = vcmp.eq.f32.partialorder %v476, %v7754
      %vm7789 = vcmp.eq.f32.partialorder %v477, %v7750
      %vm7790 = vcmp.eq.f32.partialorder %v477, %v7754
      %vm7791 = vcmp.eq.f32.partialorder %v478, %v7750
      %vm7792 = vcmp.eq.f32.partialorder %v478, %v7754
      %vm7793 = vcmp.eq.f32.partialorder %v479, %v7750
      %vm7794 = vcmp.eq.f32.partialorder %v479, %v7754
      %vm7795 = vcmp.eq.f32.partialorder %v480, %v7750
      %vm7796 = vcmp.eq.f32.partialorder %v480, %v7754
      %vm7797 = vcmp.eq.f32.partialorder %v481, %v7750
      %vm7798 = vcmp.eq.f32.partialorder %v481, %v7754
      %vm7799 = vcmp.eq.f32.partialorder %v482, %v7750
      %vm7800 = vcmp.eq.f32.partialorder %v482, %v7754
      %vm7801 = vcmp.eq.f32.partialorder %v483, %v7750
      %vm7802 = vcmp.eq.f32.partialorder %v483, %v7754
      %vm7803 = vcmp.eq.f32.partialorder %v484, %v7750
      %vm7804 = vcmp.eq.f32.partialorder %v484, %v7754
      %vm7805 = vcmp.eq.f32.partialorder %v485, %v7750
      %vm7806 = vcmp.eq.f32.partialorder %v485, %v7754
      %vm7807 = vcmp.eq.f32.partialorder %v486, %v7750
      %vm7808 = vcmp.eq.f32.partialorder %v486, %v7754
      %vm7809 = vcmp.eq.f32.partialorder %v487, %v7750
      %vm7810 = vcmp.eq.f32.partialorder %v487, %v7754
      %vm7811 = vcmp.eq.f32.partialorder %v488, %v7750
      %vm7812 = vcmp.eq.f32.partialorder %v488, %v7754
      %vm7813 = vcmp.eq.f32.partialorder %v489, %v7750
      %vm7814 = vcmp.eq.f32.partialorder %v489, %v7754
      %vm7815 = vcmp.eq.f32.partialorder %v490, %v7750
      %vm7816 = vcmp.eq.f32.partialorder %v490, %v7754
      %vm7817 = vcmp.eq.f32.partialorder %v491, %v7750
      %vm7818 = vcmp.eq.f32.partialorder %v491, %v7754
      %v7819 = vsub.f32 1.0, %v7745
      %v7820 = vsub.f32 1.0, %v7746
      %v7821 = vlaneseq
      %v7822 = vshrl.u32 %v7821, 7
      %v7823 = vsub.s32 0, %v7822
      %v7824 = vrot.slane %v7819, %v7823
      %v7825 = vlaneseq
      %v7826 = vshrl.u32 %v7825, 7
      %v7827 = vsub.s32 0, %v7826
      %v7828 = vrot.slane %v7820, %v7827
      %v7829 = vsel %vm7755, %v7824, 0.0
      %v7830 = vsel %vm7756, %v7828, 0.0
      %v7831 = vsel %vm7757, %v7824, 0.0
      %v7832 = vsel %vm7758, %v7828, 0.0
      %v7833 = vsel %vm7759, %v7824, 0.0
      %v7834 = vsel %vm7760, %v7828, 0.0
      %v7835 = vsel %vm7761, %v7824, 0.0
      %v7836 = vsel %vm7762, %v7828, 0.0
      %v7837 = vsel %vm7763, %v7824, 0.0
      %v7838 = vsel %vm7764, %v7828, 0.0
      %v7839 = vsel %vm7765, %v7824, 0.0
      %v7840 = vsel %vm7766, %v7828, 0.0
      %v7841 = vsel %vm7767, %v7824, 0.0
      %v7842 = vsel %vm7768, %v7828, 0.0
      %v7843 = vsel %vm7769, %v7824, 0.0
      %v7844 = vsel %vm7770, %v7828, 0.0
      %v7845 = vsel %vm7771, %v7824, 0.0
      %v7846 = vsel %vm7772, %v7828, 0.0
      %v7847 = vsel %vm7773, %v7824, 0.0
      %v7848 = vsel %vm7774, %v7828, 0.0
      %v7849 = vsel %vm7775, %v7824, 0.0
      %v7850 = vsel %vm7776, %v7828, 0.0
      %v7851 = vsel %vm7777, %v7824, 0.0
      %v7852 = vsel %vm7778, %v7828, 0.0
      %v7853 = vsel %vm7779, %v7824, 0.0
      %v7854 = vsel %vm7780, %v7828, 0.0
      %v7855 = vsel %vm7781, %v7824, 0.0
      %v7856 = vsel %vm7782, %v7828, 0.0
      %v7857 = vsel %vm7783, %v7824, 0.0
      %v7858 = vsel %vm7784, %v7828, 0.0
      %v7859 = vsel %vm7785, %v7824, 0.0
      %v7860 = vsel %vm7786, %v7828, 0.0
      %v7861 = vsel %vm7787, %v7824, 0.0
      %v7862 = vsel %vm7788, %v7828, 0.0
      %v7863 = vsel %vm7789, %v7824, 0.0
      %v7864 = vsel %vm7790, %v7828, 0.0
      %v7865 = vsel %vm7791, %v7824, 0.0
      %v7866 = vsel %vm7792, %v7828, 0.0
      %v7867 = vsel %vm7793, %v7824, 0.0
      %v7868 = vsel %vm7794, %v7828, 0.0
      %v7869 = vsel %vm7795, %v7824, 0.0
      %v7870 = vsel %vm7796, %v7828, 0.0
      %v7871 = vsel %vm7797, %v7824, 0.0
      %v7872 = vsel %vm7798, %v7828, 0.0
      %v7873 = vsel %vm7799, %v7824, 0.0
      %v7874 = vsel %vm7800, %v7828, 0.0
      %v7875 = vsel %vm7801, %v7824, 0.0
      %v7876 = vsel %vm7802, %v7828, 0.0
      %v7877 = vsel %vm7803, %v7824, 0.0
      %v7878 = vsel %vm7804, %v7828, 0.0
      %v7879 = vsel %vm7805, %v7824, 0.0
      %v7880 = vsel %vm7806, %v7828, 0.0
      %v7881 = vsel %vm7807, %v7824, 0.0
      %v7882 = vsel %vm7808, %v7828, 0.0
      %v7883 = vsel %vm7809, %v7824, 0.0
      %v7884 = vsel %vm7810, %v7828, 0.0
      %v7885 = vsel %vm7811, %v7824, 0.0
      %v7886 = vsel %vm7812, %v7828, 0.0
      %v7887 = vsel %vm7813, %v7824, 0.0
      %v7888 = vsel %vm7814, %v7828, 0.0
      %v7889 = vsel %vm7815, %v7824, 0.0
      %v7890 = vsel %vm7816, %v7828, 0.0
      %v7891 = vsel %vm7817, %v7824, 0.0
      %v7892 = vsel %vm7818, %v7828, 0.0
      %v7893 = vadd.f32 %v7741, 1.0
      %v7894 = vadd.f32 %v7742, 1.0
      %v7895 = vlaneseq
      %v7896 = vshrl.u32 %v7895, 7
      %v7897 = vsub.s32 0, %v7896
      %v7898 = vrot.slane %v7893, %v7897
      %v7899 = vlaneseq
      %v7900 = vshrl.u32 %v7899, 7
      %v7901 = vsub.s32 0, %v7900
      %v7902 = vrot.slane %v7894, %v7901
      %vm7903 = vcmp.eq.f32.partialorder %v460, %v7898
      %vm7904 = vcmp.eq.f32.partialorder %v460, %v7902
      %vm7905 = vcmp.eq.f32.partialorder %v461, %v7898
      %vm7906 = vcmp.eq.f32.partialorder %v461, %v7902
      %vm7907 = vcmp.eq.f32.partialorder %v462, %v7898
      %vm7908 = vcmp.eq.f32.partialorder %v462, %v7902
      %vm7909 = vcmp.eq.f32.partialorder %v463, %v7898
      %vm7910 = vcmp.eq.f32.partialorder %v463, %v7902
      %vm7911 = vcmp.eq.f32.partialorder %v464, %v7898
      %vm7912 = vcmp.eq.f32.partialorder %v464, %v7902
      %vm7913 = vcmp.eq.f32.partialorder %v465, %v7898
      %vm7914 = vcmp.eq.f32.partialorder %v465, %v7902
      %vm7915 = vcmp.eq.f32.partialorder %v466, %v7898
      %vm7916 = vcmp.eq.f32.partialorder %v466, %v7902
      %vm7917 = vcmp.eq.f32.partialorder %v467, %v7898
      %vm7918 = vcmp.eq.f32.partialorder %v467, %v7902
      %vm7919 = vcmp.eq.f32.partialorder %v468, %v7898
      %vm7920 = vcmp.eq.f32.partialorder %v468, %v7902
      %vm7921 = vcmp.eq.f32.partialorder %v469, %v7898
      %vm7922 = vcmp.eq.f32.partialorder %v469, %v7902
      %vm7923 = vcmp.eq.f32.partialorder %v470, %v7898
      %vm7924 = vcmp.eq.f32.partialorder %v470, %v7902
      %vm7925 = vcmp.eq.f32.partialorder %v471, %v7898
      %vm7926 = vcmp.eq.f32.partialorder %v471, %v7902
      %vm7927 = vcmp.eq.f32.partialorder %v472, %v7898
      %vm7928 = vcmp.eq.f32.partialorder %v472, %v7902
      %vm7929 = vcmp.eq.f32.partialorder %v473, %v7898
      %vm7930 = vcmp.eq.f32.partialorder %v473, %v7902
      %vm7931 = vcmp.eq.f32.partialorder %v474, %v7898
      %vm7932 = vcmp.eq.f32.partialorder %v474, %v7902
      %vm7933 = vcmp.eq.f32.partialorder %v475, %v7898
      %vm7934 = vcmp.eq.f32.partialorder %v475, %v7902
      %vm7935 = vcmp.eq.f32.partialorder %v476, %v7898
      %vm7936 = vcmp.eq.f32.partialorder %v476, %v7902
      %vm7937 = vcmp.eq.f32.partialorder %v477, %v7898
      %vm7938 = vcmp.eq.f32.partialorder %v477, %v7902
      %vm7939 = vcmp.eq.f32.partialorder %v478, %v7898
      %vm7940 = vcmp.eq.f32.partialorder %v478, %v7902
      %vm7941 = vcmp.eq.f32.partialorder %v479, %v7898
      %vm7942 = vcmp.eq.f32.partialorder %v479, %v7902
      %vm7943 = vcmp.eq.f32.partialorder %v480, %v7898
      %vm7944 = vcmp.eq.f32.partialorder %v480, %v7902
      %vm7945 = vcmp.eq.f32.partialorder %v481, %v7898
      %vm7946 = vcmp.eq.f32.partialorder %v481, %v7902
      %vm7947 = vcmp.eq.f32.partialorder %v482, %v7898
      %vm7948 = vcmp.eq.f32.partialorder %v482, %v7902
      %vm7949 = vcmp.eq.f32.partialorder %v483, %v7898
      %vm7950 = vcmp.eq.f32.partialorder %v483, %v7902
      %vm7951 = vcmp.eq.f32.partialorder %v484, %v7898
      %vm7952 = vcmp.eq.f32.partialorder %v484, %v7902
      %vm7953 = vcmp.eq.f32.partialorder %v485, %v7898
      %vm7954 = vcmp.eq.f32.partialorder %v485, %v7902
      %vm7955 = vcmp.eq.f32.partialorder %v486, %v7898
      %vm7956 = vcmp.eq.f32.partialorder %v486, %v7902
      %vm7957 = vcmp.eq.f32.partialorder %v487, %v7898
      %vm7958 = vcmp.eq.f32.partialorder %v487, %v7902
      %vm7959 = vcmp.eq.f32.partialorder %v488, %v7898
      %vm7960 = vcmp.eq.f32.partialorder %v488, %v7902
      %vm7961 = vcmp.eq.f32.partialorder %v489, %v7898
      %vm7962 = vcmp.eq.f32.partialorder %v489, %v7902
      %vm7963 = vcmp.eq.f32.partialorder %v490, %v7898
      %vm7964 = vcmp.eq.f32.partialorder %v490, %v7902
      %vm7965 = vcmp.eq.f32.partialorder %v491, %v7898
      %vm7966 = vcmp.eq.f32.partialorder %v491, %v7902
      %v7967 = vlaneseq
      %v7968 = vshrl.u32 %v7967, 7
      %v7969 = vsub.s32 0, %v7968
      %v7970 = vrot.slane %v7745, %v7969
      %v7971 = vlaneseq
      %v7972 = vshrl.u32 %v7971, 7
      %v7973 = vsub.s32 0, %v7972
      %v7974 = vrot.slane %v7746, %v7973
      %v7975 = vsel %vm7903, %v7970, 0.0
      %v7976 = vsel %vm7904, %v7974, 0.0
      %v7977 = vsel %vm7905, %v7970, 0.0
      %v7978 = vsel %vm7906, %v7974, 0.0
      %v7979 = vsel %vm7907, %v7970, 0.0
      %v7980 = vsel %vm7908, %v7974, 0.0
      %v7981 = vsel %vm7909, %v7970, 0.0
      %v7982 = vsel %vm7910, %v7974, 0.0
      %v7983 = vsel %vm7911, %v7970, 0.0
      %v7984 = vsel %vm7912, %v7974, 0.0
      %v7985 = vsel %vm7913, %v7970, 0.0
      %v7986 = vsel %vm7914, %v7974, 0.0
      %v7987 = vsel %vm7915, %v7970, 0.0
      %v7988 = vsel %vm7916, %v7974, 0.0
      %v7989 = vsel %vm7917, %v7970, 0.0
      %v7990 = vsel %vm7918, %v7974, 0.0
      %v7991 = vsel %vm7919, %v7970, 0.0
      %v7992 = vsel %vm7920, %v7974, 0.0
      %v7993 = vsel %vm7921, %v7970, 0.0
      %v7994 = vsel %vm7922, %v7974, 0.0
      %v7995 = vsel %vm7923, %v7970, 0.0
      %v7996 = vsel %vm7924, %v7974, 0.0
      %v7997 = vsel %vm7925, %v7970, 0.0
      %v7998 = vsel %vm7926, %v7974, 0.0
      %v7999 = vsel %vm7927, %v7970, 0.0
      %v8000 = vsel %vm7928, %v7974, 0.0
      %v8001 = vsel %vm7929, %v7970, 0.0
      %v8002 = vsel %vm7930, %v7974, 0.0
      %v8003 = vsel %vm7931, %v7970, 0.0
      %v8004 = vsel %vm7932, %v7974, 0.0
      %v8005 = vsel %vm7933, %v7970, 0.0
      %v8006 = vsel %vm7934, %v7974, 0.0
      %v8007 = vsel %vm7935, %v7970, 0.0
      %v8008 = vsel %vm7936, %v7974, 0.0
      %v8009 = vsel %vm7937, %v7970, 0.0
      %v8010 = vsel %vm7938, %v7974, 0.0
      %v8011 = vsel %vm7939, %v7970, 0.0
      %v8012 = vsel %vm7940, %v7974, 0.0
      %v8013 = vsel %vm7941, %v7970, 0.0
      %v8014 = vsel %vm7942, %v7974, 0.0
      %v8015 = vsel %vm7943, %v7970, 0.0
      %v8016 = vsel %vm7944, %v7974, 0.0
      %v8017 = vsel %vm7945, %v7970, 0.0
      %v8018 = vsel %vm7946, %v7974, 0.0
      %v8019 = vsel %vm7947, %v7970, 0.0
      %v8020 = vsel %vm7948, %v7974, 0.0
      %v8021 = vsel %vm7949, %v7970, 0.0
      %v8022 = vsel %vm7950, %v7974, 0.0
      %v8023 = vsel %vm7951, %v7970, 0.0
      %v8024 = vsel %vm7952, %v7974, 0.0
      %v8025 = vsel %vm7953, %v7970, 0.0
      %v8026 = vsel %vm7954, %v7974, 0.0
      %v8027 = vsel %vm7955, %v7970, 0.0
      %v8028 = vsel %vm7956, %v7974, 0.0
      %v8029 = vsel %vm7957, %v7970, 0.0
      %v8030 = vsel %vm7958, %v7974, 0.0
      %v8031 = vsel %vm7959, %v7970, 0.0
      %v8032 = vsel %vm7960, %v7974, 0.0
      %v8033 = vsel %vm7961, %v7970, 0.0
      %v8034 = vsel %vm7962, %v7974, 0.0
      %v8035 = vsel %vm7963, %v7970, 0.0
      %v8036 = vsel %vm7964, %v7974, 0.0
      %v8037 = vsel %vm7965, %v7970, 0.0
      %v8038 = vsel %vm7966, %v7974, 0.0
      %v8039 = vadd.f32 %v7829, %v7975
      %v8040 = vadd.f32 %v7830, %v7976
      %v8041 = vadd.f32 %v7831, %v7977
      %v8042 = vadd.f32 %v7832, %v7978
      %v8043 = vadd.f32 %v7833, %v7979
      %v8044 = vadd.f32 %v7834, %v7980
      %v8045 = vadd.f32 %v7835, %v7981
      %v8046 = vadd.f32 %v7836, %v7982
      %v8047 = vadd.f32 %v7837, %v7983
      %v8048 = vadd.f32 %v7838, %v7984
      %v8049 = vadd.f32 %v7839, %v7985
      %v8050 = vadd.f32 %v7840, %v7986
      %v8051 = vadd.f32 %v7841, %v7987
      %v8052 = vadd.f32 %v7842, %v7988
      %v8053 = vadd.f32 %v7843, %v7989
      %v8054 = vadd.f32 %v7844, %v7990
      %v8055 = vadd.f32 %v7845, %v7991
      %v8056 = vadd.f32 %v7846, %v7992
      %v8057 = vadd.f32 %v7847, %v7993
      %v8058 = vadd.f32 %v7848, %v7994
      %v8059 = vadd.f32 %v7849, %v7995
      %v8060 = vadd.f32 %v7850, %v7996
      %v8061 = vadd.f32 %v7851, %v7997
      %v8062 = vadd.f32 %v7852, %v7998
      %v8063 = vadd.f32 %v7853, %v7999
      %v8064 = vadd.f32 %v7854, %v8000
      %v8065 = vadd.f32 %v7855, %v8001
      %v8066 = vadd.f32 %v7856, %v8002
      %v8067 = vadd.f32 %v7857, %v8003
      %v8068 = vadd.f32 %v7858, %v8004
      %v8069 = vadd.f32 %v7859, %v8005
      %v8070 = vadd.f32 %v7860, %v8006
      %v8071 = vadd.f32 %v7861, %v8007
      %v8072 = vadd.f32 %v7862, %v8008
      %v8073 = vadd.f32 %v7863, %v8009
      %v8074 = vadd.f32 %v7864, %v8010
      %v8075 = vadd.f32 %v7865, %v8011
      %v8076 = vadd.f32 %v7866, %v8012
      %v8077 = vadd.f32 %v7867, %v8013
      %v8078 = vadd.f32 %v7868, %v8014
      %v8079 = vadd.f32 %v7869, %v8015
      %v8080 = vadd.f32 %v7870, %v8016
      %v8081 = vadd.f32 %v7871, %v8017
      %v8082 = vadd.f32 %v7872, %v8018
      %v8083 = vadd.f32 %v7873, %v8019
      %v8084 = vadd.f32 %v7874, %v8020
      %v8085 = vadd.f32 %v7875, %v8021
      %v8086 = vadd.f32 %v7876, %v8022
      %v8087 = vadd.f32 %v7877, %v8023
      %v8088 = vadd.f32 %v7878, %v8024
      %v8089 = vadd.f32 %v7879, %v8025
      %v8090 = vadd.f32 %v7880, %v8026
      %v8091 = vadd.f32 %v7881, %v8027
      %v8092 = vadd.f32 %v7882, %v8028
      %v8093 = vadd.f32 %v7883, %v8029
      %v8094 = vadd.f32 %v7884, %v8030
      %v8095 = vadd.f32 %v7885, %v8031
      %v8096 = vadd.f32 %v7886, %v8032
      %v8097 = vadd.f32 %v7887, %v8033
      %v8098 = vadd.f32 %v7888, %v8034
      %v8099 = vadd.f32 %v7889, %v8035
      %v8100 = vadd.f32 %v7890, %v8036
      %v8101 = vadd.f32 %v7891, %v8037
      %v8102 = vadd.f32 %v7892, %v8038
      %v8103 = vlaneseq
      %v8104 = vshrl.u32 %v8103, 7
      %v8105 = vsub.s32 0, %v8104
      %v8106 = vrot.slane %v7739, %v8105
      %v8107 = vlaneseq
      %v8108 = vshrl.u32 %v8107, 7
      %v8109 = vsub.s32 0, %v8108
      %v8110 = vrot.slane %v7740, %v8109
      %vm8111 = vcmp.eq.f32.partialorder %v524, %v8106
      %vm8112 = vcmp.eq.f32.partialorder %v524, %v8110
      %vm8113 = vcmp.eq.f32.partialorder %v525, %v8106
      %vm8114 = vcmp.eq.f32.partialorder %v525, %v8110
      %vm8115 = vcmp.eq.f32.partialorder %v526, %v8106
      %vm8116 = vcmp.eq.f32.partialorder %v526, %v8110
      %vm8117 = vcmp.eq.f32.partialorder %v527, %v8106
      %vm8118 = vcmp.eq.f32.partialorder %v527, %v8110
      %vm8119 = vcmp.eq.f32.partialorder %v528, %v8106
      %vm8120 = vcmp.eq.f32.partialorder %v528, %v8110
      %vm8121 = vcmp.eq.f32.partialorder %v529, %v8106
      %vm8122 = vcmp.eq.f32.partialorder %v529, %v8110
      %vm8123 = vcmp.eq.f32.partialorder %v530, %v8106
      %vm8124 = vcmp.eq.f32.partialorder %v530, %v8110
      %vm8125 = vcmp.eq.f32.partialorder %v531, %v8106
      %vm8126 = vcmp.eq.f32.partialorder %v531, %v8110
      %vm8127 = vcmp.eq.f32.partialorder %v532, %v8106
      %vm8128 = vcmp.eq.f32.partialorder %v532, %v8110
      %vm8129 = vcmp.eq.f32.partialorder %v533, %v8106
      %vm8130 = vcmp.eq.f32.partialorder %v533, %v8110
      %vm8131 = vcmp.eq.f32.partialorder %v534, %v8106
      %vm8132 = vcmp.eq.f32.partialorder %v534, %v8110
      %vm8133 = vcmp.eq.f32.partialorder %v535, %v8106
      %vm8134 = vcmp.eq.f32.partialorder %v535, %v8110
      %vm8135 = vcmp.eq.f32.partialorder %v536, %v8106
      %vm8136 = vcmp.eq.f32.partialorder %v536, %v8110
      %vm8137 = vcmp.eq.f32.partialorder %v537, %v8106
      %vm8138 = vcmp.eq.f32.partialorder %v537, %v8110
      %vm8139 = vcmp.eq.f32.partialorder %v538, %v8106
      %vm8140 = vcmp.eq.f32.partialorder %v538, %v8110
      %vm8141 = vcmp.eq.f32.partialorder %v539, %v8106
      %vm8142 = vcmp.eq.f32.partialorder %v539, %v8110
      %vm8143 = vcmp.eq.f32.partialorder %v540, %v8106
      %vm8144 = vcmp.eq.f32.partialorder %v540, %v8110
      %vm8145 = vcmp.eq.f32.partialorder %v541, %v8106
      %vm8146 = vcmp.eq.f32.partialorder %v541, %v8110
      %vm8147 = vcmp.eq.f32.partialorder %v542, %v8106
      %vm8148 = vcmp.eq.f32.partialorder %v542, %v8110
      %vm8149 = vcmp.eq.f32.partialorder %v543, %v8106
      %vm8150 = vcmp.eq.f32.partialorder %v543, %v8110
      %vm8151 = vcmp.eq.f32.partialorder %v544, %v8106
      %vm8152 = vcmp.eq.f32.partialorder %v544, %v8110
      %vm8153 = vcmp.eq.f32.partialorder %v545, %v8106
      %vm8154 = vcmp.eq.f32.partialorder %v545, %v8110
      %vm8155 = vcmp.eq.f32.partialorder %v546, %v8106
      %vm8156 = vcmp.eq.f32.partialorder %v546, %v8110
      %vm8157 = vcmp.eq.f32.partialorder %v547, %v8106
      %vm8158 = vcmp.eq.f32.partialorder %v547, %v8110
      %vm8159 = vcmp.eq.f32.partialorder %v548, %v8106
      %vm8160 = vcmp.eq.f32.partialorder %v548, %v8110
      %vm8161 = vcmp.eq.f32.partialorder %v549, %v8106
      %vm8162 = vcmp.eq.f32.partialorder %v549, %v8110
      %vm8163 = vcmp.eq.f32.partialorder %v550, %v8106
      %vm8164 = vcmp.eq.f32.partialorder %v550, %v8110
      %vm8165 = vcmp.eq.f32.partialorder %v551, %v8106
      %vm8166 = vcmp.eq.f32.partialorder %v551, %v8110
      %vm8167 = vcmp.eq.f32.partialorder %v552, %v8106
      %vm8168 = vcmp.eq.f32.partialorder %v552, %v8110
      %vm8169 = vcmp.eq.f32.partialorder %v553, %v8106
      %vm8170 = vcmp.eq.f32.partialorder %v553, %v8110
      %vm8171 = vcmp.eq.f32.partialorder %v554, %v8106
      %vm8172 = vcmp.eq.f32.partialorder %v554, %v8110
      %vm8173 = vcmp.eq.f32.partialorder %v555, %v8106
      %vm8174 = vcmp.eq.f32.partialorder %v555, %v8110
      %v8175 = vsub.f32 1.0, %v7743
      %v8176 = vsub.f32 1.0, %v7744
      %v8177 = vlaneseq
      %v8178 = vshrl.u32 %v8177, 7
      %v8179 = vsub.s32 0, %v8178
      %v8180 = vrot.slane %v8175, %v8179
      %v8181 = vlaneseq
      %v8182 = vshrl.u32 %v8181, 7
      %v8183 = vsub.s32 0, %v8182
      %v8184 = vrot.slane %v8176, %v8183
      %v8185 = vsel %vm8111, %v8180, 0.0
      %v8186 = vsel %vm8112, %v8184, 0.0
      %v8187 = vsel %vm8113, %v8180, 0.0
      %v8188 = vsel %vm8114, %v8184, 0.0
      %v8189 = vsel %vm8115, %v8180, 0.0
      %v8190 = vsel %vm8116, %v8184, 0.0
      %v8191 = vsel %vm8117, %v8180, 0.0
      %v8192 = vsel %vm8118, %v8184, 0.0
      %v8193 = vsel %vm8119, %v8180, 0.0
      %v8194 = vsel %vm8120, %v8184, 0.0
      %v8195 = vsel %vm8121, %v8180, 0.0
      %v8196 = vsel %vm8122, %v8184, 0.0
      %v8197 = vsel %vm8123, %v8180, 0.0
      %v8198 = vsel %vm8124, %v8184, 0.0
      %v8199 = vsel %vm8125, %v8180, 0.0
      %v8200 = vsel %vm8126, %v8184, 0.0
      %v8201 = vsel %vm8127, %v8180, 0.0
      %v8202 = vsel %vm8128, %v8184, 0.0
      %v8203 = vsel %vm8129, %v8180, 0.0
      %v8204 = vsel %vm8130, %v8184, 0.0
      %v8205 = vsel %vm8131, %v8180, 0.0
      %v8206 = vsel %vm8132, %v8184, 0.0
      %v8207 = vsel %vm8133, %v8180, 0.0
      %v8208 = vsel %vm8134, %v8184, 0.0
      %v8209 = vsel %vm8135, %v8180, 0.0
      %v8210 = vsel %vm8136, %v8184, 0.0
      %v8211 = vsel %vm8137, %v8180, 0.0
      %v8212 = vsel %vm8138, %v8184, 0.0
      %v8213 = vsel %vm8139, %v8180, 0.0
      %v8214 = vsel %vm8140, %v8184, 0.0
      %v8215 = vsel %vm8141, %v8180, 0.0
      %v8216 = vsel %vm8142, %v8184, 0.0
      %v8217 = vsel %vm8143, %v8180, 0.0
      %v8218 = vsel %vm8144, %v8184, 0.0
      %v8219 = vsel %vm8145, %v8180, 0.0
      %v8220 = vsel %vm8146, %v8184, 0.0
      %v8221 = vsel %vm8147, %v8180, 0.0
      %v8222 = vsel %vm8148, %v8184, 0.0
      %v8223 = vsel %vm8149, %v8180, 0.0
      %v8224 = vsel %vm8150, %v8184, 0.0
      %v8225 = vsel %vm8151, %v8180, 0.0
      %v8226 = vsel %vm8152, %v8184, 0.0
      %v8227 = vsel %vm8153, %v8180, 0.0
      %v8228 = vsel %vm8154, %v8184, 0.0
      %v8229 = vsel %vm8155, %v8180, 0.0
      %v8230 = vsel %vm8156, %v8184, 0.0
      %v8231 = vsel %vm8157, %v8180, 0.0
      %v8232 = vsel %vm8158, %v8184, 0.0
      %v8233 = vsel %vm8159, %v8180, 0.0
      %v8234 = vsel %vm8160, %v8184, 0.0
      %v8235 = vsel %vm8161, %v8180, 0.0
      %v8236 = vsel %vm8162, %v8184, 0.0
      %v8237 = vsel %vm8163, %v8180, 0.0
      %v8238 = vsel %vm8164, %v8184, 0.0
      %v8239 = vsel %vm8165, %v8180, 0.0
      %v8240 = vsel %vm8166, %v8184, 0.0
      %v8241 = vsel %vm8167, %v8180, 0.0
      %v8242 = vsel %vm8168, %v8184, 0.0
      %v8243 = vsel %vm8169, %v8180, 0.0
      %v8244 = vsel %vm8170, %v8184, 0.0
      %v8245 = vsel %vm8171, %v8180, 0.0
      %v8246 = vsel %vm8172, %v8184, 0.0
      %v8247 = vsel %vm8173, %v8180, 0.0
      %v8248 = vsel %vm8174, %v8184, 0.0
      %v8249 = vadd.f32 %v7739, 1.0
      %v8250 = vadd.f32 %v7740, 1.0
      %v8251 = vlaneseq
      %v8252 = vshrl.u32 %v8251, 7
      %v8253 = vsub.s32 0, %v8252
      %v8254 = vrot.slane %v8249, %v8253
      %v8255 = vlaneseq
      %v8256 = vshrl.u32 %v8255, 7
      %v8257 = vsub.s32 0, %v8256
      %v8258 = vrot.slane %v8250, %v8257
      %vm8259 = vcmp.eq.f32.partialorder %v524, %v8254
      %vm8260 = vcmp.eq.f32.partialorder %v524, %v8258
      %vm8261 = vcmp.eq.f32.partialorder %v525, %v8254
      %vm8262 = vcmp.eq.f32.partialorder %v525, %v8258
      %vm8263 = vcmp.eq.f32.partialorder %v526, %v8254
      %vm8264 = vcmp.eq.f32.partialorder %v526, %v8258
      %vm8265 = vcmp.eq.f32.partialorder %v527, %v8254
      %vm8266 = vcmp.eq.f32.partialorder %v527, %v8258
      %vm8267 = vcmp.eq.f32.partialorder %v528, %v8254
      %vm8268 = vcmp.eq.f32.partialorder %v528, %v8258
      %vm8269 = vcmp.eq.f32.partialorder %v529, %v8254
      %vm8270 = vcmp.eq.f32.partialorder %v529, %v8258
      %vm8271 = vcmp.eq.f32.partialorder %v530, %v8254
      %vm8272 = vcmp.eq.f32.partialorder %v530, %v8258
      %vm8273 = vcmp.eq.f32.partialorder %v531, %v8254
      %vm8274 = vcmp.eq.f32.partialorder %v531, %v8258
      %vm8275 = vcmp.eq.f32.partialorder %v532, %v8254
      %vm8276 = vcmp.eq.f32.partialorder %v532, %v8258
      %vm8277 = vcmp.eq.f32.partialorder %v533, %v8254
      %vm8278 = vcmp.eq.f32.partialorder %v533, %v8258
      %vm8279 = vcmp.eq.f32.partialorder %v534, %v8254
      %vm8280 = vcmp.eq.f32.partialorder %v534, %v8258
      %vm8281 = vcmp.eq.f32.partialorder %v535, %v8254
      %vm8282 = vcmp.eq.f32.partialorder %v535, %v8258
      %vm8283 = vcmp.eq.f32.partialorder %v536, %v8254
      %vm8284 = vcmp.eq.f32.partialorder %v536, %v8258
      %vm8285 = vcmp.eq.f32.partialorder %v537, %v8254
      %vm8286 = vcmp.eq.f32.partialorder %v537, %v8258
      %vm8287 = vcmp.eq.f32.partialorder %v538, %v8254
      %vm8288 = vcmp.eq.f32.partialorder %v538, %v8258
      %vm8289 = vcmp.eq.f32.partialorder %v539, %v8254
      %vm8290 = vcmp.eq.f32.partialorder %v539, %v8258
      %vm8291 = vcmp.eq.f32.partialorder %v540, %v8254
      %vm8292 = vcmp.eq.f32.partialorder %v540, %v8258
      %vm8293 = vcmp.eq.f32.partialorder %v541, %v8254
      %vm8294 = vcmp.eq.f32.partialorder %v541, %v8258
      %vm8295 = vcmp.eq.f32.partialorder %v542, %v8254
      %vm8296 = vcmp.eq.f32.partialorder %v542, %v8258
      %vm8297 = vcmp.eq.f32.partialorder %v543, %v8254
      %vm8298 = vcmp.eq.f32.partialorder %v543, %v8258
      %vm8299 = vcmp.eq.f32.partialorder %v544, %v8254
      %vm8300 = vcmp.eq.f32.partialorder %v544, %v8258
      %vm8301 = vcmp.eq.f32.partialorder %v545, %v8254
      %vm8302 = vcmp.eq.f32.partialorder %v545, %v8258
      %vm8303 = vcmp.eq.f32.partialorder %v546, %v8254
      %vm8304 = vcmp.eq.f32.partialorder %v546, %v8258
      %vm8305 = vcmp.eq.f32.partialorder %v547, %v8254
      %vm8306 = vcmp.eq.f32.partialorder %v547, %v8258
      %vm8307 = vcmp.eq.f32.partialorder %v548, %v8254
      %vm8308 = vcmp.eq.f32.partialorder %v548, %v8258
      %vm8309 = vcmp.eq.f32.partialorder %v549, %v8254
      %vm8310 = vcmp.eq.f32.partialorder %v549, %v8258
      %vm8311 = vcmp.eq.f32.partialorder %v550, %v8254
      %vm8312 = vcmp.eq.f32.partialorder %v550, %v8258
      %vm8313 = vcmp.eq.f32.partialorder %v551, %v8254
      %vm8314 = vcmp.eq.f32.partialorder %v551, %v8258
      %vm8315 = vcmp.eq.f32.partialorder %v552, %v8254
      %vm8316 = vcmp.eq.f32.partialorder %v552, %v8258
      %vm8317 = vcmp.eq.f32.partialorder %v553, %v8254
      %vm8318 = vcmp.eq.f32.partialorder %v553, %v8258
      %vm8319 = vcmp.eq.f32.partialorder %v554, %v8254
      %vm8320 = vcmp.eq.f32.partialorder %v554, %v8258
      %vm8321 = vcmp.eq.f32.partialorder %v555, %v8254
      %vm8322 = vcmp.eq.f32.partialorder %v555, %v8258
      %v8323 = vlaneseq
      %v8324 = vshrl.u32 %v8323, 7
      %v8325 = vsub.s32 0, %v8324
      %v8326 = vrot.slane %v7743, %v8325
      %v8327 = vlaneseq
      %v8328 = vshrl.u32 %v8327, 7
      %v8329 = vsub.s32 0, %v8328
      %v8330 = vrot.slane %v7744, %v8329
      %v8331 = vsel %vm8259, %v8326, 0.0
      %v8332 = vsel %vm8260, %v8330, 0.0
      %v8333 = vsel %vm8261, %v8326, 0.0
      %v8334 = vsel %vm8262, %v8330, 0.0
      %v8335 = vsel %vm8263, %v8326, 0.0
      %v8336 = vsel %vm8264, %v8330, 0.0
      %v8337 = vsel %vm8265, %v8326, 0.0
      %v8338 = vsel %vm8266, %v8330, 0.0
      %v8339 = vsel %vm8267, %v8326, 0.0
      %v8340 = vsel %vm8268, %v8330, 0.0
      %v8341 = vsel %vm8269, %v8326, 0.0
      %v8342 = vsel %vm8270, %v8330, 0.0
      %v8343 = vsel %vm8271, %v8326, 0.0
      %v8344 = vsel %vm8272, %v8330, 0.0
      %v8345 = vsel %vm8273, %v8326, 0.0
      %v8346 = vsel %vm8274, %v8330, 0.0
      %v8347 = vsel %vm8275, %v8326, 0.0
      %v8348 = vsel %vm8276, %v8330, 0.0
      %v8349 = vsel %vm8277, %v8326, 0.0
      %v8350 = vsel %vm8278, %v8330, 0.0
      %v8351 = vsel %vm8279, %v8326, 0.0
      %v8352 = vsel %vm8280, %v8330, 0.0
      %v8353 = vsel %vm8281, %v8326, 0.0
      %v8354 = vsel %vm8282, %v8330, 0.0
      %v8355 = vsel %vm8283, %v8326, 0.0
      %v8356 = vsel %vm8284, %v8330, 0.0
      %v8357 = vsel %vm8285, %v8326, 0.0
      %v8358 = vsel %vm8286, %v8330, 0.0
      %v8359 = vsel %vm8287, %v8326, 0.0
      %v8360 = vsel %vm8288, %v8330, 0.0
      %v8361 = vsel %vm8289, %v8326, 0.0
      %v8362 = vsel %vm8290, %v8330, 0.0
      %v8363 = vsel %vm8291, %v8326, 0.0
      %v8364 = vsel %vm8292, %v8330, 0.0
      %v8365 = vsel %vm8293, %v8326, 0.0
      %v8366 = vsel %vm8294, %v8330, 0.0
      %v8367 = vsel %vm8295, %v8326, 0.0
      %v8368 = vsel %vm8296, %v8330, 0.0
      %v8369 = vsel %vm8297, %v8326, 0.0
      %v8370 = vsel %vm8298, %v8330, 0.0
      %v8371 = vsel %vm8299, %v8326, 0.0
      %v8372 = vsel %vm8300, %v8330, 0.0
      %v8373 = vsel %vm8301, %v8326, 0.0
      %v8374 = vsel %vm8302, %v8330, 0.0
      %v8375 = vsel %vm8303, %v8326, 0.0
      %v8376 = vsel %vm8304, %v8330, 0.0
      %v8377 = vsel %vm8305, %v8326, 0.0
      %v8378 = vsel %vm8306, %v8330, 0.0
      %v8379 = vsel %vm8307, %v8326, 0.0
      %v8380 = vsel %vm8308, %v8330, 0.0
      %v8381 = vsel %vm8309, %v8326, 0.0
      %v8382 = vsel %vm8310, %v8330, 0.0
      %v8383 = vsel %vm8311, %v8326, 0.0
      %v8384 = vsel %vm8312, %v8330, 0.0
      %v8385 = vsel %vm8313, %v8326, 0.0
      %v8386 = vsel %vm8314, %v8330, 0.0
      %v8387 = vsel %vm8315, %v8326, 0.0
      %v8388 = vsel %vm8316, %v8330, 0.0
      %v8389 = vsel %vm8317, %v8326, 0.0
      %v8390 = vsel %vm8318, %v8330, 0.0
      %v8391 = vsel %vm8319, %v8326, 0.0
      %v8392 = vsel %vm8320, %v8330, 0.0
      %v8393 = vsel %vm8321, %v8326, 0.0
      %v8394 = vsel %vm8322, %v8330, 0.0
      %v8395 = vadd.f32 %v8185, %v8331
      %v8396 = vadd.f32 %v8186, %v8332
      %v8397 = vadd.f32 %v8187, %v8333
      %v8398 = vadd.f32 %v8188, %v8334
      %v8399 = vadd.f32 %v8189, %v8335
      %v8400 = vadd.f32 %v8190, %v8336
      %v8401 = vadd.f32 %v8191, %v8337
      %v8402 = vadd.f32 %v8192, %v8338
      %v8403 = vadd.f32 %v8193, %v8339
      %v8404 = vadd.f32 %v8194, %v8340
      %v8405 = vadd.f32 %v8195, %v8341
      %v8406 = vadd.f32 %v8196, %v8342
      %v8407 = vadd.f32 %v8197, %v8343
      %v8408 = vadd.f32 %v8198, %v8344
      %v8409 = vadd.f32 %v8199, %v8345
      %v8410 = vadd.f32 %v8200, %v8346
      %v8411 = vadd.f32 %v8201, %v8347
      %v8412 = vadd.f32 %v8202, %v8348
      %v8413 = vadd.f32 %v8203, %v8349
      %v8414 = vadd.f32 %v8204, %v8350
      %v8415 = vadd.f32 %v8205, %v8351
      %v8416 = vadd.f32 %v8206, %v8352
      %v8417 = vadd.f32 %v8207, %v8353
      %v8418 = vadd.f32 %v8208, %v8354
      %v8419 = vadd.f32 %v8209, %v8355
      %v8420 = vadd.f32 %v8210, %v8356
      %v8421 = vadd.f32 %v8211, %v8357
      %v8422 = vadd.f32 %v8212, %v8358
      %v8423 = vadd.f32 %v8213, %v8359
      %v8424 = vadd.f32 %v8214, %v8360
      %v8425 = vadd.f32 %v8215, %v8361
      %v8426 = vadd.f32 %v8216, %v8362
      %v8427 = vadd.f32 %v8217, %v8363
      %v8428 = vadd.f32 %v8218, %v8364
      %v8429 = vadd.f32 %v8219, %v8365
      %v8430 = vadd.f32 %v8220, %v8366
      %v8431 = vadd.f32 %v8221, %v8367
      %v8432 = vadd.f32 %v8222, %v8368
      %v8433 = vadd.f32 %v8223, %v8369
      %v8434 = vadd.f32 %v8224, %v8370
      %v8435 = vadd.f32 %v8225, %v8371
      %v8436 = vadd.f32 %v8226, %v8372
      %v8437 = vadd.f32 %v8227, %v8373
      %v8438 = vadd.f32 %v8228, %v8374
      %v8439 = vadd.f32 %v8229, %v8375
      %v8440 = vadd.f32 %v8230, %v8376
      %v8441 = vadd.f32 %v8231, %v8377
      %v8442 = vadd.f32 %v8232, %v8378
      %v8443 = vadd.f32 %v8233, %v8379
      %v8444 = vadd.f32 %v8234, %v8380
      %v8445 = vadd.f32 %v8235, %v8381
      %v8446 = vadd.f32 %v8236, %v8382
      %v8447 = vadd.f32 %v8237, %v8383
      %v8448 = vadd.f32 %v8238, %v8384
      %v8449 = vadd.f32 %v8239, %v8385
      %v8450 = vadd.f32 %v8240, %v8386
      %v8451 = vadd.f32 %v8241, %v8387
      %v8452 = vadd.f32 %v8242, %v8388
      %v8453 = vadd.f32 %v8243, %v8389
      %v8454 = vadd.f32 %v8244, %v8390
      %v8455 = vadd.f32 %v8245, %v8391
      %v8456 = vadd.f32 %v8246, %v8392
      %v8457 = vadd.f32 %v8247, %v8393
      %v8458 = vadd.f32 %v8248, %v8394
      %v8459 = vmul.f32 %v8039, %v8395
      %v8460 = vmul.f32 %v8040, %v8396
      %v8461 = vmul.f32 %v8041, %v8397
      %v8462 = vmul.f32 %v8042, %v8398
      %v8463 = vmul.f32 %v8043, %v8399
      %v8464 = vmul.f32 %v8044, %v8400
      %v8465 = vmul.f32 %v8045, %v8401
      %v8466 = vmul.f32 %v8046, %v8402
      %v8467 = vmul.f32 %v8047, %v8403
      %v8468 = vmul.f32 %v8048, %v8404
      %v8469 = vmul.f32 %v8049, %v8405
      %v8470 = vmul.f32 %v8050, %v8406
      %v8471 = vmul.f32 %v8051, %v8407
      %v8472 = vmul.f32 %v8052, %v8408
      %v8473 = vmul.f32 %v8053, %v8409
      %v8474 = vmul.f32 %v8054, %v8410
      %v8475 = vmul.f32 %v8055, %v8411
      %v8476 = vmul.f32 %v8056, %v8412
      %v8477 = vmul.f32 %v8057, %v8413
      %v8478 = vmul.f32 %v8058, %v8414
      %v8479 = vmul.f32 %v8059, %v8415
      %v8480 = vmul.f32 %v8060, %v8416
      %v8481 = vmul.f32 %v8061, %v8417
      %v8482 = vmul.f32 %v8062, %v8418
      %v8483 = vmul.f32 %v8063, %v8419
      %v8484 = vmul.f32 %v8064, %v8420
      %v8485 = vmul.f32 %v8065, %v8421
      %v8486 = vmul.f32 %v8066, %v8422
      %v8487 = vmul.f32 %v8067, %v8423
      %v8488 = vmul.f32 %v8068, %v8424
      %v8489 = vmul.f32 %v8069, %v8425
      %v8490 = vmul.f32 %v8070, %v8426
      %v8491 = vmul.f32 %v8071, %v8427
      %v8492 = vmul.f32 %v8072, %v8428
      %v8493 = vmul.f32 %v8073, %v8429
      %v8494 = vmul.f32 %v8074, %v8430
      %v8495 = vmul.f32 %v8075, %v8431
      %v8496 = vmul.f32 %v8076, %v8432
      %v8497 = vmul.f32 %v8077, %v8433
      %v8498 = vmul.f32 %v8078, %v8434
      %v8499 = vmul.f32 %v8079, %v8435
      %v8500 = vmul.f32 %v8080, %v8436
      %v8501 = vmul.f32 %v8081, %v8437
      %v8502 = vmul.f32 %v8082, %v8438
      %v8503 = vmul.f32 %v8083, %v8439
      %v8504 = vmul.f32 %v8084, %v8440
      %v8505 = vmul.f32 %v8085, %v8441
      %v8506 = vmul.f32 %v8086, %v8442
      %v8507 = vmul.f32 %v8087, %v8443
      %v8508 = vmul.f32 %v8088, %v8444
      %v8509 = vmul.f32 %v8089, %v8445
      %v8510 = vmul.f32 %v8090, %v8446
      %v8511 = vmul.f32 %v8091, %v8447
      %v8512 = vmul.f32 %v8092, %v8448
      %v8513 = vmul.f32 %v8093, %v8449
      %v8514 = vmul.f32 %v8094, %v8450
      %v8515 = vmul.f32 %v8095, %v8451
      %v8516 = vmul.f32 %v8096, %v8452
      %v8517 = vmul.f32 %v8097, %v8453
      %v8518 = vmul.f32 %v8098, %v8454
      %v8519 = vmul.f32 %v8099, %v8455
      %v8520 = vmul.f32 %v8100, %v8456
      %v8521 = vmul.f32 %v8101, %v8457
      %v8522 = vmul.f32 %v8102, %v8458
      %v8523 = vld [vmem:[%s293] sm:$0xff]
      %v8525 = vcombine.high %v8523, %v8523
      %8527 = vmatprep.subr.mxu0 %v8490
      %8528 = vmatpush1.msra.mxu0 %v8489
      %8529 = vmatprep.subr.mxu0 %v8488
      %8530 = vmatpush1.msra.mxu0 %v8487
      %8531 = vmatprep.subr.mxu0 %v8486
      %8532 = vmatpush1.msra.mxu0 %v8485
      %8533 = vmatprep.subr.mxu0 %v8484
      %8534 = vmatpush1.msra.mxu0 %v8483
      %8535 = vmatprep.subr.mxu0 %v8482
      %8536 = vmatpush1.msra.mxu0 %v8481
      %8537 = vmatprep.subr.mxu0 %v8480
      %8538 = vmatpush1.msra.mxu0 %v8479
      %8539 = vmatprep.subr.mxu0 %v8478
      %8540 = vmatpush1.msra.mxu0 %v8477
      %8541 = vmatprep.subr.mxu0 %v8476
      %8542 = vmatpush1.msra.mxu0 %v8475
      %8543 = vmatprep.subr.mxu0 %v8474
      %8544 = vmatpush1.msra.mxu0 %v8473
      %8545 = vmatprep.subr.mxu0 %v8472
      %8546 = vmatpush1.msra.mxu0 %v8471
      %8547 = vmatprep.subr.mxu0 %v8470
      %8548 = vmatpush1.msra.mxu0 %v8469
      %8549 = vmatprep.subr.mxu0 %v8468
      %8550 = vmatpush1.msra.mxu0 %v8467
      %8551 = vmatprep.subr.mxu0 %v8466
      %8552 = vmatpush1.msra.mxu0 %v8465
      %8553 = vmatprep.subr.mxu0 %v8464
      %8554 = vmatpush1.msra.mxu0 %v8463
      %8555 = vmatprep.subr.mxu0 %v8462
      %8556 = vmatpush1.msra.mxu0 %v8461
      %8557 = vmatprep.subr.mxu0 %v8460
      %8558 = vmatpush1.msra.mxu0 %v8459
      %8559 = vmatprep.subr.mxu0 %v8522
      %8560 = vmatpush2.msra.mxu0 %v8521
      %8561 = vmatprep.subr.mxu0 %v8520
      %8562 = vmatpush2.msra.mxu0 %v8519
      %8563 = vmatprep.subr.mxu0 %v8518
      %8564 = vmatpush2.msra.mxu0 %v8517
      %8565 = vmatprep.subr.mxu0 %v8516
      %8566 = vmatpush2.msra.mxu0 %v8515
      %8567 = vmatprep.subr.mxu0 %v8514
      %8568 = vmatpush2.msra.mxu0 %v8513
      %8569 = vmatprep.subr.mxu0 %v8512
      %8570 = vmatpush2.msra.mxu0 %v8511
      %8571 = vmatprep.subr.mxu0 %v8510
      %8572 = vmatpush2.msra.mxu0 %v8509
      %8573 = vmatprep.subr.mxu0 %v8508
      %8574 = vmatpush2.msra.mxu0 %v8507
      %8575 = vmatprep.subr.mxu0 %v8506
      %8576 = vmatpush2.msra.mxu0 %v8505
      %8577 = vmatprep.subr.mxu0 %v8504
      %8578 = vmatpush2.msra.mxu0 %v8503
      %8579 = vmatprep.subr.mxu0 %v8502
      %8580 = vmatpush2.msra.mxu0 %v8501
      %8581 = vmatprep.subr.mxu0 %v8500
      %8582 = vmatpush2.msra.mxu0 %v8499
      %8583 = vmatprep.subr.mxu0 %v8498
      %8584 = vmatpush2.msra.mxu0 %v8497
      %8585 = vmatprep.subr.mxu0 %v8496
      %8586 = vmatpush2.msra.mxu0 %v8495
      %8587 = vmatprep.subr.mxu0 %v8494
      %8588 = vmatpush2.msra.mxu0 %v8493
      %8589 = vmatprep.subr.mxu0 %v8492
      %8590 = vmatpush2.msra.mxu0 %v8491
      %8591 = vmatprep.mubr.f32.mxu0 %v8525
      %8592 = vmatmul.mubr.f32.gmra.mxu0 %v8523
      %v8593 = vpop.f32.mrf.mxu0
      %v8594 = vadd.f32 0.0, %v8593
      %v8595 = vpop.f32.mrf.mxu0
      %v8596 = vadd.f32 0.0, %v8595
      %8597 = vdwg.mxu0
      %v8600 = vcombine.low %v8594, %v8596
      %8602 = vst [vmem:[%s298] sm:$0xff] %v8600
      %p8603 = scmp.lt.s32.totalorder %s18, 1
      %s8604 = scalar_select %p8603, %s18, 1
      %s8605 = smul.addr %s8604, 2
      %s8606 = smul.addr %s8605, 4
      %s8607 = scalar_lea.vmem %s7, %s8606
      // Predicated region
      $region49: #{spatial_transformer_forward.1} parent=47 // pred_check
        %p8608 = pneg %p193
      $region50: #{spatial_transformer_forward.1} parent=47 // pred_check_branch
        %8610 = sbr.rel (%p8608) target = $region52
      $region51: #{spatial_transformer_forward.1} parent=47 // pred_region
        _
      $region52: #{spatial_transformer_forward.1} parent=47 // pred_fallthru
        _
    $region48: #{spatial_transformer_forward.1} parent=5 // pred_fallthru
      _
    %p8611 = scmp.le.s32.totalorder 2, %s13
    // Predicated region
    $region53: #{spatial_transformer_forward.1} parent=5 // pred_check
      %p8612 = pneg %p8611
    $region54: #{spatial_transformer_forward.1} parent=5 // pred_check_branch
      %8614 = sbr.rel (%p8612) target = $region56
    $region55: #{spatial_transformer_forward.1} parent=5 // pred_region
      %s8615 = ssub.s32 %s13, 2
      // Predicated region
      $region57: #{spatial_transformer_forward.1} parent=55 // pred_check
        %p8616 = pneg %p199
      $region58: #{spatial_transformer_forward.1} parent=55 // pred_check_branch
        %8618 = sbr.rel (%p8616) target = $region60
      $region59: #{spatial_transformer_forward.1} parent=55 // pred_region
        %p8619 = scmp.lt.s32.totalorder %s19, 1
        %s8620 = scalar_select %p8619, %s19, 1
        %s8621 = smul.addr %s8620, 2
        %s8622 = smul.addr %s8621, 4
        %s8623 = scalar_lea.vmem %s7, %s8622
      $region60: #{spatial_transformer_forward.1} parent=55 // pred_fallthru
        _
    $region56: #{spatial_transformer_forward.1} parent=5 // pred_fallthru
      _
  $region6: #{spatial_transformer_forward.1} parent=0 // loop_footer
    %s17 = sadd.s32 1, %s13
  $region7: #{spatial_transformer_forward.1} parent=0 // loop_footer_branch
    %12 = sbr.rel target = $region3
  $region8: #{spatial_transformer_forward.1} parent=0 // loop_exit
    _

</llo_original>
